<compile_context>
chip_gen: v5e
topology: v5e:2x2
jax: 0.10.0
libtpu: 0.0.40
codegen_flags: <defaults>
</compile_context>

<pallas_src>
import functools

import jax
import jax.numpy as jnp
from jax.experimental import pallas as pl
from jax.experimental.pallas import tpu as pltpu

HIDDEN = 1000
HIDDEN_PAD = 1024        # 1000 -> 1024: multiples of (8, 128) everywhere
N_CLASSES = 2
OUT_PAD = 128            # 2 -> 128-lane output slab (unmasked vst), sliced outside
LEAKY_SLOPE = 0.2
N_HIDDEN_LAYERS = 4      # the four square Linear(1000,1000) layers (streamed)
LAYERS_PER_STEP = 2      # fold 2 square layers per grid step -> grid=(2,)


def _round_up(n, m):
    return ((n + m - 1) // m) * m


def _fused_mlp_kernel(x_ref, w_in_ref, b_in_ref, w_hid_ref, b_hid_ref,
                      w_out_ref, b_out_ref, o_ref, h_ref, *,
                      slope, n_classes, layers_per_step):
    """One grid step == `layers_per_step` square layers; h lives in VMEM scratch.

    Prologue (step 0)   : h = leaky(x @ W_in + b_in)
    Body (every step)   : h = leaky(h @ W_hid[j] + b_hid[j])  for j in [0, layers_per_step)
    Epilogue (last step): out = log_softmax(h @ W_out + b_out)  over the real classes
    """
    step = pl.program_id(0)

    def leaky(y):
        return jnp.where(y > 0, y, slope * y)

    # ---- Prologue: input layer (z_pad -> HIDDEN_PAD), resident small weights.
    @pl.when(step == 0)
    def _():
        y0 = jnp.dot(x_ref[...].astype(jnp.bfloat16), w_in_ref[...],
                     preferred_element_type=jnp.float32) + b_in_ref[...]
        h_ref[...] = leaky(y0)

    # ---- Folded square hidden layers: weights streamed bf16 straight to MXU.
    for j in range(layers_per_step):                      # static unroll
        y = jnp.dot(h_ref[...].astype(jnp.bfloat16), w_hid_ref[j],
                    preferred_element_type=jnp.float32) + b_hid_ref[j]
        h_ref[...] = leaky(y)

    # ---- Epilogue: output layer + log_softmax over the real classes.
    @pl.when(step == pl.num_programs(0) - 1)
    def _():
        logits = jnp.dot(h_ref[...].astype(jnp.bfloat16), w_out_ref[...],
                         preferred_element_type=jnp.float32) + b_out_ref[...]
        col = jax.lax.broadcasted_iota(jnp.int32, logits.shape, 1)
        masked = jnp.where(col < n_classes, logits, -1e30)   # kill pad lanes
        m = jnp.max(masked, axis=1, keepdims=True)
        s = masked - m
        lse = jnp.log(jnp.sum(jnp.exp(s), axis=1, keepdims=True))
        o_ref[...] = (s - lse).astype(o_ref.dtype)


def discriminator_forward(packed_params, x):
    """x: (B, z_dim) float32 -> (B, 2) log-probabilities."""
    w_in, b_in, w_hid, b_hid, w_out, b_out = packed_params
    n_hid = w_hid.shape[0]
    assert n_hid % LAYERS_PER_STEP == 0
    n_steps = n_hid // LAYERS_PER_STEP

    b, z_dim = x.shape
    z_pad = w_in.shape[0]
    assert z_dim <= z_pad, "z_dim exceeds packed input-layer padding"
    bp = _round_up(b, 8)                                   # sublane-align the batch

    x_pad = jnp.zeros((bp, z_pad), jnp.float32)
    x_pad = x_pad.at[:b, :z_dim].set(x.astype(jnp.float32))

    const2d = lambda l: (0, 0)                             # resident 2-D blocks

    out = pl.pallas_call(
        functools.partial(_fused_mlp_kernel, slope=LEAKY_SLOPE,
                          n_classes=N_CLASSES, layers_per_step=LAYERS_PER_STEP),
        out_shape=jax.ShapeDtypeStruct((bp, OUT_PAD), jnp.float32),
        grid=(n_steps,),
        in_specs=[
            # input activations: fetched once, resident across the grid
            pl.BlockSpec((bp, z_pad), const2d),
            # first-layer weights/bias: small, tightly packed, resident
            pl.BlockSpec((z_pad, HIDDEN_PAD), const2d),
            pl.BlockSpec((1, HIDDEN_PAD), const2d),
            # streamed square hidden layers: 2 layers (4 MiB bf16) per grid step,
            # prefetched by the BlockSpec pipeline while the previous pair runs
            pl.BlockSpec((LAYERS_PER_STEP, HIDDEN_PAD, HIDDEN_PAD),
                         lambda l: (l, 0, 0)),
            pl.BlockSpec((LAYERS_PER_STEP, 1, HIDDEN_PAD),
                         lambda l: (l, 0, 0)),
            # last-layer weights/bias: small, tightly packed, resident
            pl.BlockSpec((HIDDEN_PAD, OUT_PAD), const2d),
            pl.BlockSpec((1, OUT_PAD), const2d),
        ],
        # constant block index -> output resident across the grid, written back once
        out_specs=pl.BlockSpec((bp, OUT_PAD), const2d),
        scratch_shapes=[pltpu.VMEM((bp, HIDDEN_PAD), jnp.float32)],
        compiler_params=pltpu.CompilerParams(
            dimension_semantics=("arbitrary",),            # sequential layer dependency
            vmem_limit_bytes=32 << 20,                     # ~10 MiB needed; v7x-safe
        ),
    )(x_pad, w_in, b_in, w_hid, b_hid, w_out, b_out)

    return out[:b, :N_CLASSES]


def init_discriminator_params(key, z_dim, hidden=HIDDEN, n_classes=N_CLASSES):
    """PyTorch-style init: U(-1/sqrt(fan_in), +1/sqrt(fan_in)); weights kept in bf16."""
    dims = [z_dim] + [hidden] * (N_HIDDEN_LAYERS + 1) + [n_classes]
    params = []
    for fan_in, fan_out in zip(dims[:-1], dims[1:]):
        key, kw, kb = jax.random.split(key, 3)
        bound = 1.0 / float(fan_in) ** 0.5
        # stored as (in, out) — i.e. W.T relative to PyTorch's (out, in) layout
        w = jax.random.uniform(kw, (fan_in, fan_out), jnp.float32, -bound, bound)
        b = jax.random.uniform(kb, (1, fan_out), jnp.float32, -bound, bound)
        params.append((w.astype(jnp.bfloat16), b))          # bf16 weights: half the HBM bytes
    return params


def pack_params(params):
    """Pack into (w_in, b_in, w_hid_stack, b_hid_stack, w_out, b_out).

    First/last layers are packed tightly (no 1024x1024 zero padding); only the
    four square hidden layers are stacked for streaming.
    """
    (w0, b0) = params[0]
    hidden_layers = params[1:-1]
    (wl, bl) = params[-1]

    z_dim = w0.shape[0]
    z_pad = _round_up(max(z_dim, 1), 128)

    w_in = jnp.zeros((z_pad, HIDDEN_PAD), jnp.bfloat16).at[:z_dim, :HIDDEN].set(w0)
    b_in = jnp.zeros((1, HIDDEN_PAD), jnp.float32).at[:, :HIDDEN].set(b0)

    n_hid = len(hidden_layers)
    w_hid = jnp.zeros((n_hid, HIDDEN_PAD, HIDDEN_PAD), jnp.bfloat16)
    b_hid = jnp.zeros((n_hid, 1, HIDDEN_PAD), jnp.float32)
    for i, (w, bias) in enumerate(hidden_layers):
        w_hid = w_hid.at[i, :HIDDEN, :HIDDEN].set(w)
        b_hid = b_hid.at[i, :, :HIDDEN].set(bias)

    w_out = jnp.zeros((HIDDEN_PAD, OUT_PAD), jnp.bfloat16).at[:HIDDEN, :N_CLASSES].set(wl)
    b_out = jnp.zeros((1, OUT_PAD), jnp.float32).at[:, :N_CLASSES].set(bl)

    return w_in, b_in, w_hid, b_hid, w_out, b_out


def _reference_forward(params, x):
    h = x
    for w, bias in params[:-1]:
        y = h @ w.astype(jnp.float32) + bias
        h = jnp.where(y > 0, y, LEAKY_SLOPE * y)
    w, bias = params[-1]
    y = h @ w.astype(jnp.float32) + bias
    return jax.nn.log_softmax(y, axis=1)


if __name__ == "__main__":
    key = jax.random.PRNGKey(0)
    z_dim = 16
    batch = 8

    kp, kx = jax.random.split(key)
    params = init_discriminator_params(kp, z_dim)
    packed = pack_params(params)
    x = jax.random.normal(kx, (batch, z_dim), jnp.float32)

    out = discriminator_forward(packed, x)
    out = jax.block_until_ready(out)

    ref = _reference_forward(params, x)
    assert out.shape == (batch, N_CLASSES), out.shape
    max_err = float(jnp.max(jnp.abs(out - ref)))
    assert jnp.allclose(out, ref, atol=2e-3, rtol=2e-3), max_err

    print("KERNEL_OK")
</pallas_src>

<mosaic_0001>
module attributes {stable_mosaic.version = 11 : i64} {
  func.func @_fused_mlp_kernel(%arg0: i32, %arg1: memref<8x128xf32, #tpu.memory_space<vmem>>, %arg2: memref<128x1024xbf16, #tpu.memory_space<vmem>>, %arg3: memref<1x1024xf32, #tpu.memory_space<vmem>>, %arg4: memref<2x1024x1024xbf16, #tpu.memory_space<vmem>>, %arg5: memref<2x1x1024xf32, #tpu.memory_space<vmem>>, %arg6: memref<1024x128xbf16, #tpu.memory_space<vmem>>, %arg7: memref<1x128xf32, #tpu.memory_space<vmem>>, %arg8: memref<8x128xf32, #tpu.memory_space<vmem>>, %arg9: memref<8x1024xf32, #tpu.memory_space<vmem>>) attributes {dimension_semantics = [#tpu.dimension_semantics<arbitrary>], iteration_bounds = array<i64: 2>, scalar_prefetch = 0 : i64, scratch_operands = 1 : i64, tpu.core_type = #tpu.core_type<tc>, window_params = [{pipeline_mode = #tpu.pipeline_mode<synchronous>, transform_indices = @transform_0, window_bounds = array<i64: 8, 128>}, {pipeline_mode = #tpu.pipeline_mode<synchronous>, transform_indices = @transform_1, window_bounds = array<i64: 128, 1024>}, {pipeline_mode = #tpu.pipeline_mode<synchronous>, transform_indices = @transform_2, window_bounds = array<i64: 1, 1024>}, {transform_indices = @transform_3, window_bounds = array<i64: 2, 1024, 1024>}, {transform_indices = @transform_4, window_bounds = array<i64: 2, 1, 1024>}, {pipeline_mode = #tpu.pipeline_mode<synchronous>, transform_indices = @transform_5, window_bounds = array<i64: 1024, 128>}, {pipeline_mode = #tpu.pipeline_mode<synchronous>, transform_indices = @transform_6, window_bounds = array<i64: 1, 128>}, {pipeline_mode = #tpu.pipeline_mode<synchronous>, transform_indices = @transform_7, window_bounds = array<i64: 8, 128>}]} {
    %c0_i32 = arith.constant 0 : i32
    %0 = arith.cmpi eq, %arg0, %c0_i32 : i32
    %1 = arith.extui %0 : i1 to i32
    %c0_i32_0 = arith.constant 0 : i32
    %2 = arith.cmpi ne, %1, %c0_i32_0 : i32
    scf.if %2 {
      %c0_25 = arith.constant 0 : index
      %c0_26 = arith.constant 0 : index
      %36 = vector.load %arg1[%c0_25, %c0_26] : memref<8x128xf32, #tpu.memory_space<vmem>>, vector<8x128xf32>
      %37 = arith.truncf %36 : vector<8x128xf32> to vector<8x128xbf16>
      %c0_27 = arith.constant 0 : index
      %c0_28 = arith.constant 0 : index
      %38 = vector.load %arg2[%c0_27, %c0_28] : memref<128x1024xbf16, #tpu.memory_space<vmem>>, vector<128x1024xbf16>
      %cst_29 = arith.constant dense<0.000000e+00> : vector<8x1024xf32>
      %39 = tpu.matmul %37, %38, %cst_29 {dimension_numbers = #tpu.dot_dimension_numbers<[1], [0], [0], [1], [0, 0, 1, 1], [], []>} : vector<8x128xbf16>, vector<128x1024xbf16>, vector<8x1024xf32> -> vector<8x1024xf32>
      %c0_30 = arith.constant 0 : index
      %c0_31 = arith.constant 0 : index
      %40 = vector.load %arg3[%c0_30, %c0_31] : memref<1x1024xf32, #tpu.memory_space<vmem>>, vector<1x1024xf32>
      %41 = vector.broadcast %40 : vector<1x1024xf32> to vector<8x1024xf32>
      %42 = arith.addf %39, %41 : vector<8x1024xf32>
      %cst_32 = arith.constant 0.000000e+00 : f32
      %43 = vector.broadcast %cst_32 : f32 to vector<8x1024xf32>
      %44 = arith.cmpf ogt, %42, %43 : vector<8x1024xf32>
      %cst_33 = arith.constant 2.000000e-01 : f32
      %45 = vector.broadcast %cst_33 : f32 to vector<8x1024xf32>
      %46 = arith.mulf %45, %42 : vector<8x1024xf32>
      %47 = arith.select %44, %42, %46 : vector<8x1024xi1>, vector<8x1024xf32>
      %c0_34 = arith.constant 0 : index
      %c0_35 = arith.constant 0 : index
      %48 = vector.load %arg9[%c0_34, %c0_35] : memref<8x1024xf32, #tpu.memory_space<vmem>>, vector<8x1024xf32>
      tpu.vector_store %arg9[%c0_34, %c0_35], %47 {strides = array<i32>} : memref<8x1024xf32, #tpu.memory_space<vmem>>, vector<8x1024xf32>,
    } else {
    }
    %c0 = arith.constant 0 : index
    %c0_1 = arith.constant 0 : index
    %3 = vector.load %arg9[%c0, %c0_1] : memref<8x1024xf32, #tpu.memory_space<vmem>>, vector<8x1024xf32>
    %4 = arith.truncf %3 : vector<8x1024xf32> to vector<8x1024xbf16>
    %c0_2 = arith.constant 0 : index
    %c0_3 = arith.constant 0 : index
    %c0_4 = arith.constant 0 : index
    %5 = vector.load %arg4[%c0_2, %c0_3, %c0_4] : memref<2x1024x1024xbf16, #tpu.memory_space<vmem>>, vector<1x1024x1024xbf16>
    %6 = vector.shape_cast %5 : vector<1x1024x1024xbf16> to vector<1024x1024xbf16>
    %cst = arith.constant dense<0.000000e+00> : vector<8x1024xf32>
    %7 = tpu.matmul %4, %6, %cst {dimension_numbers = #tpu.dot_dimension_numbers<[1], [0], [0], [1], [0, 0, 1, 1], [], []>} : vector<8x1024xbf16>, vector<1024x1024xbf16>, vector<8x1024xf32> -> vector<8x1024xf32>
    %c0_5 = arith.constant 0 : index
    %c0_6 = arith.constant 0 : index
    %c0_7 = arith.constant 0 : index
    %8 = vector.load %arg5[%c0_5, %c0_6, %c0_7] : memref<2x1x1024xf32, #tpu.memory_space<vmem>>, vector<1x1x1024xf32>
    %9 = vector.shape_cast %8 : vector<1x1x1024xf32> to vector<1x1024xf32>
    %10 = vector.broadcast %9 : vector<1x1024xf32> to vector<8x1024xf32>
    %11 = arith.addf %7, %10 : vector<8x1024xf32>
    %cst_8 = arith.constant 0.000000e+00 : f32
    %12 = vector.broadcast %cst_8 : f32 to vector<8x1024xf32>
    %13 = arith.cmpf ogt, %11, %12 : vector<8x1024xf32>
    %cst_9 = arith.constant 2.000000e-01 : f32
    %14 = vector.broadcast %cst_9 : f32 to vector<8x1024xf32>
    %15 = arith.mulf %14, %11 : vector<8x1024xf32>
    %16 = arith.select %13, %11, %15 : vector<8x1024xi1>, vector<8x1024xf32>
    %c0_10 = arith.constant 0 : index
    %c0_11 = arith.constant 0 : index
    %17 = vector.load %arg9[%c0_10, %c0_11] : memref<8x1024xf32, #tpu.memory_space<vmem>>, vector<8x1024xf32>
    tpu.vector_store %arg9[%c0_10, %c0_11], %16 {strides = array<i32>} : memref<8x1024xf32, #tpu.memory_space<vmem>>, vector<8x1024xf32>,
    %c0_12 = arith.constant 0 : index
    %c0_13 = arith.constant 0 : index
    %18 = vector.load %arg9[%c0_12, %c0_13] : memref<8x1024xf32, #tpu.memory_space<vmem>>, vector<8x1024xf32>
    %19 = arith.truncf %18 : vector<8x1024xf32> to vector<8x1024xbf16>
    %c1 = arith.constant 1 : index
    %c0_14 = arith.constant 0 : index
    %c0_15 = arith.constant 0 : index
    %20 = vector.load %arg4[%c1, %c0_14, %c0_15] : memref<2x1024x1024xbf16, #tpu.memory_space<vmem>>, vector<1x1024x1024xbf16>
    %21 = vector.shape_cast %20 : vector<1x1024x1024xbf16> to vector<1024x1024xbf16>
    %cst_16 = arith.constant dense<0.000000e+00> : vector<8x1024xf32>
    %22 = tpu.matmul %19, %21, %cst_16 {dimension_numbers = #tpu.dot_dimension_numbers<[1], [0], [0], [1], [0, 0, 1, 1], [], []>} : vector<8x1024xbf16>, vector<1024x1024xbf16>, vector<8x1024xf32> -> vector<8x1024xf32>
    %c1_17 = arith.constant 1 : index
    %c0_18 = arith.constant 0 : index
    %c0_19 = arith.constant 0 : index
    %23 = vector.load %arg5[%c1_17, %c0_18, %c0_19] : memref<2x1x1024xf32, #tpu.memory_space<vmem>>, vector<1x1x1024xf32>
    %24 = vector.shape_cast %23 : vector<1x1x1024xf32> to vector<1x1024xf32>
    %25 = vector.broadcast %24 : vector<1x1024xf32> to vector<8x1024xf32>
    %26 = arith.addf %22, %25 : vector<8x1024xf32>
    %cst_20 = arith.constant 0.000000e+00 : f32
    %27 = vector.broadcast %cst_20 : f32 to vector<8x1024xf32>
    %28 = arith.cmpf ogt, %26, %27 : vector<8x1024xf32>
    %cst_21 = arith.constant 2.000000e-01 : f32
    %29 = vector.broadcast %cst_21 : f32 to vector<8x1024xf32>
    %30 = arith.mulf %29, %26 : vector<8x1024xf32>
    %31 = arith.select %28, %26, %30 : vector<8x1024xi1>, vector<8x1024xf32>
    %c0_22 = arith.constant 0 : index
    %c0_23 = arith.constant 0 : index
    %32 = vector.load %arg9[%c0_22, %c0_23] : memref<8x1024xf32, #tpu.memory_space<vmem>>, vector<8x1024xf32>
    tpu.vector_store %arg9[%c0_22, %c0_23], %31 {strides = array<i32>} : memref<8x1024xf32, #tpu.memory_space<vmem>>, vector<8x1024xf32>,
    %c1_i32 = arith.constant 1 : i32
    %33 = arith.cmpi eq, %arg0, %c1_i32 : i32
    %34 = arith.extui %33 : i1 to i32
    %c0_i32_24 = arith.constant 0 : i32
    %35 = arith.cmpi ne, %34, %c0_i32_24 : i32
    scf.if %35 {
      %c0_25 = arith.constant 0 : index
      %c0_26 = arith.constant 0 : index
      %36 = vector.load %arg9[%c0_25, %c0_26] : memref<8x1024xf32, #tpu.memory_space<vmem>>, vector<8x1024xf32>
      %37 = arith.truncf %36 : vector<8x1024xf32> to vector<8x1024xbf16>
      %c0_27 = arith.constant 0 : index
      %c0_28 = arith.constant 0 : index
      %38 = vector.load %arg6[%c0_27, %c0_28] : memref<1024x128xbf16, #tpu.memory_space<vmem>>, vector<1024x128xbf16>
      %cst_29 = arith.constant dense<0.000000e+00> : vector<8x128xf32>
      %39 = tpu.matmul %37, %38, %cst_29 {dimension_numbers = #tpu.dot_dimension_numbers<[1], [0], [0], [1], [0, 0, 1, 1], [], []>} : vector<8x1024xbf16>, vector<1024x128xbf16>, vector<8x128xf32> -> vector<8x128xf32>
      %c0_30 = arith.constant 0 : index
      %c0_31 = arith.constant 0 : index
      %40 = vector.load %arg7[%c0_30, %c0_31] : memref<1x128xf32, #tpu.memory_space<vmem>>, vector<1x128xf32>
      %41 = vector.broadcast %40 : vector<1x128xf32> to vector<8x128xf32>
      %42 = arith.addf %39, %41 : vector<8x128xf32>
      %43 = tpu.iota {dimensions = array<i32: 1>} : vector<8x128xi32>
      %c2_i32 = arith.constant 2 : i32
      %44 = vector.broadcast %c2_i32 : i32 to vector<8x128xi32>
      %45 = arith.cmpi slt, %43, %44 : vector<8x128xi32>
      %cst_32 = arith.constant -1.000000e+30 : f32
      %46 = vector.broadcast %cst_32 : f32 to vector<8x128xf32>
      %47 = arith.select %45, %42, %46 : vector<8x128xi1>, vector<8x128xf32>
      %cst_33 = arith.constant dense<0xFF800000> : vector<8xf32>
      %48 = vector.multi_reduction <maximumf>, %47, %cst_33 [1] : vector<8x128xf32> to vector<8xf32>
      %49 = vector.shape_cast %48 : vector<8xf32> to vector<8x1xf32>
      %50 = vector.broadcast %49 : vector<8x1xf32> to vector<8x128xf32>
      %51 = arith.subf %47, %50 : vector<8x128xf32>
      %52 = math.exp %51 : vector<8x128xf32>
      %cst_34 = arith.constant dense<0.000000e+00> : vector<8xf32>
      %53 = vector.multi_reduction <add>, %52, %cst_34 [1] : vector<8x128xf32> to vector<8xf32>
      %54 = vector.shape_cast %53 : vector<8xf32> to vector<8x1xf32>
      %55 = math.log %54 : vector<8x1xf32>
      %56 = vector.broadcast %55 : vector<8x1xf32> to vector<8x128xf32>
      %57 = arith.subf %51, %56 : vector<8x128xf32>
      %c0_35 = arith.constant 0 : index
      %c0_36 = arith.constant 0 : index
      %58 = vector.load %arg8[%c0_35, %c0_36] : memref<8x128xf32, #tpu.memory_space<vmem>>, vector<8x128xf32>
      tpu.vector_store %arg8[%c0_35, %c0_36], %57 {strides = array<i32>} : memref<8x128xf32, #tpu.memory_space<vmem>>, vector<8x128xf32>,
    } else {
    }
    return
  }
  func.func @transform_0(%arg0: i32) -> (i32, i32) {
    %c0_i32 = arith.constant 0 : i32
    %c0_i32_0 = arith.constant 0 : i32
    %c0_i32_1 = arith.constant 0 : i32
    return %c0_i32, %c0_i32_0 : i32, i32
  }
  func.func @transform_1(%arg0: i32) -> (i32, i32) {
    %c0_i32 = arith.constant 0 : i32
    %c0_i32_0 = arith.constant 0 : i32
    %c0_i32_1 = arith.constant 0 : i32
    return %c0_i32, %c0_i32_0 : i32, i32
  }
  func.func @transform_2(%arg0: i32) -> (i32, i32) {
    %c0_i32 = arith.constant 0 : i32
    %c0_i32_0 = arith.constant 0 : i32
    %c0_i32_1 = arith.constant 0 : i32
    return %c0_i32, %c0_i32_0 : i32, i32
  }
  func.func @transform_3(%arg0: i32) -> (i32, i32, i32) {
    %c0_i32 = arith.constant 0 : i32
    %c0_i32_0 = arith.constant 0 : i32
    %c0_i32_1 = arith.constant 0 : i32
    return %arg0, %c0_i32, %c0_i32_0 : i32, i32, i32
  }
  func.func @transform_4(%arg0: i32) -> (i32, i32, i32) {
    %c0_i32 = arith.constant 0 : i32
    %c0_i32_0 = arith.constant 0 : i32
    %c0_i32_1 = arith.constant 0 : i32
    return %arg0, %c0_i32, %c0_i32_0 : i32, i32, i32
  }
  func.func @transform_5(%arg0: i32) -> (i32, i32) {
    %c0_i32 = arith.constant 0 : i32
    %c0_i32_0 = arith.constant 0 : i32
    %c0_i32_1 = arith.constant 0 : i32
    return %c0_i32, %c0_i32_0 : i32, i32
  }
  func.func @transform_6(%arg0: i32) -> (i32, i32) {
    %c0_i32 = arith.constant 0 : i32
    %c0_i32_0 = arith.constant 0 : i32
    %c0_i32_1 = arith.constant 0 : i32
    return %c0_i32, %c0_i32_0 : i32, i32
  }
  func.func @transform_7(%arg0: i32) -> (i32, i32) {
    %c0_i32 = arith.constant 0 : i32
    %c0_i32_0 = arith.constant 0 : i32
    %c0_i32_1 = arith.constant 0 : i32
    return %c0_i32, %c0_i32_0 : i32, i32
  }
}

</mosaic_0001>

<llo_original>
// kernel: tpu_custom_call.1
$region0: #{tpu_custom_call.1}
  #allocation0 [shape = 'u32[]', space=smem, size = 0x4, offset = 0x4, fixed_abs, tag = 'smem constant byte address 0x4 - core index']
  #allocation1 [shape = 'u32[72,128]{1,0:T(1,128)}', space=vmem, size = 0x9000, scoped, tag = 'internal scratch']
  #allocation2 [shape = 'f32[8,1024]{1,0:T(8,128)}', space=vmem, size = 0x8000, scoped, tag = 'scratch operand']
  %s0 = inlined_call_operand.hbm [shape: f32[8,128], index: 0, kind: input, shape index: {}]
  %s1 = inlined_call_operand.hbm [shape: bf16[128,1024], index: 1, kind: input, shape index: {}]
  %s2 = inlined_call_operand.hbm [shape: f32[1,1024], index: 2, kind: input, shape index: {}]
  %s3 = inlined_call_operand.hbm [shape: bf16[4,1024,1024], index: 3, kind: input, shape index: {}]
  %s4 = inlined_call_operand.hbm [shape: f32[4,1,1024], index: 4, kind: input, shape index: {}]
  %s5 = inlined_call_operand.hbm [shape: bf16[1024,128], index: 5, kind: input, shape index: {}]
  %s6 = inlined_call_operand.hbm [shape: f32[1,128], index: 6, kind: input, shape index: {}]
  %s7 = inlined_call_operand.hbm [shape: f32[8,128], index: 7, kind: output, shape index: {}]
  %s8 = sld [smem:[#allocation0]]
  $region97: #{tpu_custom_call.1} parent=0
    _
  %s10 = ssub.s32 1, %s8
  %s11 = scalar_select 0, %s10, %s8
  $region1: #{tpu_custom_call.1} parent=0
    #allocation3 [shape = 'u8[4096]{0}', space=vmem, size = 0x1000, scoped, tag = 'input window, operand 0, single buffered']
    #allocation4 [shape = 's32[2]{0}', space=sflag, size = 0x8, scoped, tag = 'scoped memory for tpu_custom_call.1']
    #allocation5 [shape = 's32[2]{0}', space=sflag, size = 0x8, scoped, tag = 'scoped memory for tpu_custom_call.1']
    #allocation6 [shape = 'u8[262144]{0}', space=vmem, size = 0x40000, scoped, tag = 'input window, operand 1, single buffered']
    #allocation7 [shape = 's32[1]{0}', space=sflag, size = 0x4, scoped, tag = 'scoped memory for tpu_custom_call.1']
    #allocation8 [shape = 'u8[4096]{0}', space=vmem, size = 0x1000, scoped, tag = 'input window, operand 2, single buffered']
    #allocation9 [shape = 'u8[8388608]{0}', space=vmem, size = 0x800000, scoped, tag = 'input window, operand 3']
    #allocation10 [shape = 's32[2]{0}', space=sflag, size = 0x8, scoped, tag = 'scoped memory for tpu_custom_call.1']
    #allocation11 [shape = 'u8[16384]{0}', space=vmem, size = 0x4000, scoped, tag = 'input window, operand 4']
    #allocation12 [shape = 'u8[262144]{0}', space=vmem, size = 0x40000, scoped, tag = 'input window, operand 5, single buffered']
    #allocation13 [shape = 's32[1]{0}', space=sflag, size = 0x4, scoped, tag = 'scoped memory for tpu_custom_call.1']
    #allocation14 [shape = 'u8[512]{0}', space=vmem, size = 0x400, scoped, tag = 'input window, operand 6, single buffered']
    #allocation15 [shape = 'u8[4096]{0}', space=vmem, size = 0x1000, scoped, tag = 'output window, operand 0, single buffered']
    %12 = vsyncpa [#allocation4], 0
    %13 = vsyncpa [#allocation7], 0
    %14 = vsyncpa [#allocation10], 0
    %s15 = scalar_lea.sflag [#allocation10], 1
    %16 = vsyncpa %s15, 0
    %17 = vsyncpa [#allocation13], 0
    %18 = vsyncpa [#allocation5], 0
    loop: start=0, step=1, limit=4
    $region2: #{tpu_custom_call.1} parent=1 // loop_pre_header
      _
    $region3: #{tpu_custom_call.1} parent=1 // loop_header
      %s20 = sphi 0, %s24
      %p21 = scmp.ge.s32.totalorder %s20, 4
      %s28 = sphi 0, %s28
      %s30 = sphi 0, %s28
      %s31 = sphi 0, %s30
      %s45 = sphi 0, %s31
      %s49 = sphi 0, %s49
      %s51 = sphi 0, %s49
      %s52 = sphi 0, %s51
      %s66 = sphi 0, %s52
      %s70 = sphi 0, %s70
      %s72 = sphi 0, %s70
      %s73 = sphi 0, %s72
      %s87 = sphi 0, %s73
      %s93 = sphi 0, %s95
      %s96 = sphi 0, %s93
      %s97 = sphi 0, %s96
      %s113 = sphi 0, %s97
      %s119 = sphi 0, %s121
      %s122 = sphi 0, %s119
      %s123 = sphi 0, %s122
      %s139 = sphi 0, %s123
      %s143 = sphi 0, %s143
      %s145 = sphi 0, %s143
      %s146 = sphi 0, %s145
      %s160 = sphi 0, %s146
      %s164 = sphi 0, %s164
      %s166 = sphi 0, %s164
      %s167 = sphi 0, %s166
      %s181 = sphi 0, %s167
      %s185 = sphi 0, %s185
      %s187 = sphi 0, %s185
      %s188 = sphi 0, %s187
      %s202 = sphi 0, %s188
    $region4: #{tpu_custom_call.1} parent=1 // loop_header_branch
      %23 = sbr.rel (%p21) target = $region8
    $region5: #{tpu_custom_call.1} parent=1 // loop_body
      %s25 = ssub.s32 %s20, 1
      %s26 = ssub.s32 %s20, 2
      %s27 = sadd.s32 %s20, 1
      %s29 = sadd.s32 %s28, 1
      %p32 = scmp.eq.s32.totalorder %s20, 1
      %p33 = scmp.ne.s32.totalorder %s28, %s30
      %p34 = scmp.eq.s32.totalorder %s20, 0
      %p35 = por %p33, %p34
      %p36 = scmp.ne.s32.totalorder %s28, %s30
      %p37 = scmp.eq.s32.totalorder %s25, 1
      %p38 = por %p36, %p37
      %p39 = scmp.ne.s32.totalorder %s30, %s31
      %p40 = scmp.eq.s32.totalorder %s25, 0
      %p41 = por %p39, %p40
      %p42 = scmp.ne.s32.totalorder %s30, %s31
      %p43 = scmp.eq.s32.totalorder %s26, 1
      %p44 = por %p42, %p43
      %p46 = scmp.ne.s32.totalorder %s31, %s45
      %p47 = scmp.eq.s32.totalorder %s26, 0
      %p48 = por %p46, %p47
      %s50 = sadd.s32 %s49, 1
      %p53 = scmp.eq.s32.totalorder %s20, 1
      %p54 = scmp.ne.s32.totalorder %s49, %s51
      %p55 = scmp.eq.s32.totalorder %s20, 0
      %p56 = por %p54, %p55
      %p57 = scmp.ne.s32.totalorder %s49, %s51
      %p58 = scmp.eq.s32.totalorder %s25, 1
      %p59 = por %p57, %p58
      %p60 = scmp.ne.s32.totalorder %s51, %s52
      %p61 = scmp.eq.s32.totalorder %s25, 0
      %p62 = por %p60, %p61
      %p63 = scmp.ne.s32.totalorder %s51, %s52
      %p64 = scmp.eq.s32.totalorder %s26, 1
      %p65 = por %p63, %p64
      %p67 = scmp.ne.s32.totalorder %s52, %s66
      %p68 = scmp.eq.s32.totalorder %s26, 0
      %p69 = por %p67, %p68
      %s71 = sadd.s32 %s70, 1
      %p74 = scmp.eq.s32.totalorder %s20, 1
      %p75 = scmp.ne.s32.totalorder %s70, %s72
      %p76 = scmp.eq.s32.totalorder %s20, 0
      %p77 = por %p75, %p76
      %p78 = scmp.ne.s32.totalorder %s70, %s72
      %p79 = scmp.eq.s32.totalorder %s25, 1
      %p80 = por %p78, %p79
      %p81 = scmp.ne.s32.totalorder %s72, %s73
      %p82 = scmp.eq.s32.totalorder %s25, 0
      %p83 = por %p81, %p82
      %p84 = scmp.ne.s32.totalorder %s72, %s73
      %p85 = scmp.eq.s32.totalorder %s26, 1
      %p86 = por %p84, %p85
      %p88 = scmp.ne.s32.totalorder %s73, %s87
      %p89 = scmp.eq.s32.totalorder %s26, 0
      %p90 = por %p88, %p89
      %s91 = ssub.s32 %s20, %s27
      %p92 = scmp.eq.s32.totalorder %s91, 0
      %s94 = sadd.s32 %s93, 1
      %s95 = scalar_select %p92, %s93, %s94
      %p98 = pneg %p92
      %p99 = scmp.eq.s32.totalorder %s20, 1
      %p100 = por %p98, %p99
      %p101 = scmp.ne.s32.totalorder %s93, %s96
      %p102 = scmp.eq.s32.totalorder %s20, 0
      %p103 = por %p101, %p102
      %p104 = scmp.ne.s32.totalorder %s93, %s96
      %p105 = scmp.eq.s32.totalorder %s25, 1
      %p106 = por %p104, %p105
      %p107 = scmp.ne.s32.totalorder %s96, %s97
      %p108 = scmp.eq.s32.totalorder %s25, 0
      %p109 = por %p107, %p108
      %p110 = scmp.ne.s32.totalorder %s96, %s97
      %p111 = scmp.eq.s32.totalorder %s26, 1
      %p112 = por %p110, %p111
      %p114 = scmp.ne.s32.totalorder %s97, %s113
      %p115 = scmp.eq.s32.totalorder %s26, 0
      %p116 = por %p114, %p115
      %s117 = ssub.s32 %s20, %s27
      %p118 = scmp.eq.s32.totalorder %s117, 0
      %s120 = sadd.s32 %s119, 1
      %s121 = scalar_select %p118, %s119, %s120
      %p124 = pneg %p118
      %p125 = scmp.eq.s32.totalorder %s20, 1
      %p126 = por %p124, %p125
      %p127 = scmp.ne.s32.totalorder %s119, %s122
      %p128 = scmp.eq.s32.totalorder %s20, 0
      %p129 = por %p127, %p128
      %p130 = scmp.ne.s32.totalorder %s119, %s122
      %p131 = scmp.eq.s32.totalorder %s25, 1
      %p132 = por %p130, %p131
      %p133 = scmp.ne.s32.totalorder %s122, %s123
      %p134 = scmp.eq.s32.totalorder %s25, 0
      %p135 = por %p133, %p134
      %p136 = scmp.ne.s32.totalorder %s122, %s123
      %p137 = scmp.eq.s32.totalorder %s26, 1
      %p138 = por %p136, %p137
      %p140 = scmp.ne.s32.totalorder %s123, %s139
      %p141 = scmp.eq.s32.totalorder %s26, 0
      %p142 = por %p140, %p141
      %s144 = sadd.s32 %s143, 1
      %p147 = scmp.eq.s32.totalorder %s20, 1
      %p148 = scmp.ne.s32.totalorder %s143, %s145
      %p149 = scmp.eq.s32.totalorder %s20, 0
      %p150 = por %p148, %p149
      %p151 = scmp.ne.s32.totalorder %s143, %s145
      %p152 = scmp.eq.s32.totalorder %s25, 1
      %p153 = por %p151, %p152
      %p154 = scmp.ne.s32.totalorder %s145, %s146
      %p155 = scmp.eq.s32.totalorder %s25, 0
      %p156 = por %p154, %p155
      %p157 = scmp.ne.s32.totalorder %s145, %s146
      %p158 = scmp.eq.s32.totalorder %s26, 1
      %p159 = por %p157, %p158
      %p161 = scmp.ne.s32.totalorder %s146, %s160
      %p162 = scmp.eq.s32.totalorder %s26, 0
      %p163 = por %p161, %p162
      %s165 = sadd.s32 %s164, 1
      %p168 = scmp.eq.s32.totalorder %s20, 1
      %p169 = scmp.ne.s32.totalorder %s164, %s166
      %p170 = scmp.eq.s32.totalorder %s20, 0
      %p171 = por %p169, %p170
      %p172 = scmp.ne.s32.totalorder %s164, %s166
      %p173 = scmp.eq.s32.totalorder %s25, 1
      %p174 = por %p172, %p173
      %p175 = scmp.ne.s32.totalorder %s166, %s167
      %p176 = scmp.eq.s32.totalorder %s25, 0
      %p177 = por %p175, %p176
      %p178 = scmp.ne.s32.totalorder %s166, %s167
      %p179 = scmp.eq.s32.totalorder %s26, 1
      %p180 = por %p178, %p179
      %p182 = scmp.ne.s32.totalorder %s167, %s181
      %p183 = scmp.eq.s32.totalorder %s26, 0
      %p184 = por %p182, %p183
      %s186 = sadd.s32 %s185, 1
      %p189 = scmp.eq.s32.totalorder %s20, 1
      %p190 = scmp.ne.s32.totalorder %s185, %s187
      %p191 = scmp.eq.s32.totalorder %s20, 0
      %p192 = por %p190, %p191
      %p193 = scmp.ne.s32.totalorder %s185, %s187
      %p194 = scmp.eq.s32.totalorder %s25, 1
      %p195 = por %p193, %p194
      %p196 = scmp.ne.s32.totalorder %s187, %s188
      %p197 = scmp.eq.s32.totalorder %s25, 0
      %p198 = por %p196, %p197
      %p199 = scmp.ne.s32.totalorder %s187, %s188
      %p200 = scmp.eq.s32.totalorder %s26, 1
      %p201 = por %p199, %p200
      %p203 = scmp.ne.s32.totalorder %s188, %s202
      %p204 = scmp.eq.s32.totalorder %s26, 0
      %p205 = por %p203, %p204
      %p206 = scmp.le.s32.totalorder 1, %s20
      %p207 = scmp.lt.s32.totalorder %s20, 3
      %p208 = pnand %p206, %p207
      %p209 = pneg %p208
      // Predicated region
      $region9: #{tpu_custom_call.1} parent=5 // pred_check
        _
      $region10: #{tpu_custom_call.1} parent=5 // pred_check_branch
        %211 = sbr.rel (%p208) target = $region12
      $region11: #{tpu_custom_call.1} parent=5 // pred_region
        %s212 = ssub.s32 %s20, 1
        // Predicated region
        $region13: #{tpu_custom_call.1} parent=11 // pred_check
          %p213 = pneg %p41
        $region14: #{tpu_custom_call.1} parent=11 // pred_check_branch
          %215 = sbr.rel (%p213) target = $region16
        $region15: #{tpu_custom_call.1} parent=11 // pred_region
          %217 = vsyncadd [#allocation4], 0
          %s219 = sshll.u32 %s0, 4
          %s220 = int_to_ptr.hbm [resolvable:$true] %s219
          %s221 = sshll.u32 [#allocation3], 4
          %s222 = int_to_ptr.vmem [resolvable:$true] %s221
          %224 = dma.hbm_to_vmem [thread:$0]  %s220, 128, %s222, [#allocation4]
        $region16: #{tpu_custom_call.1} parent=11 // pred_fallthru
          _
        // Predicated region
        $region17: #{tpu_custom_call.1} parent=11 // pred_check
          %p225 = pneg %p62
        $region18: #{tpu_custom_call.1} parent=11 // pred_check_branch
          %227 = sbr.rel (%p225) target = $region20
        $region19: #{tpu_custom_call.1} parent=11 // pred_region
          %229 = vsyncadd [#allocation7], 0
          %s230 = sshll.u32 %s1, 4
          %s231 = int_to_ptr.hbm [resolvable:$true] %s230
          %s232 = sshll.u32 [#allocation6], 4
          %s233 = int_to_ptr.vmem [resolvable:$true] %s232
          %238 = dma.hbm_to_vmem [thread:$0]  %s231, 8192, %s233, [#allocation7], 512, 512, 32
        $region20: #{tpu_custom_call.1} parent=11 // pred_fallthru
          _
        // Predicated region
        $region21: #{tpu_custom_call.1} parent=11 // pred_check
          %p239 = pneg %p83
        $region22: #{tpu_custom_call.1} parent=11 // pred_check_branch
          %241 = sbr.rel (%p239) target = $region24
        $region23: #{tpu_custom_call.1} parent=11 // pred_region
          %243 = vsyncadd [#allocation7], 0
          %s245 = sshll.u32 %s2, 4
          %s246 = int_to_ptr.hbm [resolvable:$true] %s245
          %s247 = sshll.u32 [#allocation8], 4
          %s248 = int_to_ptr.vmem [resolvable:$true] %s247
          %250 = dma.hbm_to_vmem [thread:$0]  %s246, 128, %s248, [#allocation7]
        $region24: #{tpu_custom_call.1} parent=11 // pred_fallthru
          _
        // Predicated region
        $region25: #{tpu_custom_call.1} parent=11 // pred_check
          %p251 = pneg %p156
        $region26: #{tpu_custom_call.1} parent=11 // pred_check_branch
          %253 = sbr.rel (%p251) target = $region28
        $region27: #{tpu_custom_call.1} parent=11 // pred_region
          %255 = vsyncadd [#allocation13], 0
          %s256 = sshll.u32 %s5, 4
          %s257 = int_to_ptr.hbm [resolvable:$true] %s256
          %s258 = sshll.u32 [#allocation12], 4
          %s259 = int_to_ptr.vmem [resolvable:$true] %s258
          %264 = dma.hbm_to_vmem [thread:$0]  %s257, 8192, %s259, [#allocation13], 64, 64, 4
        $region28: #{tpu_custom_call.1} parent=11 // pred_fallthru
          _
        // Predicated region
        $region29: #{tpu_custom_call.1} parent=11 // pred_check
          %p265 = pneg %p177
        $region30: #{tpu_custom_call.1} parent=11 // pred_check_branch
          %267 = sbr.rel (%p265) target = $region32
        $region31: #{tpu_custom_call.1} parent=11 // pred_region
          %269 = vsyncadd [#allocation13], 0
          %s271 = sshll.u32 %s6, 4
          %s272 = int_to_ptr.hbm [resolvable:$true] %s271
          %s273 = sshll.u32 [#allocation14], 4
          %s274 = int_to_ptr.vmem [resolvable:$true] %s273
          %276 = dma.hbm_to_vmem [thread:$0]  %s272, 16, %s274, [#allocation13]
        $region32: #{tpu_custom_call.1} parent=11 // pred_fallthru
          _
      $region12: #{tpu_custom_call.1} parent=5 // pred_fallthru
        _
      %p277 = scmp.lt.s32.totalorder %s20, 2
      // Predicated region
      $region33: #{tpu_custom_call.1} parent=5 // pred_check
        %p278 = pneg %p277
      $region34: #{tpu_custom_call.1} parent=5 // pred_check_branch
        %280 = sbr.rel (%p278) target = $region36
      $region35: #{tpu_custom_call.1} parent=5 // pred_region
        // Predicated region
        $region37: #{tpu_custom_call.1} parent=35 // pred_check
          %p281 = pneg %p103
        $region38: #{tpu_custom_call.1} parent=35 // pred_check_branch
          %283 = sbr.rel (%p281) target = $region40
        $region39: #{tpu_custom_call.1} parent=35 // pred_region
          %s284 = sand.u32 %s20, 1
          %s285 = scalar_lea.sflag [#allocation10], %s284
          %s286 = sand.u32 %s93, 1
          %s287 = smul.addr %s286, 8192
          %s288 = scalar_lea.vmem [#allocation9], %s287
          %s289 = smul.u32 2, %s20
          %291 = vsyncadd %s285, 0
          %s292 = smul.addr %s289, 1024
          %s293 = smul.addr %s292, 4
          %s294 = scalar_lea.hbm %s3, %s293
          %s295 = sshll.u32 %s294, 4
          %s296 = int_to_ptr.hbm [resolvable:$true] %s295
          %s297 = sshll.u32 %s288, 4
          %s298 = int_to_ptr.vmem [resolvable:$true] %s297
          %303 = dma.hbm_to_vmem [thread:$0]  %s296, 131072, %s298, %s285, 512, 512, 32
        $region40: #{tpu_custom_call.1} parent=35 // pred_fallthru
          _
        // Predicated region
        $region41: #{tpu_custom_call.1} parent=35 // pred_check
          %p304 = pneg %p129
        $region42: #{tpu_custom_call.1} parent=35 // pred_check_branch
          %306 = sbr.rel (%p304) target = $region44
        $region43: #{tpu_custom_call.1} parent=35 // pred_region
          %s307 = sand.u32 %s20, 1
          %s308 = scalar_lea.sflag [#allocation10], %s307
          %s309 = sand.u32 %s119, 1
          %s310 = smul.addr %s309, 16
          %s311 = scalar_lea.vmem [#allocation11], %s310
          %s312 = smul.u32 2, %s20
          %314 = vsyncadd %s308, 0
          %s315 = smul.addr %s312, 8
          %s316 = scalar_lea.hbm %s4, %s315
          %s317 = sshll.u32 %s316, 4
          %s318 = int_to_ptr.hbm [resolvable:$true] %s317
          %s319 = sshll.u32 %s311, 4
          %s320 = int_to_ptr.vmem [resolvable:$true] %s319
          %325 = dma.hbm_to_vmem [thread:$0]  %s318, 256, %s320, %s308, 128, 128, 8
        $region44: #{tpu_custom_call.1} parent=35 // pred_fallthru
          _
      $region36: #{tpu_custom_call.1} parent=5 // pred_fallthru
        _
      %p326 = scmp.le.s32.totalorder 1, %s20
      %p327 = scmp.lt.s32.totalorder %s20, 3
      %p328 = pnand %p326, %p327
      %p329 = pneg %p328
      // Predicated region
      $region45: #{tpu_custom_call.1} parent=5 // pred_check
        _
      $region46: #{tpu_custom_call.1} parent=5 // pred_check_branch
        %331 = sbr.rel (%p328) target = $region48
      $region47: #{tpu_custom_call.1} parent=5 // pred_region
        %s332 = ssub.s32 %s20, 1
        // Predicated region
        $region49: #{tpu_custom_call.1} parent=47 // pred_check
          %p333 = pneg %p41
        $region50: #{tpu_custom_call.1} parent=47 // pred_check_branch
          %335 = sbr.rel (%p333) target = $region52
        $region51: #{tpu_custom_call.1} parent=47 // pred_region
          %337 = dma.done [#allocation4], 128
        $region52: #{tpu_custom_call.1} parent=47 // pred_fallthru
          _
        // Predicated region
        $region53: #{tpu_custom_call.1} parent=47 // pred_check
          %p338 = pneg %p62
        $region54: #{tpu_custom_call.1} parent=47 // pred_check_branch
          %340 = sbr.rel (%p338) target = $region56
        $region55: #{tpu_custom_call.1} parent=47 // pred_region
          %342 = dma.done [#allocation7], 8192
        $region56: #{tpu_custom_call.1} parent=47 // pred_fallthru
          _
        // Predicated region
        $region57: #{tpu_custom_call.1} parent=47 // pred_check
          %p343 = pneg %p83
        $region58: #{tpu_custom_call.1} parent=47 // pred_check_branch
          %345 = sbr.rel (%p343) target = $region60
        $region59: #{tpu_custom_call.1} parent=47 // pred_region
          %347 = dma.done [#allocation7], 128
        $region60: #{tpu_custom_call.1} parent=47 // pred_fallthru
          _
        %s348 = sand.u32 %s25, 1
        %s349 = scalar_lea.sflag [#allocation10], %s348
        %s350 = sand.u32 %s96, 1
        %s351 = smul.addr %s350, 8192
        %s352 = scalar_lea.vmem [#allocation9], %s351
        // Predicated region
        $region61: #{tpu_custom_call.1} parent=47 // pred_check
          %p353 = pneg %p109
        $region62: #{tpu_custom_call.1} parent=47 // pred_check_branch
          %355 = sbr.rel (%p353) target = $region64
        $region63: #{tpu_custom_call.1} parent=47 // pred_region
          %357 = dma.done %s349, 131072
        $region64: #{tpu_custom_call.1} parent=47 // pred_fallthru
          _
        %s358 = sand.u32 %s25, 1
        %s359 = scalar_lea.sflag [#allocation10], %s358
        %s360 = sand.u32 %s122, 1
        %s361 = smul.addr %s360, 16
        %s362 = scalar_lea.vmem [#allocation11], %s361
        // Predicated region
        $region65: #{tpu_custom_call.1} parent=47 // pred_check
          %p363 = pneg %p135
        $region66: #{tpu_custom_call.1} parent=47 // pred_check_branch
          %365 = sbr.rel (%p363) target = $region68
        $region67: #{tpu_custom_call.1} parent=47 // pred_region
          %367 = dma.done %s359, 256
        $region68: #{tpu_custom_call.1} parent=47 // pred_fallthru
          _
        // Predicated region
        $region69: #{tpu_custom_call.1} parent=47 // pred_check
          %p368 = pneg %p156
        $region70: #{tpu_custom_call.1} parent=47 // pred_check_branch
          %370 = sbr.rel (%p368) target = $region72
        $region71: #{tpu_custom_call.1} parent=47 // pred_region
          %372 = dma.done [#allocation13], 8192
        $region72: #{tpu_custom_call.1} parent=47 // pred_fallthru
          _
        // Predicated region
        $region73: #{tpu_custom_call.1} parent=47 // pred_check
          %p373 = pneg %p177
        $region74: #{tpu_custom_call.1} parent=47 // pred_check_branch
          %375 = sbr.rel (%p373) target = $region76
        $region75: #{tpu_custom_call.1} parent=47 // pred_region
          %377 = dma.done [#allocation13], 16
        $region76: #{tpu_custom_call.1} parent=47 // pred_fallthru
          _
        %p378 = pneg %p41
        %p379 = pneg %p38
        %p380 = pneg %p62
        %p381 = pneg %p59
        %p382 = pneg %p83
        %p383 = pneg %p80
        %s384 = sand.u32 %s25, 1
        %s385 = scalar_lea.sflag [#allocation10], %s384
        %s386 = sand.u32 %s96, 1
        %s387 = smul.addr %s386, 8192
        %s388 = scalar_lea.vmem [#allocation9], %s387
        %p389 = pneg %p109
        %p390 = pneg %p106
        %s391 = sand.u32 %s25, 1
        %s392 = scalar_lea.sflag [#allocation10], %s391
        %s393 = sand.u32 %s122, 1
        %s394 = smul.addr %s393, 16
        %s395 = scalar_lea.vmem [#allocation11], %s394
        %p396 = pneg %p135
        %p397 = pneg %p132
        %p398 = pneg %p156
        %p399 = pneg %p153
        %p400 = pneg %p177
        %p401 = pneg %p174
        %p402 = pneg %p198
        %p403 = pneg %p195
        %s404 = smul.u32 2, %s25
        %s405 = smul.u32 2, %s25
        %p406 = scmp.eq.s32.totalorder %s25, 0
        // Predicated region
        $region77: #{tpu_custom_call.1} parent=47 // pred_check
          %p407 = pneg %p406
        $region78: #{tpu_custom_call.1} parent=47 // pred_check_branch
          %409 = sbr.rel (%p407) target = $region80
        $region79: #{tpu_custom_call.1} parent=47 // pred_region
          %v410 = vld [vmem:[#allocation3] sm:$0xff]
          %v411 = vpack.c.bf16 %v410, %v410
          %v412 = vld [vmem:[#allocation6] sm:$0xff]
          %v413 = vld [vmem:[#allocation6 + $0x8] sm:$0xff]
          %v414 = vld [vmem:[#allocation6 + $0x10] sm:$0xff]
          %v415 = vld [vmem:[#allocation6 + $0x18] sm:$0xff]
          %v416 = vld [vmem:[#allocation6 + $0x20] sm:$0xff]
          %v417 = vld [vmem:[#allocation6 + $0x28] sm:$0xff]
          %v418 = vld [vmem:[#allocation6 + $0x30] sm:$0xff]
          %v419 = vld [vmem:[#allocation6 + $0x38] sm:$0xff]
          %v420 = vld [vmem:[#allocation6 + $0x40] sm:$0xff]
          %v421 = vld [vmem:[#allocation6 + $0x48] sm:$0xff]
          %v422 = vld [vmem:[#allocation6 + $0x50] sm:$0xff]
          %v423 = vld [vmem:[#allocation6 + $0x58] sm:$0xff]
          %v424 = vld [vmem:[#allocation6 + $0x60] sm:$0xff]
          %v425 = vld [vmem:[#allocation6 + $0x68] sm:$0xff]
          %v426 = vld [vmem:[#allocation6 + $0x70] sm:$0xff]
          %v427 = vld [vmem:[#allocation6 + $0x78] sm:$0xff]
          %v428 = vld [vmem:[#allocation6 + $0x80] sm:$0xff]
          %v429 = vld [vmem:[#allocation6 + $0x88] sm:$0xff]
          %v430 = vld [vmem:[#allocation6 + $0x90] sm:$0xff]
          %v431 = vld [vmem:[#allocation6 + $0x98] sm:$0xff]
          %v432 = vld [vmem:[#allocation6 + $0xa0] sm:$0xff]
          %v433 = vld [vmem:[#allocation6 + $0xa8] sm:$0xff]
          %v434 = vld [vmem:[#allocation6 + $0xb0] sm:$0xff]
          %v435 = vld [vmem:[#allocation6 + $0xb8] sm:$0xff]
          %v436 = vld [vmem:[#allocation6 + $0xc0] sm:$0xff]
          %v437 = vld [vmem:[#allocation6 + $0xc8] sm:$0xff]
          %v438 = vld [vmem:[#allocation6 + $0xd0] sm:$0xff]
          %v439 = vld [vmem:[#allocation6 + $0xd8] sm:$0xff]
          %v440 = vld [vmem:[#allocation6 + $0xe0] sm:$0xff]
          %v441 = vld [vmem:[#allocation6 + $0xe8] sm:$0xff]
          %v442 = vld [vmem:[#allocation6 + $0xf0] sm:$0xff]
          %v443 = vld [vmem:[#allocation6 + $0xf8] sm:$0xff]
          %v444 = vld [vmem:[#allocation6 + $0x100] sm:$0xff]
          %v445 = vld [vmem:[#allocation6 + $0x108] sm:$0xff]
          %v446 = vld [vmem:[#allocation6 + $0x110] sm:$0xff]
          %v447 = vld [vmem:[#allocation6 + $0x118] sm:$0xff]
          %v448 = vld [vmem:[#allocation6 + $0x120] sm:$0xff]
          %v449 = vld [vmem:[#allocation6 + $0x128] sm:$0xff]
          %v450 = vld [vmem:[#allocation6 + $0x130] sm:$0xff]
          %v451 = vld [vmem:[#allocation6 + $0x138] sm:$0xff]
          %v452 = vld [vmem:[#allocation6 + $0x140] sm:$0xff]
          %v453 = vld [vmem:[#allocation6 + $0x148] sm:$0xff]
          %v454 = vld [vmem:[#allocation6 + $0x150] sm:$0xff]
          %v455 = vld [vmem:[#allocation6 + $0x158] sm:$0xff]
          %v456 = vld [vmem:[#allocation6 + $0x160] sm:$0xff]
          %v457 = vld [vmem:[#allocation6 + $0x168] sm:$0xff]
          %v458 = vld [vmem:[#allocation6 + $0x170] sm:$0xff]
          %v459 = vld [vmem:[#allocation6 + $0x178] sm:$0xff]
          %v460 = vld [vmem:[#allocation6 + $0x180] sm:$0xff]
          %v461 = vld [vmem:[#allocation6 + $0x188] sm:$0xff]
          %v462 = vld [vmem:[#allocation6 + $0x190] sm:$0xff]
          %v463 = vld [vmem:[#allocation6 + $0x198] sm:$0xff]
          %v464 = vld [vmem:[#allocation6 + $0x1a0] sm:$0xff]
          %v465 = vld [vmem:[#allocation6 + $0x1a8] sm:$0xff]
          %v466 = vld [vmem:[#allocation6 + $0x1b0] sm:$0xff]
          %v467 = vld [vmem:[#allocation6 + $0x1b8] sm:$0xff]
          %v468 = vld [vmem:[#allocation6 + $0x1c0] sm:$0xff]
          %v469 = vld [vmem:[#allocation6 + $0x1c8] sm:$0xff]
          %v470 = vld [vmem:[#allocation6 + $0x1d0] sm:$0xff]
          %v471 = vld [vmem:[#allocation6 + $0x1d8] sm:$0xff]
          %v472 = vld [vmem:[#allocation6 + $0x1e0] sm:$0xff]
          %v473 = vld [vmem:[#allocation6 + $0x1e8] sm:$0xff]
          %v474 = vld [vmem:[#allocation6 + $0x1f0] sm:$0xff]
          %v475 = vld [vmem:[#allocation6 + $0x1f8] sm:$0xff]
          %v476 = vld [vmem:[#allocation8] sm:$0xff]
          %v478 = vperm.slane %v476, 0
          %v479 = vperm.slane %v476, 1
          %v480 = vperm.slane %v476, 2
          %v481 = vperm.slane %v476, 3
          %v482 = vperm.slane %v476, 4
          %v483 = vperm.slane %v476, 5
          %v484 = vperm.slane %v476, 6
          %v485 = vperm.slane %v476, 7
          %v558 = vunpack.c.l.b16 %v412
          %v559 = vunpack.c.h.b16 %v412
          %v560 = vunpack.c.l.b16 %v413
          %v561 = vunpack.c.h.b16 %v413
          %v562 = vunpack.c.l.b16 %v414
          %v563 = vunpack.c.h.b16 %v414
          %v564 = vunpack.c.l.b16 %v415
          %v565 = vunpack.c.h.b16 %v415
          %v566 = vunpack.c.l.b16 %v416
          %v567 = vunpack.c.h.b16 %v416
          %v568 = vunpack.c.l.b16 %v417
          %v569 = vunpack.c.h.b16 %v417
          %v570 = vunpack.c.l.b16 %v418
          %v571 = vunpack.c.h.b16 %v418
          %v572 = vunpack.c.l.b16 %v419
          %v573 = vunpack.c.h.b16 %v419
          %v574 = vunpack.c.l.b16 %v420
          %v575 = vunpack.c.h.b16 %v420
          %v576 = vunpack.c.l.b16 %v421
          %v577 = vunpack.c.h.b16 %v421
          %v578 = vunpack.c.l.b16 %v422
          %v579 = vunpack.c.h.b16 %v422
          %v580 = vunpack.c.l.b16 %v423
          %v581 = vunpack.c.h.b16 %v423
          %v582 = vunpack.c.l.b16 %v424
          %v583 = vunpack.c.h.b16 %v424
          %v584 = vunpack.c.l.b16 %v425
          %v585 = vunpack.c.h.b16 %v425
          %v586 = vunpack.c.l.b16 %v426
          %v587 = vunpack.c.h.b16 %v426
          %v588 = vunpack.c.l.b16 %v427
          %v589 = vunpack.c.h.b16 %v427
          %v590 = vunpack.c.l.b16 %v428
          %v591 = vunpack.c.h.b16 %v428
          %v592 = vunpack.c.l.b16 %v429
          %v593 = vunpack.c.h.b16 %v429
          %v594 = vunpack.c.l.b16 %v430
          %v595 = vunpack.c.h.b16 %v430
          %v596 = vunpack.c.l.b16 %v431
          %v597 = vunpack.c.h.b16 %v431
          %v598 = vunpack.c.l.b16 %v432
          %v599 = vunpack.c.h.b16 %v432
          %v600 = vunpack.c.l.b16 %v433
          %v601 = vunpack.c.h.b16 %v433
          %v602 = vunpack.c.l.b16 %v434
          %v603 = vunpack.c.h.b16 %v434
          %v604 = vunpack.c.l.b16 %v435
          %v605 = vunpack.c.h.b16 %v435
          %v606 = vunpack.c.l.b16 %v436
          %v607 = vunpack.c.h.b16 %v436
          %v608 = vunpack.c.l.b16 %v437
          %v609 = vunpack.c.h.b16 %v437
          %v610 = vunpack.c.l.b16 %v438
          %v611 = vunpack.c.h.b16 %v438
          %v612 = vunpack.c.l.b16 %v439
          %v613 = vunpack.c.h.b16 %v439
          %v614 = vunpack.c.l.b16 %v440
          %v615 = vunpack.c.h.b16 %v440
          %v616 = vunpack.c.l.b16 %v441
          %v617 = vunpack.c.h.b16 %v441
          %v618 = vunpack.c.l.b16 %v442
          %v619 = vunpack.c.h.b16 %v442
          %v620 = vunpack.c.l.b16 %v443
          %v621 = vunpack.c.h.b16 %v443
          %v622 = vunpack.c.l.b16 %v444
          %v623 = vunpack.c.h.b16 %v444
          %v624 = vunpack.c.l.b16 %v445
          %v625 = vunpack.c.h.b16 %v445
          %v626 = vunpack.c.l.b16 %v446
          %v627 = vunpack.c.h.b16 %v446
          %v628 = vunpack.c.l.b16 %v447
          %v629 = vunpack.c.h.b16 %v447
          %v630 = vunpack.c.l.b16 %v448
          %v631 = vunpack.c.h.b16 %v448
          %v632 = vunpack.c.l.b16 %v449
          %v633 = vunpack.c.h.b16 %v449
          %v634 = vunpack.c.l.b16 %v450
          %v635 = vunpack.c.h.b16 %v450
          %v636 = vunpack.c.l.b16 %v451
          %v637 = vunpack.c.h.b16 %v451
          %v638 = vunpack.c.l.b16 %v452
          %v639 = vunpack.c.h.b16 %v452
          %v640 = vunpack.c.l.b16 %v453
          %v641 = vunpack.c.h.b16 %v453
          %v642 = vunpack.c.l.b16 %v454
          %v643 = vunpack.c.h.b16 %v454
          %v644 = vunpack.c.l.b16 %v455
          %v645 = vunpack.c.h.b16 %v455
          %v646 = vunpack.c.l.b16 %v456
          %v647 = vunpack.c.h.b16 %v456
          %v648 = vunpack.c.l.b16 %v457
          %v649 = vunpack.c.h.b16 %v457
          %v650 = vunpack.c.l.b16 %v458
          %v651 = vunpack.c.h.b16 %v458
          %v652 = vunpack.c.l.b16 %v459
          %v653 = vunpack.c.h.b16 %v459
          %v654 = vunpack.c.l.b16 %v460
          %v655 = vunpack.c.h.b16 %v460
          %v656 = vunpack.c.l.b16 %v461
          %v657 = vunpack.c.h.b16 %v461
          %v658 = vunpack.c.l.b16 %v462
          %v659 = vunpack.c.h.b16 %v462
          %v660 = vunpack.c.l.b16 %v463
          %v661 = vunpack.c.h.b16 %v463
          %v662 = vunpack.c.l.b16 %v464
          %v663 = vunpack.c.h.b16 %v464
          %v664 = vunpack.c.l.b16 %v465
          %v665 = vunpack.c.h.b16 %v465
          %v666 = vunpack.c.l.b16 %v466
          %v667 = vunpack.c.h.b16 %v466
          %v668 = vunpack.c.l.b16 %v467
          %v669 = vunpack.c.h.b16 %v467
          %v670 = vunpack.c.l.b16 %v468
          %v671 = vunpack.c.h.b16 %v468
          %v672 = vunpack.c.l.b16 %v469
          %v673 = vunpack.c.h.b16 %v469
          %v674 = vunpack.c.l.b16 %v470
          %v675 = vunpack.c.h.b16 %v470
          %v676 = vunpack.c.l.b16 %v471
          %v677 = vunpack.c.h.b16 %v471
          %v678 = vunpack.c.l.b16 %v472
          %v679 = vunpack.c.h.b16 %v472
          %v680 = vunpack.c.l.b16 %v473
          %v681 = vunpack.c.h.b16 %v473
          %v682 = vunpack.c.l.b16 %v474
          %v683 = vunpack.c.h.b16 %v474
          %v684 = vunpack.c.l.b16 %v475
          %v685 = vunpack.c.h.b16 %v475
          %v686 = vpack.c.b16 %v566, %v558
          %v687 = vpack.c.b16 %v567, %v559
          %v688 = vpack.c.b16 %v568, %v560
          %v689 = vpack.c.b16 %v569, %v561
          %v690 = vpack.c.b16 %v570, %v562
          %v691 = vpack.c.b16 %v571, %v563
          %v692 = vpack.c.b16 %v572, %v564
          %v693 = vpack.c.b16 %v573, %v565
          %v694 = vpack.c.b16 %v582, %v574
          %v695 = vpack.c.b16 %v583, %v575
          %v696 = vpack.c.b16 %v584, %v576
          %v697 = vpack.c.b16 %v585, %v577
          %v698 = vpack.c.b16 %v586, %v578
          %v699 = vpack.c.b16 %v587, %v579
          %v700 = vpack.c.b16 %v588, %v580
          %v701 = vpack.c.b16 %v589, %v581
          %v702 = vpack.c.b16 %v598, %v590
          %v703 = vpack.c.b16 %v599, %v591
          %v704 = vpack.c.b16 %v600, %v592
          %v705 = vpack.c.b16 %v601, %v593
          %v706 = vpack.c.b16 %v602, %v594
          %v707 = vpack.c.b16 %v603, %v595
          %v708 = vpack.c.b16 %v604, %v596
          %v709 = vpack.c.b16 %v605, %v597
          %v710 = vpack.c.b16 %v614, %v606
          %v711 = vpack.c.b16 %v615, %v607
          %v712 = vpack.c.b16 %v616, %v608
          %v713 = vpack.c.b16 %v617, %v609
          %v714 = vpack.c.b16 %v618, %v610
          %v715 = vpack.c.b16 %v619, %v611
          %v716 = vpack.c.b16 %v620, %v612
          %v717 = vpack.c.b16 %v621, %v613
          %v718 = vpack.c.b16 %v630, %v622
          %v719 = vpack.c.b16 %v631, %v623
          %v720 = vpack.c.b16 %v632, %v624
          %v721 = vpack.c.b16 %v633, %v625
          %v722 = vpack.c.b16 %v634, %v626
          %v723 = vpack.c.b16 %v635, %v627
          %v724 = vpack.c.b16 %v636, %v628
          %v725 = vpack.c.b16 %v637, %v629
          %v726 = vpack.c.b16 %v646, %v638
          %v727 = vpack.c.b16 %v647, %v639
          %v728 = vpack.c.b16 %v648, %v640
          %v729 = vpack.c.b16 %v649, %v641
          %v730 = vpack.c.b16 %v650, %v642
          %v731 = vpack.c.b16 %v651, %v643
          %v732 = vpack.c.b16 %v652, %v644
          %v733 = vpack.c.b16 %v653, %v645
          %v734 = vpack.c.b16 %v662, %v654
          %v735 = vpack.c.b16 %v663, %v655
          %v736 = vpack.c.b16 %v664, %v656
          %v737 = vpack.c.b16 %v665, %v657
          %v738 = vpack.c.b16 %v666, %v658
          %v739 = vpack.c.b16 %v667, %v659
          %v740 = vpack.c.b16 %v668, %v660
          %v741 = vpack.c.b16 %v669, %v661
          %v742 = vpack.c.b16 %v678, %v670
          %v743 = vpack.c.b16 %v679, %v671
          %v744 = vpack.c.b16 %v680, %v672
          %v745 = vpack.c.b16 %v681, %v673
          %v746 = vpack.c.b16 %v682, %v674
          %v747 = vpack.c.b16 %v683, %v675
          %v748 = vpack.c.b16 %v684, %v676
          %v749 = vpack.c.b16 %v685, %v677
          %814 = vmatpush.bf16.msra.mxu0 %v742
          %815 = vmatpush.bf16.msra.mxu0 %v734
          %816 = vmatpush.bf16.msra.mxu0 %v726
          %817 = vmatpush.bf16.msra.mxu0 %v718
          %818 = vmatpush.bf16.msra.mxu0 %v710
          %819 = vmatpush.bf16.msra.mxu0 %v702
          %820 = vmatpush.bf16.msra.mxu0 %v694
          %821 = vmatpush.bf16.msra.mxu0 %v686
          %822 = vmatmul.bf16.gmra.mxu0 %v411
          %v823 = vpop.f32.mrf.mxu0
          %v824 = vadd.f32 %v478, %v823
          %v825 = vpop.f32.mrf.mxu0
          %826 = vdwg.mxu0
          %827 = vmatpush.bf16.msra.mxu0 %v743
          %828 = vmatpush.bf16.msra.mxu0 %v735
          %829 = vmatpush.bf16.msra.mxu0 %v727
          %830 = vmatpush.bf16.msra.mxu0 %v719
          %831 = vmatpush.bf16.msra.mxu0 %v711
          %832 = vmatpush.bf16.msra.mxu0 %v703
          %833 = vmatpush.bf16.msra.mxu0 %v695
          %834 = vmatpush.bf16.msra.mxu0 %v687
          %835 = vmatmul.bf16.gmra.mxu0 %v411
          %v836 = vpop.f32.mrf.mxu0
          %v837 = vadd.f32 %v479, %v836
          %v838 = vpop.f32.mrf.mxu0
          %839 = vdwg.mxu0
          %840 = vmatpush.bf16.msra.mxu0 %v744
          %841 = vmatpush.bf16.msra.mxu0 %v736
          %842 = vmatpush.bf16.msra.mxu0 %v728
          %843 = vmatpush.bf16.msra.mxu0 %v720
          %844 = vmatpush.bf16.msra.mxu0 %v712
          %845 = vmatpush.bf16.msra.mxu0 %v704
          %846 = vmatpush.bf16.msra.mxu0 %v696
          %847 = vmatpush.bf16.msra.mxu0 %v688
          %848 = vmatmul.bf16.gmra.mxu0 %v411
          %v849 = vpop.f32.mrf.mxu0
          %v850 = vadd.f32 %v480, %v849
          %v851 = vpop.f32.mrf.mxu0
          %852 = vdwg.mxu0
          %853 = vmatpush.bf16.msra.mxu0 %v745
          %854 = vmatpush.bf16.msra.mxu0 %v737
          %855 = vmatpush.bf16.msra.mxu0 %v729
          %856 = vmatpush.bf16.msra.mxu0 %v721
          %857 = vmatpush.bf16.msra.mxu0 %v713
          %858 = vmatpush.bf16.msra.mxu0 %v705
          %859 = vmatpush.bf16.msra.mxu0 %v697
          %860 = vmatpush.bf16.msra.mxu0 %v689
          %861 = vmatmul.bf16.gmra.mxu0 %v411
          %v862 = vpop.f32.mrf.mxu0
          %v863 = vadd.f32 %v481, %v862
          %v864 = vpop.f32.mrf.mxu0
          %865 = vdwg.mxu0
          %866 = vmatpush.bf16.msra.mxu0 %v746
          %867 = vmatpush.bf16.msra.mxu0 %v738
          %868 = vmatpush.bf16.msra.mxu0 %v730
          %869 = vmatpush.bf16.msra.mxu0 %v722
          %870 = vmatpush.bf16.msra.mxu0 %v714
          %871 = vmatpush.bf16.msra.mxu0 %v706
          %872 = vmatpush.bf16.msra.mxu0 %v698
          %873 = vmatpush.bf16.msra.mxu0 %v690
          %874 = vmatmul.bf16.gmra.mxu0 %v411
          %v875 = vpop.f32.mrf.mxu0
          %v876 = vadd.f32 %v482, %v875
          %v877 = vpop.f32.mrf.mxu0
          %878 = vdwg.mxu0
          %879 = vmatpush.bf16.msra.mxu0 %v747
          %880 = vmatpush.bf16.msra.mxu0 %v739
          %881 = vmatpush.bf16.msra.mxu0 %v731
          %882 = vmatpush.bf16.msra.mxu0 %v723
          %883 = vmatpush.bf16.msra.mxu0 %v715
          %884 = vmatpush.bf16.msra.mxu0 %v707
          %885 = vmatpush.bf16.msra.mxu0 %v699
          %886 = vmatpush.bf16.msra.mxu0 %v691
          %887 = vmatmul.bf16.gmra.mxu0 %v411
          %v888 = vpop.f32.mrf.mxu0
          %v889 = vadd.f32 %v483, %v888
          %v890 = vpop.f32.mrf.mxu0
          %891 = vdwg.mxu0
          %892 = vmatpush.bf16.msra.mxu0 %v748
          %893 = vmatpush.bf16.msra.mxu0 %v740
          %894 = vmatpush.bf16.msra.mxu0 %v732
          %895 = vmatpush.bf16.msra.mxu0 %v724
          %896 = vmatpush.bf16.msra.mxu0 %v716
          %897 = vmatpush.bf16.msra.mxu0 %v708
          %898 = vmatpush.bf16.msra.mxu0 %v700
          %899 = vmatpush.bf16.msra.mxu0 %v692
          %900 = vmatmul.bf16.gmra.mxu0 %v411
          %v901 = vpop.f32.mrf.mxu0
          %v902 = vadd.f32 %v484, %v901
          %v903 = vpop.f32.mrf.mxu0
          %904 = vdwg.mxu0
          %905 = vmatpush.bf16.msra.mxu0 %v749
          %906 = vmatpush.bf16.msra.mxu0 %v741
          %907 = vmatpush.bf16.msra.mxu0 %v733
          %908 = vmatpush.bf16.msra.mxu0 %v725
          %909 = vmatpush.bf16.msra.mxu0 %v717
          %910 = vmatpush.bf16.msra.mxu0 %v709
          %911 = vmatpush.bf16.msra.mxu0 %v701
          %912 = vmatpush.bf16.msra.mxu0 %v693
          %913 = vmatmul.bf16.gmra.mxu0 %v411
          %v914 = vpop.f32.mrf.mxu0
          %v915 = vadd.f32 %v485, %v914
          %v916 = vpop.f32.mrf.mxu0
          %917 = vdwg.mxu0
          %vm918 = vcmp.gt.f32.partialorder %v824, 0.0
          %vm919 = vcmp.gt.f32.partialorder %v837, 0.0
          %vm920 = vcmp.gt.f32.partialorder %v850, 0.0
          %vm921 = vcmp.gt.f32.partialorder %v863, 0.0
          %vm922 = vcmp.gt.f32.partialorder %v876, 0.0
          %vm923 = vcmp.gt.f32.partialorder %v889, 0.0
          %vm924 = vcmp.gt.f32.partialorder %v902, 0.0
          %vm925 = vcmp.gt.f32.partialorder %v915, 0.0
          %v926 = vmul.f32 %v824, 0.2
          %v927 = vmul.f32 %v837, 0.2
          %v928 = vmul.f32 %v850, 0.2
          %v929 = vmul.f32 %v863, 0.2
          %v930 = vmul.f32 %v876, 0.2
          %v931 = vmul.f32 %v889, 0.2
          %v932 = vmul.f32 %v902, 0.2
          %v933 = vmul.f32 %v915, 0.2
          %v934 = vsel %vm918, %v824, %v926
          %v935 = vsel %vm919, %v837, %v927
          %v936 = vsel %vm920, %v850, %v928
          %v937 = vsel %vm921, %v863, %v929
          %v938 = vsel %vm922, %v876, %v930
          %v939 = vsel %vm923, %v889, %v931
          %v940 = vsel %vm924, %v902, %v932
          %v941 = vsel %vm925, %v915, %v933
          %942 = vst [vmem:[#allocation2] sm:$0xff] %v934
          %943 = vst [vmem:[#allocation2 + $0x8] sm:$0xff] %v935
          %944 = vst [vmem:[#allocation2 + $0x10] sm:$0xff] %v936
          %945 = vst [vmem:[#allocation2 + $0x18] sm:$0xff] %v937
          %946 = vst [vmem:[#allocation2 + $0x20] sm:$0xff] %v938
          %947 = vst [vmem:[#allocation2 + $0x28] sm:$0xff] %v939
          %948 = vst [vmem:[#allocation2 + $0x30] sm:$0xff] %v940
          %949 = vst [vmem:[#allocation2 + $0x38] sm:$0xff] %v941
        $region80: #{tpu_custom_call.1} parent=47 // pred_fallthru
          _
        %v950 = vld [vmem:[#allocation2] sm:$0xff]
        %v951 = vld [vmem:[#allocation2 + $0x8] sm:$0xff]
        %v952 = vld [vmem:[#allocation2 + $0x10] sm:$0xff]
        %v953 = vld [vmem:[#allocation2 + $0x18] sm:$0xff]
        %v954 = vld [vmem:[#allocation2 + $0x20] sm:$0xff]
        %v955 = vld [vmem:[#allocation2 + $0x28] sm:$0xff]
        %v956 = vld [vmem:[#allocation2 + $0x30] sm:$0xff]
        %v957 = vld [vmem:[#allocation2 + $0x38] sm:$0xff]
        %v958 = vpack.c.bf16 %v950, %v950
        %v959 = vpack.c.bf16 %v951, %v951
        %v960 = vpack.c.bf16 %v952, %v952
        %v961 = vpack.c.bf16 %v953, %v953
        %v962 = vpack.c.bf16 %v954, %v954
        %v963 = vpack.c.bf16 %v955, %v955
        %v964 = vpack.c.bf16 %v956, %v956
        %v965 = vpack.c.bf16 %v957, %v957
        %v966 = vld [vmem:[%s352] sm:$0xff]
        %v967 = vld [vmem:[%s352 + $0x8] sm:$0xff]
        %v968 = vld [vmem:[%s352 + $0x10] sm:$0xff]
        %v969 = vld [vmem:[%s352 + $0x18] sm:$0xff]
        %v970 = vld [vmem:[%s352 + $0x20] sm:$0xff]
        %v971 = vld [vmem:[%s352 + $0x28] sm:$0xff]
        %v972 = vld [vmem:[%s352 + $0x30] sm:$0xff]
        %v973 = vld [vmem:[%s352 + $0x38] sm:$0xff]
        %v974 = vld [vmem:[%s352 + $0x40] sm:$0xff]
        %v975 = vld [vmem:[%s352 + $0x48] sm:$0xff]
        %v976 = vld [vmem:[%s352 + $0x50] sm:$0xff]
        %v977 = vld [vmem:[%s352 + $0x58] sm:$0xff]
        %v978 = vld [vmem:[%s352 + $0x60] sm:$0xff]
        %v979 = vld [vmem:[%s352 + $0x68] sm:$0xff]
        %v980 = vld [vmem:[%s352 + $0x70] sm:$0xff]
        %v981 = vld [vmem:[%s352 + $0x78] sm:$0xff]
        %v982 = vld [vmem:[%s352 + $0x80] sm:$0xff]
        %v983 = vld [vmem:[%s352 + $0x88] sm:$0xff]
        %v984 = vld [vmem:[%s352 + $0x90] sm:$0xff]
        %v985 = vld [vmem:[%s352 + $0x98] sm:$0xff]
        %v986 = vld [vmem:[%s352 + $0xa0] sm:$0xff]
        %v987 = vld [vmem:[%s352 + $0xa8] sm:$0xff]
        %v988 = vld [vmem:[%s352 + $0xb0] sm:$0xff]
        %v989 = vld [vmem:[%s352 + $0xb8] sm:$0xff]
        %v990 = vld [vmem:[%s352 + $0xc0] sm:$0xff]
        %v991 = vld [vmem:[%s352 + $0xc8] sm:$0xff]
        %v992 = vld [vmem:[%s352 + $0xd0] sm:$0xff]
        %v993 = vld [vmem:[%s352 + $0xd8] sm:$0xff]
        %v994 = vld [vmem:[%s352 + $0xe0] sm:$0xff]
        %v995 = vld [vmem:[%s352 + $0xe8] sm:$0xff]
        %v996 = vld [vmem:[%s352 + $0xf0] sm:$0xff]
        %v997 = vld [vmem:[%s352 + $0xf8] sm:$0xff]
        %v998 = vld [vmem:[%s352 + $0x100] sm:$0xff]
        %v999 = vld [vmem:[%s352 + $0x108] sm:$0xff]
        %v1000 = vld [vmem:[%s352 + $0x110] sm:$0xff]
        %v1001 = vld [vmem:[%s352 + $0x118] sm:$0xff]
        %v1002 = vld [vmem:[%s352 + $0x120] sm:$0xff]
        %v1003 = vld [vmem:[%s352 + $0x128] sm:$0xff]
        %v1004 = vld [vmem:[%s352 + $0x130] sm:$0xff]
        %v1005 = vld [vmem:[%s352 + $0x138] sm:$0xff]
        %v1006 = vld [vmem:[%s352 + $0x140] sm:$0xff]
        %v1007 = vld [vmem:[%s352 + $0x148] sm:$0xff]
        %v1008 = vld [vmem:[%s352 + $0x150] sm:$0xff]
        %v1009 = vld [vmem:[%s352 + $0x158] sm:$0xff]
        %v1010 = vld [vmem:[%s352 + $0x160] sm:$0xff]
        %v1011 = vld [vmem:[%s352 + $0x168] sm:$0xff]
        %v1012 = vld [vmem:[%s352 + $0x170] sm:$0xff]
        %v1013 = vld [vmem:[%s352 + $0x178] sm:$0xff]
        %v1014 = vld [vmem:[%s352 + $0x180] sm:$0xff]
        %v1015 = vld [vmem:[%s352 + $0x188] sm:$0xff]
        %v1016 = vld [vmem:[%s352 + $0x190] sm:$0xff]
        %v1017 = vld [vmem:[%s352 + $0x198] sm:$0xff]
        %v1018 = vld [vmem:[%s352 + $0x1a0] sm:$0xff]
        %v1019 = vld [vmem:[%s352 + $0x1a8] sm:$0xff]
        %v1020 = vld [vmem:[%s352 + $0x1b0] sm:$0xff]
        %v1021 = vld [vmem:[%s352 + $0x1b8] sm:$0xff]
        %v1022 = vld [vmem:[%s352 + $0x1c0] sm:$0xff]
        %v1023 = vld [vmem:[%s352 + $0x1c8] sm:$0xff]
        %v1024 = vld [vmem:[%s352 + $0x1d0] sm:$0xff]
        %v1025 = vld [vmem:[%s352 + $0x1d8] sm:$0xff]
        %v1026 = vld [vmem:[%s352 + $0x1e0] sm:$0xff]
        %v1027 = vld [vmem:[%s352 + $0x1e8] sm:$0xff]
        %v1028 = vld [vmem:[%s352 + $0x1f0] sm:$0xff]
        %v1029 = vld [vmem:[%s352 + $0x1f8] sm:$0xff]
        %v1030 = vld [vmem:[%s352 + $0x200] sm:$0xff]
        %v1031 = vld [vmem:[%s352 + $0x208] sm:$0xff]
        %v1032 = vld [vmem:[%s352 + $0x210] sm:$0xff]
        %v1033 = vld [vmem:[%s352 + $0x218] sm:$0xff]
        %v1034 = vld [vmem:[%s352 + $0x220] sm:$0xff]
        %v1035 = vld [vmem:[%s352 + $0x228] sm:$0xff]
        %v1036 = vld [vmem:[%s352 + $0x230] sm:$0xff]
        %v1037 = vld [vmem:[%s352 + $0x238] sm:$0xff]
        %v1038 = vld [vmem:[%s352 + $0x240] sm:$0xff]
        %v1039 = vld [vmem:[%s352 + $0x248] sm:$0xff]
        %v1040 = vld [vmem:[%s352 + $0x250] sm:$0xff]
        %v1041 = vld [vmem:[%s352 + $0x258] sm:$0xff]
        %v1042 = vld [vmem:[%s352 + $0x260] sm:$0xff]
        %v1043 = vld [vmem:[%s352 + $0x268] sm:$0xff]
        %v1044 = vld [vmem:[%s352 + $0x270] sm:$0xff]
        %v1045 = vld [vmem:[%s352 + $0x278] sm:$0xff]
        %v1046 = vld [vmem:[%s352 + $0x280] sm:$0xff]
        %v1047 = vld [vmem:[%s352 + $0x288] sm:$0xff]
        %v1048 = vld [vmem:[%s352 + $0x290] sm:$0xff]
        %v1049 = vld [vmem:[%s352 + $0x298] sm:$0xff]
        %v1050 = vld [vmem:[%s352 + $0x2a0] sm:$0xff]
        %v1051 = vld [vmem:[%s352 + $0x2a8] sm:$0xff]
        %v1052 = vld [vmem:[%s352 + $0x2b0] sm:$0xff]
        %v1053 = vld [vmem:[%s352 + $0x2b8] sm:$0xff]
        %v1054 = vld [vmem:[%s352 + $0x2c0] sm:$0xff]
        %v1055 = vld [vmem:[%s352 + $0x2c8] sm:$0xff]
        %v1056 = vld [vmem:[%s352 + $0x2d0] sm:$0xff]
        %v1057 = vld [vmem:[%s352 + $0x2d8] sm:$0xff]
        %v1058 = vld [vmem:[%s352 + $0x2e0] sm:$0xff]
        %v1059 = vld [vmem:[%s352 + $0x2e8] sm:$0xff]
        %v1060 = vld [vmem:[%s352 + $0x2f0] sm:$0xff]
        %v1061 = vld [vmem:[%s352 + $0x2f8] sm:$0xff]
        %v1062 = vld [vmem:[%s352 + $0x300] sm:$0xff]
        %v1063 = vld [vmem:[%s352 + $0x308] sm:$0xff]
        %v1064 = vld [vmem:[%s352 + $0x310] sm:$0xff]
        %v1065 = vld [vmem:[%s352 + $0x318] sm:$0xff]
        %v1066 = vld [vmem:[%s352 + $0x320] sm:$0xff]
        %v1067 = vld [vmem:[%s352 + $0x328] sm:$0xff]
        %v1068 = vld [vmem:[%s352 + $0x330] sm:$0xff]
        %v1069 = vld [vmem:[%s352 + $0x338] sm:$0xff]
        %v1070 = vld [vmem:[%s352 + $0x340] sm:$0xff]
        %v1071 = vld [vmem:[%s352 + $0x348] sm:$0xff]
        %v1072 = vld [vmem:[%s352 + $0x350] sm:$0xff]
        %v1073 = vld [vmem:[%s352 + $0x358] sm:$0xff]
        %v1074 = vld [vmem:[%s352 + $0x360] sm:$0xff]
        %v1075 = vld [vmem:[%s352 + $0x368] sm:$0xff]
        %v1076 = vld [vmem:[%s352 + $0x370] sm:$0xff]
        %v1077 = vld [vmem:[%s352 + $0x378] sm:$0xff]
        %v1078 = vld [vmem:[%s352 + $0x380] sm:$0xff]
        %v1079 = vld [vmem:[%s352 + $0x388] sm:$0xff]
        %v1080 = vld [vmem:[%s352 + $0x390] sm:$0xff]
        %v1081 = vld [vmem:[%s352 + $0x398] sm:$0xff]
        %v1082 = vld [vmem:[%s352 + $0x3a0] sm:$0xff]
        %v1083 = vld [vmem:[%s352 + $0x3a8] sm:$0xff]
        %v1084 = vld [vmem:[%s352 + $0x3b0] sm:$0xff]
        %v1085 = vld [vmem:[%s352 + $0x3b8] sm:$0xff]
        %v1086 = vld [vmem:[%s352 + $0x3c0] sm:$0xff]
        %v1087 = vld [vmem:[%s352 + $0x3c8] sm:$0xff]
        %v1088 = vld [vmem:[%s352 + $0x3d0] sm:$0xff]
        %v1089 = vld [vmem:[%s352 + $0x3d8] sm:$0xff]
        %v1090 = vld [vmem:[%s352 + $0x3e0] sm:$0xff]
        %v1091 = vld [vmem:[%s352 + $0x3e8] sm:$0xff]
        %v1092 = vld [vmem:[%s352 + $0x3f0] sm:$0xff]
        %v1093 = vld [vmem:[%s352 + $0x3f8] sm:$0xff]
        %v1094 = vld [vmem:[%s352 + $0x400] sm:$0xff]
        %v1095 = vld [vmem:[%s352 + $0x408] sm:$0xff]
        %v1096 = vld [vmem:[%s352 + $0x410] sm:$0xff]
        %v1097 = vld [vmem:[%s352 + $0x418] sm:$0xff]
        %v1098 = vld [vmem:[%s352 + $0x420] sm:$0xff]
        %v1099 = vld [vmem:[%s352 + $0x428] sm:$0xff]
        %v1100 = vld [vmem:[%s352 + $0x430] sm:$0xff]
        %v1101 = vld [vmem:[%s352 + $0x438] sm:$0xff]
        %v1102 = vld [vmem:[%s352 + $0x440] sm:$0xff]
        %v1103 = vld [vmem:[%s352 + $0x448] sm:$0xff]
        %v1104 = vld [vmem:[%s352 + $0x450] sm:$0xff]
        %v1105 = vld [vmem:[%s352 + $0x458] sm:$0xff]
        %v1106 = vld [vmem:[%s352 + $0x460] sm:$0xff]
        %v1107 = vld [vmem:[%s352 + $0x468] sm:$0xff]
        %v1108 = vld [vmem:[%s352 + $0x470] sm:$0xff]
        %v1109 = vld [vmem:[%s352 + $0x478] sm:$0xff]
        %v1110 = vld [vmem:[%s352 + $0x480] sm:$0xff]
        %v1111 = vld [vmem:[%s352 + $0x488] sm:$0xff]
        %v1112 = vld [vmem:[%s352 + $0x490] sm:$0xff]
        %v1113 = vld [vmem:[%s352 + $0x498] sm:$0xff]
        %v1114 = vld [vmem:[%s352 + $0x4a0] sm:$0xff]
        %v1115 = vld [vmem:[%s352 + $0x4a8] sm:$0xff]
        %v1116 = vld [vmem:[%s352 + $0x4b0] sm:$0xff]
        %v1117 = vld [vmem:[%s352 + $0x4b8] sm:$0xff]
        %v1118 = vld [vmem:[%s352 + $0x4c0] sm:$0xff]
        %v1119 = vld [vmem:[%s352 + $0x4c8] sm:$0xff]
        %v1120 = vld [vmem:[%s352 + $0x4d0] sm:$0xff]
        %v1121 = vld [vmem:[%s352 + $0x4d8] sm:$0xff]
        %v1122 = vld [vmem:[%s352 + $0x4e0] sm:$0xff]
        %v1123 = vld [vmem:[%s352 + $0x4e8] sm:$0xff]
        %v1124 = vld [vmem:[%s352 + $0x4f0] sm:$0xff]
        %v1125 = vld [vmem:[%s352 + $0x4f8] sm:$0xff]
        %v1126 = vld [vmem:[%s352 + $0x500] sm:$0xff]
        %v1127 = vld [vmem:[%s352 + $0x508] sm:$0xff]
        %v1128 = vld [vmem:[%s352 + $0x510] sm:$0xff]
        %v1129 = vld [vmem:[%s352 + $0x518] sm:$0xff]
        %v1130 = vld [vmem:[%s352 + $0x520] sm:$0xff]
        %v1131 = vld [vmem:[%s352 + $0x528] sm:$0xff]
        %v1132 = vld [vmem:[%s352 + $0x530] sm:$0xff]
        %v1133 = vld [vmem:[%s352 + $0x538] sm:$0xff]
        %v1134 = vld [vmem:[%s352 + $0x540] sm:$0xff]
        %v1135 = vld [vmem:[%s352 + $0x548] sm:$0xff]
        %v1136 = vld [vmem:[%s352 + $0x550] sm:$0xff]
        %v1137 = vld [vmem:[%s352 + $0x558] sm:$0xff]
        %v1138 = vld [vmem:[%s352 + $0x560] sm:$0xff]
        %v1139 = vld [vmem:[%s352 + $0x568] sm:$0xff]
        %v1140 = vld [vmem:[%s352 + $0x570] sm:$0xff]
        %v1141 = vld [vmem:[%s352 + $0x578] sm:$0xff]
        %v1142 = vld [vmem:[%s352 + $0x580] sm:$0xff]
        %v1143 = vld [vmem:[%s352 + $0x588] sm:$0xff]
        %v1144 = vld [vmem:[%s352 + $0x590] sm:$0xff]
        %v1145 = vld [vmem:[%s352 + $0x598] sm:$0xff]
        %v1146 = vld [vmem:[%s352 + $0x5a0] sm:$0xff]
        %v1147 = vld [vmem:[%s352 + $0x5a8] sm:$0xff]
        %v1148 = vld [vmem:[%s352 + $0x5b0] sm:$0xff]
        %v1149 = vld [vmem:[%s352 + $0x5b8] sm:$0xff]
        %v1150 = vld [vmem:[%s352 + $0x5c0] sm:$0xff]
        %v1151 = vld [vmem:[%s352 + $0x5c8] sm:$0xff]
        %v1152 = vld [vmem:[%s352 + $0x5d0] sm:$0xff]
        %v1153 = vld [vmem:[%s352 + $0x5d8] sm:$0xff]
        %v1154 = vld [vmem:[%s352 + $0x5e0] sm:$0xff]
        %v1155 = vld [vmem:[%s352 + $0x5e8] sm:$0xff]
        %v1156 = vld [vmem:[%s352 + $0x5f0] sm:$0xff]
        %v1157 = vld [vmem:[%s352 + $0x5f8] sm:$0xff]
        %v1158 = vld [vmem:[%s352 + $0x600] sm:$0xff]
        %v1159 = vld [vmem:[%s352 + $0x608] sm:$0xff]
        %v1160 = vld [vmem:[%s352 + $0x610] sm:$0xff]
        %v1161 = vld [vmem:[%s352 + $0x618] sm:$0xff]
        %v1162 = vld [vmem:[%s352 + $0x620] sm:$0xff]
        %v1163 = vld [vmem:[%s352 + $0x628] sm:$0xff]
        %v1164 = vld [vmem:[%s352 + $0x630] sm:$0xff]
        %v1165 = vld [vmem:[%s352 + $0x638] sm:$0xff]
        %v1166 = vld [vmem:[%s352 + $0x640] sm:$0xff]
        %v1167 = vld [vmem:[%s352 + $0x648] sm:$0xff]
        %v1168 = vld [vmem:[%s352 + $0x650] sm:$0xff]
        %v1169 = vld [vmem:[%s352 + $0x658] sm:$0xff]
        %v1170 = vld [vmem:[%s352 + $0x660] sm:$0xff]
        %v1171 = vld [vmem:[%s352 + $0x668] sm:$0xff]
        %v1172 = vld [vmem:[%s352 + $0x670] sm:$0xff]
        %v1173 = vld [vmem:[%s352 + $0x678] sm:$0xff]
        %v1174 = vld [vmem:[%s352 + $0x680] sm:$0xff]
        %v1175 = vld [vmem:[%s352 + $0x688] sm:$0xff]
        %v1176 = vld [vmem:[%s352 + $0x690] sm:$0xff]
        %v1177 = vld [vmem:[%s352 + $0x698] sm:$0xff]
        %v1178 = vld [vmem:[%s352 + $0x6a0] sm:$0xff]
        %v1179 = vld [vmem:[%s352 + $0x6a8] sm:$0xff]
        %v1180 = vld [vmem:[%s352 + $0x6b0] sm:$0xff]
        %v1181 = vld [vmem:[%s352 + $0x6b8] sm:$0xff]
        %v1182 = vld [vmem:[%s352 + $0x6c0] sm:$0xff]
        %v1183 = vld [vmem:[%s352 + $0x6c8] sm:$0xff]
        %v1184 = vld [vmem:[%s352 + $0x6d0] sm:$0xff]
        %v1185 = vld [vmem:[%s352 + $0x6d8] sm:$0xff]
        %v1186 = vld [vmem:[%s352 + $0x6e0] sm:$0xff]
        %v1187 = vld [vmem:[%s352 + $0x6e8] sm:$0xff]
        %v1188 = vld [vmem:[%s352 + $0x6f0] sm:$0xff]
        %v1189 = vld [vmem:[%s352 + $0x6f8] sm:$0xff]
        %v1190 = vld [vmem:[%s352 + $0x700] sm:$0xff]
        %v1191 = vld [vmem:[%s352 + $0x708] sm:$0xff]
        %v1192 = vld [vmem:[%s352 + $0x710] sm:$0xff]
        %v1193 = vld [vmem:[%s352 + $0x718] sm:$0xff]
        %v1194 = vld [vmem:[%s352 + $0x720] sm:$0xff]
        %v1195 = vld [vmem:[%s352 + $0x728] sm:$0xff]
        %v1196 = vld [vmem:[%s352 + $0x730] sm:$0xff]
        %v1197 = vld [vmem:[%s352 + $0x738] sm:$0xff]
        %v1198 = vld [vmem:[%s352 + $0x740] sm:$0xff]
        %v1199 = vld [vmem:[%s352 + $0x748] sm:$0xff]
        %v1200 = vld [vmem:[%s352 + $0x750] sm:$0xff]
        %v1201 = vld [vmem:[%s352 + $0x758] sm:$0xff]
        %v1202 = vld [vmem:[%s352 + $0x760] sm:$0xff]
        %v1203 = vld [vmem:[%s352 + $0x768] sm:$0xff]
        %v1204 = vld [vmem:[%s352 + $0x770] sm:$0xff]
        %v1205 = vld [vmem:[%s352 + $0x778] sm:$0xff]
        %v1206 = vld [vmem:[%s352 + $0x780] sm:$0xff]
        %v1207 = vld [vmem:[%s352 + $0x788] sm:$0xff]
        %v1208 = vld [vmem:[%s352 + $0x790] sm:$0xff]
        %v1209 = vld [vmem:[%s352 + $0x798] sm:$0xff]
        %v1210 = vld [vmem:[%s352 + $0x7a0] sm:$0xff]
        %v1211 = vld [vmem:[%s352 + $0x7a8] sm:$0xff]
        %v1212 = vld [vmem:[%s352 + $0x7b0] sm:$0xff]
        %v1213 = vld [vmem:[%s352 + $0x7b8] sm:$0xff]
        %v1214 = vld [vmem:[%s352 + $0x7c0] sm:$0xff]
        %v1215 = vld [vmem:[%s352 + $0x7c8] sm:$0xff]
        %v1216 = vld [vmem:[%s352 + $0x7d0] sm:$0xff]
        %v1217 = vld [vmem:[%s352 + $0x7d8] sm:$0xff]
        %v1218 = vld [vmem:[%s352 + $0x7e0] sm:$0xff]
        %v1219 = vld [vmem:[%s352 + $0x7e8] sm:$0xff]
        %v1220 = vld [vmem:[%s352 + $0x7f0] sm:$0xff]
        %v1221 = vld [vmem:[%s352 + $0x7f8] sm:$0xff]
        %v1222 = vld [vmem:[%s352 + $0x800] sm:$0xff]
        %v1223 = vld [vmem:[%s352 + $0x808] sm:$0xff]
        %v1224 = vld [vmem:[%s352 + $0x810] sm:$0xff]
        %v1225 = vld [vmem:[%s352 + $0x818] sm:$0xff]
        %v1226 = vld [vmem:[%s352 + $0x820] sm:$0xff]
        %v1227 = vld [vmem:[%s352 + $0x828] sm:$0xff]
        %v1228 = vld [vmem:[%s352 + $0x830] sm:$0xff]
        %v1229 = vld [vmem:[%s352 + $0x838] sm:$0xff]
        %v1230 = vld [vmem:[%s352 + $0x840] sm:$0xff]
        %v1231 = vld [vmem:[%s352 + $0x848] sm:$0xff]
        %v1232 = vld [vmem:[%s352 + $0x850] sm:$0xff]
        %v1233 = vld [vmem:[%s352 + $0x858] sm:$0xff]
        %v1234 = vld [vmem:[%s352 + $0x860] sm:$0xff]
        %v1235 = vld [vmem:[%s352 + $0x868] sm:$0xff]
        %v1236 = vld [vmem:[%s352 + $0x870] sm:$0xff]
        %v1237 = vld [vmem:[%s352 + $0x878] sm:$0xff]
        %v1238 = vld [vmem:[%s352 + $0x880] sm:$0xff]
        %v1239 = vld [vmem:[%s352 + $0x888] sm:$0xff]
        %v1240 = vld [vmem:[%s352 + $0x890] sm:$0xff]
        %v1241 = vld [vmem:[%s352 + $0x898] sm:$0xff]
        %v1242 = vld [vmem:[%s352 + $0x8a0] sm:$0xff]
        %v1243 = vld [vmem:[%s352 + $0x8a8] sm:$0xff]
        %v1244 = vld [vmem:[%s352 + $0x8b0] sm:$0xff]
        %v1245 = vld [vmem:[%s352 + $0x8b8] sm:$0xff]
        %v1246 = vld [vmem:[%s352 + $0x8c0] sm:$0xff]
        %v1247 = vld [vmem:[%s352 + $0x8c8] sm:$0xff]
        %v1248 = vld [vmem:[%s352 + $0x8d0] sm:$0xff]
        %v1249 = vld [vmem:[%s352 + $0x8d8] sm:$0xff]
        %v1250 = vld [vmem:[%s352 + $0x8e0] sm:$0xff]
        %v1251 = vld [vmem:[%s352 + $0x8e8] sm:$0xff]
        %v1252 = vld [vmem:[%s352 + $0x8f0] sm:$0xff]
        %v1253 = vld [vmem:[%s352 + $0x8f8] sm:$0xff]
        %v1254 = vld [vmem:[%s352 + $0x900] sm:$0xff]
        %v1255 = vld [vmem:[%s352 + $0x908] sm:$0xff]
        %v1256 = vld [vmem:[%s352 + $0x910] sm:$0xff]
        %v1257 = vld [vmem:[%s352 + $0x918] sm:$0xff]
        %v1258 = vld [vmem:[%s352 + $0x920] sm:$0xff]
        %v1259 = vld [vmem:[%s352 + $0x928] sm:$0xff]
        %v1260 = vld [vmem:[%s352 + $0x930] sm:$0xff]
        %v1261 = vld [vmem:[%s352 + $0x938] sm:$0xff]
        %v1262 = vld [vmem:[%s352 + $0x940] sm:$0xff]
        %v1263 = vld [vmem:[%s352 + $0x948] sm:$0xff]
        %v1264 = vld [vmem:[%s352 + $0x950] sm:$0xff]
        %v1265 = vld [vmem:[%s352 + $0x958] sm:$0xff]
        %v1266 = vld [vmem:[%s352 + $0x960] sm:$0xff]
        %v1267 = vld [vmem:[%s352 + $0x968] sm:$0xff]
        %v1268 = vld [vmem:[%s352 + $0x970] sm:$0xff]
        %v1269 = vld [vmem:[%s352 + $0x978] sm:$0xff]
        %v1270 = vld [vmem:[%s352 + $0x980] sm:$0xff]
        %v1271 = vld [vmem:[%s352 + $0x988] sm:$0xff]
        %v1272 = vld [vmem:[%s352 + $0x990] sm:$0xff]
        %v1273 = vld [vmem:[%s352 + $0x998] sm:$0xff]
        %v1274 = vld [vmem:[%s352 + $0x9a0] sm:$0xff]
        %v1275 = vld [vmem:[%s352 + $0x9a8] sm:$0xff]
        %v1276 = vld [vmem:[%s352 + $0x9b0] sm:$0xff]
        %v1277 = vld [vmem:[%s352 + $0x9b8] sm:$0xff]
        %v1278 = vld [vmem:[%s352 + $0x9c0] sm:$0xff]
        %v1279 = vld [vmem:[%s352 + $0x9c8] sm:$0xff]
        %v1280 = vld [vmem:[%s352 + $0x9d0] sm:$0xff]
        %v1281 = vld [vmem:[%s352 + $0x9d8] sm:$0xff]
        %v1282 = vld [vmem:[%s352 + $0x9e0] sm:$0xff]
        %v1283 = vld [vmem:[%s352 + $0x9e8] sm:$0xff]
        %v1284 = vld [vmem:[%s352 + $0x9f0] sm:$0xff]
        %v1285 = vld [vmem:[%s352 + $0x9f8] sm:$0xff]
        %v1286 = vld [vmem:[%s352 + $0xa00] sm:$0xff]
        %v1287 = vld [vmem:[%s352 + $0xa08] sm:$0xff]
        %v1288 = vld [vmem:[%s352 + $0xa10] sm:$0xff]
        %v1289 = vld [vmem:[%s352 + $0xa18] sm:$0xff]
        %v1290 = vld [vmem:[%s352 + $0xa20] sm:$0xff]
        %v1291 = vld [vmem:[%s352 + $0xa28] sm:$0xff]
        %v1292 = vld [vmem:[%s352 + $0xa30] sm:$0xff]
        %v1293 = vld [vmem:[%s352 + $0xa38] sm:$0xff]
        %v1294 = vld [vmem:[%s352 + $0xa40] sm:$0xff]
        %v1295 = vld [vmem:[%s352 + $0xa48] sm:$0xff]
        %v1296 = vld [vmem:[%s352 + $0xa50] sm:$0xff]
        %v1297 = vld [vmem:[%s352 + $0xa58] sm:$0xff]
        %v1298 = vld [vmem:[%s352 + $0xa60] sm:$0xff]
        %v1299 = vld [vmem:[%s352 + $0xa68] sm:$0xff]
        %v1300 = vld [vmem:[%s352 + $0xa70] sm:$0xff]
        %v1301 = vld [vmem:[%s352 + $0xa78] sm:$0xff]
        %v1302 = vld [vmem:[%s352 + $0xa80] sm:$0xff]
        %v1303 = vld [vmem:[%s352 + $0xa88] sm:$0xff]
        %v1304 = vld [vmem:[%s352 + $0xa90] sm:$0xff]
        %v1305 = vld [vmem:[%s352 + $0xa98] sm:$0xff]
        %v1306 = vld [vmem:[%s352 + $0xaa0] sm:$0xff]
        %v1307 = vld [vmem:[%s352 + $0xaa8] sm:$0xff]
        %v1308 = vld [vmem:[%s352 + $0xab0] sm:$0xff]
        %v1309 = vld [vmem:[%s352 + $0xab8] sm:$0xff]
        %v1310 = vld [vmem:[%s352 + $0xac0] sm:$0xff]
        %v1311 = vld [vmem:[%s352 + $0xac8] sm:$0xff]
        %v1312 = vld [vmem:[%s352 + $0xad0] sm:$0xff]
        %v1313 = vld [vmem:[%s352 + $0xad8] sm:$0xff]
        %v1314 = vld [vmem:[%s352 + $0xae0] sm:$0xff]
        %v1315 = vld [vmem:[%s352 + $0xae8] sm:$0xff]
        %v1316 = vld [vmem:[%s352 + $0xaf0] sm:$0xff]
        %v1317 = vld [vmem:[%s352 + $0xaf8] sm:$0xff]
        %v1318 = vld [vmem:[%s352 + $0xb00] sm:$0xff]
        %v1319 = vld [vmem:[%s352 + $0xb08] sm:$0xff]
        %v1320 = vld [vmem:[%s352 + $0xb10] sm:$0xff]
        %v1321 = vld [vmem:[%s352 + $0xb18] sm:$0xff]
        %v1322 = vld [vmem:[%s352 + $0xb20] sm:$0xff]
        %v1323 = vld [vmem:[%s352 + $0xb28] sm:$0xff]
        %v1324 = vld [vmem:[%s352 + $0xb30] sm:$0xff]
        %v1325 = vld [vmem:[%s352 + $0xb38] sm:$0xff]
        %v1326 = vld [vmem:[%s352 + $0xb40] sm:$0xff]
        %v1327 = vld [vmem:[%s352 + $0xb48] sm:$0xff]
        %v1328 = vld [vmem:[%s352 + $0xb50] sm:$0xff]
        %v1329 = vld [vmem:[%s352 + $0xb58] sm:$0xff]
        %v1330 = vld [vmem:[%s352 + $0xb60] sm:$0xff]
        %v1331 = vld [vmem:[%s352 + $0xb68] sm:$0xff]
        %v1332 = vld [vmem:[%s352 + $0xb70] sm:$0xff]
        %v1333 = vld [vmem:[%s352 + $0xb78] sm:$0xff]
        %v1334 = vld [vmem:[%s352 + $0xb80] sm:$0xff]
        %v1335 = vld [vmem:[%s352 + $0xb88] sm:$0xff]
        %v1336 = vld [vmem:[%s352 + $0xb90] sm:$0xff]
        %v1337 = vld [vmem:[%s352 + $0xb98] sm:$0xff]
        %v1338 = vld [vmem:[%s352 + $0xba0] sm:$0xff]
        %v1339 = vld [vmem:[%s352 + $0xba8] sm:$0xff]
        %v1340 = vld [vmem:[%s352 + $0xbb0] sm:$0xff]
        %v1341 = vld [vmem:[%s352 + $0xbb8] sm:$0xff]
        %v1342 = vld [vmem:[%s352 + $0xbc0] sm:$0xff]
        %v1343 = vld [vmem:[%s352 + $0xbc8] sm:$0xff]
        %v1344 = vld [vmem:[%s352 + $0xbd0] sm:$0xff]
        %v1345 = vld [vmem:[%s352 + $0xbd8] sm:$0xff]
        %v1346 = vld [vmem:[%s352 + $0xbe0] sm:$0xff]
        %v1347 = vld [vmem:[%s352 + $0xbe8] sm:$0xff]
        %v1348 = vld [vmem:[%s352 + $0xbf0] sm:$0xff]
        %v1349 = vld [vmem:[%s352 + $0xbf8] sm:$0xff]
        %v1350 = vld [vmem:[%s352 + $0xc00] sm:$0xff]
        %v1351 = vld [vmem:[%s352 + $0xc08] sm:$0xff]
        %v1352 = vld [vmem:[%s352 + $0xc10] sm:$0xff]
        %v1353 = vld [vmem:[%s352 + $0xc18] sm:$0xff]
        %v1354 = vld [vmem:[%s352 + $0xc20] sm:$0xff]
        %v1355 = vld [vmem:[%s352 + $0xc28] sm:$0xff]
        %v1356 = vld [vmem:[%s352 + $0xc30] sm:$0xff]
        %v1357 = vld [vmem:[%s352 + $0xc38] sm:$0xff]
        %v1358 = vld [vmem:[%s352 + $0xc40] sm:$0xff]
        %v1359 = vld [vmem:[%s352 + $0xc48] sm:$0xff]
        %v1360 = vld [vmem:[%s352 + $0xc50] sm:$0xff]
        %v1361 = vld [vmem:[%s352 + $0xc58] sm:$0xff]
        %v1362 = vld [vmem:[%s352 + $0xc60] sm:$0xff]
        %v1363 = vld [vmem:[%s352 + $0xc68] sm:$0xff]
        %v1364 = vld [vmem:[%s352 + $0xc70] sm:$0xff]
        %v1365 = vld [vmem:[%s352 + $0xc78] sm:$0xff]
        %v1366 = vld [vmem:[%s352 + $0xc80] sm:$0xff]
        %v1367 = vld [vmem:[%s352 + $0xc88] sm:$0xff]
        %v1368 = vld [vmem:[%s352 + $0xc90] sm:$0xff]
        %v1369 = vld [vmem:[%s352 + $0xc98] sm:$0xff]
        %v1370 = vld [vmem:[%s352 + $0xca0] sm:$0xff]
        %v1371 = vld [vmem:[%s352 + $0xca8] sm:$0xff]
        %v1372 = vld [vmem:[%s352 + $0xcb0] sm:$0xff]
        %v1373 = vld [vmem:[%s352 + $0xcb8] sm:$0xff]
        %v1374 = vld [vmem:[%s352 + $0xcc0] sm:$0xff]
        %v1375 = vld [vmem:[%s352 + $0xcc8] sm:$0xff]
        %v1376 = vld [vmem:[%s352 + $0xcd0] sm:$0xff]
        %v1377 = vld [vmem:[%s352 + $0xcd8] sm:$0xff]
        %v1378 = vld [vmem:[%s352 + $0xce0] sm:$0xff]
        %v1379 = vld [vmem:[%s352 + $0xce8] sm:$0xff]
        %v1380 = vld [vmem:[%s352 + $0xcf0] sm:$0xff]
        %v1381 = vld [vmem:[%s352 + $0xcf8] sm:$0xff]
        %v1382 = vld [vmem:[%s352 + $0xd00] sm:$0xff]
        %v1383 = vld [vmem:[%s352 + $0xd08] sm:$0xff]
        %v1384 = vld [vmem:[%s352 + $0xd10] sm:$0xff]
        %v1385 = vld [vmem:[%s352 + $0xd18] sm:$0xff]
        %v1386 = vld [vmem:[%s352 + $0xd20] sm:$0xff]
        %v1387 = vld [vmem:[%s352 + $0xd28] sm:$0xff]
        %v1388 = vld [vmem:[%s352 + $0xd30] sm:$0xff]
        %v1389 = vld [vmem:[%s352 + $0xd38] sm:$0xff]
        %v1390 = vld [vmem:[%s352 + $0xd40] sm:$0xff]
        %v1391 = vld [vmem:[%s352 + $0xd48] sm:$0xff]
        %v1392 = vld [vmem:[%s352 + $0xd50] sm:$0xff]
        %v1393 = vld [vmem:[%s352 + $0xd58] sm:$0xff]
        %v1394 = vld [vmem:[%s352 + $0xd60] sm:$0xff]
        %v1395 = vld [vmem:[%s352 + $0xd68] sm:$0xff]
        %v1396 = vld [vmem:[%s352 + $0xd70] sm:$0xff]
        %v1397 = vld [vmem:[%s352 + $0xd78] sm:$0xff]
        %v1398 = vld [vmem:[%s352 + $0xd80] sm:$0xff]
        %v1399 = vld [vmem:[%s352 + $0xd88] sm:$0xff]
        %v1400 = vld [vmem:[%s352 + $0xd90] sm:$0xff]
        %v1401 = vld [vmem:[%s352 + $0xd98] sm:$0xff]
        %v1402 = vld [vmem:[%s352 + $0xda0] sm:$0xff]
        %v1403 = vld [vmem:[%s352 + $0xda8] sm:$0xff]
        %v1404 = vld [vmem:[%s352 + $0xdb0] sm:$0xff]
        %v1405 = vld [vmem:[%s352 + $0xdb8] sm:$0xff]
        %v1406 = vld [vmem:[%s352 + $0xdc0] sm:$0xff]
        %v1407 = vld [vmem:[%s352 + $0xdc8] sm:$0xff]
        %v1408 = vld [vmem:[%s352 + $0xdd0] sm:$0xff]
        %v1409 = vld [vmem:[%s352 + $0xdd8] sm:$0xff]
        %v1410 = vld [vmem:[%s352 + $0xde0] sm:$0xff]
        %v1411 = vld [vmem:[%s352 + $0xde8] sm:$0xff]
        %v1412 = vld [vmem:[%s352 + $0xdf0] sm:$0xff]
        %v1413 = vld [vmem:[%s352 + $0xdf8] sm:$0xff]
        %v1414 = vld [vmem:[%s352 + $0xe00] sm:$0xff]
        %v1415 = vld [vmem:[%s352 + $0xe08] sm:$0xff]
        %v1416 = vld [vmem:[%s352 + $0xe10] sm:$0xff]
        %v1417 = vld [vmem:[%s352 + $0xe18] sm:$0xff]
        %v1418 = vld [vmem:[%s352 + $0xe20] sm:$0xff]
        %v1419 = vld [vmem:[%s352 + $0xe28] sm:$0xff]
        %v1420 = vld [vmem:[%s352 + $0xe30] sm:$0xff]
        %v1421 = vld [vmem:[%s352 + $0xe38] sm:$0xff]
        %v1422 = vld [vmem:[%s352 + $0xe40] sm:$0xff]
        %v1423 = vld [vmem:[%s352 + $0xe48] sm:$0xff]
        %v1424 = vld [vmem:[%s352 + $0xe50] sm:$0xff]
        %v1425 = vld [vmem:[%s352 + $0xe58] sm:$0xff]
        %v1426 = vld [vmem:[%s352 + $0xe60] sm:$0xff]
        %v1427 = vld [vmem:[%s352 + $0xe68] sm:$0xff]
        %v1428 = vld [vmem:[%s352 + $0xe70] sm:$0xff]
        %v1429 = vld [vmem:[%s352 + $0xe78] sm:$0xff]
        %v1430 = vld [vmem:[%s352 + $0xe80] sm:$0xff]
        %v1431 = vld [vmem:[%s352 + $0xe88] sm:$0xff]
        %v1432 = vld [vmem:[%s352 + $0xe90] sm:$0xff]
        %v1433 = vld [vmem:[%s352 + $0xe98] sm:$0xff]
        %v1434 = vld [vmem:[%s352 + $0xea0] sm:$0xff]
        %v1435 = vld [vmem:[%s352 + $0xea8] sm:$0xff]
        %v1436 = vld [vmem:[%s352 + $0xeb0] sm:$0xff]
        %v1437 = vld [vmem:[%s352 + $0xeb8] sm:$0xff]
        %v1438 = vld [vmem:[%s352 + $0xec0] sm:$0xff]
        %v1439 = vld [vmem:[%s352 + $0xec8] sm:$0xff]
        %v1440 = vld [vmem:[%s352 + $0xed0] sm:$0xff]
        %v1441 = vld [vmem:[%s352 + $0xed8] sm:$0xff]
        %v1442 = vld [vmem:[%s352 + $0xee0] sm:$0xff]
        %v1443 = vld [vmem:[%s352 + $0xee8] sm:$0xff]
        %v1444 = vld [vmem:[%s352 + $0xef0] sm:$0xff]
        %v1445 = vld [vmem:[%s352 + $0xef8] sm:$0xff]
        %v1446 = vld [vmem:[%s352 + $0xf00] sm:$0xff]
        %v1447 = vld [vmem:[%s352 + $0xf08] sm:$0xff]
        %v1448 = vld [vmem:[%s352 + $0xf10] sm:$0xff]
        %v1449 = vld [vmem:[%s352 + $0xf18] sm:$0xff]
        %v1450 = vld [vmem:[%s352 + $0xf20] sm:$0xff]
        %v1451 = vld [vmem:[%s352 + $0xf28] sm:$0xff]
        %v1452 = vld [vmem:[%s352 + $0xf30] sm:$0xff]
        %v1453 = vld [vmem:[%s352 + $0xf38] sm:$0xff]
        %v1454 = vld [vmem:[%s352 + $0xf40] sm:$0xff]
        %v1455 = vld [vmem:[%s352 + $0xf48] sm:$0xff]
        %v1456 = vld [vmem:[%s352 + $0xf50] sm:$0xff]
        %v1457 = vld [vmem:[%s352 + $0xf58] sm:$0xff]
        %v1458 = vld [vmem:[%s352 + $0xf60] sm:$0xff]
        %v1459 = vld [vmem:[%s352 + $0xf68] sm:$0xff]
        %v1460 = vld [vmem:[%s352 + $0xf70] sm:$0xff]
        %v1461 = vld [vmem:[%s352 + $0xf78] sm:$0xff]
        %v1462 = vld [vmem:[%s352 + $0xf80] sm:$0xff]
        %v1463 = vld [vmem:[%s352 + $0xf88] sm:$0xff]
        %v1464 = vld [vmem:[%s352 + $0xf90] sm:$0xff]
        %v1465 = vld [vmem:[%s352 + $0xf98] sm:$0xff]
        %v1466 = vld [vmem:[%s352 + $0xfa0] sm:$0xff]
        %v1467 = vld [vmem:[%s352 + $0xfa8] sm:$0xff]
        %v1468 = vld [vmem:[%s352 + $0xfb0] sm:$0xff]
        %v1469 = vld [vmem:[%s352 + $0xfb8] sm:$0xff]
        %v1470 = vld [vmem:[%s352 + $0xfc0] sm:$0xff]
        %v1471 = vld [vmem:[%s352 + $0xfc8] sm:$0xff]
        %v1472 = vld [vmem:[%s352 + $0xfd0] sm:$0xff]
        %v1473 = vld [vmem:[%s352 + $0xfd8] sm:$0xff]
        %v1474 = vld [vmem:[%s352 + $0xfe0] sm:$0xff]
        %v1475 = vld [vmem:[%s352 + $0xfe8] sm:$0xff]
        %v1476 = vld [vmem:[%s352 + $0xff0] sm:$0xff]
        %v1477 = vld [vmem:[%s352 + $0xff8] sm:$0xff]
        %v1478 = vld [vmem:[%s362] sm:$0xff]
        %v1480 = vperm.slane %v1478, 0
        %v1481 = vperm.slane %v1478, 1
        %v1482 = vperm.slane %v1478, 2
        %v1483 = vperm.slane %v1478, 3
        %v1484 = vperm.slane %v1478, 4
        %v1485 = vperm.slane %v1478, 5
        %v1486 = vperm.slane %v1478, 6
        %v1487 = vperm.slane %v1478, 7
        %v2008 = vunpack.c.l.b16 %v966
        %v2009 = vunpack.c.h.b16 %v966
        %v2010 = vunpack.c.l.b16 %v967
        %v2011 = vunpack.c.h.b16 %v967
        %v2012 = vunpack.c.l.b16 %v968
        %v2013 = vunpack.c.h.b16 %v968
        %v2014 = vunpack.c.l.b16 %v969
        %v2015 = vunpack.c.h.b16 %v969
        %v2016 = vunpack.c.l.b16 %v970
        %v2017 = vunpack.c.h.b16 %v970
        %v2018 = vunpack.c.l.b16 %v971
        %v2019 = vunpack.c.h.b16 %v971
        %v2020 = vunpack.c.l.b16 %v972
        %v2021 = vunpack.c.h.b16 %v972
        %v2022 = vunpack.c.l.b16 %v973
        %v2023 = vunpack.c.h.b16 %v973
        %v2024 = vunpack.c.l.b16 %v974
        %v2025 = vunpack.c.h.b16 %v974
        %v2026 = vunpack.c.l.b16 %v975
        %v2027 = vunpack.c.h.b16 %v975
        %v2028 = vunpack.c.l.b16 %v976
        %v2029 = vunpack.c.h.b16 %v976
        %v2030 = vunpack.c.l.b16 %v977
        %v2031 = vunpack.c.h.b16 %v977
        %v2032 = vunpack.c.l.b16 %v978
        %v2033 = vunpack.c.h.b16 %v978
        %v2034 = vunpack.c.l.b16 %v979
        %v2035 = vunpack.c.h.b16 %v979
        %v2036 = vunpack.c.l.b16 %v980
        %v2037 = vunpack.c.h.b16 %v980
        %v2038 = vunpack.c.l.b16 %v981
        %v2039 = vunpack.c.h.b16 %v981
        %v2040 = vunpack.c.l.b16 %v982
        %v2041 = vunpack.c.h.b16 %v982
        %v2042 = vunpack.c.l.b16 %v983
        %v2043 = vunpack.c.h.b16 %v983
        %v2044 = vunpack.c.l.b16 %v984
        %v2045 = vunpack.c.h.b16 %v984
        %v2046 = vunpack.c.l.b16 %v985
        %v2047 = vunpack.c.h.b16 %v985
        %v2048 = vunpack.c.l.b16 %v986
        %v2049 = vunpack.c.h.b16 %v986
        %v2050 = vunpack.c.l.b16 %v987
        %v2051 = vunpack.c.h.b16 %v987
        %v2052 = vunpack.c.l.b16 %v988
        %v2053 = vunpack.c.h.b16 %v988
        %v2054 = vunpack.c.l.b16 %v989
        %v2055 = vunpack.c.h.b16 %v989
        %v2056 = vunpack.c.l.b16 %v990
        %v2057 = vunpack.c.h.b16 %v990
        %v2058 = vunpack.c.l.b16 %v991
        %v2059 = vunpack.c.h.b16 %v991
        %v2060 = vunpack.c.l.b16 %v992
        %v2061 = vunpack.c.h.b16 %v992
        %v2062 = vunpack.c.l.b16 %v993
        %v2063 = vunpack.c.h.b16 %v993
        %v2064 = vunpack.c.l.b16 %v994
        %v2065 = vunpack.c.h.b16 %v994
        %v2066 = vunpack.c.l.b16 %v995
        %v2067 = vunpack.c.h.b16 %v995
        %v2068 = vunpack.c.l.b16 %v996
        %v2069 = vunpack.c.h.b16 %v996
        %v2070 = vunpack.c.l.b16 %v997
        %v2071 = vunpack.c.h.b16 %v997
        %v2072 = vunpack.c.l.b16 %v998
        %v2073 = vunpack.c.h.b16 %v998
        %v2074 = vunpack.c.l.b16 %v999
        %v2075 = vunpack.c.h.b16 %v999
        %v2076 = vunpack.c.l.b16 %v1000
        %v2077 = vunpack.c.h.b16 %v1000
        %v2078 = vunpack.c.l.b16 %v1001
        %v2079 = vunpack.c.h.b16 %v1001
        %v2080 = vunpack.c.l.b16 %v1002
        %v2081 = vunpack.c.h.b16 %v1002
        %v2082 = vunpack.c.l.b16 %v1003
        %v2083 = vunpack.c.h.b16 %v1003
        %v2084 = vunpack.c.l.b16 %v1004
        %v2085 = vunpack.c.h.b16 %v1004
        %v2086 = vunpack.c.l.b16 %v1005
        %v2087 = vunpack.c.h.b16 %v1005
        %v2088 = vunpack.c.l.b16 %v1006
        %v2089 = vunpack.c.h.b16 %v1006
        %v2090 = vunpack.c.l.b16 %v1007
        %v2091 = vunpack.c.h.b16 %v1007
        %v2092 = vunpack.c.l.b16 %v1008
        %v2093 = vunpack.c.h.b16 %v1008
        %v2094 = vunpack.c.l.b16 %v1009
        %v2095 = vunpack.c.h.b16 %v1009
        %v2096 = vunpack.c.l.b16 %v1010
        %v2097 = vunpack.c.h.b16 %v1010
        %v2098 = vunpack.c.l.b16 %v1011
        %v2099 = vunpack.c.h.b16 %v1011
        %v2100 = vunpack.c.l.b16 %v1012
        %v2101 = vunpack.c.h.b16 %v1012
        %v2102 = vunpack.c.l.b16 %v1013
        %v2103 = vunpack.c.h.b16 %v1013
        %v2104 = vunpack.c.l.b16 %v1014
        %v2105 = vunpack.c.h.b16 %v1014
        %v2106 = vunpack.c.l.b16 %v1015
        %v2107 = vunpack.c.h.b16 %v1015
        %v2108 = vunpack.c.l.b16 %v1016
        %v2109 = vunpack.c.h.b16 %v1016
        %v2110 = vunpack.c.l.b16 %v1017
        %v2111 = vunpack.c.h.b16 %v1017
        %v2112 = vunpack.c.l.b16 %v1018
        %v2113 = vunpack.c.h.b16 %v1018
        %v2114 = vunpack.c.l.b16 %v1019
        %v2115 = vunpack.c.h.b16 %v1019
        %v2116 = vunpack.c.l.b16 %v1020
        %v2117 = vunpack.c.h.b16 %v1020
        %v2118 = vunpack.c.l.b16 %v1021
        %v2119 = vunpack.c.h.b16 %v1021
        %v2120 = vunpack.c.l.b16 %v1022
        %v2121 = vunpack.c.h.b16 %v1022
        %v2122 = vunpack.c.l.b16 %v1023
        %v2123 = vunpack.c.h.b16 %v1023
        %v2124 = vunpack.c.l.b16 %v1024
        %v2125 = vunpack.c.h.b16 %v1024
        %v2126 = vunpack.c.l.b16 %v1025
        %v2127 = vunpack.c.h.b16 %v1025
        %v2128 = vunpack.c.l.b16 %v1026
        %v2129 = vunpack.c.h.b16 %v1026
        %v2130 = vunpack.c.l.b16 %v1027
        %v2131 = vunpack.c.h.b16 %v1027
        %v2132 = vunpack.c.l.b16 %v1028
        %v2133 = vunpack.c.h.b16 %v1028
        %v2134 = vunpack.c.l.b16 %v1029
        %v2135 = vunpack.c.h.b16 %v1029
        %v2136 = vunpack.c.l.b16 %v1030
        %v2137 = vunpack.c.h.b16 %v1030
        %v2138 = vunpack.c.l.b16 %v1031
        %v2139 = vunpack.c.h.b16 %v1031
        %v2140 = vunpack.c.l.b16 %v1032
        %v2141 = vunpack.c.h.b16 %v1032
        %v2142 = vunpack.c.l.b16 %v1033
        %v2143 = vunpack.c.h.b16 %v1033
        %v2144 = vunpack.c.l.b16 %v1034
        %v2145 = vunpack.c.h.b16 %v1034
        %v2146 = vunpack.c.l.b16 %v1035
        %v2147 = vunpack.c.h.b16 %v1035
        %v2148 = vunpack.c.l.b16 %v1036
        %v2149 = vunpack.c.h.b16 %v1036
        %v2150 = vunpack.c.l.b16 %v1037
        %v2151 = vunpack.c.h.b16 %v1037
        %v2152 = vunpack.c.l.b16 %v1038
        %v2153 = vunpack.c.h.b16 %v1038
        %v2154 = vunpack.c.l.b16 %v1039
        %v2155 = vunpack.c.h.b16 %v1039
        %v2156 = vunpack.c.l.b16 %v1040
        %v2157 = vunpack.c.h.b16 %v1040
        %v2158 = vunpack.c.l.b16 %v1041
        %v2159 = vunpack.c.h.b16 %v1041
        %v2160 = vunpack.c.l.b16 %v1042
        %v2161 = vunpack.c.h.b16 %v1042
        %v2162 = vunpack.c.l.b16 %v1043
        %v2163 = vunpack.c.h.b16 %v1043
        %v2164 = vunpack.c.l.b16 %v1044
        %v2165 = vunpack.c.h.b16 %v1044
        %v2166 = vunpack.c.l.b16 %v1045
        %v2167 = vunpack.c.h.b16 %v1045
        %v2168 = vunpack.c.l.b16 %v1046
        %v2169 = vunpack.c.h.b16 %v1046
        %v2170 = vunpack.c.l.b16 %v1047
        %v2171 = vunpack.c.h.b16 %v1047
        %v2172 = vunpack.c.l.b16 %v1048
        %v2173 = vunpack.c.h.b16 %v1048
        %v2174 = vunpack.c.l.b16 %v1049
        %v2175 = vunpack.c.h.b16 %v1049
        %v2176 = vunpack.c.l.b16 %v1050
        %v2177 = vunpack.c.h.b16 %v1050
        %v2178 = vunpack.c.l.b16 %v1051
        %v2179 = vunpack.c.h.b16 %v1051
        %v2180 = vunpack.c.l.b16 %v1052
        %v2181 = vunpack.c.h.b16 %v1052
        %v2182 = vunpack.c.l.b16 %v1053
        %v2183 = vunpack.c.h.b16 %v1053
        %v2184 = vunpack.c.l.b16 %v1054
        %v2185 = vunpack.c.h.b16 %v1054
        %v2186 = vunpack.c.l.b16 %v1055
        %v2187 = vunpack.c.h.b16 %v1055
        %v2188 = vunpack.c.l.b16 %v1056
        %v2189 = vunpack.c.h.b16 %v1056
        %v2190 = vunpack.c.l.b16 %v1057
        %v2191 = vunpack.c.h.b16 %v1057
        %v2192 = vunpack.c.l.b16 %v1058
        %v2193 = vunpack.c.h.b16 %v1058
        %v2194 = vunpack.c.l.b16 %v1059
        %v2195 = vunpack.c.h.b16 %v1059
        %v2196 = vunpack.c.l.b16 %v1060
        %v2197 = vunpack.c.h.b16 %v1060
        %v2198 = vunpack.c.l.b16 %v1061
        %v2199 = vunpack.c.h.b16 %v1061
        %v2200 = vunpack.c.l.b16 %v1062
        %v2201 = vunpack.c.h.b16 %v1062
        %v2202 = vunpack.c.l.b16 %v1063
        %v2203 = vunpack.c.h.b16 %v1063
        %v2204 = vunpack.c.l.b16 %v1064
        %v2205 = vunpack.c.h.b16 %v1064
        %v2206 = vunpack.c.l.b16 %v1065
        %v2207 = vunpack.c.h.b16 %v1065
        %v2208 = vunpack.c.l.b16 %v1066
        %v2209 = vunpack.c.h.b16 %v1066
        %v2210 = vunpack.c.l.b16 %v1067
        %v2211 = vunpack.c.h.b16 %v1067
        %v2212 = vunpack.c.l.b16 %v1068
        %v2213 = vunpack.c.h.b16 %v1068
        %v2214 = vunpack.c.l.b16 %v1069
        %v2215 = vunpack.c.h.b16 %v1069
        %v2216 = vunpack.c.l.b16 %v1070
        %v2217 = vunpack.c.h.b16 %v1070
        %v2218 = vunpack.c.l.b16 %v1071
        %v2219 = vunpack.c.h.b16 %v1071
        %v2220 = vunpack.c.l.b16 %v1072
        %v2221 = vunpack.c.h.b16 %v1072
        %v2222 = vunpack.c.l.b16 %v1073
        %v2223 = vunpack.c.h.b16 %v1073
        %v2224 = vunpack.c.l.b16 %v1074
        %v2225 = vunpack.c.h.b16 %v1074
        %v2226 = vunpack.c.l.b16 %v1075
        %v2227 = vunpack.c.h.b16 %v1075
        %v2228 = vunpack.c.l.b16 %v1076
        %v2229 = vunpack.c.h.b16 %v1076
        %v2230 = vunpack.c.l.b16 %v1077
        %v2231 = vunpack.c.h.b16 %v1077
        %v2232 = vunpack.c.l.b16 %v1078
        %v2233 = vunpack.c.h.b16 %v1078
        %v2234 = vunpack.c.l.b16 %v1079
        %v2235 = vunpack.c.h.b16 %v1079
        %v2236 = vunpack.c.l.b16 %v1080
        %v2237 = vunpack.c.h.b16 %v1080
        %v2238 = vunpack.c.l.b16 %v1081
        %v2239 = vunpack.c.h.b16 %v1081
        %v2240 = vunpack.c.l.b16 %v1082
        %v2241 = vunpack.c.h.b16 %v1082
        %v2242 = vunpack.c.l.b16 %v1083
        %v2243 = vunpack.c.h.b16 %v1083
        %v2244 = vunpack.c.l.b16 %v1084
        %v2245 = vunpack.c.h.b16 %v1084
        %v2246 = vunpack.c.l.b16 %v1085
        %v2247 = vunpack.c.h.b16 %v1085
        %v2248 = vunpack.c.l.b16 %v1086
        %v2249 = vunpack.c.h.b16 %v1086
        %v2250 = vunpack.c.l.b16 %v1087
        %v2251 = vunpack.c.h.b16 %v1087
        %v2252 = vunpack.c.l.b16 %v1088
        %v2253 = vunpack.c.h.b16 %v1088
        %v2254 = vunpack.c.l.b16 %v1089
        %v2255 = vunpack.c.h.b16 %v1089
        %v2256 = vunpack.c.l.b16 %v1090
        %v2257 = vunpack.c.h.b16 %v1090
        %v2258 = vunpack.c.l.b16 %v1091
        %v2259 = vunpack.c.h.b16 %v1091
        %v2260 = vunpack.c.l.b16 %v1092
        %v2261 = vunpack.c.h.b16 %v1092
        %v2262 = vunpack.c.l.b16 %v1093
        %v2263 = vunpack.c.h.b16 %v1093
        %v2264 = vunpack.c.l.b16 %v1094
        %v2265 = vunpack.c.h.b16 %v1094
        %v2266 = vunpack.c.l.b16 %v1095
        %v2267 = vunpack.c.h.b16 %v1095
        %v2268 = vunpack.c.l.b16 %v1096
        %v2269 = vunpack.c.h.b16 %v1096
        %v2270 = vunpack.c.l.b16 %v1097
        %v2271 = vunpack.c.h.b16 %v1097
        %v2272 = vunpack.c.l.b16 %v1098
        %v2273 = vunpack.c.h.b16 %v1098
        %v2274 = vunpack.c.l.b16 %v1099
        %v2275 = vunpack.c.h.b16 %v1099
        %v2276 = vunpack.c.l.b16 %v1100
        %v2277 = vunpack.c.h.b16 %v1100
        %v2278 = vunpack.c.l.b16 %v1101
        %v2279 = vunpack.c.h.b16 %v1101
        %v2280 = vunpack.c.l.b16 %v1102
        %v2281 = vunpack.c.h.b16 %v1102
        %v2282 = vunpack.c.l.b16 %v1103
        %v2283 = vunpack.c.h.b16 %v1103
        %v2284 = vunpack.c.l.b16 %v1104
        %v2285 = vunpack.c.h.b16 %v1104
        %v2286 = vunpack.c.l.b16 %v1105
        %v2287 = vunpack.c.h.b16 %v1105
        %v2288 = vunpack.c.l.b16 %v1106
        %v2289 = vunpack.c.h.b16 %v1106
        %v2290 = vunpack.c.l.b16 %v1107
        %v2291 = vunpack.c.h.b16 %v1107
        %v2292 = vunpack.c.l.b16 %v1108
        %v2293 = vunpack.c.h.b16 %v1108
        %v2294 = vunpack.c.l.b16 %v1109
        %v2295 = vunpack.c.h.b16 %v1109
        %v2296 = vunpack.c.l.b16 %v1110
        %v2297 = vunpack.c.h.b16 %v1110
        %v2298 = vunpack.c.l.b16 %v1111
        %v2299 = vunpack.c.h.b16 %v1111
        %v2300 = vunpack.c.l.b16 %v1112
        %v2301 = vunpack.c.h.b16 %v1112
        %v2302 = vunpack.c.l.b16 %v1113
        %v2303 = vunpack.c.h.b16 %v1113
        %v2304 = vunpack.c.l.b16 %v1114
        %v2305 = vunpack.c.h.b16 %v1114
        %v2306 = vunpack.c.l.b16 %v1115
        %v2307 = vunpack.c.h.b16 %v1115
        %v2308 = vunpack.c.l.b16 %v1116
        %v2309 = vunpack.c.h.b16 %v1116
        %v2310 = vunpack.c.l.b16 %v1117
        %v2311 = vunpack.c.h.b16 %v1117
        %v2312 = vunpack.c.l.b16 %v1118
        %v2313 = vunpack.c.h.b16 %v1118
        %v2314 = vunpack.c.l.b16 %v1119
        %v2315 = vunpack.c.h.b16 %v1119
        %v2316 = vunpack.c.l.b16 %v1120
        %v2317 = vunpack.c.h.b16 %v1120
        %v2318 = vunpack.c.l.b16 %v1121
        %v2319 = vunpack.c.h.b16 %v1121
        %v2320 = vunpack.c.l.b16 %v1122
        %v2321 = vunpack.c.h.b16 %v1122
        %v2322 = vunpack.c.l.b16 %v1123
        %v2323 = vunpack.c.h.b16 %v1123
        %v2324 = vunpack.c.l.b16 %v1124
        %v2325 = vunpack.c.h.b16 %v1124
        %v2326 = vunpack.c.l.b16 %v1125
        %v2327 = vunpack.c.h.b16 %v1125
        %v2328 = vunpack.c.l.b16 %v1126
        %v2329 = vunpack.c.h.b16 %v1126
        %v2330 = vunpack.c.l.b16 %v1127
        %v2331 = vunpack.c.h.b16 %v1127
        %v2332 = vunpack.c.l.b16 %v1128
        %v2333 = vunpack.c.h.b16 %v1128
        %v2334 = vunpack.c.l.b16 %v1129
        %v2335 = vunpack.c.h.b16 %v1129
        %v2336 = vunpack.c.l.b16 %v1130
        %v2337 = vunpack.c.h.b16 %v1130
        %v2338 = vunpack.c.l.b16 %v1131
        %v2339 = vunpack.c.h.b16 %v1131
        %v2340 = vunpack.c.l.b16 %v1132
        %v2341 = vunpack.c.h.b16 %v1132
        %v2342 = vunpack.c.l.b16 %v1133
        %v2343 = vunpack.c.h.b16 %v1133
        %v2344 = vunpack.c.l.b16 %v1134
        %v2345 = vunpack.c.h.b16 %v1134
        %v2346 = vunpack.c.l.b16 %v1135
        %v2347 = vunpack.c.h.b16 %v1135
        %v2348 = vunpack.c.l.b16 %v1136
        %v2349 = vunpack.c.h.b16 %v1136
        %v2350 = vunpack.c.l.b16 %v1137
        %v2351 = vunpack.c.h.b16 %v1137
        %v2352 = vunpack.c.l.b16 %v1138
        %v2353 = vunpack.c.h.b16 %v1138
        %v2354 = vunpack.c.l.b16 %v1139
        %v2355 = vunpack.c.h.b16 %v1139
        %v2356 = vunpack.c.l.b16 %v1140
        %v2357 = vunpack.c.h.b16 %v1140
        %v2358 = vunpack.c.l.b16 %v1141
        %v2359 = vunpack.c.h.b16 %v1141
        %v2360 = vunpack.c.l.b16 %v1142
        %v2361 = vunpack.c.h.b16 %v1142
        %v2362 = vunpack.c.l.b16 %v1143
        %v2363 = vunpack.c.h.b16 %v1143
        %v2364 = vunpack.c.l.b16 %v1144
        %v2365 = vunpack.c.h.b16 %v1144
        %v2366 = vunpack.c.l.b16 %v1145
        %v2367 = vunpack.c.h.b16 %v1145
        %v2368 = vunpack.c.l.b16 %v1146
        %v2369 = vunpack.c.h.b16 %v1146
        %v2370 = vunpack.c.l.b16 %v1147
        %v2371 = vunpack.c.h.b16 %v1147
        %v2372 = vunpack.c.l.b16 %v1148
        %v2373 = vunpack.c.h.b16 %v1148
        %v2374 = vunpack.c.l.b16 %v1149
        %v2375 = vunpack.c.h.b16 %v1149
        %v2376 = vunpack.c.l.b16 %v1150
        %v2377 = vunpack.c.h.b16 %v1150
        %v2378 = vunpack.c.l.b16 %v1151
        %v2379 = vunpack.c.h.b16 %v1151
        %v2380 = vunpack.c.l.b16 %v1152
        %v2381 = vunpack.c.h.b16 %v1152
        %v2382 = vunpack.c.l.b16 %v1153
        %v2383 = vunpack.c.h.b16 %v1153
        %v2384 = vunpack.c.l.b16 %v1154
        %v2385 = vunpack.c.h.b16 %v1154
        %v2386 = vunpack.c.l.b16 %v1155
        %v2387 = vunpack.c.h.b16 %v1155
        %v2388 = vunpack.c.l.b16 %v1156
        %v2389 = vunpack.c.h.b16 %v1156
        %v2390 = vunpack.c.l.b16 %v1157
        %v2391 = vunpack.c.h.b16 %v1157
        %v2392 = vunpack.c.l.b16 %v1158
        %v2393 = vunpack.c.h.b16 %v1158
        %v2394 = vunpack.c.l.b16 %v1159
        %v2395 = vunpack.c.h.b16 %v1159
        %v2396 = vunpack.c.l.b16 %v1160
        %v2397 = vunpack.c.h.b16 %v1160
        %v2398 = vunpack.c.l.b16 %v1161
        %v2399 = vunpack.c.h.b16 %v1161
        %v2400 = vunpack.c.l.b16 %v1162
        %v2401 = vunpack.c.h.b16 %v1162
        %v2402 = vunpack.c.l.b16 %v1163
        %v2403 = vunpack.c.h.b16 %v1163
        %v2404 = vunpack.c.l.b16 %v1164
        %v2405 = vunpack.c.h.b16 %v1164
        %v2406 = vunpack.c.l.b16 %v1165
        %v2407 = vunpack.c.h.b16 %v1165
        %v2408 = vunpack.c.l.b16 %v1166
        %v2409 = vunpack.c.h.b16 %v1166
        %v2410 = vunpack.c.l.b16 %v1167
        %v2411 = vunpack.c.h.b16 %v1167
        %v2412 = vunpack.c.l.b16 %v1168
        %v2413 = vunpack.c.h.b16 %v1168
        %v2414 = vunpack.c.l.b16 %v1169
        %v2415 = vunpack.c.h.b16 %v1169
        %v2416 = vunpack.c.l.b16 %v1170
        %v2417 = vunpack.c.h.b16 %v1170
        %v2418 = vunpack.c.l.b16 %v1171
        %v2419 = vunpack.c.h.b16 %v1171
        %v2420 = vunpack.c.l.b16 %v1172
        %v2421 = vunpack.c.h.b16 %v1172
        %v2422 = vunpack.c.l.b16 %v1173
        %v2423 = vunpack.c.h.b16 %v1173
        %v2424 = vunpack.c.l.b16 %v1174
        %v2425 = vunpack.c.h.b16 %v1174
        %v2426 = vunpack.c.l.b16 %v1175
        %v2427 = vunpack.c.h.b16 %v1175
        %v2428 = vunpack.c.l.b16 %v1176
        %v2429 = vunpack.c.h.b16 %v1176
        %v2430 = vunpack.c.l.b16 %v1177
        %v2431 = vunpack.c.h.b16 %v1177
        %v2432 = vunpack.c.l.b16 %v1178
        %v2433 = vunpack.c.h.b16 %v1178
        %v2434 = vunpack.c.l.b16 %v1179
        %v2435 = vunpack.c.h.b16 %v1179
        %v2436 = vunpack.c.l.b16 %v1180
        %v2437 = vunpack.c.h.b16 %v1180
        %v2438 = vunpack.c.l.b16 %v1181
        %v2439 = vunpack.c.h.b16 %v1181
        %v2440 = vunpack.c.l.b16 %v1182
        %v2441 = vunpack.c.h.b16 %v1182
        %v2442 = vunpack.c.l.b16 %v1183
        %v2443 = vunpack.c.h.b16 %v1183
        %v2444 = vunpack.c.l.b16 %v1184
        %v2445 = vunpack.c.h.b16 %v1184
        %v2446 = vunpack.c.l.b16 %v1185
        %v2447 = vunpack.c.h.b16 %v1185
        %v2448 = vunpack.c.l.b16 %v1186
        %v2449 = vunpack.c.h.b16 %v1186
        %v2450 = vunpack.c.l.b16 %v1187
        %v2451 = vunpack.c.h.b16 %v1187
        %v2452 = vunpack.c.l.b16 %v1188
        %v2453 = vunpack.c.h.b16 %v1188
        %v2454 = vunpack.c.l.b16 %v1189
        %v2455 = vunpack.c.h.b16 %v1189
        %v2456 = vunpack.c.l.b16 %v1190
        %v2457 = vunpack.c.h.b16 %v1190
        %v2458 = vunpack.c.l.b16 %v1191
        %v2459 = vunpack.c.h.b16 %v1191
        %v2460 = vunpack.c.l.b16 %v1192
        %v2461 = vunpack.c.h.b16 %v1192
        %v2462 = vunpack.c.l.b16 %v1193
        %v2463 = vunpack.c.h.b16 %v1193
        %v2464 = vunpack.c.l.b16 %v1194
        %v2465 = vunpack.c.h.b16 %v1194
        %v2466 = vunpack.c.l.b16 %v1195
        %v2467 = vunpack.c.h.b16 %v1195
        %v2468 = vunpack.c.l.b16 %v1196
        %v2469 = vunpack.c.h.b16 %v1196
        %v2470 = vunpack.c.l.b16 %v1197
        %v2471 = vunpack.c.h.b16 %v1197
        %v2472 = vunpack.c.l.b16 %v1198
        %v2473 = vunpack.c.h.b16 %v1198
        %v2474 = vunpack.c.l.b16 %v1199
        %v2475 = vunpack.c.h.b16 %v1199
        %v2476 = vunpack.c.l.b16 %v1200
        %v2477 = vunpack.c.h.b16 %v1200
        %v2478 = vunpack.c.l.b16 %v1201
        %v2479 = vunpack.c.h.b16 %v1201
        %v2480 = vunpack.c.l.b16 %v1202
        %v2481 = vunpack.c.h.b16 %v1202
        %v2482 = vunpack.c.l.b16 %v1203
        %v2483 = vunpack.c.h.b16 %v1203
        %v2484 = vunpack.c.l.b16 %v1204
        %v2485 = vunpack.c.h.b16 %v1204
        %v2486 = vunpack.c.l.b16 %v1205
        %v2487 = vunpack.c.h.b16 %v1205
        %v2488 = vunpack.c.l.b16 %v1206
        %v2489 = vunpack.c.h.b16 %v1206
        %v2490 = vunpack.c.l.b16 %v1207
        %v2491 = vunpack.c.h.b16 %v1207
        %v2492 = vunpack.c.l.b16 %v1208
        %v2493 = vunpack.c.h.b16 %v1208
        %v2494 = vunpack.c.l.b16 %v1209
        %v2495 = vunpack.c.h.b16 %v1209
        %v2496 = vunpack.c.l.b16 %v1210
        %v2497 = vunpack.c.h.b16 %v1210
        %v2498 = vunpack.c.l.b16 %v1211
        %v2499 = vunpack.c.h.b16 %v1211
        %v2500 = vunpack.c.l.b16 %v1212
        %v2501 = vunpack.c.h.b16 %v1212
        %v2502 = vunpack.c.l.b16 %v1213
        %v2503 = vunpack.c.h.b16 %v1213
        %v2504 = vunpack.c.l.b16 %v1214
        %v2505 = vunpack.c.h.b16 %v1214
        %v2506 = vunpack.c.l.b16 %v1215
        %v2507 = vunpack.c.h.b16 %v1215
        %v2508 = vunpack.c.l.b16 %v1216
        %v2509 = vunpack.c.h.b16 %v1216
        %v2510 = vunpack.c.l.b16 %v1217
        %v2511 = vunpack.c.h.b16 %v1217
        %v2512 = vunpack.c.l.b16 %v1218
        %v2513 = vunpack.c.h.b16 %v1218
        %v2514 = vunpack.c.l.b16 %v1219
        %v2515 = vunpack.c.h.b16 %v1219
        %v2516 = vunpack.c.l.b16 %v1220
        %v2517 = vunpack.c.h.b16 %v1220
        %v2518 = vunpack.c.l.b16 %v1221
        %v2519 = vunpack.c.h.b16 %v1221
        %v2520 = vunpack.c.l.b16 %v1222
        %v2521 = vunpack.c.h.b16 %v1222
        %v2522 = vunpack.c.l.b16 %v1223
        %v2523 = vunpack.c.h.b16 %v1223
        %v2524 = vunpack.c.l.b16 %v1224
        %v2525 = vunpack.c.h.b16 %v1224
        %v2526 = vunpack.c.l.b16 %v1225
        %v2527 = vunpack.c.h.b16 %v1225
        %v2528 = vunpack.c.l.b16 %v1226
        %v2529 = vunpack.c.h.b16 %v1226
        %v2530 = vunpack.c.l.b16 %v1227
        %v2531 = vunpack.c.h.b16 %v1227
        %v2532 = vunpack.c.l.b16 %v1228
        %v2533 = vunpack.c.h.b16 %v1228
        %v2534 = vunpack.c.l.b16 %v1229
        %v2535 = vunpack.c.h.b16 %v1229
        %v2536 = vunpack.c.l.b16 %v1230
        %v2537 = vunpack.c.h.b16 %v1230
        %v2538 = vunpack.c.l.b16 %v1231
        %v2539 = vunpack.c.h.b16 %v1231
        %v2540 = vunpack.c.l.b16 %v1232
        %v2541 = vunpack.c.h.b16 %v1232
        %v2542 = vunpack.c.l.b16 %v1233
        %v2543 = vunpack.c.h.b16 %v1233
        %v2544 = vunpack.c.l.b16 %v1234
        %v2545 = vunpack.c.h.b16 %v1234
        %v2546 = vunpack.c.l.b16 %v1235
        %v2547 = vunpack.c.h.b16 %v1235
        %v2548 = vunpack.c.l.b16 %v1236
        %v2549 = vunpack.c.h.b16 %v1236
        %v2550 = vunpack.c.l.b16 %v1237
        %v2551 = vunpack.c.h.b16 %v1237
        %v2552 = vunpack.c.l.b16 %v1238
        %v2553 = vunpack.c.h.b16 %v1238
        %v2554 = vunpack.c.l.b16 %v1239
        %v2555 = vunpack.c.h.b16 %v1239
        %v2556 = vunpack.c.l.b16 %v1240
        %v2557 = vunpack.c.h.b16 %v1240
        %v2558 = vunpack.c.l.b16 %v1241
        %v2559 = vunpack.c.h.b16 %v1241
        %v2560 = vunpack.c.l.b16 %v1242
        %v2561 = vunpack.c.h.b16 %v1242
        %v2562 = vunpack.c.l.b16 %v1243
        %v2563 = vunpack.c.h.b16 %v1243
        %v2564 = vunpack.c.l.b16 %v1244
        %v2565 = vunpack.c.h.b16 %v1244
        %v2566 = vunpack.c.l.b16 %v1245
        %v2567 = vunpack.c.h.b16 %v1245
        %v2568 = vunpack.c.l.b16 %v1246
        %v2569 = vunpack.c.h.b16 %v1246
        %v2570 = vunpack.c.l.b16 %v1247
        %v2571 = vunpack.c.h.b16 %v1247
        %v2572 = vunpack.c.l.b16 %v1248
        %v2573 = vunpack.c.h.b16 %v1248
        %v2574 = vunpack.c.l.b16 %v1249
        %v2575 = vunpack.c.h.b16 %v1249
        %v2576 = vunpack.c.l.b16 %v1250
        %v2577 = vunpack.c.h.b16 %v1250
        %v2578 = vunpack.c.l.b16 %v1251
        %v2579 = vunpack.c.h.b16 %v1251
        %v2580 = vunpack.c.l.b16 %v1252
        %v2581 = vunpack.c.h.b16 %v1252
        %v2582 = vunpack.c.l.b16 %v1253
        %v2583 = vunpack.c.h.b16 %v1253
        %v2584 = vunpack.c.l.b16 %v1254
        %v2585 = vunpack.c.h.b16 %v1254
        %v2586 = vunpack.c.l.b16 %v1255
        %v2587 = vunpack.c.h.b16 %v1255
        %v2588 = vunpack.c.l.b16 %v1256
        %v2589 = vunpack.c.h.b16 %v1256
        %v2590 = vunpack.c.l.b16 %v1257
        %v2591 = vunpack.c.h.b16 %v1257
        %v2592 = vunpack.c.l.b16 %v1258
        %v2593 = vunpack.c.h.b16 %v1258
        %v2594 = vunpack.c.l.b16 %v1259
        %v2595 = vunpack.c.h.b16 %v1259
        %v2596 = vunpack.c.l.b16 %v1260
        %v2597 = vunpack.c.h.b16 %v1260
        %v2598 = vunpack.c.l.b16 %v1261
        %v2599 = vunpack.c.h.b16 %v1261
        %v2600 = vunpack.c.l.b16 %v1262
        %v2601 = vunpack.c.h.b16 %v1262
        %v2602 = vunpack.c.l.b16 %v1263
        %v2603 = vunpack.c.h.b16 %v1263
        %v2604 = vunpack.c.l.b16 %v1264
        %v2605 = vunpack.c.h.b16 %v1264
        %v2606 = vunpack.c.l.b16 %v1265
        %v2607 = vunpack.c.h.b16 %v1265
        %v2608 = vunpack.c.l.b16 %v1266
        %v2609 = vunpack.c.h.b16 %v1266
        %v2610 = vunpack.c.l.b16 %v1267
        %v2611 = vunpack.c.h.b16 %v1267
        %v2612 = vunpack.c.l.b16 %v1268
        %v2613 = vunpack.c.h.b16 %v1268
        %v2614 = vunpack.c.l.b16 %v1269
        %v2615 = vunpack.c.h.b16 %v1269
        %v2616 = vunpack.c.l.b16 %v1270
        %v2617 = vunpack.c.h.b16 %v1270
        %v2618 = vunpack.c.l.b16 %v1271
        %v2619 = vunpack.c.h.b16 %v1271
        %v2620 = vunpack.c.l.b16 %v1272
        %v2621 = vunpack.c.h.b16 %v1272
        %v2622 = vunpack.c.l.b16 %v1273
        %v2623 = vunpack.c.h.b16 %v1273
        %v2624 = vunpack.c.l.b16 %v1274
        %v2625 = vunpack.c.h.b16 %v1274
        %v2626 = vunpack.c.l.b16 %v1275
        %v2627 = vunpack.c.h.b16 %v1275
        %v2628 = vunpack.c.l.b16 %v1276
        %v2629 = vunpack.c.h.b16 %v1276
        %v2630 = vunpack.c.l.b16 %v1277
        %v2631 = vunpack.c.h.b16 %v1277
        %v2632 = vunpack.c.l.b16 %v1278
        %v2633 = vunpack.c.h.b16 %v1278
        %v2634 = vunpack.c.l.b16 %v1279
        %v2635 = vunpack.c.h.b16 %v1279
        %v2636 = vunpack.c.l.b16 %v1280
        %v2637 = vunpack.c.h.b16 %v1280
        %v2638 = vunpack.c.l.b16 %v1281
        %v2639 = vunpack.c.h.b16 %v1281
        %v2640 = vunpack.c.l.b16 %v1282
        %v2641 = vunpack.c.h.b16 %v1282
        %v2642 = vunpack.c.l.b16 %v1283
        %v2643 = vunpack.c.h.b16 %v1283
        %v2644 = vunpack.c.l.b16 %v1284
        %v2645 = vunpack.c.h.b16 %v1284
        %v2646 = vunpack.c.l.b16 %v1285
        %v2647 = vunpack.c.h.b16 %v1285
        %v2648 = vunpack.c.l.b16 %v1286
        %v2649 = vunpack.c.h.b16 %v1286
        %v2650 = vunpack.c.l.b16 %v1287
        %v2651 = vunpack.c.h.b16 %v1287
        %v2652 = vunpack.c.l.b16 %v1288
        %v2653 = vunpack.c.h.b16 %v1288
        %v2654 = vunpack.c.l.b16 %v1289
        %v2655 = vunpack.c.h.b16 %v1289
        %v2656 = vunpack.c.l.b16 %v1290
        %v2657 = vunpack.c.h.b16 %v1290
        %v2658 = vunpack.c.l.b16 %v1291
        %v2659 = vunpack.c.h.b16 %v1291
        %v2660 = vunpack.c.l.b16 %v1292
        %v2661 = vunpack.c.h.b16 %v1292
        %v2662 = vunpack.c.l.b16 %v1293
        %v2663 = vunpack.c.h.b16 %v1293
        %v2664 = vunpack.c.l.b16 %v1294
        %v2665 = vunpack.c.h.b16 %v1294
        %v2666 = vunpack.c.l.b16 %v1295
        %v2667 = vunpack.c.h.b16 %v1295
        %v2668 = vunpack.c.l.b16 %v1296
        %v2669 = vunpack.c.h.b16 %v1296
        %v2670 = vunpack.c.l.b16 %v1297
        %v2671 = vunpack.c.h.b16 %v1297
        %v2672 = vunpack.c.l.b16 %v1298
        %v2673 = vunpack.c.h.b16 %v1298
        %v2674 = vunpack.c.l.b16 %v1299
        %v2675 = vunpack.c.h.b16 %v1299
        %v2676 = vunpack.c.l.b16 %v1300
        %v2677 = vunpack.c.h.b16 %v1300
        %v2678 = vunpack.c.l.b16 %v1301
        %v2679 = vunpack.c.h.b16 %v1301
        %v2680 = vunpack.c.l.b16 %v1302
        %v2681 = vunpack.c.h.b16 %v1302
        %v2682 = vunpack.c.l.b16 %v1303
        %v2683 = vunpack.c.h.b16 %v1303
        %v2684 = vunpack.c.l.b16 %v1304
        %v2685 = vunpack.c.h.b16 %v1304
        %v2686 = vunpack.c.l.b16 %v1305
        %v2687 = vunpack.c.h.b16 %v1305
        %v2688 = vunpack.c.l.b16 %v1306
        %v2689 = vunpack.c.h.b16 %v1306
        %v2690 = vunpack.c.l.b16 %v1307
        %v2691 = vunpack.c.h.b16 %v1307
        %v2692 = vunpack.c.l.b16 %v1308
        %v2693 = vunpack.c.h.b16 %v1308
        %v2694 = vunpack.c.l.b16 %v1309
        %v2695 = vunpack.c.h.b16 %v1309
        %v2696 = vunpack.c.l.b16 %v1310
        %v2697 = vunpack.c.h.b16 %v1310
        %v2698 = vunpack.c.l.b16 %v1311
        %v2699 = vunpack.c.h.b16 %v1311
        %v2700 = vunpack.c.l.b16 %v1312
        %v2701 = vunpack.c.h.b16 %v1312
        %v2702 = vunpack.c.l.b16 %v1313
        %v2703 = vunpack.c.h.b16 %v1313
        %v2704 = vunpack.c.l.b16 %v1314
        %v2705 = vunpack.c.h.b16 %v1314
        %v2706 = vunpack.c.l.b16 %v1315
        %v2707 = vunpack.c.h.b16 %v1315
        %v2708 = vunpack.c.l.b16 %v1316
        %v2709 = vunpack.c.h.b16 %v1316
        %v2710 = vunpack.c.l.b16 %v1317
        %v2711 = vunpack.c.h.b16 %v1317
        %v2712 = vunpack.c.l.b16 %v1318
        %v2713 = vunpack.c.h.b16 %v1318
        %v2714 = vunpack.c.l.b16 %v1319
        %v2715 = vunpack.c.h.b16 %v1319
        %v2716 = vunpack.c.l.b16 %v1320
        %v2717 = vunpack.c.h.b16 %v1320
        %v2718 = vunpack.c.l.b16 %v1321
        %v2719 = vunpack.c.h.b16 %v1321
        %v2720 = vunpack.c.l.b16 %v1322
        %v2721 = vunpack.c.h.b16 %v1322
        %v2722 = vunpack.c.l.b16 %v1323
        %v2723 = vunpack.c.h.b16 %v1323
        %v2724 = vunpack.c.l.b16 %v1324
        %v2725 = vunpack.c.h.b16 %v1324
        %v2726 = vunpack.c.l.b16 %v1325
        %v2727 = vunpack.c.h.b16 %v1325
        %v2728 = vunpack.c.l.b16 %v1326
        %v2729 = vunpack.c.h.b16 %v1326
        %v2730 = vunpack.c.l.b16 %v1327
        %v2731 = vunpack.c.h.b16 %v1327
        %v2732 = vunpack.c.l.b16 %v1328
        %v2733 = vunpack.c.h.b16 %v1328
        %v2734 = vunpack.c.l.b16 %v1329
        %v2735 = vunpack.c.h.b16 %v1329
        %v2736 = vunpack.c.l.b16 %v1330
        %v2737 = vunpack.c.h.b16 %v1330
        %v2738 = vunpack.c.l.b16 %v1331
        %v2739 = vunpack.c.h.b16 %v1331
        %v2740 = vunpack.c.l.b16 %v1332
        %v2741 = vunpack.c.h.b16 %v1332
        %v2742 = vunpack.c.l.b16 %v1333
        %v2743 = vunpack.c.h.b16 %v1333
        %v2744 = vunpack.c.l.b16 %v1334
        %v2745 = vunpack.c.h.b16 %v1334
        %v2746 = vunpack.c.l.b16 %v1335
        %v2747 = vunpack.c.h.b16 %v1335
        %v2748 = vunpack.c.l.b16 %v1336
        %v2749 = vunpack.c.h.b16 %v1336
        %v2750 = vunpack.c.l.b16 %v1337
        %v2751 = vunpack.c.h.b16 %v1337
        %v2752 = vunpack.c.l.b16 %v1338
        %v2753 = vunpack.c.h.b16 %v1338
        %v2754 = vunpack.c.l.b16 %v1339
        %v2755 = vunpack.c.h.b16 %v1339
        %v2756 = vunpack.c.l.b16 %v1340
        %v2757 = vunpack.c.h.b16 %v1340
        %v2758 = vunpack.c.l.b16 %v1341
        %v2759 = vunpack.c.h.b16 %v1341
        %v2760 = vunpack.c.l.b16 %v1342
        %v2761 = vunpack.c.h.b16 %v1342
        %v2762 = vunpack.c.l.b16 %v1343
        %v2763 = vunpack.c.h.b16 %v1343
        %v2764 = vunpack.c.l.b16 %v1344
        %v2765 = vunpack.c.h.b16 %v1344
        %v2766 = vunpack.c.l.b16 %v1345
        %v2767 = vunpack.c.h.b16 %v1345
        %v2768 = vunpack.c.l.b16 %v1346
        %v2769 = vunpack.c.h.b16 %v1346
        %v2770 = vunpack.c.l.b16 %v1347
        %v2771 = vunpack.c.h.b16 %v1347
        %v2772 = vunpack.c.l.b16 %v1348
        %v2773 = vunpack.c.h.b16 %v1348
        %v2774 = vunpack.c.l.b16 %v1349
        %v2775 = vunpack.c.h.b16 %v1349
        %v2776 = vunpack.c.l.b16 %v1350
        %v2777 = vunpack.c.h.b16 %v1350
        %v2778 = vunpack.c.l.b16 %v1351
        %v2779 = vunpack.c.h.b16 %v1351
        %v2780 = vunpack.c.l.b16 %v1352
        %v2781 = vunpack.c.h.b16 %v1352
        %v2782 = vunpack.c.l.b16 %v1353
        %v2783 = vunpack.c.h.b16 %v1353
        %v2784 = vunpack.c.l.b16 %v1354
        %v2785 = vunpack.c.h.b16 %v1354
        %v2786 = vunpack.c.l.b16 %v1355
        %v2787 = vunpack.c.h.b16 %v1355
        %v2788 = vunpack.c.l.b16 %v1356
        %v2789 = vunpack.c.h.b16 %v1356
        %v2790 = vunpack.c.l.b16 %v1357
        %v2791 = vunpack.c.h.b16 %v1357
        %v2792 = vunpack.c.l.b16 %v1358
        %v2793 = vunpack.c.h.b16 %v1358
        %v2794 = vunpack.c.l.b16 %v1359
        %v2795 = vunpack.c.h.b16 %v1359
        %v2796 = vunpack.c.l.b16 %v1360
        %v2797 = vunpack.c.h.b16 %v1360
        %v2798 = vunpack.c.l.b16 %v1361
        %v2799 = vunpack.c.h.b16 %v1361
        %v2800 = vunpack.c.l.b16 %v1362
        %v2801 = vunpack.c.h.b16 %v1362
        %v2802 = vunpack.c.l.b16 %v1363
        %v2803 = vunpack.c.h.b16 %v1363
        %v2804 = vunpack.c.l.b16 %v1364
        %v2805 = vunpack.c.h.b16 %v1364
        %v2806 = vunpack.c.l.b16 %v1365
        %v2807 = vunpack.c.h.b16 %v1365
        %v2808 = vunpack.c.l.b16 %v1366
        %v2809 = vunpack.c.h.b16 %v1366
        %v2810 = vunpack.c.l.b16 %v1367
        %v2811 = vunpack.c.h.b16 %v1367
        %v2812 = vunpack.c.l.b16 %v1368
        %v2813 = vunpack.c.h.b16 %v1368
        %v2814 = vunpack.c.l.b16 %v1369
        %v2815 = vunpack.c.h.b16 %v1369
        %v2816 = vunpack.c.l.b16 %v1370
        %v2817 = vunpack.c.h.b16 %v1370
        %v2818 = vunpack.c.l.b16 %v1371
        %v2819 = vunpack.c.h.b16 %v1371
        %v2820 = vunpack.c.l.b16 %v1372
        %v2821 = vunpack.c.h.b16 %v1372
        %v2822 = vunpack.c.l.b16 %v1373
        %v2823 = vunpack.c.h.b16 %v1373
        %v2824 = vunpack.c.l.b16 %v1374
        %v2825 = vunpack.c.h.b16 %v1374
        %v2826 = vunpack.c.l.b16 %v1375
        %v2827 = vunpack.c.h.b16 %v1375
        %v2828 = vunpack.c.l.b16 %v1376
        %v2829 = vunpack.c.h.b16 %v1376
        %v2830 = vunpack.c.l.b16 %v1377
        %v2831 = vunpack.c.h.b16 %v1377
        %v2832 = vunpack.c.l.b16 %v1378
        %v2833 = vunpack.c.h.b16 %v1378
        %v2834 = vunpack.c.l.b16 %v1379
        %v2835 = vunpack.c.h.b16 %v1379
        %v2836 = vunpack.c.l.b16 %v1380
        %v2837 = vunpack.c.h.b16 %v1380
        %v2838 = vunpack.c.l.b16 %v1381
        %v2839 = vunpack.c.h.b16 %v1381
        %v2840 = vunpack.c.l.b16 %v1382
        %v2841 = vunpack.c.h.b16 %v1382
        %v2842 = vunpack.c.l.b16 %v1383
        %v2843 = vunpack.c.h.b16 %v1383
        %v2844 = vunpack.c.l.b16 %v1384
        %v2845 = vunpack.c.h.b16 %v1384
        %v2846 = vunpack.c.l.b16 %v1385
        %v2847 = vunpack.c.h.b16 %v1385
        %v2848 = vunpack.c.l.b16 %v1386
        %v2849 = vunpack.c.h.b16 %v1386
        %v2850 = vunpack.c.l.b16 %v1387
        %v2851 = vunpack.c.h.b16 %v1387
        %v2852 = vunpack.c.l.b16 %v1388
        %v2853 = vunpack.c.h.b16 %v1388
        %v2854 = vunpack.c.l.b16 %v1389
        %v2855 = vunpack.c.h.b16 %v1389
        %v2856 = vunpack.c.l.b16 %v1390
        %v2857 = vunpack.c.h.b16 %v1390
        %v2858 = vunpack.c.l.b16 %v1391
        %v2859 = vunpack.c.h.b16 %v1391
        %v2860 = vunpack.c.l.b16 %v1392
        %v2861 = vunpack.c.h.b16 %v1392
        %v2862 = vunpack.c.l.b16 %v1393
        %v2863 = vunpack.c.h.b16 %v1393
        %v2864 = vunpack.c.l.b16 %v1394
        %v2865 = vunpack.c.h.b16 %v1394
        %v2866 = vunpack.c.l.b16 %v1395
        %v2867 = vunpack.c.h.b16 %v1395
        %v2868 = vunpack.c.l.b16 %v1396
        %v2869 = vunpack.c.h.b16 %v1396
        %v2870 = vunpack.c.l.b16 %v1397
        %v2871 = vunpack.c.h.b16 %v1397
        %v2872 = vunpack.c.l.b16 %v1398
        %v2873 = vunpack.c.h.b16 %v1398
        %v2874 = vunpack.c.l.b16 %v1399
        %v2875 = vunpack.c.h.b16 %v1399
        %v2876 = vunpack.c.l.b16 %v1400
        %v2877 = vunpack.c.h.b16 %v1400
        %v2878 = vunpack.c.l.b16 %v1401
        %v2879 = vunpack.c.h.b16 %v1401
        %v2880 = vunpack.c.l.b16 %v1402
        %v2881 = vunpack.c.h.b16 %v1402
        %v2882 = vunpack.c.l.b16 %v1403
        %v2883 = vunpack.c.h.b16 %v1403
        %v2884 = vunpack.c.l.b16 %v1404
        %v2885 = vunpack.c.h.b16 %v1404
        %v2886 = vunpack.c.l.b16 %v1405
        %v2887 = vunpack.c.h.b16 %v1405
        %v2888 = vunpack.c.l.b16 %v1406
        %v2889 = vunpack.c.h.b16 %v1406
        %v2890 = vunpack.c.l.b16 %v1407
        %v2891 = vunpack.c.h.b16 %v1407
        %v2892 = vunpack.c.l.b16 %v1408
        %v2893 = vunpack.c.h.b16 %v1408
        %v2894 = vunpack.c.l.b16 %v1409
        %v2895 = vunpack.c.h.b16 %v1409
        %v2896 = vunpack.c.l.b16 %v1410
        %v2897 = vunpack.c.h.b16 %v1410
        %v2898 = vunpack.c.l.b16 %v1411
        %v2899 = vunpack.c.h.b16 %v1411
        %v2900 = vunpack.c.l.b16 %v1412
        %v2901 = vunpack.c.h.b16 %v1412
        %v2902 = vunpack.c.l.b16 %v1413
        %v2903 = vunpack.c.h.b16 %v1413
        %v2904 = vunpack.c.l.b16 %v1414
        %v2905 = vunpack.c.h.b16 %v1414
        %v2906 = vunpack.c.l.b16 %v1415
        %v2907 = vunpack.c.h.b16 %v1415
        %v2908 = vunpack.c.l.b16 %v1416
        %v2909 = vunpack.c.h.b16 %v1416
        %v2910 = vunpack.c.l.b16 %v1417
        %v2911 = vunpack.c.h.b16 %v1417
        %v2912 = vunpack.c.l.b16 %v1418
        %v2913 = vunpack.c.h.b16 %v1418
        %v2914 = vunpack.c.l.b16 %v1419
        %v2915 = vunpack.c.h.b16 %v1419
        %v2916 = vunpack.c.l.b16 %v1420
        %v2917 = vunpack.c.h.b16 %v1420
        %v2918 = vunpack.c.l.b16 %v1421
        %v2919 = vunpack.c.h.b16 %v1421
        %v2920 = vunpack.c.l.b16 %v1422
        %v2921 = vunpack.c.h.b16 %v1422
        %v2922 = vunpack.c.l.b16 %v1423
        %v2923 = vunpack.c.h.b16 %v1423
        %v2924 = vunpack.c.l.b16 %v1424
        %v2925 = vunpack.c.h.b16 %v1424
        %v2926 = vunpack.c.l.b16 %v1425
        %v2927 = vunpack.c.h.b16 %v1425
        %v2928 = vunpack.c.l.b16 %v1426
        %v2929 = vunpack.c.h.b16 %v1426
        %v2930 = vunpack.c.l.b16 %v1427
        %v2931 = vunpack.c.h.b16 %v1427
        %v2932 = vunpack.c.l.b16 %v1428
        %v2933 = vunpack.c.h.b16 %v1428
        %v2934 = vunpack.c.l.b16 %v1429
        %v2935 = vunpack.c.h.b16 %v1429
        %v2936 = vunpack.c.l.b16 %v1430
        %v2937 = vunpack.c.h.b16 %v1430
        %v2938 = vunpack.c.l.b16 %v1431
        %v2939 = vunpack.c.h.b16 %v1431
        %v2940 = vunpack.c.l.b16 %v1432
        %v2941 = vunpack.c.h.b16 %v1432
        %v2942 = vunpack.c.l.b16 %v1433
        %v2943 = vunpack.c.h.b16 %v1433
        %v2944 = vunpack.c.l.b16 %v1434
        %v2945 = vunpack.c.h.b16 %v1434
        %v2946 = vunpack.c.l.b16 %v1435
        %v2947 = vunpack.c.h.b16 %v1435
        %v2948 = vunpack.c.l.b16 %v1436
        %v2949 = vunpack.c.h.b16 %v1436
        %v2950 = vunpack.c.l.b16 %v1437
        %v2951 = vunpack.c.h.b16 %v1437
        %v2952 = vunpack.c.l.b16 %v1438
        %v2953 = vunpack.c.h.b16 %v1438
        %v2954 = vunpack.c.l.b16 %v1439
        %v2955 = vunpack.c.h.b16 %v1439
        %v2956 = vunpack.c.l.b16 %v1440
        %v2957 = vunpack.c.h.b16 %v1440
        %v2958 = vunpack.c.l.b16 %v1441
        %v2959 = vunpack.c.h.b16 %v1441
        %v2960 = vunpack.c.l.b16 %v1442
        %v2961 = vunpack.c.h.b16 %v1442
        %v2962 = vunpack.c.l.b16 %v1443
        %v2963 = vunpack.c.h.b16 %v1443
        %v2964 = vunpack.c.l.b16 %v1444
        %v2965 = vunpack.c.h.b16 %v1444
        %v2966 = vunpack.c.l.b16 %v1445
        %v2967 = vunpack.c.h.b16 %v1445
        %v2968 = vunpack.c.l.b16 %v1446
        %v2969 = vunpack.c.h.b16 %v1446
        %v2970 = vunpack.c.l.b16 %v1447
        %v2971 = vunpack.c.h.b16 %v1447
        %v2972 = vunpack.c.l.b16 %v1448
        %v2973 = vunpack.c.h.b16 %v1448
        %v2974 = vunpack.c.l.b16 %v1449
        %v2975 = vunpack.c.h.b16 %v1449
        %v2976 = vunpack.c.l.b16 %v1450
        %v2977 = vunpack.c.h.b16 %v1450
        %v2978 = vunpack.c.l.b16 %v1451
        %v2979 = vunpack.c.h.b16 %v1451
        %v2980 = vunpack.c.l.b16 %v1452
        %v2981 = vunpack.c.h.b16 %v1452
        %v2982 = vunpack.c.l.b16 %v1453
        %v2983 = vunpack.c.h.b16 %v1453
        %v2984 = vunpack.c.l.b16 %v1454
        %v2985 = vunpack.c.h.b16 %v1454
        %v2986 = vunpack.c.l.b16 %v1455
        %v2987 = vunpack.c.h.b16 %v1455
        %v2988 = vunpack.c.l.b16 %v1456
        %v2989 = vunpack.c.h.b16 %v1456
        %v2990 = vunpack.c.l.b16 %v1457
        %v2991 = vunpack.c.h.b16 %v1457
        %v2992 = vunpack.c.l.b16 %v1458
        %v2993 = vunpack.c.h.b16 %v1458
        %v2994 = vunpack.c.l.b16 %v1459
        %v2995 = vunpack.c.h.b16 %v1459
        %v2996 = vunpack.c.l.b16 %v1460
        %v2997 = vunpack.c.h.b16 %v1460
        %v2998 = vunpack.c.l.b16 %v1461
        %v2999 = vunpack.c.h.b16 %v1461
        %v3000 = vunpack.c.l.b16 %v1462
        %v3001 = vunpack.c.h.b16 %v1462
        %v3002 = vunpack.c.l.b16 %v1463
        %v3003 = vunpack.c.h.b16 %v1463
        %v3004 = vunpack.c.l.b16 %v1464
        %v3005 = vunpack.c.h.b16 %v1464
        %v3006 = vunpack.c.l.b16 %v1465
        %v3007 = vunpack.c.h.b16 %v1465
        %v3008 = vunpack.c.l.b16 %v1466
        %v3009 = vunpack.c.h.b16 %v1466
        %v3010 = vunpack.c.l.b16 %v1467
        %v3011 = vunpack.c.h.b16 %v1467
        %v3012 = vunpack.c.l.b16 %v1468
        %v3013 = vunpack.c.h.b16 %v1468
        %v3014 = vunpack.c.l.b16 %v1469
        %v3015 = vunpack.c.h.b16 %v1469
        %v3016 = vunpack.c.l.b16 %v1470
        %v3017 = vunpack.c.h.b16 %v1470
        %v3018 = vunpack.c.l.b16 %v1471
        %v3019 = vunpack.c.h.b16 %v1471
        %v3020 = vunpack.c.l.b16 %v1472
        %v3021 = vunpack.c.h.b16 %v1472
        %v3022 = vunpack.c.l.b16 %v1473
        %v3023 = vunpack.c.h.b16 %v1473
        %v3024 = vunpack.c.l.b16 %v1474
        %v3025 = vunpack.c.h.b16 %v1474
        %v3026 = vunpack.c.l.b16 %v1475
        %v3027 = vunpack.c.h.b16 %v1475
        %v3028 = vunpack.c.l.b16 %v1476
        %v3029 = vunpack.c.h.b16 %v1476
        %v3030 = vunpack.c.l.b16 %v1477
        %v3031 = vunpack.c.h.b16 %v1477
        %v3032 = vpack.c.b16 %v2016, %v2008
        %v3033 = vpack.c.b16 %v2017, %v2009
        %v3034 = vpack.c.b16 %v2018, %v2010
        %v3035 = vpack.c.b16 %v2019, %v2011
        %v3036 = vpack.c.b16 %v2020, %v2012
        %v3037 = vpack.c.b16 %v2021, %v2013
        %v3038 = vpack.c.b16 %v2022, %v2014
        %v3039 = vpack.c.b16 %v2023, %v2015
        %v3040 = vpack.c.b16 %v2032, %v2024
        %v3041 = vpack.c.b16 %v2033, %v2025
        %v3042 = vpack.c.b16 %v2034, %v2026
        %v3043 = vpack.c.b16 %v2035, %v2027
        %v3044 = vpack.c.b16 %v2036, %v2028
        %v3045 = vpack.c.b16 %v2037, %v2029
        %v3046 = vpack.c.b16 %v2038, %v2030
        %v3047 = vpack.c.b16 %v2039, %v2031
        %v3048 = vpack.c.b16 %v2048, %v2040
        %v3049 = vpack.c.b16 %v2049, %v2041
        %v3050 = vpack.c.b16 %v2050, %v2042
        %v3051 = vpack.c.b16 %v2051, %v2043
        %v3052 = vpack.c.b16 %v2052, %v2044
        %v3053 = vpack.c.b16 %v2053, %v2045
        %v3054 = vpack.c.b16 %v2054, %v2046
        %v3055 = vpack.c.b16 %v2055, %v2047
        %v3056 = vpack.c.b16 %v2064, %v2056
        %v3057 = vpack.c.b16 %v2065, %v2057
        %v3058 = vpack.c.b16 %v2066, %v2058
        %v3059 = vpack.c.b16 %v2067, %v2059
        %v3060 = vpack.c.b16 %v2068, %v2060
        %v3061 = vpack.c.b16 %v2069, %v2061
        %v3062 = vpack.c.b16 %v2070, %v2062
        %v3063 = vpack.c.b16 %v2071, %v2063
        %v3064 = vpack.c.b16 %v2080, %v2072
        %v3065 = vpack.c.b16 %v2081, %v2073
        %v3066 = vpack.c.b16 %v2082, %v2074
        %v3067 = vpack.c.b16 %v2083, %v2075
        %v3068 = vpack.c.b16 %v2084, %v2076
        %v3069 = vpack.c.b16 %v2085, %v2077
        %v3070 = vpack.c.b16 %v2086, %v2078
        %v3071 = vpack.c.b16 %v2087, %v2079
        %v3072 = vpack.c.b16 %v2096, %v2088
        %v3073 = vpack.c.b16 %v2097, %v2089
        %v3074 = vpack.c.b16 %v2098, %v2090
        %v3075 = vpack.c.b16 %v2099, %v2091
        %v3076 = vpack.c.b16 %v2100, %v2092
        %v3077 = vpack.c.b16 %v2101, %v2093
        %v3078 = vpack.c.b16 %v2102, %v2094
        %v3079 = vpack.c.b16 %v2103, %v2095
        %v3080 = vpack.c.b16 %v2112, %v2104
        %v3081 = vpack.c.b16 %v2113, %v2105
        %v3082 = vpack.c.b16 %v2114, %v2106
        %v3083 = vpack.c.b16 %v2115, %v2107
        %v3084 = vpack.c.b16 %v2116, %v2108
        %v3085 = vpack.c.b16 %v2117, %v2109
        %v3086 = vpack.c.b16 %v2118, %v2110
        %v3087 = vpack.c.b16 %v2119, %v2111
        %v3088 = vpack.c.b16 %v2128, %v2120
        %v3089 = vpack.c.b16 %v2129, %v2121
        %v3090 = vpack.c.b16 %v2130, %v2122
        %v3091 = vpack.c.b16 %v2131, %v2123
        %v3092 = vpack.c.b16 %v2132, %v2124
        %v3093 = vpack.c.b16 %v2133, %v2125
        %v3094 = vpack.c.b16 %v2134, %v2126
        %v3095 = vpack.c.b16 %v2135, %v2127
        %v3096 = vpack.c.b16 %v2144, %v2136
        %v3097 = vpack.c.b16 %v2145, %v2137
        %v3098 = vpack.c.b16 %v2146, %v2138
        %v3099 = vpack.c.b16 %v2147, %v2139
        %v3100 = vpack.c.b16 %v2148, %v2140
        %v3101 = vpack.c.b16 %v2149, %v2141
        %v3102 = vpack.c.b16 %v2150, %v2142
        %v3103 = vpack.c.b16 %v2151, %v2143
        %v3104 = vpack.c.b16 %v2160, %v2152
        %v3105 = vpack.c.b16 %v2161, %v2153
        %v3106 = vpack.c.b16 %v2162, %v2154
        %v3107 = vpack.c.b16 %v2163, %v2155
        %v3108 = vpack.c.b16 %v2164, %v2156
        %v3109 = vpack.c.b16 %v2165, %v2157
        %v3110 = vpack.c.b16 %v2166, %v2158
        %v3111 = vpack.c.b16 %v2167, %v2159
        %v3112 = vpack.c.b16 %v2176, %v2168
        %v3113 = vpack.c.b16 %v2177, %v2169
        %v3114 = vpack.c.b16 %v2178, %v2170
        %v3115 = vpack.c.b16 %v2179, %v2171
        %v3116 = vpack.c.b16 %v2180, %v2172
        %v3117 = vpack.c.b16 %v2181, %v2173
        %v3118 = vpack.c.b16 %v2182, %v2174
        %v3119 = vpack.c.b16 %v2183, %v2175
        %v3120 = vpack.c.b16 %v2192, %v2184
        %v3121 = vpack.c.b16 %v2193, %v2185
        %v3122 = vpack.c.b16 %v2194, %v2186
        %v3123 = vpack.c.b16 %v2195, %v2187
        %v3124 = vpack.c.b16 %v2196, %v2188
        %v3125 = vpack.c.b16 %v2197, %v2189
        %v3126 = vpack.c.b16 %v2198, %v2190
        %v3127 = vpack.c.b16 %v2199, %v2191
        %v3128 = vpack.c.b16 %v2208, %v2200
        %v3129 = vpack.c.b16 %v2209, %v2201
        %v3130 = vpack.c.b16 %v2210, %v2202
        %v3131 = vpack.c.b16 %v2211, %v2203
        %v3132 = vpack.c.b16 %v2212, %v2204
        %v3133 = vpack.c.b16 %v2213, %v2205
        %v3134 = vpack.c.b16 %v2214, %v2206
        %v3135 = vpack.c.b16 %v2215, %v2207
        %v3136 = vpack.c.b16 %v2224, %v2216
        %v3137 = vpack.c.b16 %v2225, %v2217
        %v3138 = vpack.c.b16 %v2226, %v2218
        %v3139 = vpack.c.b16 %v2227, %v2219
        %v3140 = vpack.c.b16 %v2228, %v2220
        %v3141 = vpack.c.b16 %v2229, %v2221
        %v3142 = vpack.c.b16 %v2230, %v2222
        %v3143 = vpack.c.b16 %v2231, %v2223
        %v3144 = vpack.c.b16 %v2240, %v2232
        %v3145 = vpack.c.b16 %v2241, %v2233
        %v3146 = vpack.c.b16 %v2242, %v2234
        %v3147 = vpack.c.b16 %v2243, %v2235
        %v3148 = vpack.c.b16 %v2244, %v2236
        %v3149 = vpack.c.b16 %v2245, %v2237
        %v3150 = vpack.c.b16 %v2246, %v2238
        %v3151 = vpack.c.b16 %v2247, %v2239
        %v3152 = vpack.c.b16 %v2256, %v2248
        %v3153 = vpack.c.b16 %v2257, %v2249
        %v3154 = vpack.c.b16 %v2258, %v2250
        %v3155 = vpack.c.b16 %v2259, %v2251
        %v3156 = vpack.c.b16 %v2260, %v2252
        %v3157 = vpack.c.b16 %v2261, %v2253
        %v3158 = vpack.c.b16 %v2262, %v2254
        %v3159 = vpack.c.b16 %v2263, %v2255
        %v3160 = vpack.c.b16 %v2272, %v2264
        %v3161 = vpack.c.b16 %v2273, %v2265
        %v3162 = vpack.c.b16 %v2274, %v2266
        %v3163 = vpack.c.b16 %v2275, %v2267
        %v3164 = vpack.c.b16 %v2276, %v2268
        %v3165 = vpack.c.b16 %v2277, %v2269
        %v3166 = vpack.c.b16 %v2278, %v2270
        %v3167 = vpack.c.b16 %v2279, %v2271
        %v3168 = vpack.c.b16 %v2288, %v2280
        %v3169 = vpack.c.b16 %v2289, %v2281
        %v3170 = vpack.c.b16 %v2290, %v2282
        %v3171 = vpack.c.b16 %v2291, %v2283
        %v3172 = vpack.c.b16 %v2292, %v2284
        %v3173 = vpack.c.b16 %v2293, %v2285
        %v3174 = vpack.c.b16 %v2294, %v2286
        %v3175 = vpack.c.b16 %v2295, %v2287
        %v3176 = vpack.c.b16 %v2304, %v2296
        %v3177 = vpack.c.b16 %v2305, %v2297
        %v3178 = vpack.c.b16 %v2306, %v2298
        %v3179 = vpack.c.b16 %v2307, %v2299
        %v3180 = vpack.c.b16 %v2308, %v2300
        %v3181 = vpack.c.b16 %v2309, %v2301
        %v3182 = vpack.c.b16 %v2310, %v2302
        %v3183 = vpack.c.b16 %v2311, %v2303
        %v3184 = vpack.c.b16 %v2320, %v2312
        %v3185 = vpack.c.b16 %v2321, %v2313
        %v3186 = vpack.c.b16 %v2322, %v2314
        %v3187 = vpack.c.b16 %v2323, %v2315
        %v3188 = vpack.c.b16 %v2324, %v2316
        %v3189 = vpack.c.b16 %v2325, %v2317
        %v3190 = vpack.c.b16 %v2326, %v2318
        %v3191 = vpack.c.b16 %v2327, %v2319
        %v3192 = vpack.c.b16 %v2336, %v2328
        %v3193 = vpack.c.b16 %v2337, %v2329
        %v3194 = vpack.c.b16 %v2338, %v2330
        %v3195 = vpack.c.b16 %v2339, %v2331
        %v3196 = vpack.c.b16 %v2340, %v2332
        %v3197 = vpack.c.b16 %v2341, %v2333
        %v3198 = vpack.c.b16 %v2342, %v2334
        %v3199 = vpack.c.b16 %v2343, %v2335
        %v3200 = vpack.c.b16 %v2352, %v2344
        %v3201 = vpack.c.b16 %v2353, %v2345
        %v3202 = vpack.c.b16 %v2354, %v2346
        %v3203 = vpack.c.b16 %v2355, %v2347
        %v3204 = vpack.c.b16 %v2356, %v2348
        %v3205 = vpack.c.b16 %v2357, %v2349
        %v3206 = vpack.c.b16 %v2358, %v2350
        %v3207 = vpack.c.b16 %v2359, %v2351
        %v3208 = vpack.c.b16 %v2368, %v2360
        %v3209 = vpack.c.b16 %v2369, %v2361
        %v3210 = vpack.c.b16 %v2370, %v2362
        %v3211 = vpack.c.b16 %v2371, %v2363
        %v3212 = vpack.c.b16 %v2372, %v2364
        %v3213 = vpack.c.b16 %v2373, %v2365
        %v3214 = vpack.c.b16 %v2374, %v2366
        %v3215 = vpack.c.b16 %v2375, %v2367
        %v3216 = vpack.c.b16 %v2384, %v2376
        %v3217 = vpack.c.b16 %v2385, %v2377
        %v3218 = vpack.c.b16 %v2386, %v2378
        %v3219 = vpack.c.b16 %v2387, %v2379
        %v3220 = vpack.c.b16 %v2388, %v2380
        %v3221 = vpack.c.b16 %v2389, %v2381
        %v3222 = vpack.c.b16 %v2390, %v2382
        %v3223 = vpack.c.b16 %v2391, %v2383
        %v3224 = vpack.c.b16 %v2400, %v2392
        %v3225 = vpack.c.b16 %v2401, %v2393
        %v3226 = vpack.c.b16 %v2402, %v2394
        %v3227 = vpack.c.b16 %v2403, %v2395
        %v3228 = vpack.c.b16 %v2404, %v2396
        %v3229 = vpack.c.b16 %v2405, %v2397
        %v3230 = vpack.c.b16 %v2406, %v2398
        %v3231 = vpack.c.b16 %v2407, %v2399
        %v3232 = vpack.c.b16 %v2416, %v2408
        %v3233 = vpack.c.b16 %v2417, %v2409
        %v3234 = vpack.c.b16 %v2418, %v2410
        %v3235 = vpack.c.b16 %v2419, %v2411
        %v3236 = vpack.c.b16 %v2420, %v2412
        %v3237 = vpack.c.b16 %v2421, %v2413
        %v3238 = vpack.c.b16 %v2422, %v2414
        %v3239 = vpack.c.b16 %v2423, %v2415
        %v3240 = vpack.c.b16 %v2432, %v2424
        %v3241 = vpack.c.b16 %v2433, %v2425
        %v3242 = vpack.c.b16 %v2434, %v2426
        %v3243 = vpack.c.b16 %v2435, %v2427
        %v3244 = vpack.c.b16 %v2436, %v2428
        %v3245 = vpack.c.b16 %v2437, %v2429
        %v3246 = vpack.c.b16 %v2438, %v2430
        %v3247 = vpack.c.b16 %v2439, %v2431
        %v3248 = vpack.c.b16 %v2448, %v2440
        %v3249 = vpack.c.b16 %v2449, %v2441
        %v3250 = vpack.c.b16 %v2450, %v2442
        %v3251 = vpack.c.b16 %v2451, %v2443
        %v3252 = vpack.c.b16 %v2452, %v2444
        %v3253 = vpack.c.b16 %v2453, %v2445
        %v3254 = vpack.c.b16 %v2454, %v2446
        %v3255 = vpack.c.b16 %v2455, %v2447
        %v3256 = vpack.c.b16 %v2464, %v2456
        %v3257 = vpack.c.b16 %v2465, %v2457
        %v3258 = vpack.c.b16 %v2466, %v2458
        %v3259 = vpack.c.b16 %v2467, %v2459
        %v3260 = vpack.c.b16 %v2468, %v2460
        %v3261 = vpack.c.b16 %v2469, %v2461
        %v3262 = vpack.c.b16 %v2470, %v2462
        %v3263 = vpack.c.b16 %v2471, %v2463
        %v3264 = vpack.c.b16 %v2480, %v2472
        %v3265 = vpack.c.b16 %v2481, %v2473
        %v3266 = vpack.c.b16 %v2482, %v2474
        %v3267 = vpack.c.b16 %v2483, %v2475
        %v3268 = vpack.c.b16 %v2484, %v2476
        %v3269 = vpack.c.b16 %v2485, %v2477
        %v3270 = vpack.c.b16 %v2486, %v2478
        %v3271 = vpack.c.b16 %v2487, %v2479
        %v3272 = vpack.c.b16 %v2496, %v2488
        %v3273 = vpack.c.b16 %v2497, %v2489
        %v3274 = vpack.c.b16 %v2498, %v2490
        %v3275 = vpack.c.b16 %v2499, %v2491
        %v3276 = vpack.c.b16 %v2500, %v2492
        %v3277 = vpack.c.b16 %v2501, %v2493
        %v3278 = vpack.c.b16 %v2502, %v2494
        %v3279 = vpack.c.b16 %v2503, %v2495
        %v3280 = vpack.c.b16 %v2512, %v2504
        %v3281 = vpack.c.b16 %v2513, %v2505
        %v3282 = vpack.c.b16 %v2514, %v2506
        %v3283 = vpack.c.b16 %v2515, %v2507
        %v3284 = vpack.c.b16 %v2516, %v2508
        %v3285 = vpack.c.b16 %v2517, %v2509
        %v3286 = vpack.c.b16 %v2518, %v2510
        %v3287 = vpack.c.b16 %v2519, %v2511
        %v3288 = vpack.c.b16 %v2528, %v2520
        %v3289 = vpack.c.b16 %v2529, %v2521
        %v3290 = vpack.c.b16 %v2530, %v2522
        %v3291 = vpack.c.b16 %v2531, %v2523
        %v3292 = vpack.c.b16 %v2532, %v2524
        %v3293 = vpack.c.b16 %v2533, %v2525
        %v3294 = vpack.c.b16 %v2534, %v2526
        %v3295 = vpack.c.b16 %v2535, %v2527
        %v3296 = vpack.c.b16 %v2544, %v2536
        %v3297 = vpack.c.b16 %v2545, %v2537
        %v3298 = vpack.c.b16 %v2546, %v2538
        %v3299 = vpack.c.b16 %v2547, %v2539
        %v3300 = vpack.c.b16 %v2548, %v2540
        %v3301 = vpack.c.b16 %v2549, %v2541
        %v3302 = vpack.c.b16 %v2550, %v2542
        %v3303 = vpack.c.b16 %v2551, %v2543
        %v3304 = vpack.c.b16 %v2560, %v2552
        %v3305 = vpack.c.b16 %v2561, %v2553
        %v3306 = vpack.c.b16 %v2562, %v2554
        %v3307 = vpack.c.b16 %v2563, %v2555
        %v3308 = vpack.c.b16 %v2564, %v2556
        %v3309 = vpack.c.b16 %v2565, %v2557
        %v3310 = vpack.c.b16 %v2566, %v2558
        %v3311 = vpack.c.b16 %v2567, %v2559
        %v3312 = vpack.c.b16 %v2576, %v2568
        %v3313 = vpack.c.b16 %v2577, %v2569
        %v3314 = vpack.c.b16 %v2578, %v2570
        %v3315 = vpack.c.b16 %v2579, %v2571
        %v3316 = vpack.c.b16 %v2580, %v2572
        %v3317 = vpack.c.b16 %v2581, %v2573
        %v3318 = vpack.c.b16 %v2582, %v2574
        %v3319 = vpack.c.b16 %v2583, %v2575
        %v3320 = vpack.c.b16 %v2592, %v2584
        %v3321 = vpack.c.b16 %v2593, %v2585
        %v3322 = vpack.c.b16 %v2594, %v2586
        %v3323 = vpack.c.b16 %v2595, %v2587
        %v3324 = vpack.c.b16 %v2596, %v2588
        %v3325 = vpack.c.b16 %v2597, %v2589
        %v3326 = vpack.c.b16 %v2598, %v2590
        %v3327 = vpack.c.b16 %v2599, %v2591
        %v3328 = vpack.c.b16 %v2608, %v2600
        %v3329 = vpack.c.b16 %v2609, %v2601
        %v3330 = vpack.c.b16 %v2610, %v2602
        %v3331 = vpack.c.b16 %v2611, %v2603
        %v3332 = vpack.c.b16 %v2612, %v2604
        %v3333 = vpack.c.b16 %v2613, %v2605
        %v3334 = vpack.c.b16 %v2614, %v2606
        %v3335 = vpack.c.b16 %v2615, %v2607
        %v3336 = vpack.c.b16 %v2624, %v2616
        %v3337 = vpack.c.b16 %v2625, %v2617
        %v3338 = vpack.c.b16 %v2626, %v2618
        %v3339 = vpack.c.b16 %v2627, %v2619
        %v3340 = vpack.c.b16 %v2628, %v2620
        %v3341 = vpack.c.b16 %v2629, %v2621
        %v3342 = vpack.c.b16 %v2630, %v2622
        %v3343 = vpack.c.b16 %v2631, %v2623
        %v3344 = vpack.c.b16 %v2640, %v2632
        %v3345 = vpack.c.b16 %v2641, %v2633
        %v3346 = vpack.c.b16 %v2642, %v2634
        %v3347 = vpack.c.b16 %v2643, %v2635
        %v3348 = vpack.c.b16 %v2644, %v2636
        %v3349 = vpack.c.b16 %v2645, %v2637
        %v3350 = vpack.c.b16 %v2646, %v2638
        %v3351 = vpack.c.b16 %v2647, %v2639
        %v3352 = vpack.c.b16 %v2656, %v2648
        %v3353 = vpack.c.b16 %v2657, %v2649
        %v3354 = vpack.c.b16 %v2658, %v2650
        %v3355 = vpack.c.b16 %v2659, %v2651
        %v3356 = vpack.c.b16 %v2660, %v2652
        %v3357 = vpack.c.b16 %v2661, %v2653
        %v3358 = vpack.c.b16 %v2662, %v2654
        %v3359 = vpack.c.b16 %v2663, %v2655
        %v3360 = vpack.c.b16 %v2672, %v2664
        %v3361 = vpack.c.b16 %v2673, %v2665
        %v3362 = vpack.c.b16 %v2674, %v2666
        %v3363 = vpack.c.b16 %v2675, %v2667
        %v3364 = vpack.c.b16 %v2676, %v2668
        %v3365 = vpack.c.b16 %v2677, %v2669
        %v3366 = vpack.c.b16 %v2678, %v2670
        %v3367 = vpack.c.b16 %v2679, %v2671
        %v3368 = vpack.c.b16 %v2688, %v2680
        %v3369 = vpack.c.b16 %v2689, %v2681
        %v3370 = vpack.c.b16 %v2690, %v2682
        %v3371 = vpack.c.b16 %v2691, %v2683
        %v3372 = vpack.c.b16 %v2692, %v2684
        %v3373 = vpack.c.b16 %v2693, %v2685
        %v3374 = vpack.c.b16 %v2694, %v2686
        %v3375 = vpack.c.b16 %v2695, %v2687
        %v3376 = vpack.c.b16 %v2704, %v2696
        %v3377 = vpack.c.b16 %v2705, %v2697
        %v3378 = vpack.c.b16 %v2706, %v2698
        %v3379 = vpack.c.b16 %v2707, %v2699
        %v3380 = vpack.c.b16 %v2708, %v2700
        %v3381 = vpack.c.b16 %v2709, %v2701
        %v3382 = vpack.c.b16 %v2710, %v2702
        %v3383 = vpack.c.b16 %v2711, %v2703
        %v3384 = vpack.c.b16 %v2720, %v2712
        %v3385 = vpack.c.b16 %v2721, %v2713
        %v3386 = vpack.c.b16 %v2722, %v2714
        %v3387 = vpack.c.b16 %v2723, %v2715
        %v3388 = vpack.c.b16 %v2724, %v2716
        %v3389 = vpack.c.b16 %v2725, %v2717
        %v3390 = vpack.c.b16 %v2726, %v2718
        %v3391 = vpack.c.b16 %v2727, %v2719
        %v3392 = vpack.c.b16 %v2736, %v2728
        %v3393 = vpack.c.b16 %v2737, %v2729
        %v3394 = vpack.c.b16 %v2738, %v2730
        %v3395 = vpack.c.b16 %v2739, %v2731
        %v3396 = vpack.c.b16 %v2740, %v2732
        %v3397 = vpack.c.b16 %v2741, %v2733
        %v3398 = vpack.c.b16 %v2742, %v2734
        %v3399 = vpack.c.b16 %v2743, %v2735
        %v3400 = vpack.c.b16 %v2752, %v2744
        %v3401 = vpack.c.b16 %v2753, %v2745
        %v3402 = vpack.c.b16 %v2754, %v2746
        %v3403 = vpack.c.b16 %v2755, %v2747
        %v3404 = vpack.c.b16 %v2756, %v2748
        %v3405 = vpack.c.b16 %v2757, %v2749
        %v3406 = vpack.c.b16 %v2758, %v2750
        %v3407 = vpack.c.b16 %v2759, %v2751
        %v3408 = vpack.c.b16 %v2768, %v2760
        %v3409 = vpack.c.b16 %v2769, %v2761
        %v3410 = vpack.c.b16 %v2770, %v2762
        %v3411 = vpack.c.b16 %v2771, %v2763
        %v3412 = vpack.c.b16 %v2772, %v2764
        %v3413 = vpack.c.b16 %v2773, %v2765
        %v3414 = vpack.c.b16 %v2774, %v2766
        %v3415 = vpack.c.b16 %v2775, %v2767
        %v3416 = vpack.c.b16 %v2784, %v2776
        %v3417 = vpack.c.b16 %v2785, %v2777
        %v3418 = vpack.c.b16 %v2786, %v2778
        %v3419 = vpack.c.b16 %v2787, %v2779
        %v3420 = vpack.c.b16 %v2788, %v2780
        %v3421 = vpack.c.b16 %v2789, %v2781
        %v3422 = vpack.c.b16 %v2790, %v2782
        %v3423 = vpack.c.b16 %v2791, %v2783
        %v3424 = vpack.c.b16 %v2800, %v2792
        %v3425 = vpack.c.b16 %v2801, %v2793
        %v3426 = vpack.c.b16 %v2802, %v2794
        %v3427 = vpack.c.b16 %v2803, %v2795
        %v3428 = vpack.c.b16 %v2804, %v2796
        %v3429 = vpack.c.b16 %v2805, %v2797
        %v3430 = vpack.c.b16 %v2806, %v2798
        %v3431 = vpack.c.b16 %v2807, %v2799
        %v3432 = vpack.c.b16 %v2816, %v2808
        %v3433 = vpack.c.b16 %v2817, %v2809
        %v3434 = vpack.c.b16 %v2818, %v2810
        %v3435 = vpack.c.b16 %v2819, %v2811
        %v3436 = vpack.c.b16 %v2820, %v2812
        %v3437 = vpack.c.b16 %v2821, %v2813
        %v3438 = vpack.c.b16 %v2822, %v2814
        %v3439 = vpack.c.b16 %v2823, %v2815
        %v3440 = vpack.c.b16 %v2832, %v2824
        %v3441 = vpack.c.b16 %v2833, %v2825
        %v3442 = vpack.c.b16 %v2834, %v2826
        %v3443 = vpack.c.b16 %v2835, %v2827
        %v3444 = vpack.c.b16 %v2836, %v2828
        %v3445 = vpack.c.b16 %v2837, %v2829
        %v3446 = vpack.c.b16 %v2838, %v2830
        %v3447 = vpack.c.b16 %v2839, %v2831
        %v3448 = vpack.c.b16 %v2848, %v2840
        %v3449 = vpack.c.b16 %v2849, %v2841
        %v3450 = vpack.c.b16 %v2850, %v2842
        %v3451 = vpack.c.b16 %v2851, %v2843
        %v3452 = vpack.c.b16 %v2852, %v2844
        %v3453 = vpack.c.b16 %v2853, %v2845
        %v3454 = vpack.c.b16 %v2854, %v2846
        %v3455 = vpack.c.b16 %v2855, %v2847
        %v3456 = vpack.c.b16 %v2864, %v2856
        %v3457 = vpack.c.b16 %v2865, %v2857
        %v3458 = vpack.c.b16 %v2866, %v2858
        %v3459 = vpack.c.b16 %v2867, %v2859
        %v3460 = vpack.c.b16 %v2868, %v2860
        %v3461 = vpack.c.b16 %v2869, %v2861
        %v3462 = vpack.c.b16 %v2870, %v2862
        %v3463 = vpack.c.b16 %v2871, %v2863
        %v3464 = vpack.c.b16 %v2880, %v2872
        %v3465 = vpack.c.b16 %v2881, %v2873
        %v3466 = vpack.c.b16 %v2882, %v2874
        %v3467 = vpack.c.b16 %v2883, %v2875
        %v3468 = vpack.c.b16 %v2884, %v2876
        %v3469 = vpack.c.b16 %v2885, %v2877
        %v3470 = vpack.c.b16 %v2886, %v2878
        %v3471 = vpack.c.b16 %v2887, %v2879
        %v3472 = vpack.c.b16 %v2896, %v2888
        %v3473 = vpack.c.b16 %v2897, %v2889
        %v3474 = vpack.c.b16 %v2898, %v2890
        %v3475 = vpack.c.b16 %v2899, %v2891
        %v3476 = vpack.c.b16 %v2900, %v2892
        %v3477 = vpack.c.b16 %v2901, %v2893
        %v3478 = vpack.c.b16 %v2902, %v2894
        %v3479 = vpack.c.b16 %v2903, %v2895
        %v3480 = vpack.c.b16 %v2912, %v2904
        %v3481 = vpack.c.b16 %v2913, %v2905
        %v3482 = vpack.c.b16 %v2914, %v2906
        %v3483 = vpack.c.b16 %v2915, %v2907
        %v3484 = vpack.c.b16 %v2916, %v2908
        %v3485 = vpack.c.b16 %v2917, %v2909
        %v3486 = vpack.c.b16 %v2918, %v2910
        %v3487 = vpack.c.b16 %v2919, %v2911
        %v3488 = vpack.c.b16 %v2928, %v2920
        %v3489 = vpack.c.b16 %v2929, %v2921
        %v3490 = vpack.c.b16 %v2930, %v2922
        %v3491 = vpack.c.b16 %v2931, %v2923
        %v3492 = vpack.c.b16 %v2932, %v2924
        %v3493 = vpack.c.b16 %v2933, %v2925
        %v3494 = vpack.c.b16 %v2934, %v2926
        %v3495 = vpack.c.b16 %v2935, %v2927
        %v3496 = vpack.c.b16 %v2944, %v2936
        %v3497 = vpack.c.b16 %v2945, %v2937
        %v3498 = vpack.c.b16 %v2946, %v2938
        %v3499 = vpack.c.b16 %v2947, %v2939
        %v3500 = vpack.c.b16 %v2948, %v2940
        %v3501 = vpack.c.b16 %v2949, %v2941
        %v3502 = vpack.c.b16 %v2950, %v2942
        %v3503 = vpack.c.b16 %v2951, %v2943
        %v3504 = vpack.c.b16 %v2960, %v2952
        %v3505 = vpack.c.b16 %v2961, %v2953
        %v3506 = vpack.c.b16 %v2962, %v2954
        %v3507 = vpack.c.b16 %v2963, %v2955
        %v3508 = vpack.c.b16 %v2964, %v2956
        %v3509 = vpack.c.b16 %v2965, %v2957
        %v3510 = vpack.c.b16 %v2966, %v2958
        %v3511 = vpack.c.b16 %v2967, %v2959
        %v3512 = vpack.c.b16 %v2976, %v2968
        %v3513 = vpack.c.b16 %v2977, %v2969
        %v3514 = vpack.c.b16 %v2978, %v2970
        %v3515 = vpack.c.b16 %v2979, %v2971
        %v3516 = vpack.c.b16 %v2980, %v2972
        %v3517 = vpack.c.b16 %v2981, %v2973
        %v3518 = vpack.c.b16 %v2982, %v2974
        %v3519 = vpack.c.b16 %v2983, %v2975
        %v3520 = vpack.c.b16 %v2992, %v2984
        %v3521 = vpack.c.b16 %v2993, %v2985
        %v3522 = vpack.c.b16 %v2994, %v2986
        %v3523 = vpack.c.b16 %v2995, %v2987
        %v3524 = vpack.c.b16 %v2996, %v2988
        %v3525 = vpack.c.b16 %v2997, %v2989
        %v3526 = vpack.c.b16 %v2998, %v2990
        %v3527 = vpack.c.b16 %v2999, %v2991
        %v3528 = vpack.c.b16 %v3008, %v3000
        %v3529 = vpack.c.b16 %v3009, %v3001
        %v3530 = vpack.c.b16 %v3010, %v3002
        %v3531 = vpack.c.b16 %v3011, %v3003
        %v3532 = vpack.c.b16 %v3012, %v3004
        %v3533 = vpack.c.b16 %v3013, %v3005
        %v3534 = vpack.c.b16 %v3014, %v3006
        %v3535 = vpack.c.b16 %v3015, %v3007
        %v3536 = vpack.c.b16 %v3024, %v3016
        %v3537 = vpack.c.b16 %v3025, %v3017
        %v3538 = vpack.c.b16 %v3026, %v3018
        %v3539 = vpack.c.b16 %v3027, %v3019
        %v3540 = vpack.c.b16 %v3028, %v3020
        %v3541 = vpack.c.b16 %v3029, %v3021
        %v3542 = vpack.c.b16 %v3030, %v3022
        %v3543 = vpack.c.b16 %v3031, %v3023
        %4056 = vmatpush.bf16.msra.mxu0 %v3088
        %4057 = vmatpush.bf16.msra.mxu0 %v3080
        %4058 = vmatpush.bf16.msra.mxu0 %v3072
        %4059 = vmatpush.bf16.msra.mxu0 %v3064
        %4060 = vmatpush.bf16.msra.mxu0 %v3056
        %4061 = vmatpush.bf16.msra.mxu0 %v3048
        %4062 = vmatpush.bf16.msra.mxu0 %v3040
        %4063 = vmatpush.bf16.msra.mxu0 %v3032
        %4064 = vmatmul.bf16.gmra.mxu0 %v958
        %v4065 = vpop.f32.mrf.mxu0
        %v4066 = vadd.f32 %v1480, %v4065
        %v4067 = vpop.f32.mrf.mxu0
        %4068 = vdwg.mxu0
        %4069 = vmatpush.bf16.msra.mxu0 %v3152
        %4070 = vmatpush.bf16.msra.mxu0 %v3144
        %4071 = vmatpush.bf16.msra.mxu0 %v3136
        %4072 = vmatpush.bf16.msra.mxu0 %v3128
        %4073 = vmatpush.bf16.msra.mxu0 %v3120
        %4074 = vmatpush.bf16.msra.mxu0 %v3112
        %4075 = vmatpush.bf16.msra.mxu0 %v3104
        %4076 = vmatpush.bf16.msra.mxu0 %v3096
        %4077 = vmatmul.bf16.gmra.mxu0 %v959
        %v4078 = vpop.f32.mrf.mxu0
        %v4079 = vadd.f32 %v4066, %v4078
        %v4080 = vpop.f32.mrf.mxu0
        %4081 = vdwg.mxu0
        %4082 = vmatpush.bf16.msra.mxu0 %v3216
        %4083 = vmatpush.bf16.msra.mxu0 %v3208
        %4084 = vmatpush.bf16.msra.mxu0 %v3200
        %4085 = vmatpush.bf16.msra.mxu0 %v3192
        %4086 = vmatpush.bf16.msra.mxu0 %v3184
        %4087 = vmatpush.bf16.msra.mxu0 %v3176
        %4088 = vmatpush.bf16.msra.mxu0 %v3168
        %4089 = vmatpush.bf16.msra.mxu0 %v3160
        %4090 = vmatmul.bf16.gmra.mxu0 %v960
        %v4091 = vpop.f32.mrf.mxu0
        %v4092 = vadd.f32 %v4079, %v4091
        %v4093 = vpop.f32.mrf.mxu0
        %4094 = vdwg.mxu0
        %4095 = vmatpush.bf16.msra.mxu0 %v3280
        %4096 = vmatpush.bf16.msra.mxu0 %v3272
        %4097 = vmatpush.bf16.msra.mxu0 %v3264
        %4098 = vmatpush.bf16.msra.mxu0 %v3256
        %4099 = vmatpush.bf16.msra.mxu0 %v3248
        %4100 = vmatpush.bf16.msra.mxu0 %v3240
        %4101 = vmatpush.bf16.msra.mxu0 %v3232
        %4102 = vmatpush.bf16.msra.mxu0 %v3224
        %4103 = vmatmul.bf16.gmra.mxu0 %v961
        %v4104 = vpop.f32.mrf.mxu0
        %v4105 = vadd.f32 %v4092, %v4104
        %v4106 = vpop.f32.mrf.mxu0
        %4107 = vdwg.mxu0
        %4108 = vmatpush.bf16.msra.mxu0 %v3344
        %4109 = vmatpush.bf16.msra.mxu0 %v3336
        %4110 = vmatpush.bf16.msra.mxu0 %v3328
        %4111 = vmatpush.bf16.msra.mxu0 %v3320
        %4112 = vmatpush.bf16.msra.mxu0 %v3312
        %4113 = vmatpush.bf16.msra.mxu0 %v3304
        %4114 = vmatpush.bf16.msra.mxu0 %v3296
        %4115 = vmatpush.bf16.msra.mxu0 %v3288
        %4116 = vmatmul.bf16.gmra.mxu0 %v962
        %v4117 = vpop.f32.mrf.mxu0
        %v4118 = vadd.f32 %v4105, %v4117
        %v4119 = vpop.f32.mrf.mxu0
        %4120 = vdwg.mxu0
        %4121 = vmatpush.bf16.msra.mxu0 %v3408
        %4122 = vmatpush.bf16.msra.mxu0 %v3400
        %4123 = vmatpush.bf16.msra.mxu0 %v3392
        %4124 = vmatpush.bf16.msra.mxu0 %v3384
        %4125 = vmatpush.bf16.msra.mxu0 %v3376
        %4126 = vmatpush.bf16.msra.mxu0 %v3368
        %4127 = vmatpush.bf16.msra.mxu0 %v3360
        %4128 = vmatpush.bf16.msra.mxu0 %v3352
        %4129 = vmatmul.bf16.gmra.mxu0 %v963
        %v4130 = vpop.f32.mrf.mxu0
        %v4131 = vadd.f32 %v4118, %v4130
        %v4132 = vpop.f32.mrf.mxu0
        %4133 = vdwg.mxu0
        %4134 = vmatpush.bf16.msra.mxu0 %v3472
        %4135 = vmatpush.bf16.msra.mxu0 %v3464
        %4136 = vmatpush.bf16.msra.mxu0 %v3456
        %4137 = vmatpush.bf16.msra.mxu0 %v3448
        %4138 = vmatpush.bf16.msra.mxu0 %v3440
        %4139 = vmatpush.bf16.msra.mxu0 %v3432
        %4140 = vmatpush.bf16.msra.mxu0 %v3424
        %4141 = vmatpush.bf16.msra.mxu0 %v3416
        %4142 = vmatmul.bf16.gmra.mxu0 %v964
        %v4143 = vpop.f32.mrf.mxu0
        %v4144 = vadd.f32 %v4131, %v4143
        %v4145 = vpop.f32.mrf.mxu0
        %4146 = vdwg.mxu0
        %4147 = vmatpush.bf16.msra.mxu0 %v3536
        %4148 = vmatpush.bf16.msra.mxu0 %v3528
        %4149 = vmatpush.bf16.msra.mxu0 %v3520
        %4150 = vmatpush.bf16.msra.mxu0 %v3512
        %4151 = vmatpush.bf16.msra.mxu0 %v3504
        %4152 = vmatpush.bf16.msra.mxu0 %v3496
        %4153 = vmatpush.bf16.msra.mxu0 %v3488
        %4154 = vmatpush.bf16.msra.mxu0 %v3480
        %4155 = vmatmul.bf16.gmra.mxu0 %v965
        %v4156 = vpop.f32.mrf.mxu0
        %v4157 = vadd.f32 %v4144, %v4156
        %v4158 = vpop.f32.mrf.mxu0
        %4159 = vdwg.mxu0
        %4160 = vmatpush.bf16.msra.mxu0 %v3089
        %4161 = vmatpush.bf16.msra.mxu0 %v3081
        %4162 = vmatpush.bf16.msra.mxu0 %v3073
        %4163 = vmatpush.bf16.msra.mxu0 %v3065
        %4164 = vmatpush.bf16.msra.mxu0 %v3057
        %4165 = vmatpush.bf16.msra.mxu0 %v3049
        %4166 = vmatpush.bf16.msra.mxu0 %v3041
        %4167 = vmatpush.bf16.msra.mxu0 %v3033
        %4168 = vmatmul.bf16.gmra.mxu0 %v958
        %v4169 = vpop.f32.mrf.mxu0
        %v4170 = vadd.f32 %v1481, %v4169
        %v4171 = vpop.f32.mrf.mxu0
        %4172 = vdwg.mxu0
        %4173 = vmatpush.bf16.msra.mxu0 %v3153
        %4174 = vmatpush.bf16.msra.mxu0 %v3145
        %4175 = vmatpush.bf16.msra.mxu0 %v3137
        %4176 = vmatpush.bf16.msra.mxu0 %v3129
        %4177 = vmatpush.bf16.msra.mxu0 %v3121
        %4178 = vmatpush.bf16.msra.mxu0 %v3113
        %4179 = vmatpush.bf16.msra.mxu0 %v3105
        %4180 = vmatpush.bf16.msra.mxu0 %v3097
        %4181 = vmatmul.bf16.gmra.mxu0 %v959
        %v4182 = vpop.f32.mrf.mxu0
        %v4183 = vadd.f32 %v4170, %v4182
        %v4184 = vpop.f32.mrf.mxu0
        %4185 = vdwg.mxu0
        %4186 = vmatpush.bf16.msra.mxu0 %v3217
        %4187 = vmatpush.bf16.msra.mxu0 %v3209
        %4188 = vmatpush.bf16.msra.mxu0 %v3201
        %4189 = vmatpush.bf16.msra.mxu0 %v3193
        %4190 = vmatpush.bf16.msra.mxu0 %v3185
        %4191 = vmatpush.bf16.msra.mxu0 %v3177
        %4192 = vmatpush.bf16.msra.mxu0 %v3169
        %4193 = vmatpush.bf16.msra.mxu0 %v3161
        %4194 = vmatmul.bf16.gmra.mxu0 %v960
        %v4195 = vpop.f32.mrf.mxu0
        %v4196 = vadd.f32 %v4183, %v4195
        %v4197 = vpop.f32.mrf.mxu0
        %4198 = vdwg.mxu0
        %4199 = vmatpush.bf16.msra.mxu0 %v3281
        %4200 = vmatpush.bf16.msra.mxu0 %v3273
        %4201 = vmatpush.bf16.msra.mxu0 %v3265
        %4202 = vmatpush.bf16.msra.mxu0 %v3257
        %4203 = vmatpush.bf16.msra.mxu0 %v3249
        %4204 = vmatpush.bf16.msra.mxu0 %v3241
        %4205 = vmatpush.bf16.msra.mxu0 %v3233
        %4206 = vmatpush.bf16.msra.mxu0 %v3225
        %4207 = vmatmul.bf16.gmra.mxu0 %v961
        %v4208 = vpop.f32.mrf.mxu0
        %v4209 = vadd.f32 %v4196, %v4208
        %v4210 = vpop.f32.mrf.mxu0
        %4211 = vdwg.mxu0
        %4212 = vmatpush.bf16.msra.mxu0 %v3345
        %4213 = vmatpush.bf16.msra.mxu0 %v3337
        %4214 = vmatpush.bf16.msra.mxu0 %v3329
        %4215 = vmatpush.bf16.msra.mxu0 %v3321
        %4216 = vmatpush.bf16.msra.mxu0 %v3313
        %4217 = vmatpush.bf16.msra.mxu0 %v3305
        %4218 = vmatpush.bf16.msra.mxu0 %v3297
        %4219 = vmatpush.bf16.msra.mxu0 %v3289
        %4220 = vmatmul.bf16.gmra.mxu0 %v962
        %v4221 = vpop.f32.mrf.mxu0
        %v4222 = vadd.f32 %v4209, %v4221
        %v4223 = vpop.f32.mrf.mxu0
        %4224 = vdwg.mxu0
        %4225 = vmatpush.bf16.msra.mxu0 %v3409
        %4226 = vmatpush.bf16.msra.mxu0 %v3401
        %4227 = vmatpush.bf16.msra.mxu0 %v3393
        %4228 = vmatpush.bf16.msra.mxu0 %v3385
        %4229 = vmatpush.bf16.msra.mxu0 %v3377
        %4230 = vmatpush.bf16.msra.mxu0 %v3369
        %4231 = vmatpush.bf16.msra.mxu0 %v3361
        %4232 = vmatpush.bf16.msra.mxu0 %v3353
        %4233 = vmatmul.bf16.gmra.mxu0 %v963
        %v4234 = vpop.f32.mrf.mxu0
        %v4235 = vadd.f32 %v4222, %v4234
        %v4236 = vpop.f32.mrf.mxu0
        %4237 = vdwg.mxu0
        %4238 = vmatpush.bf16.msra.mxu0 %v3473
        %4239 = vmatpush.bf16.msra.mxu0 %v3465
        %4240 = vmatpush.bf16.msra.mxu0 %v3457
        %4241 = vmatpush.bf16.msra.mxu0 %v3449
        %4242 = vmatpush.bf16.msra.mxu0 %v3441
        %4243 = vmatpush.bf16.msra.mxu0 %v3433
        %4244 = vmatpush.bf16.msra.mxu0 %v3425
        %4245 = vmatpush.bf16.msra.mxu0 %v3417
        %4246 = vmatmul.bf16.gmra.mxu0 %v964
        %v4247 = vpop.f32.mrf.mxu0
        %v4248 = vadd.f32 %v4235, %v4247
        %v4249 = vpop.f32.mrf.mxu0
        %4250 = vdwg.mxu0
        %4251 = vmatpush.bf16.msra.mxu0 %v3537
        %4252 = vmatpush.bf16.msra.mxu0 %v3529
        %4253 = vmatpush.bf16.msra.mxu0 %v3521
        %4254 = vmatpush.bf16.msra.mxu0 %v3513
        %4255 = vmatpush.bf16.msra.mxu0 %v3505
        %4256 = vmatpush.bf16.msra.mxu0 %v3497
        %4257 = vmatpush.bf16.msra.mxu0 %v3489
        %4258 = vmatpush.bf16.msra.mxu0 %v3481
        %4259 = vmatmul.bf16.gmra.mxu0 %v965
        %v4260 = vpop.f32.mrf.mxu0
        %v4261 = vadd.f32 %v4248, %v4260
        %v4262 = vpop.f32.mrf.mxu0
        %4263 = vdwg.mxu0
        %4264 = vmatpush.bf16.msra.mxu0 %v3090
        %4265 = vmatpush.bf16.msra.mxu0 %v3082
        %4266 = vmatpush.bf16.msra.mxu0 %v3074
        %4267 = vmatpush.bf16.msra.mxu0 %v3066
        %4268 = vmatpush.bf16.msra.mxu0 %v3058
        %4269 = vmatpush.bf16.msra.mxu0 %v3050
        %4270 = vmatpush.bf16.msra.mxu0 %v3042
        %4271 = vmatpush.bf16.msra.mxu0 %v3034
        %4272 = vmatmul.bf16.gmra.mxu0 %v958
        %v4273 = vpop.f32.mrf.mxu0
        %v4274 = vadd.f32 %v1482, %v4273
        %v4275 = vpop.f32.mrf.mxu0
        %4276 = vdwg.mxu0
        %4277 = vmatpush.bf16.msra.mxu0 %v3154
        %4278 = vmatpush.bf16.msra.mxu0 %v3146
        %4279 = vmatpush.bf16.msra.mxu0 %v3138
        %4280 = vmatpush.bf16.msra.mxu0 %v3130
        %4281 = vmatpush.bf16.msra.mxu0 %v3122
        %4282 = vmatpush.bf16.msra.mxu0 %v3114
        %4283 = vmatpush.bf16.msra.mxu0 %v3106
        %4284 = vmatpush.bf16.msra.mxu0 %v3098
        %4285 = vmatmul.bf16.gmra.mxu0 %v959
        %v4286 = vpop.f32.mrf.mxu0
        %v4287 = vadd.f32 %v4274, %v4286
        %v4288 = vpop.f32.mrf.mxu0
        %4289 = vdwg.mxu0
        %4290 = vmatpush.bf16.msra.mxu0 %v3218
        %4291 = vmatpush.bf16.msra.mxu0 %v3210
        %4292 = vmatpush.bf16.msra.mxu0 %v3202
        %4293 = vmatpush.bf16.msra.mxu0 %v3194
        %4294 = vmatpush.bf16.msra.mxu0 %v3186
        %4295 = vmatpush.bf16.msra.mxu0 %v3178
        %4296 = vmatpush.bf16.msra.mxu0 %v3170
        %4297 = vmatpush.bf16.msra.mxu0 %v3162
        %4298 = vmatmul.bf16.gmra.mxu0 %v960
        %v4299 = vpop.f32.mrf.mxu0
        %v4300 = vadd.f32 %v4287, %v4299
        %v4301 = vpop.f32.mrf.mxu0
        %4302 = vdwg.mxu0
        %4303 = vmatpush.bf16.msra.mxu0 %v3282
        %4304 = vmatpush.bf16.msra.mxu0 %v3274
        %4305 = vmatpush.bf16.msra.mxu0 %v3266
        %4306 = vmatpush.bf16.msra.mxu0 %v3258
        %4307 = vmatpush.bf16.msra.mxu0 %v3250
        %4308 = vmatpush.bf16.msra.mxu0 %v3242
        %4309 = vmatpush.bf16.msra.mxu0 %v3234
        %4310 = vmatpush.bf16.msra.mxu0 %v3226
        %4311 = vmatmul.bf16.gmra.mxu0 %v961
        %v4312 = vpop.f32.mrf.mxu0
        %v4313 = vadd.f32 %v4300, %v4312
        %v4314 = vpop.f32.mrf.mxu0
        %4315 = vdwg.mxu0
        %4316 = vmatpush.bf16.msra.mxu0 %v3346
        %4317 = vmatpush.bf16.msra.mxu0 %v3338
        %4318 = vmatpush.bf16.msra.mxu0 %v3330
        %4319 = vmatpush.bf16.msra.mxu0 %v3322
        %4320 = vmatpush.bf16.msra.mxu0 %v3314
        %4321 = vmatpush.bf16.msra.mxu0 %v3306
        %4322 = vmatpush.bf16.msra.mxu0 %v3298
        %4323 = vmatpush.bf16.msra.mxu0 %v3290
        %4324 = vmatmul.bf16.gmra.mxu0 %v962
        %v4325 = vpop.f32.mrf.mxu0
        %v4326 = vadd.f32 %v4313, %v4325
        %v4327 = vpop.f32.mrf.mxu0
        %4328 = vdwg.mxu0
        %4329 = vmatpush.bf16.msra.mxu0 %v3410
        %4330 = vmatpush.bf16.msra.mxu0 %v3402
        %4331 = vmatpush.bf16.msra.mxu0 %v3394
        %4332 = vmatpush.bf16.msra.mxu0 %v3386
        %4333 = vmatpush.bf16.msra.mxu0 %v3378
        %4334 = vmatpush.bf16.msra.mxu0 %v3370
        %4335 = vmatpush.bf16.msra.mxu0 %v3362
        %4336 = vmatpush.bf16.msra.mxu0 %v3354
        %4337 = vmatmul.bf16.gmra.mxu0 %v963
        %v4338 = vpop.f32.mrf.mxu0
        %v4339 = vadd.f32 %v4326, %v4338
        %v4340 = vpop.f32.mrf.mxu0
        %4341 = vdwg.mxu0
        %4342 = vmatpush.bf16.msra.mxu0 %v3474
        %4343 = vmatpush.bf16.msra.mxu0 %v3466
        %4344 = vmatpush.bf16.msra.mxu0 %v3458
        %4345 = vmatpush.bf16.msra.mxu0 %v3450
        %4346 = vmatpush.bf16.msra.mxu0 %v3442
        %4347 = vmatpush.bf16.msra.mxu0 %v3434
        %4348 = vmatpush.bf16.msra.mxu0 %v3426
        %4349 = vmatpush.bf16.msra.mxu0 %v3418
        %4350 = vmatmul.bf16.gmra.mxu0 %v964
        %v4351 = vpop.f32.mrf.mxu0
        %v4352 = vadd.f32 %v4339, %v4351
        %v4353 = vpop.f32.mrf.mxu0
        %4354 = vdwg.mxu0
        %4355 = vmatpush.bf16.msra.mxu0 %v3538
        %4356 = vmatpush.bf16.msra.mxu0 %v3530
        %4357 = vmatpush.bf16.msra.mxu0 %v3522
        %4358 = vmatpush.bf16.msra.mxu0 %v3514
        %4359 = vmatpush.bf16.msra.mxu0 %v3506
        %4360 = vmatpush.bf16.msra.mxu0 %v3498
        %4361 = vmatpush.bf16.msra.mxu0 %v3490
        %4362 = vmatpush.bf16.msra.mxu0 %v3482
        %4363 = vmatmul.bf16.gmra.mxu0 %v965
        %v4364 = vpop.f32.mrf.mxu0
        %v4365 = vadd.f32 %v4352, %v4364
        %v4366 = vpop.f32.mrf.mxu0
        %4367 = vdwg.mxu0
        %4368 = vmatpush.bf16.msra.mxu0 %v3091
        %4369 = vmatpush.bf16.msra.mxu0 %v3083
        %4370 = vmatpush.bf16.msra.mxu0 %v3075
        %4371 = vmatpush.bf16.msra.mxu0 %v3067
        %4372 = vmatpush.bf16.msra.mxu0 %v3059
        %4373 = vmatpush.bf16.msra.mxu0 %v3051
        %4374 = vmatpush.bf16.msra.mxu0 %v3043
        %4375 = vmatpush.bf16.msra.mxu0 %v3035
        %4376 = vmatmul.bf16.gmra.mxu0 %v958
        %v4377 = vpop.f32.mrf.mxu0
        %v4378 = vadd.f32 %v1483, %v4377
        %v4379 = vpop.f32.mrf.mxu0
        %4380 = vdwg.mxu0
        %4381 = vmatpush.bf16.msra.mxu0 %v3155
        %4382 = vmatpush.bf16.msra.mxu0 %v3147
        %4383 = vmatpush.bf16.msra.mxu0 %v3139
        %4384 = vmatpush.bf16.msra.mxu0 %v3131
        %4385 = vmatpush.bf16.msra.mxu0 %v3123
        %4386 = vmatpush.bf16.msra.mxu0 %v3115
        %4387 = vmatpush.bf16.msra.mxu0 %v3107
        %4388 = vmatpush.bf16.msra.mxu0 %v3099
        %4389 = vmatmul.bf16.gmra.mxu0 %v959
        %v4390 = vpop.f32.mrf.mxu0
        %v4391 = vadd.f32 %v4378, %v4390
        %v4392 = vpop.f32.mrf.mxu0
        %4393 = vdwg.mxu0
        %4394 = vmatpush.bf16.msra.mxu0 %v3219
        %4395 = vmatpush.bf16.msra.mxu0 %v3211
        %4396 = vmatpush.bf16.msra.mxu0 %v3203
        %4397 = vmatpush.bf16.msra.mxu0 %v3195
        %4398 = vmatpush.bf16.msra.mxu0 %v3187
        %4399 = vmatpush.bf16.msra.mxu0 %v3179
        %4400 = vmatpush.bf16.msra.mxu0 %v3171
        %4401 = vmatpush.bf16.msra.mxu0 %v3163
        %4402 = vmatmul.bf16.gmra.mxu0 %v960
        %v4403 = vpop.f32.mrf.mxu0
        %v4404 = vadd.f32 %v4391, %v4403
        %v4405 = vpop.f32.mrf.mxu0
        %4406 = vdwg.mxu0
        %4407 = vmatpush.bf16.msra.mxu0 %v3283
        %4408 = vmatpush.bf16.msra.mxu0 %v3275
        %4409 = vmatpush.bf16.msra.mxu0 %v3267
        %4410 = vmatpush.bf16.msra.mxu0 %v3259
        %4411 = vmatpush.bf16.msra.mxu0 %v3251
        %4412 = vmatpush.bf16.msra.mxu0 %v3243
        %4413 = vmatpush.bf16.msra.mxu0 %v3235
        %4414 = vmatpush.bf16.msra.mxu0 %v3227
        %4415 = vmatmul.bf16.gmra.mxu0 %v961
        %v4416 = vpop.f32.mrf.mxu0
        %v4417 = vadd.f32 %v4404, %v4416
        %v4418 = vpop.f32.mrf.mxu0
        %4419 = vdwg.mxu0
        %4420 = vmatpush.bf16.msra.mxu0 %v3347
        %4421 = vmatpush.bf16.msra.mxu0 %v3339
        %4422 = vmatpush.bf16.msra.mxu0 %v3331
        %4423 = vmatpush.bf16.msra.mxu0 %v3323
        %4424 = vmatpush.bf16.msra.mxu0 %v3315
        %4425 = vmatpush.bf16.msra.mxu0 %v3307
        %4426 = vmatpush.bf16.msra.mxu0 %v3299
        %4427 = vmatpush.bf16.msra.mxu0 %v3291
        %4428 = vmatmul.bf16.gmra.mxu0 %v962
        %v4429 = vpop.f32.mrf.mxu0
        %v4430 = vadd.f32 %v4417, %v4429
        %v4431 = vpop.f32.mrf.mxu0
        %4432 = vdwg.mxu0
        %4433 = vmatpush.bf16.msra.mxu0 %v3411
        %4434 = vmatpush.bf16.msra.mxu0 %v3403
        %4435 = vmatpush.bf16.msra.mxu0 %v3395
        %4436 = vmatpush.bf16.msra.mxu0 %v3387
        %4437 = vmatpush.bf16.msra.mxu0 %v3379
        %4438 = vmatpush.bf16.msra.mxu0 %v3371
        %4439 = vmatpush.bf16.msra.mxu0 %v3363
        %4440 = vmatpush.bf16.msra.mxu0 %v3355
        %4441 = vmatmul.bf16.gmra.mxu0 %v963
        %v4442 = vpop.f32.mrf.mxu0
        %v4443 = vadd.f32 %v4430, %v4442
        %v4444 = vpop.f32.mrf.mxu0
        %4445 = vdwg.mxu0
        %4446 = vmatpush.bf16.msra.mxu0 %v3475
        %4447 = vmatpush.bf16.msra.mxu0 %v3467
        %4448 = vmatpush.bf16.msra.mxu0 %v3459
        %4449 = vmatpush.bf16.msra.mxu0 %v3451
        %4450 = vmatpush.bf16.msra.mxu0 %v3443
        %4451 = vmatpush.bf16.msra.mxu0 %v3435
        %4452 = vmatpush.bf16.msra.mxu0 %v3427
        %4453 = vmatpush.bf16.msra.mxu0 %v3419
        %4454 = vmatmul.bf16.gmra.mxu0 %v964
        %v4455 = vpop.f32.mrf.mxu0
        %v4456 = vadd.f32 %v4443, %v4455
        %v4457 = vpop.f32.mrf.mxu0
        %4458 = vdwg.mxu0
        %4459 = vmatpush.bf16.msra.mxu0 %v3539
        %4460 = vmatpush.bf16.msra.mxu0 %v3531
        %4461 = vmatpush.bf16.msra.mxu0 %v3523
        %4462 = vmatpush.bf16.msra.mxu0 %v3515
        %4463 = vmatpush.bf16.msra.mxu0 %v3507
        %4464 = vmatpush.bf16.msra.mxu0 %v3499
        %4465 = vmatpush.bf16.msra.mxu0 %v3491
        %4466 = vmatpush.bf16.msra.mxu0 %v3483
        %4467 = vmatmul.bf16.gmra.mxu0 %v965
        %v4468 = vpop.f32.mrf.mxu0
        %v4469 = vadd.f32 %v4456, %v4468
        %v4470 = vpop.f32.mrf.mxu0
        %4471 = vdwg.mxu0
        %4472 = vmatpush.bf16.msra.mxu0 %v3092
        %4473 = vmatpush.bf16.msra.mxu0 %v3084
        %4474 = vmatpush.bf16.msra.mxu0 %v3076
        %4475 = vmatpush.bf16.msra.mxu0 %v3068
        %4476 = vmatpush.bf16.msra.mxu0 %v3060
        %4477 = vmatpush.bf16.msra.mxu0 %v3052
        %4478 = vmatpush.bf16.msra.mxu0 %v3044
        %4479 = vmatpush.bf16.msra.mxu0 %v3036
        %4480 = vmatmul.bf16.gmra.mxu0 %v958
        %v4481 = vpop.f32.mrf.mxu0
        %v4482 = vadd.f32 %v1484, %v4481
        %v4483 = vpop.f32.mrf.mxu0
        %4484 = vdwg.mxu0
        %4485 = vmatpush.bf16.msra.mxu0 %v3156
        %4486 = vmatpush.bf16.msra.mxu0 %v3148
        %4487 = vmatpush.bf16.msra.mxu0 %v3140
        %4488 = vmatpush.bf16.msra.mxu0 %v3132
        %4489 = vmatpush.bf16.msra.mxu0 %v3124
        %4490 = vmatpush.bf16.msra.mxu0 %v3116
        %4491 = vmatpush.bf16.msra.mxu0 %v3108
        %4492 = vmatpush.bf16.msra.mxu0 %v3100
        %4493 = vmatmul.bf16.gmra.mxu0 %v959
        %v4494 = vpop.f32.mrf.mxu0
        %v4495 = vadd.f32 %v4482, %v4494
        %v4496 = vpop.f32.mrf.mxu0
        %4497 = vdwg.mxu0
        %4498 = vmatpush.bf16.msra.mxu0 %v3220
        %4499 = vmatpush.bf16.msra.mxu0 %v3212
        %4500 = vmatpush.bf16.msra.mxu0 %v3204
        %4501 = vmatpush.bf16.msra.mxu0 %v3196
        %4502 = vmatpush.bf16.msra.mxu0 %v3188
        %4503 = vmatpush.bf16.msra.mxu0 %v3180
        %4504 = vmatpush.bf16.msra.mxu0 %v3172
        %4505 = vmatpush.bf16.msra.mxu0 %v3164
        %4506 = vmatmul.bf16.gmra.mxu0 %v960
        %v4507 = vpop.f32.mrf.mxu0
        %v4508 = vadd.f32 %v4495, %v4507
        %v4509 = vpop.f32.mrf.mxu0
        %4510 = vdwg.mxu0
        %4511 = vmatpush.bf16.msra.mxu0 %v3284
        %4512 = vmatpush.bf16.msra.mxu0 %v3276
        %4513 = vmatpush.bf16.msra.mxu0 %v3268
        %4514 = vmatpush.bf16.msra.mxu0 %v3260
        %4515 = vmatpush.bf16.msra.mxu0 %v3252
        %4516 = vmatpush.bf16.msra.mxu0 %v3244
        %4517 = vmatpush.bf16.msra.mxu0 %v3236
        %4518 = vmatpush.bf16.msra.mxu0 %v3228
        %4519 = vmatmul.bf16.gmra.mxu0 %v961
        %v4520 = vpop.f32.mrf.mxu0
        %v4521 = vadd.f32 %v4508, %v4520
        %v4522 = vpop.f32.mrf.mxu0
        %4523 = vdwg.mxu0
        %4524 = vmatpush.bf16.msra.mxu0 %v3348
        %4525 = vmatpush.bf16.msra.mxu0 %v3340
        %4526 = vmatpush.bf16.msra.mxu0 %v3332
        %4527 = vmatpush.bf16.msra.mxu0 %v3324
        %4528 = vmatpush.bf16.msra.mxu0 %v3316
        %4529 = vmatpush.bf16.msra.mxu0 %v3308
        %4530 = vmatpush.bf16.msra.mxu0 %v3300
        %4531 = vmatpush.bf16.msra.mxu0 %v3292
        %4532 = vmatmul.bf16.gmra.mxu0 %v962
        %v4533 = vpop.f32.mrf.mxu0
        %v4534 = vadd.f32 %v4521, %v4533
        %v4535 = vpop.f32.mrf.mxu0
        %4536 = vdwg.mxu0
        %4537 = vmatpush.bf16.msra.mxu0 %v3412
        %4538 = vmatpush.bf16.msra.mxu0 %v3404
        %4539 = vmatpush.bf16.msra.mxu0 %v3396
        %4540 = vmatpush.bf16.msra.mxu0 %v3388
        %4541 = vmatpush.bf16.msra.mxu0 %v3380
        %4542 = vmatpush.bf16.msra.mxu0 %v3372
        %4543 = vmatpush.bf16.msra.mxu0 %v3364
        %4544 = vmatpush.bf16.msra.mxu0 %v3356
        %4545 = vmatmul.bf16.gmra.mxu0 %v963
        %v4546 = vpop.f32.mrf.mxu0
        %v4547 = vadd.f32 %v4534, %v4546
        %v4548 = vpop.f32.mrf.mxu0
        %4549 = vdwg.mxu0
        %4550 = vmatpush.bf16.msra.mxu0 %v3476
        %4551 = vmatpush.bf16.msra.mxu0 %v3468
        %4552 = vmatpush.bf16.msra.mxu0 %v3460
        %4553 = vmatpush.bf16.msra.mxu0 %v3452
        %4554 = vmatpush.bf16.msra.mxu0 %v3444
        %4555 = vmatpush.bf16.msra.mxu0 %v3436
        %4556 = vmatpush.bf16.msra.mxu0 %v3428
        %4557 = vmatpush.bf16.msra.mxu0 %v3420
        %4558 = vmatmul.bf16.gmra.mxu0 %v964
        %v4559 = vpop.f32.mrf.mxu0
        %v4560 = vadd.f32 %v4547, %v4559
        %v4561 = vpop.f32.mrf.mxu0
        %4562 = vdwg.mxu0
        %4563 = vmatpush.bf16.msra.mxu0 %v3540
        %4564 = vmatpush.bf16.msra.mxu0 %v3532
        %4565 = vmatpush.bf16.msra.mxu0 %v3524
        %4566 = vmatpush.bf16.msra.mxu0 %v3516
        %4567 = vmatpush.bf16.msra.mxu0 %v3508
        %4568 = vmatpush.bf16.msra.mxu0 %v3500
        %4569 = vmatpush.bf16.msra.mxu0 %v3492
        %4570 = vmatpush.bf16.msra.mxu0 %v3484
        %4571 = vmatmul.bf16.gmra.mxu0 %v965
        %v4572 = vpop.f32.mrf.mxu0
        %v4573 = vadd.f32 %v4560, %v4572
        %v4574 = vpop.f32.mrf.mxu0
        %4575 = vdwg.mxu0
        %4576 = vmatpush.bf16.msra.mxu0 %v3093
        %4577 = vmatpush.bf16.msra.mxu0 %v3085
        %4578 = vmatpush.bf16.msra.mxu0 %v3077
        %4579 = vmatpush.bf16.msra.mxu0 %v3069
        %4580 = vmatpush.bf16.msra.mxu0 %v3061
        %4581 = vmatpush.bf16.msra.mxu0 %v3053
        %4582 = vmatpush.bf16.msra.mxu0 %v3045
        %4583 = vmatpush.bf16.msra.mxu0 %v3037
        %4584 = vmatmul.bf16.gmra.mxu0 %v958
        %v4585 = vpop.f32.mrf.mxu0
        %v4586 = vadd.f32 %v1485, %v4585
        %v4587 = vpop.f32.mrf.mxu0
        %4588 = vdwg.mxu0
        %4589 = vmatpush.bf16.msra.mxu0 %v3157
        %4590 = vmatpush.bf16.msra.mxu0 %v3149
        %4591 = vmatpush.bf16.msra.mxu0 %v3141
        %4592 = vmatpush.bf16.msra.mxu0 %v3133
        %4593 = vmatpush.bf16.msra.mxu0 %v3125
        %4594 = vmatpush.bf16.msra.mxu0 %v3117
        %4595 = vmatpush.bf16.msra.mxu0 %v3109
        %4596 = vmatpush.bf16.msra.mxu0 %v3101
        %4597 = vmatmul.bf16.gmra.mxu0 %v959
        %v4598 = vpop.f32.mrf.mxu0
        %v4599 = vadd.f32 %v4586, %v4598
        %v4600 = vpop.f32.mrf.mxu0
        %4601 = vdwg.mxu0
        %4602 = vmatpush.bf16.msra.mxu0 %v3221
        %4603 = vmatpush.bf16.msra.mxu0 %v3213
        %4604 = vmatpush.bf16.msra.mxu0 %v3205
        %4605 = vmatpush.bf16.msra.mxu0 %v3197
        %4606 = vmatpush.bf16.msra.mxu0 %v3189
        %4607 = vmatpush.bf16.msra.mxu0 %v3181
        %4608 = vmatpush.bf16.msra.mxu0 %v3173
        %4609 = vmatpush.bf16.msra.mxu0 %v3165
        %4610 = vmatmul.bf16.gmra.mxu0 %v960
        %v4611 = vpop.f32.mrf.mxu0
        %v4612 = vadd.f32 %v4599, %v4611
        %v4613 = vpop.f32.mrf.mxu0
        %4614 = vdwg.mxu0
        %4615 = vmatpush.bf16.msra.mxu0 %v3285
        %4616 = vmatpush.bf16.msra.mxu0 %v3277
        %4617 = vmatpush.bf16.msra.mxu0 %v3269
        %4618 = vmatpush.bf16.msra.mxu0 %v3261
        %4619 = vmatpush.bf16.msra.mxu0 %v3253
        %4620 = vmatpush.bf16.msra.mxu0 %v3245
        %4621 = vmatpush.bf16.msra.mxu0 %v3237
        %4622 = vmatpush.bf16.msra.mxu0 %v3229
        %4623 = vmatmul.bf16.gmra.mxu0 %v961
        %v4624 = vpop.f32.mrf.mxu0
        %v4625 = vadd.f32 %v4612, %v4624
        %v4626 = vpop.f32.mrf.mxu0
        %4627 = vdwg.mxu0
        %4628 = vmatpush.bf16.msra.mxu0 %v3349
        %4629 = vmatpush.bf16.msra.mxu0 %v3341
        %4630 = vmatpush.bf16.msra.mxu0 %v3333
        %4631 = vmatpush.bf16.msra.mxu0 %v3325
        %4632 = vmatpush.bf16.msra.mxu0 %v3317
        %4633 = vmatpush.bf16.msra.mxu0 %v3309
        %4634 = vmatpush.bf16.msra.mxu0 %v3301
        %4635 = vmatpush.bf16.msra.mxu0 %v3293
        %4636 = vmatmul.bf16.gmra.mxu0 %v962
        %v4637 = vpop.f32.mrf.mxu0
        %v4638 = vadd.f32 %v4625, %v4637
        %v4639 = vpop.f32.mrf.mxu0
        %4640 = vdwg.mxu0
        %4641 = vmatpush.bf16.msra.mxu0 %v3413
        %4642 = vmatpush.bf16.msra.mxu0 %v3405
        %4643 = vmatpush.bf16.msra.mxu0 %v3397
        %4644 = vmatpush.bf16.msra.mxu0 %v3389
        %4645 = vmatpush.bf16.msra.mxu0 %v3381
        %4646 = vmatpush.bf16.msra.mxu0 %v3373
        %4647 = vmatpush.bf16.msra.mxu0 %v3365
        %4648 = vmatpush.bf16.msra.mxu0 %v3357
        %4649 = vmatmul.bf16.gmra.mxu0 %v963
        %v4650 = vpop.f32.mrf.mxu0
        %v4651 = vadd.f32 %v4638, %v4650
        %v4652 = vpop.f32.mrf.mxu0
        %4653 = vdwg.mxu0
        %4654 = vmatpush.bf16.msra.mxu0 %v3477
        %4655 = vmatpush.bf16.msra.mxu0 %v3469
        %4656 = vmatpush.bf16.msra.mxu0 %v3461
        %4657 = vmatpush.bf16.msra.mxu0 %v3453
        %4658 = vmatpush.bf16.msra.mxu0 %v3445
        %4659 = vmatpush.bf16.msra.mxu0 %v3437
        %4660 = vmatpush.bf16.msra.mxu0 %v3429
        %4661 = vmatpush.bf16.msra.mxu0 %v3421
        %4662 = vmatmul.bf16.gmra.mxu0 %v964
        %v4663 = vpop.f32.mrf.mxu0
        %v4664 = vadd.f32 %v4651, %v4663
        %v4665 = vpop.f32.mrf.mxu0
        %4666 = vdwg.mxu0
        %4667 = vmatpush.bf16.msra.mxu0 %v3541
        %4668 = vmatpush.bf16.msra.mxu0 %v3533
        %4669 = vmatpush.bf16.msra.mxu0 %v3525
        %4670 = vmatpush.bf16.msra.mxu0 %v3517
        %4671 = vmatpush.bf16.msra.mxu0 %v3509
        %4672 = vmatpush.bf16.msra.mxu0 %v3501
        %4673 = vmatpush.bf16.msra.mxu0 %v3493
        %4674 = vmatpush.bf16.msra.mxu0 %v3485
        %4675 = vmatmul.bf16.gmra.mxu0 %v965
        %v4676 = vpop.f32.mrf.mxu0
        %v4677 = vadd.f32 %v4664, %v4676
        %v4678 = vpop.f32.mrf.mxu0
        %4679 = vdwg.mxu0
        %4680 = vmatpush.bf16.msra.mxu0 %v3094
        %4681 = vmatpush.bf16.msra.mxu0 %v3086
        %4682 = vmatpush.bf16.msra.mxu0 %v3078
        %4683 = vmatpush.bf16.msra.mxu0 %v3070
        %4684 = vmatpush.bf16.msra.mxu0 %v3062
        %4685 = vmatpush.bf16.msra.mxu0 %v3054
        %4686 = vmatpush.bf16.msra.mxu0 %v3046
        %4687 = vmatpush.bf16.msra.mxu0 %v3038
        %4688 = vmatmul.bf16.gmra.mxu0 %v958
        %v4689 = vpop.f32.mrf.mxu0
        %v4690 = vadd.f32 %v1486, %v4689
        %v4691 = vpop.f32.mrf.mxu0
        %4692 = vdwg.mxu0
        %4693 = vmatpush.bf16.msra.mxu0 %v3158
        %4694 = vmatpush.bf16.msra.mxu0 %v3150
        %4695 = vmatpush.bf16.msra.mxu0 %v3142
        %4696 = vmatpush.bf16.msra.mxu0 %v3134
        %4697 = vmatpush.bf16.msra.mxu0 %v3126
        %4698 = vmatpush.bf16.msra.mxu0 %v3118
        %4699 = vmatpush.bf16.msra.mxu0 %v3110
        %4700 = vmatpush.bf16.msra.mxu0 %v3102
        %4701 = vmatmul.bf16.gmra.mxu0 %v959
        %v4702 = vpop.f32.mrf.mxu0
        %v4703 = vadd.f32 %v4690, %v4702
        %v4704 = vpop.f32.mrf.mxu0
        %4705 = vdwg.mxu0
        %4706 = vmatpush.bf16.msra.mxu0 %v3222
        %4707 = vmatpush.bf16.msra.mxu0 %v3214
        %4708 = vmatpush.bf16.msra.mxu0 %v3206
        %4709 = vmatpush.bf16.msra.mxu0 %v3198
        %4710 = vmatpush.bf16.msra.mxu0 %v3190
        %4711 = vmatpush.bf16.msra.mxu0 %v3182
        %4712 = vmatpush.bf16.msra.mxu0 %v3174
        %4713 = vmatpush.bf16.msra.mxu0 %v3166
        %4714 = vmatmul.bf16.gmra.mxu0 %v960
        %v4715 = vpop.f32.mrf.mxu0
        %v4716 = vadd.f32 %v4703, %v4715
        %v4717 = vpop.f32.mrf.mxu0
        %4718 = vdwg.mxu0
        %4719 = vmatpush.bf16.msra.mxu0 %v3286
        %4720 = vmatpush.bf16.msra.mxu0 %v3278
        %4721 = vmatpush.bf16.msra.mxu0 %v3270
        %4722 = vmatpush.bf16.msra.mxu0 %v3262
        %4723 = vmatpush.bf16.msra.mxu0 %v3254
        %4724 = vmatpush.bf16.msra.mxu0 %v3246
        %4725 = vmatpush.bf16.msra.mxu0 %v3238
        %4726 = vmatpush.bf16.msra.mxu0 %v3230
        %4727 = vmatmul.bf16.gmra.mxu0 %v961
        %v4728 = vpop.f32.mrf.mxu0
        %v4729 = vadd.f32 %v4716, %v4728
        %v4730 = vpop.f32.mrf.mxu0
        %4731 = vdwg.mxu0
        %4732 = vmatpush.bf16.msra.mxu0 %v3350
        %4733 = vmatpush.bf16.msra.mxu0 %v3342
        %4734 = vmatpush.bf16.msra.mxu0 %v3334
        %4735 = vmatpush.bf16.msra.mxu0 %v3326
        %4736 = vmatpush.bf16.msra.mxu0 %v3318
        %4737 = vmatpush.bf16.msra.mxu0 %v3310
        %4738 = vmatpush.bf16.msra.mxu0 %v3302
        %4739 = vmatpush.bf16.msra.mxu0 %v3294
        %4740 = vmatmul.bf16.gmra.mxu0 %v962
        %v4741 = vpop.f32.mrf.mxu0
        %v4742 = vadd.f32 %v4729, %v4741
        %v4743 = vpop.f32.mrf.mxu0
        %4744 = vdwg.mxu0
        %4745 = vmatpush.bf16.msra.mxu0 %v3414
        %4746 = vmatpush.bf16.msra.mxu0 %v3406
        %4747 = vmatpush.bf16.msra.mxu0 %v3398
        %4748 = vmatpush.bf16.msra.mxu0 %v3390
        %4749 = vmatpush.bf16.msra.mxu0 %v3382
        %4750 = vmatpush.bf16.msra.mxu0 %v3374
        %4751 = vmatpush.bf16.msra.mxu0 %v3366
        %4752 = vmatpush.bf16.msra.mxu0 %v3358
        %4753 = vmatmul.bf16.gmra.mxu0 %v963
        %v4754 = vpop.f32.mrf.mxu0
        %v4755 = vadd.f32 %v4742, %v4754
        %v4756 = vpop.f32.mrf.mxu0
        %4757 = vdwg.mxu0
        %4758 = vmatpush.bf16.msra.mxu0 %v3478
        %4759 = vmatpush.bf16.msra.mxu0 %v3470
        %4760 = vmatpush.bf16.msra.mxu0 %v3462
        %4761 = vmatpush.bf16.msra.mxu0 %v3454
        %4762 = vmatpush.bf16.msra.mxu0 %v3446
        %4763 = vmatpush.bf16.msra.mxu0 %v3438
        %4764 = vmatpush.bf16.msra.mxu0 %v3430
        %4765 = vmatpush.bf16.msra.mxu0 %v3422
        %4766 = vmatmul.bf16.gmra.mxu0 %v964
        %v4767 = vpop.f32.mrf.mxu0
        %v4768 = vadd.f32 %v4755, %v4767
        %v4769 = vpop.f32.mrf.mxu0
        %4770 = vdwg.mxu0
        %4771 = vmatpush.bf16.msra.mxu0 %v3542
        %4772 = vmatpush.bf16.msra.mxu0 %v3534
        %4773 = vmatpush.bf16.msra.mxu0 %v3526
        %4774 = vmatpush.bf16.msra.mxu0 %v3518
        %4775 = vmatpush.bf16.msra.mxu0 %v3510
        %4776 = vmatpush.bf16.msra.mxu0 %v3502
        %4777 = vmatpush.bf16.msra.mxu0 %v3494
        %4778 = vmatpush.bf16.msra.mxu0 %v3486
        %4779 = vmatmul.bf16.gmra.mxu0 %v965
        %v4780 = vpop.f32.mrf.mxu0
        %v4781 = vadd.f32 %v4768, %v4780
        %v4782 = vpop.f32.mrf.mxu0
        %4783 = vdwg.mxu0
        %4784 = vmatpush.bf16.msra.mxu0 %v3095
        %4785 = vmatpush.bf16.msra.mxu0 %v3087
        %4786 = vmatpush.bf16.msra.mxu0 %v3079
        %4787 = vmatpush.bf16.msra.mxu0 %v3071
        %4788 = vmatpush.bf16.msra.mxu0 %v3063
        %4789 = vmatpush.bf16.msra.mxu0 %v3055
        %4790 = vmatpush.bf16.msra.mxu0 %v3047
        %4791 = vmatpush.bf16.msra.mxu0 %v3039
        %4792 = vmatmul.bf16.gmra.mxu0 %v958
        %v4793 = vpop.f32.mrf.mxu0
        %v4794 = vadd.f32 %v1487, %v4793
        %v4795 = vpop.f32.mrf.mxu0
        %4796 = vdwg.mxu0
        %4797 = vmatpush.bf16.msra.mxu0 %v3159
        %4798 = vmatpush.bf16.msra.mxu0 %v3151
        %4799 = vmatpush.bf16.msra.mxu0 %v3143
        %4800 = vmatpush.bf16.msra.mxu0 %v3135
        %4801 = vmatpush.bf16.msra.mxu0 %v3127
        %4802 = vmatpush.bf16.msra.mxu0 %v3119
        %4803 = vmatpush.bf16.msra.mxu0 %v3111
        %4804 = vmatpush.bf16.msra.mxu0 %v3103
        %4805 = vmatmul.bf16.gmra.mxu0 %v959
        %v4806 = vpop.f32.mrf.mxu0
        %v4807 = vadd.f32 %v4794, %v4806
        %v4808 = vpop.f32.mrf.mxu0
        %4809 = vdwg.mxu0
        %4810 = vmatpush.bf16.msra.mxu0 %v3223
        %4811 = vmatpush.bf16.msra.mxu0 %v3215
        %4812 = vmatpush.bf16.msra.mxu0 %v3207
        %4813 = vmatpush.bf16.msra.mxu0 %v3199
        %4814 = vmatpush.bf16.msra.mxu0 %v3191
        %4815 = vmatpush.bf16.msra.mxu0 %v3183
        %4816 = vmatpush.bf16.msra.mxu0 %v3175
        %4817 = vmatpush.bf16.msra.mxu0 %v3167
        %4818 = vmatmul.bf16.gmra.mxu0 %v960
        %v4819 = vpop.f32.mrf.mxu0
        %v4820 = vadd.f32 %v4807, %v4819
        %v4821 = vpop.f32.mrf.mxu0
        %4822 = vdwg.mxu0
        %4823 = vmatpush.bf16.msra.mxu0 %v3287
        %4824 = vmatpush.bf16.msra.mxu0 %v3279
        %4825 = vmatpush.bf16.msra.mxu0 %v3271
        %4826 = vmatpush.bf16.msra.mxu0 %v3263
        %4827 = vmatpush.bf16.msra.mxu0 %v3255
        %4828 = vmatpush.bf16.msra.mxu0 %v3247
        %4829 = vmatpush.bf16.msra.mxu0 %v3239
        %4830 = vmatpush.bf16.msra.mxu0 %v3231
        %4831 = vmatmul.bf16.gmra.mxu0 %v961
        %v4832 = vpop.f32.mrf.mxu0
        %v4833 = vadd.f32 %v4820, %v4832
        %v4834 = vpop.f32.mrf.mxu0
        %4835 = vdwg.mxu0
        %4836 = vmatpush.bf16.msra.mxu0 %v3351
        %4837 = vmatpush.bf16.msra.mxu0 %v3343
        %4838 = vmatpush.bf16.msra.mxu0 %v3335
        %4839 = vmatpush.bf16.msra.mxu0 %v3327
        %4840 = vmatpush.bf16.msra.mxu0 %v3319
        %4841 = vmatpush.bf16.msra.mxu0 %v3311
        %4842 = vmatpush.bf16.msra.mxu0 %v3303
        %4843 = vmatpush.bf16.msra.mxu0 %v3295
        %4844 = vmatmul.bf16.gmra.mxu0 %v962
        %v4845 = vpop.f32.mrf.mxu0
        %v4846 = vadd.f32 %v4833, %v4845
        %v4847 = vpop.f32.mrf.mxu0
        %4848 = vdwg.mxu0
        %4849 = vmatpush.bf16.msra.mxu0 %v3415
        %4850 = vmatpush.bf16.msra.mxu0 %v3407
        %4851 = vmatpush.bf16.msra.mxu0 %v3399
        %4852 = vmatpush.bf16.msra.mxu0 %v3391
        %4853 = vmatpush.bf16.msra.mxu0 %v3383
        %4854 = vmatpush.bf16.msra.mxu0 %v3375
        %4855 = vmatpush.bf16.msra.mxu0 %v3367
        %4856 = vmatpush.bf16.msra.mxu0 %v3359
        %4857 = vmatmul.bf16.gmra.mxu0 %v963
        %v4858 = vpop.f32.mrf.mxu0
        %v4859 = vadd.f32 %v4846, %v4858
        %v4860 = vpop.f32.mrf.mxu0
        %4861 = vdwg.mxu0
        %4862 = vmatpush.bf16.msra.mxu0 %v3479
        %4863 = vmatpush.bf16.msra.mxu0 %v3471
        %4864 = vmatpush.bf16.msra.mxu0 %v3463
        %4865 = vmatpush.bf16.msra.mxu0 %v3455
        %4866 = vmatpush.bf16.msra.mxu0 %v3447
        %4867 = vmatpush.bf16.msra.mxu0 %v3439
        %4868 = vmatpush.bf16.msra.mxu0 %v3431
        %4869 = vmatpush.bf16.msra.mxu0 %v3423
        %4870 = vmatmul.bf16.gmra.mxu0 %v964
        %v4871 = vpop.f32.mrf.mxu0
        %v4872 = vadd.f32 %v4859, %v4871
        %v4873 = vpop.f32.mrf.mxu0
        %4874 = vdwg.mxu0
        %4875 = vmatpush.bf16.msra.mxu0 %v3543
        %4876 = vmatpush.bf16.msra.mxu0 %v3535
        %4877 = vmatpush.bf16.msra.mxu0 %v3527
        %4878 = vmatpush.bf16.msra.mxu0 %v3519
        %4879 = vmatpush.bf16.msra.mxu0 %v3511
        %4880 = vmatpush.bf16.msra.mxu0 %v3503
        %4881 = vmatpush.bf16.msra.mxu0 %v3495
        %4882 = vmatpush.bf16.msra.mxu0 %v3487
        %4883 = vmatmul.bf16.gmra.mxu0 %v965
        %v4884 = vpop.f32.mrf.mxu0
        %v4885 = vadd.f32 %v4872, %v4884
        %v4886 = vpop.f32.mrf.mxu0
        %4887 = vdwg.mxu0
        %vm4888 = vcmp.gt.f32.partialorder %v4157, 0.0
        %vm4889 = vcmp.gt.f32.partialorder %v4261, 0.0
        %vm4890 = vcmp.gt.f32.partialorder %v4365, 0.0
        %vm4891 = vcmp.gt.f32.partialorder %v4469, 0.0
        %vm4892 = vcmp.gt.f32.partialorder %v4573, 0.0
        %vm4893 = vcmp.gt.f32.partialorder %v4677, 0.0
        %vm4894 = vcmp.gt.f32.partialorder %v4781, 0.0
        %vm4895 = vcmp.gt.f32.partialorder %v4885, 0.0
        %v4896 = vmul.f32 %v4157, 0.2
        %v4897 = vmul.f32 %v4261, 0.2
        %v4898 = vmul.f32 %v4365, 0.2
        %v4899 = vmul.f32 %v4469, 0.2
        %v4900 = vmul.f32 %v4573, 0.2
        %v4901 = vmul.f32 %v4677, 0.2
        %v4902 = vmul.f32 %v4781, 0.2
        %v4903 = vmul.f32 %v4885, 0.2
        %v4904 = vsel %vm4888, %v4157, %v4896
        %v4905 = vsel %vm4889, %v4261, %v4897
        %v4906 = vsel %vm4890, %v4365, %v4898
        %v4907 = vsel %vm4891, %v4469, %v4899
        %v4908 = vsel %vm4892, %v4573, %v4900
        %v4909 = vsel %vm4893, %v4677, %v4901
        %v4910 = vsel %vm4894, %v4781, %v4902
        %v4911 = vsel %vm4895, %v4885, %v4903
        %4912 = vst [vmem:[#allocation2] sm:$0xff] %v4904
        %4913 = vst [vmem:[#allocation2 + $0x8] sm:$0xff] %v4905
        %4914 = vst [vmem:[#allocation2 + $0x10] sm:$0xff] %v4906
        %4915 = vst [vmem:[#allocation2 + $0x18] sm:$0xff] %v4907
        %4916 = vst [vmem:[#allocation2 + $0x20] sm:$0xff] %v4908
        %4917 = vst [vmem:[#allocation2 + $0x28] sm:$0xff] %v4909
        %4918 = vst [vmem:[#allocation2 + $0x30] sm:$0xff] %v4910
        %4919 = vst [vmem:[#allocation2 + $0x38] sm:$0xff] %v4911
        %v4920 = vld [vmem:[#allocation2] sm:$0xff]
        %v4921 = vld [vmem:[#allocation2 + $0x8] sm:$0xff]
        %v4922 = vld [vmem:[#allocation2 + $0x10] sm:$0xff]
        %v4923 = vld [vmem:[#allocation2 + $0x18] sm:$0xff]
        %v4924 = vld [vmem:[#allocation2 + $0x20] sm:$0xff]
        %v4925 = vld [vmem:[#allocation2 + $0x28] sm:$0xff]
        %v4926 = vld [vmem:[#allocation2 + $0x30] sm:$0xff]
        %v4927 = vld [vmem:[#allocation2 + $0x38] sm:$0xff]
        %v4928 = vpack.c.bf16 %v4920, %v4920
        %v4929 = vpack.c.bf16 %v4921, %v4921
        %v4930 = vpack.c.bf16 %v4922, %v4922
        %v4931 = vpack.c.bf16 %v4923, %v4923
        %v4932 = vpack.c.bf16 %v4924, %v4924
        %v4933 = vpack.c.bf16 %v4925, %v4925
        %v4934 = vpack.c.bf16 %v4926, %v4926
        %v4935 = vpack.c.bf16 %v4927, %v4927
        %s4936 = scalar_lea.vmem %s352, 4096 [#allocation9]
        %v4937 = vld [vmem:[%s4936] sm:$0xff]
        %v4938 = vld [vmem:[%s4936 + $0x8] sm:$0xff]
        %v4939 = vld [vmem:[%s4936 + $0x10] sm:$0xff]
        %v4940 = vld [vmem:[%s4936 + $0x18] sm:$0xff]
        %v4941 = vld [vmem:[%s4936 + $0x20] sm:$0xff]
        %v4942 = vld [vmem:[%s4936 + $0x28] sm:$0xff]
        %v4943 = vld [vmem:[%s4936 + $0x30] sm:$0xff]
        %v4944 = vld [vmem:[%s4936 + $0x38] sm:$0xff]
        %v4945 = vld [vmem:[%s4936 + $0x40] sm:$0xff]
        %v4946 = vld [vmem:[%s4936 + $0x48] sm:$0xff]
        %v4947 = vld [vmem:[%s4936 + $0x50] sm:$0xff]
        %v4948 = vld [vmem:[%s4936 + $0x58] sm:$0xff]
        %v4949 = vld [vmem:[%s4936 + $0x60] sm:$0xff]
        %v4950 = vld [vmem:[%s4936 + $0x68] sm:$0xff]
        %v4951 = vld [vmem:[%s4936 + $0x70] sm:$0xff]
        %v4952 = vld [vmem:[%s4936 + $0x78] sm:$0xff]
        %v4953 = vld [vmem:[%s4936 + $0x80] sm:$0xff]
        %v4954 = vld [vmem:[%s4936 + $0x88] sm:$0xff]
        %v4955 = vld [vmem:[%s4936 + $0x90] sm:$0xff]
        %v4956 = vld [vmem:[%s4936 + $0x98] sm:$0xff]
        %v4957 = vld [vmem:[%s4936 + $0xa0] sm:$0xff]
        %v4958 = vld [vmem:[%s4936 + $0xa8] sm:$0xff]
        %v4959 = vld [vmem:[%s4936 + $0xb0] sm:$0xff]
        %v4960 = vld [vmem:[%s4936 + $0xb8] sm:$0xff]
        %v4961 = vld [vmem:[%s4936 + $0xc0] sm:$0xff]
        %v4962 = vld [vmem:[%s4936 + $0xc8] sm:$0xff]
        %v4963 = vld [vmem:[%s4936 + $0xd0] sm:$0xff]
        %v4964 = vld [vmem:[%s4936 + $0xd8] sm:$0xff]
        %v4965 = vld [vmem:[%s4936 + $0xe0] sm:$0xff]
        %v4966 = vld [vmem:[%s4936 + $0xe8] sm:$0xff]
        %v4967 = vld [vmem:[%s4936 + $0xf0] sm:$0xff]
        %v4968 = vld [vmem:[%s4936 + $0xf8] sm:$0xff]
        %v4969 = vld [vmem:[%s4936 + $0x100] sm:$0xff]
        %v4970 = vld [vmem:[%s4936 + $0x108] sm:$0xff]
        %v4971 = vld [vmem:[%s4936 + $0x110] sm:$0xff]
        %v4972 = vld [vmem:[%s4936 + $0x118] sm:$0xff]
        %v4973 = vld [vmem:[%s4936 + $0x120] sm:$0xff]
        %v4974 = vld [vmem:[%s4936 + $0x128] sm:$0xff]
        %v4975 = vld [vmem:[%s4936 + $0x130] sm:$0xff]
        %v4976 = vld [vmem:[%s4936 + $0x138] sm:$0xff]
        %v4977 = vld [vmem:[%s4936 + $0x140] sm:$0xff]
        %v4978 = vld [vmem:[%s4936 + $0x148] sm:$0xff]
        %v4979 = vld [vmem:[%s4936 + $0x150] sm:$0xff]
        %v4980 = vld [vmem:[%s4936 + $0x158] sm:$0xff]
        %v4981 = vld [vmem:[%s4936 + $0x160] sm:$0xff]
        %v4982 = vld [vmem:[%s4936 + $0x168] sm:$0xff]
        %v4983 = vld [vmem:[%s4936 + $0x170] sm:$0xff]
        %v4984 = vld [vmem:[%s4936 + $0x178] sm:$0xff]
        %v4985 = vld [vmem:[%s4936 + $0x180] sm:$0xff]
        %v4986 = vld [vmem:[%s4936 + $0x188] sm:$0xff]
        %v4987 = vld [vmem:[%s4936 + $0x190] sm:$0xff]
        %v4988 = vld [vmem:[%s4936 + $0x198] sm:$0xff]
        %v4989 = vld [vmem:[%s4936 + $0x1a0] sm:$0xff]
        %v4990 = vld [vmem:[%s4936 + $0x1a8] sm:$0xff]
        %v4991 = vld [vmem:[%s4936 + $0x1b0] sm:$0xff]
        %v4992 = vld [vmem:[%s4936 + $0x1b8] sm:$0xff]
        %v4993 = vld [vmem:[%s4936 + $0x1c0] sm:$0xff]
        %v4994 = vld [vmem:[%s4936 + $0x1c8] sm:$0xff]
        %v4995 = vld [vmem:[%s4936 + $0x1d0] sm:$0xff]
        %v4996 = vld [vmem:[%s4936 + $0x1d8] sm:$0xff]
        %v4997 = vld [vmem:[%s4936 + $0x1e0] sm:$0xff]
        %v4998 = vld [vmem:[%s4936 + $0x1e8] sm:$0xff]
        %v4999 = vld [vmem:[%s4936 + $0x1f0] sm:$0xff]
        %v5000 = vld [vmem:[%s4936 + $0x1f8] sm:$0xff]
        %v5001 = vld [vmem:[%s4936 + $0x200] sm:$0xff]
        %v5002 = vld [vmem:[%s4936 + $0x208] sm:$0xff]
        %v5003 = vld [vmem:[%s4936 + $0x210] sm:$0xff]
        %v5004 = vld [vmem:[%s4936 + $0x218] sm:$0xff]
        %v5005 = vld [vmem:[%s4936 + $0x220] sm:$0xff]
        %v5006 = vld [vmem:[%s4936 + $0x228] sm:$0xff]
        %v5007 = vld [vmem:[%s4936 + $0x230] sm:$0xff]
        %v5008 = vld [vmem:[%s4936 + $0x238] sm:$0xff]
        %v5009 = vld [vmem:[%s4936 + $0x240] sm:$0xff]
        %v5010 = vld [vmem:[%s4936 + $0x248] sm:$0xff]
        %v5011 = vld [vmem:[%s4936 + $0x250] sm:$0xff]
        %v5012 = vld [vmem:[%s4936 + $0x258] sm:$0xff]
        %v5013 = vld [vmem:[%s4936 + $0x260] sm:$0xff]
        %v5014 = vld [vmem:[%s4936 + $0x268] sm:$0xff]
        %v5015 = vld [vmem:[%s4936 + $0x270] sm:$0xff]
        %v5016 = vld [vmem:[%s4936 + $0x278] sm:$0xff]
        %v5017 = vld [vmem:[%s4936 + $0x280] sm:$0xff]
        %v5018 = vld [vmem:[%s4936 + $0x288] sm:$0xff]
        %v5019 = vld [vmem:[%s4936 + $0x290] sm:$0xff]
        %v5020 = vld [vmem:[%s4936 + $0x298] sm:$0xff]
        %v5021 = vld [vmem:[%s4936 + $0x2a0] sm:$0xff]
        %v5022 = vld [vmem:[%s4936 + $0x2a8] sm:$0xff]
        %v5023 = vld [vmem:[%s4936 + $0x2b0] sm:$0xff]
        %v5024 = vld [vmem:[%s4936 + $0x2b8] sm:$0xff]
        %v5025 = vld [vmem:[%s4936 + $0x2c0] sm:$0xff]
        %v5026 = vld [vmem:[%s4936 + $0x2c8] sm:$0xff]
        %v5027 = vld [vmem:[%s4936 + $0x2d0] sm:$0xff]
        %v5028 = vld [vmem:[%s4936 + $0x2d8] sm:$0xff]
        %v5029 = vld [vmem:[%s4936 + $0x2e0] sm:$0xff]
        %v5030 = vld [vmem:[%s4936 + $0x2e8] sm:$0xff]
        %v5031 = vld [vmem:[%s4936 + $0x2f0] sm:$0xff]
        %v5032 = vld [vmem:[%s4936 + $0x2f8] sm:$0xff]
        %v5033 = vld [vmem:[%s4936 + $0x300] sm:$0xff]
        %v5034 = vld [vmem:[%s4936 + $0x308] sm:$0xff]
        %v5035 = vld [vmem:[%s4936 + $0x310] sm:$0xff]
        %v5036 = vld [vmem:[%s4936 + $0x318] sm:$0xff]
        %v5037 = vld [vmem:[%s4936 + $0x320] sm:$0xff]
        %v5038 = vld [vmem:[%s4936 + $0x328] sm:$0xff]
        %v5039 = vld [vmem:[%s4936 + $0x330] sm:$0xff]
        %v5040 = vld [vmem:[%s4936 + $0x338] sm:$0xff]
        %v5041 = vld [vmem:[%s4936 + $0x340] sm:$0xff]
        %v5042 = vld [vmem:[%s4936 + $0x348] sm:$0xff]
        %v5043 = vld [vmem:[%s4936 + $0x350] sm:$0xff]
        %v5044 = vld [vmem:[%s4936 + $0x358] sm:$0xff]
        %v5045 = vld [vmem:[%s4936 + $0x360] sm:$0xff]
        %v5046 = vld [vmem:[%s4936 + $0x368] sm:$0xff]
        %v5047 = vld [vmem:[%s4936 + $0x370] sm:$0xff]
        %v5048 = vld [vmem:[%s4936 + $0x378] sm:$0xff]
        %v5049 = vld [vmem:[%s4936 + $0x380] sm:$0xff]
        %v5050 = vld [vmem:[%s4936 + $0x388] sm:$0xff]
        %v5051 = vld [vmem:[%s4936 + $0x390] sm:$0xff]
        %v5052 = vld [vmem:[%s4936 + $0x398] sm:$0xff]
        %v5053 = vld [vmem:[%s4936 + $0x3a0] sm:$0xff]
        %v5054 = vld [vmem:[%s4936 + $0x3a8] sm:$0xff]
        %v5055 = vld [vmem:[%s4936 + $0x3b0] sm:$0xff]
        %v5056 = vld [vmem:[%s4936 + $0x3b8] sm:$0xff]
        %v5057 = vld [vmem:[%s4936 + $0x3c0] sm:$0xff]
        %v5058 = vld [vmem:[%s4936 + $0x3c8] sm:$0xff]
        %v5059 = vld [vmem:[%s4936 + $0x3d0] sm:$0xff]
        %v5060 = vld [vmem:[%s4936 + $0x3d8] sm:$0xff]
        %v5061 = vld [vmem:[%s4936 + $0x3e0] sm:$0xff]
        %v5062 = vld [vmem:[%s4936 + $0x3e8] sm:$0xff]
        %v5063 = vld [vmem:[%s4936 + $0x3f0] sm:$0xff]
        %v5064 = vld [vmem:[%s4936 + $0x3f8] sm:$0xff]
        %v5065 = vld [vmem:[%s4936 + $0x400] sm:$0xff]
        %v5066 = vld [vmem:[%s4936 + $0x408] sm:$0xff]
        %v5067 = vld [vmem:[%s4936 + $0x410] sm:$0xff]
        %v5068 = vld [vmem:[%s4936 + $0x418] sm:$0xff]
        %v5069 = vld [vmem:[%s4936 + $0x420] sm:$0xff]
        %v5070 = vld [vmem:[%s4936 + $0x428] sm:$0xff]
        %v5071 = vld [vmem:[%s4936 + $0x430] sm:$0xff]
        %v5072 = vld [vmem:[%s4936 + $0x438] sm:$0xff]
        %v5073 = vld [vmem:[%s4936 + $0x440] sm:$0xff]
        %v5074 = vld [vmem:[%s4936 + $0x448] sm:$0xff]
        %v5075 = vld [vmem:[%s4936 + $0x450] sm:$0xff]
        %v5076 = vld [vmem:[%s4936 + $0x458] sm:$0xff]
        %v5077 = vld [vmem:[%s4936 + $0x460] sm:$0xff]
        %v5078 = vld [vmem:[%s4936 + $0x468] sm:$0xff]
        %v5079 = vld [vmem:[%s4936 + $0x470] sm:$0xff]
        %v5080 = vld [vmem:[%s4936 + $0x478] sm:$0xff]
        %v5081 = vld [vmem:[%s4936 + $0x480] sm:$0xff]
        %v5082 = vld [vmem:[%s4936 + $0x488] sm:$0xff]
        %v5083 = vld [vmem:[%s4936 + $0x490] sm:$0xff]
        %v5084 = vld [vmem:[%s4936 + $0x498] sm:$0xff]
        %v5085 = vld [vmem:[%s4936 + $0x4a0] sm:$0xff]
        %v5086 = vld [vmem:[%s4936 + $0x4a8] sm:$0xff]
        %v5087 = vld [vmem:[%s4936 + $0x4b0] sm:$0xff]
        %v5088 = vld [vmem:[%s4936 + $0x4b8] sm:$0xff]
        %v5089 = vld [vmem:[%s4936 + $0x4c0] sm:$0xff]
        %v5090 = vld [vmem:[%s4936 + $0x4c8] sm:$0xff]
        %v5091 = vld [vmem:[%s4936 + $0x4d0] sm:$0xff]
        %v5092 = vld [vmem:[%s4936 + $0x4d8] sm:$0xff]
        %v5093 = vld [vmem:[%s4936 + $0x4e0] sm:$0xff]
        %v5094 = vld [vmem:[%s4936 + $0x4e8] sm:$0xff]
        %v5095 = vld [vmem:[%s4936 + $0x4f0] sm:$0xff]
        %v5096 = vld [vmem:[%s4936 + $0x4f8] sm:$0xff]
        %v5097 = vld [vmem:[%s4936 + $0x500] sm:$0xff]
        %v5098 = vld [vmem:[%s4936 + $0x508] sm:$0xff]
        %v5099 = vld [vmem:[%s4936 + $0x510] sm:$0xff]
        %v5100 = vld [vmem:[%s4936 + $0x518] sm:$0xff]
        %v5101 = vld [vmem:[%s4936 + $0x520] sm:$0xff]
        %v5102 = vld [vmem:[%s4936 + $0x528] sm:$0xff]
        %v5103 = vld [vmem:[%s4936 + $0x530] sm:$0xff]
        %v5104 = vld [vmem:[%s4936 + $0x538] sm:$0xff]
        %v5105 = vld [vmem:[%s4936 + $0x540] sm:$0xff]
        %v5106 = vld [vmem:[%s4936 + $0x548] sm:$0xff]
        %v5107 = vld [vmem:[%s4936 + $0x550] sm:$0xff]
        %v5108 = vld [vmem:[%s4936 + $0x558] sm:$0xff]
        %v5109 = vld [vmem:[%s4936 + $0x560] sm:$0xff]
        %v5110 = vld [vmem:[%s4936 + $0x568] sm:$0xff]
        %v5111 = vld [vmem:[%s4936 + $0x570] sm:$0xff]
        %v5112 = vld [vmem:[%s4936 + $0x578] sm:$0xff]
        %v5113 = vld [vmem:[%s4936 + $0x580] sm:$0xff]
        %v5114 = vld [vmem:[%s4936 + $0x588] sm:$0xff]
        %v5115 = vld [vmem:[%s4936 + $0x590] sm:$0xff]
        %v5116 = vld [vmem:[%s4936 + $0x598] sm:$0xff]
        %v5117 = vld [vmem:[%s4936 + $0x5a0] sm:$0xff]
        %v5118 = vld [vmem:[%s4936 + $0x5a8] sm:$0xff]
        %v5119 = vld [vmem:[%s4936 + $0x5b0] sm:$0xff]
        %v5120 = vld [vmem:[%s4936 + $0x5b8] sm:$0xff]
        %v5121 = vld [vmem:[%s4936 + $0x5c0] sm:$0xff]
        %v5122 = vld [vmem:[%s4936 + $0x5c8] sm:$0xff]
        %v5123 = vld [vmem:[%s4936 + $0x5d0] sm:$0xff]
        %v5124 = vld [vmem:[%s4936 + $0x5d8] sm:$0xff]
        %v5125 = vld [vmem:[%s4936 + $0x5e0] sm:$0xff]
        %v5126 = vld [vmem:[%s4936 + $0x5e8] sm:$0xff]
        %v5127 = vld [vmem:[%s4936 + $0x5f0] sm:$0xff]
        %v5128 = vld [vmem:[%s4936 + $0x5f8] sm:$0xff]
        %v5129 = vld [vmem:[%s4936 + $0x600] sm:$0xff]
        %v5130 = vld [vmem:[%s4936 + $0x608] sm:$0xff]
        %v5131 = vld [vmem:[%s4936 + $0x610] sm:$0xff]
        %v5132 = vld [vmem:[%s4936 + $0x618] sm:$0xff]
        %v5133 = vld [vmem:[%s4936 + $0x620] sm:$0xff]
        %v5134 = vld [vmem:[%s4936 + $0x628] sm:$0xff]
        %v5135 = vld [vmem:[%s4936 + $0x630] sm:$0xff]
        %v5136 = vld [vmem:[%s4936 + $0x638] sm:$0xff]
        %v5137 = vld [vmem:[%s4936 + $0x640] sm:$0xff]
        %v5138 = vld [vmem:[%s4936 + $0x648] sm:$0xff]
        %v5139 = vld [vmem:[%s4936 + $0x650] sm:$0xff]
        %v5140 = vld [vmem:[%s4936 + $0x658] sm:$0xff]
        %v5141 = vld [vmem:[%s4936 + $0x660] sm:$0xff]
        %v5142 = vld [vmem:[%s4936 + $0x668] sm:$0xff]
        %v5143 = vld [vmem:[%s4936 + $0x670] sm:$0xff]
        %v5144 = vld [vmem:[%s4936 + $0x678] sm:$0xff]
        %v5145 = vld [vmem:[%s4936 + $0x680] sm:$0xff]
        %v5146 = vld [vmem:[%s4936 + $0x688] sm:$0xff]
        %v5147 = vld [vmem:[%s4936 + $0x690] sm:$0xff]
        %v5148 = vld [vmem:[%s4936 + $0x698] sm:$0xff]
        %v5149 = vld [vmem:[%s4936 + $0x6a0] sm:$0xff]
        %v5150 = vld [vmem:[%s4936 + $0x6a8] sm:$0xff]
        %v5151 = vld [vmem:[%s4936 + $0x6b0] sm:$0xff]
        %v5152 = vld [vmem:[%s4936 + $0x6b8] sm:$0xff]
        %v5153 = vld [vmem:[%s4936 + $0x6c0] sm:$0xff]
        %v5154 = vld [vmem:[%s4936 + $0x6c8] sm:$0xff]
        %v5155 = vld [vmem:[%s4936 + $0x6d0] sm:$0xff]
        %v5156 = vld [vmem:[%s4936 + $0x6d8] sm:$0xff]
        %v5157 = vld [vmem:[%s4936 + $0x6e0] sm:$0xff]
        %v5158 = vld [vmem:[%s4936 + $0x6e8] sm:$0xff]
        %v5159 = vld [vmem:[%s4936 + $0x6f0] sm:$0xff]
        %v5160 = vld [vmem:[%s4936 + $0x6f8] sm:$0xff]
        %v5161 = vld [vmem:[%s4936 + $0x700] sm:$0xff]
        %v5162 = vld [vmem:[%s4936 + $0x708] sm:$0xff]
        %v5163 = vld [vmem:[%s4936 + $0x710] sm:$0xff]
        %v5164 = vld [vmem:[%s4936 + $0x718] sm:$0xff]
        %v5165 = vld [vmem:[%s4936 + $0x720] sm:$0xff]
        %v5166 = vld [vmem:[%s4936 + $0x728] sm:$0xff]
        %v5167 = vld [vmem:[%s4936 + $0x730] sm:$0xff]
        %v5168 = vld [vmem:[%s4936 + $0x738] sm:$0xff]
        %v5169 = vld [vmem:[%s4936 + $0x740] sm:$0xff]
        %v5170 = vld [vmem:[%s4936 + $0x748] sm:$0xff]
        %v5171 = vld [vmem:[%s4936 + $0x750] sm:$0xff]
        %v5172 = vld [vmem:[%s4936 + $0x758] sm:$0xff]
        %v5173 = vld [vmem:[%s4936 + $0x760] sm:$0xff]
        %v5174 = vld [vmem:[%s4936 + $0x768] sm:$0xff]
        %v5175 = vld [vmem:[%s4936 + $0x770] sm:$0xff]
        %v5176 = vld [vmem:[%s4936 + $0x778] sm:$0xff]
        %v5177 = vld [vmem:[%s4936 + $0x780] sm:$0xff]
        %v5178 = vld [vmem:[%s4936 + $0x788] sm:$0xff]
        %v5179 = vld [vmem:[%s4936 + $0x790] sm:$0xff]
        %v5180 = vld [vmem:[%s4936 + $0x798] sm:$0xff]
        %v5181 = vld [vmem:[%s4936 + $0x7a0] sm:$0xff]
        %v5182 = vld [vmem:[%s4936 + $0x7a8] sm:$0xff]
        %v5183 = vld [vmem:[%s4936 + $0x7b0] sm:$0xff]
        %v5184 = vld [vmem:[%s4936 + $0x7b8] sm:$0xff]
        %v5185 = vld [vmem:[%s4936 + $0x7c0] sm:$0xff]
        %v5186 = vld [vmem:[%s4936 + $0x7c8] sm:$0xff]
        %v5187 = vld [vmem:[%s4936 + $0x7d0] sm:$0xff]
        %v5188 = vld [vmem:[%s4936 + $0x7d8] sm:$0xff]
        %v5189 = vld [vmem:[%s4936 + $0x7e0] sm:$0xff]
        %v5190 = vld [vmem:[%s4936 + $0x7e8] sm:$0xff]
        %v5191 = vld [vmem:[%s4936 + $0x7f0] sm:$0xff]
        %v5192 = vld [vmem:[%s4936 + $0x7f8] sm:$0xff]
        %v5193 = vld [vmem:[%s4936 + $0x800] sm:$0xff]
        %v5194 = vld [vmem:[%s4936 + $0x808] sm:$0xff]
        %v5195 = vld [vmem:[%s4936 + $0x810] sm:$0xff]
        %v5196 = vld [vmem:[%s4936 + $0x818] sm:$0xff]
        %v5197 = vld [vmem:[%s4936 + $0x820] sm:$0xff]
        %v5198 = vld [vmem:[%s4936 + $0x828] sm:$0xff]
        %v5199 = vld [vmem:[%s4936 + $0x830] sm:$0xff]
        %v5200 = vld [vmem:[%s4936 + $0x838] sm:$0xff]
        %v5201 = vld [vmem:[%s4936 + $0x840] sm:$0xff]
        %v5202 = vld [vmem:[%s4936 + $0x848] sm:$0xff]
        %v5203 = vld [vmem:[%s4936 + $0x850] sm:$0xff]
        %v5204 = vld [vmem:[%s4936 + $0x858] sm:$0xff]
        %v5205 = vld [vmem:[%s4936 + $0x860] sm:$0xff]
        %v5206 = vld [vmem:[%s4936 + $0x868] sm:$0xff]
        %v5207 = vld [vmem:[%s4936 + $0x870] sm:$0xff]
        %v5208 = vld [vmem:[%s4936 + $0x878] sm:$0xff]
        %v5209 = vld [vmem:[%s4936 + $0x880] sm:$0xff]
        %v5210 = vld [vmem:[%s4936 + $0x888] sm:$0xff]
        %v5211 = vld [vmem:[%s4936 + $0x890] sm:$0xff]
        %v5212 = vld [vmem:[%s4936 + $0x898] sm:$0xff]
        %v5213 = vld [vmem:[%s4936 + $0x8a0] sm:$0xff]
        %v5214 = vld [vmem:[%s4936 + $0x8a8] sm:$0xff]
        %v5215 = vld [vmem:[%s4936 + $0x8b0] sm:$0xff]
        %v5216 = vld [vmem:[%s4936 + $0x8b8] sm:$0xff]
        %v5217 = vld [vmem:[%s4936 + $0x8c0] sm:$0xff]
        %v5218 = vld [vmem:[%s4936 + $0x8c8] sm:$0xff]
        %v5219 = vld [vmem:[%s4936 + $0x8d0] sm:$0xff]
        %v5220 = vld [vmem:[%s4936 + $0x8d8] sm:$0xff]
        %v5221 = vld [vmem:[%s4936 + $0x8e0] sm:$0xff]
        %v5222 = vld [vmem:[%s4936 + $0x8e8] sm:$0xff]
        %v5223 = vld [vmem:[%s4936 + $0x8f0] sm:$0xff]
        %v5224 = vld [vmem:[%s4936 + $0x8f8] sm:$0xff]
        %v5225 = vld [vmem:[%s4936 + $0x900] sm:$0xff]
        %v5226 = vld [vmem:[%s4936 + $0x908] sm:$0xff]
        %v5227 = vld [vmem:[%s4936 + $0x910] sm:$0xff]
        %v5228 = vld [vmem:[%s4936 + $0x918] sm:$0xff]
        %v5229 = vld [vmem:[%s4936 + $0x920] sm:$0xff]
        %v5230 = vld [vmem:[%s4936 + $0x928] sm:$0xff]
        %v5231 = vld [vmem:[%s4936 + $0x930] sm:$0xff]
        %v5232 = vld [vmem:[%s4936 + $0x938] sm:$0xff]
        %v5233 = vld [vmem:[%s4936 + $0x940] sm:$0xff]
        %v5234 = vld [vmem:[%s4936 + $0x948] sm:$0xff]
        %v5235 = vld [vmem:[%s4936 + $0x950] sm:$0xff]
        %v5236 = vld [vmem:[%s4936 + $0x958] sm:$0xff]
        %v5237 = vld [vmem:[%s4936 + $0x960] sm:$0xff]
        %v5238 = vld [vmem:[%s4936 + $0x968] sm:$0xff]
        %v5239 = vld [vmem:[%s4936 + $0x970] sm:$0xff]
        %v5240 = vld [vmem:[%s4936 + $0x978] sm:$0xff]
        %v5241 = vld [vmem:[%s4936 + $0x980] sm:$0xff]
        %v5242 = vld [vmem:[%s4936 + $0x988] sm:$0xff]
        %v5243 = vld [vmem:[%s4936 + $0x990] sm:$0xff]
        %v5244 = vld [vmem:[%s4936 + $0x998] sm:$0xff]
        %v5245 = vld [vmem:[%s4936 + $0x9a0] sm:$0xff]
        %v5246 = vld [vmem:[%s4936 + $0x9a8] sm:$0xff]
        %v5247 = vld [vmem:[%s4936 + $0x9b0] sm:$0xff]
        %v5248 = vld [vmem:[%s4936 + $0x9b8] sm:$0xff]
        %v5249 = vld [vmem:[%s4936 + $0x9c0] sm:$0xff]
        %v5250 = vld [vmem:[%s4936 + $0x9c8] sm:$0xff]
        %v5251 = vld [vmem:[%s4936 + $0x9d0] sm:$0xff]
        %v5252 = vld [vmem:[%s4936 + $0x9d8] sm:$0xff]
        %v5253 = vld [vmem:[%s4936 + $0x9e0] sm:$0xff]
        %v5254 = vld [vmem:[%s4936 + $0x9e8] sm:$0xff]
        %v5255 = vld [vmem:[%s4936 + $0x9f0] sm:$0xff]
        %v5256 = vld [vmem:[%s4936 + $0x9f8] sm:$0xff]
        %v5257 = vld [vmem:[%s4936 + $0xa00] sm:$0xff]
        %v5258 = vld [vmem:[%s4936 + $0xa08] sm:$0xff]
        %v5259 = vld [vmem:[%s4936 + $0xa10] sm:$0xff]
        %v5260 = vld [vmem:[%s4936 + $0xa18] sm:$0xff]
        %v5261 = vld [vmem:[%s4936 + $0xa20] sm:$0xff]
        %v5262 = vld [vmem:[%s4936 + $0xa28] sm:$0xff]
        %v5263 = vld [vmem:[%s4936 + $0xa30] sm:$0xff]
        %v5264 = vld [vmem:[%s4936 + $0xa38] sm:$0xff]
        %v5265 = vld [vmem:[%s4936 + $0xa40] sm:$0xff]
        %v5266 = vld [vmem:[%s4936 + $0xa48] sm:$0xff]
        %v5267 = vld [vmem:[%s4936 + $0xa50] sm:$0xff]
        %v5268 = vld [vmem:[%s4936 + $0xa58] sm:$0xff]
        %v5269 = vld [vmem:[%s4936 + $0xa60] sm:$0xff]
        %v5270 = vld [vmem:[%s4936 + $0xa68] sm:$0xff]
        %v5271 = vld [vmem:[%s4936 + $0xa70] sm:$0xff]
        %v5272 = vld [vmem:[%s4936 + $0xa78] sm:$0xff]
        %v5273 = vld [vmem:[%s4936 + $0xa80] sm:$0xff]
        %v5274 = vld [vmem:[%s4936 + $0xa88] sm:$0xff]
        %v5275 = vld [vmem:[%s4936 + $0xa90] sm:$0xff]
        %v5276 = vld [vmem:[%s4936 + $0xa98] sm:$0xff]
        %v5277 = vld [vmem:[%s4936 + $0xaa0] sm:$0xff]
        %v5278 = vld [vmem:[%s4936 + $0xaa8] sm:$0xff]
        %v5279 = vld [vmem:[%s4936 + $0xab0] sm:$0xff]
        %v5280 = vld [vmem:[%s4936 + $0xab8] sm:$0xff]
        %v5281 = vld [vmem:[%s4936 + $0xac0] sm:$0xff]
        %v5282 = vld [vmem:[%s4936 + $0xac8] sm:$0xff]
        %v5283 = vld [vmem:[%s4936 + $0xad0] sm:$0xff]
        %v5284 = vld [vmem:[%s4936 + $0xad8] sm:$0xff]
        %v5285 = vld [vmem:[%s4936 + $0xae0] sm:$0xff]
        %v5286 = vld [vmem:[%s4936 + $0xae8] sm:$0xff]
        %v5287 = vld [vmem:[%s4936 + $0xaf0] sm:$0xff]
        %v5288 = vld [vmem:[%s4936 + $0xaf8] sm:$0xff]
        %v5289 = vld [vmem:[%s4936 + $0xb00] sm:$0xff]
        %v5290 = vld [vmem:[%s4936 + $0xb08] sm:$0xff]
        %v5291 = vld [vmem:[%s4936 + $0xb10] sm:$0xff]
        %v5292 = vld [vmem:[%s4936 + $0xb18] sm:$0xff]
        %v5293 = vld [vmem:[%s4936 + $0xb20] sm:$0xff]
        %v5294 = vld [vmem:[%s4936 + $0xb28] sm:$0xff]
        %v5295 = vld [vmem:[%s4936 + $0xb30] sm:$0xff]
        %v5296 = vld [vmem:[%s4936 + $0xb38] sm:$0xff]
        %v5297 = vld [vmem:[%s4936 + $0xb40] sm:$0xff]
        %v5298 = vld [vmem:[%s4936 + $0xb48] sm:$0xff]
        %v5299 = vld [vmem:[%s4936 + $0xb50] sm:$0xff]
        %v5300 = vld [vmem:[%s4936 + $0xb58] sm:$0xff]
        %v5301 = vld [vmem:[%s4936 + $0xb60] sm:$0xff]
        %v5302 = vld [vmem:[%s4936 + $0xb68] sm:$0xff]
        %v5303 = vld [vmem:[%s4936 + $0xb70] sm:$0xff]
        %v5304 = vld [vmem:[%s4936 + $0xb78] sm:$0xff]
        %v5305 = vld [vmem:[%s4936 + $0xb80] sm:$0xff]
        %v5306 = vld [vmem:[%s4936 + $0xb88] sm:$0xff]
        %v5307 = vld [vmem:[%s4936 + $0xb90] sm:$0xff]
        %v5308 = vld [vmem:[%s4936 + $0xb98] sm:$0xff]
        %v5309 = vld [vmem:[%s4936 + $0xba0] sm:$0xff]
        %v5310 = vld [vmem:[%s4936 + $0xba8] sm:$0xff]
        %v5311 = vld [vmem:[%s4936 + $0xbb0] sm:$0xff]
        %v5312 = vld [vmem:[%s4936 + $0xbb8] sm:$0xff]
        %v5313 = vld [vmem:[%s4936 + $0xbc0] sm:$0xff]
        %v5314 = vld [vmem:[%s4936 + $0xbc8] sm:$0xff]
        %v5315 = vld [vmem:[%s4936 + $0xbd0] sm:$0xff]
        %v5316 = vld [vmem:[%s4936 + $0xbd8] sm:$0xff]
        %v5317 = vld [vmem:[%s4936 + $0xbe0] sm:$0xff]
        %v5318 = vld [vmem:[%s4936 + $0xbe8] sm:$0xff]
        %v5319 = vld [vmem:[%s4936 + $0xbf0] sm:$0xff]
        %v5320 = vld [vmem:[%s4936 + $0xbf8] sm:$0xff]
        %v5321 = vld [vmem:[%s4936 + $0xc00] sm:$0xff]
        %v5322 = vld [vmem:[%s4936 + $0xc08] sm:$0xff]
        %v5323 = vld [vmem:[%s4936 + $0xc10] sm:$0xff]
        %v5324 = vld [vmem:[%s4936 + $0xc18] sm:$0xff]
        %v5325 = vld [vmem:[%s4936 + $0xc20] sm:$0xff]
        %v5326 = vld [vmem:[%s4936 + $0xc28] sm:$0xff]
        %v5327 = vld [vmem:[%s4936 + $0xc30] sm:$0xff]
        %v5328 = vld [vmem:[%s4936 + $0xc38] sm:$0xff]
        %v5329 = vld [vmem:[%s4936 + $0xc40] sm:$0xff]
        %v5330 = vld [vmem:[%s4936 + $0xc48] sm:$0xff]
        %v5331 = vld [vmem:[%s4936 + $0xc50] sm:$0xff]
        %v5332 = vld [vmem:[%s4936 + $0xc58] sm:$0xff]
        %v5333 = vld [vmem:[%s4936 + $0xc60] sm:$0xff]
        %v5334 = vld [vmem:[%s4936 + $0xc68] sm:$0xff]
        %v5335 = vld [vmem:[%s4936 + $0xc70] sm:$0xff]
        %v5336 = vld [vmem:[%s4936 + $0xc78] sm:$0xff]
        %v5337 = vld [vmem:[%s4936 + $0xc80] sm:$0xff]
        %v5338 = vld [vmem:[%s4936 + $0xc88] sm:$0xff]
        %v5339 = vld [vmem:[%s4936 + $0xc90] sm:$0xff]
        %v5340 = vld [vmem:[%s4936 + $0xc98] sm:$0xff]
        %v5341 = vld [vmem:[%s4936 + $0xca0] sm:$0xff]
        %v5342 = vld [vmem:[%s4936 + $0xca8] sm:$0xff]
        %v5343 = vld [vmem:[%s4936 + $0xcb0] sm:$0xff]
        %v5344 = vld [vmem:[%s4936 + $0xcb8] sm:$0xff]
        %v5345 = vld [vmem:[%s4936 + $0xcc0] sm:$0xff]
        %v5346 = vld [vmem:[%s4936 + $0xcc8] sm:$0xff]
        %v5347 = vld [vmem:[%s4936 + $0xcd0] sm:$0xff]
        %v5348 = vld [vmem:[%s4936 + $0xcd8] sm:$0xff]
        %v5349 = vld [vmem:[%s4936 + $0xce0] sm:$0xff]
        %v5350 = vld [vmem:[%s4936 + $0xce8] sm:$0xff]
        %v5351 = vld [vmem:[%s4936 + $0xcf0] sm:$0xff]
        %v5352 = vld [vmem:[%s4936 + $0xcf8] sm:$0xff]
        %v5353 = vld [vmem:[%s4936 + $0xd00] sm:$0xff]
        %v5354 = vld [vmem:[%s4936 + $0xd08] sm:$0xff]
        %v5355 = vld [vmem:[%s4936 + $0xd10] sm:$0xff]
        %v5356 = vld [vmem:[%s4936 + $0xd18] sm:$0xff]
        %v5357 = vld [vmem:[%s4936 + $0xd20] sm:$0xff]
        %v5358 = vld [vmem:[%s4936 + $0xd28] sm:$0xff]
        %v5359 = vld [vmem:[%s4936 + $0xd30] sm:$0xff]
        %v5360 = vld [vmem:[%s4936 + $0xd38] sm:$0xff]
        %v5361 = vld [vmem:[%s4936 + $0xd40] sm:$0xff]
        %v5362 = vld [vmem:[%s4936 + $0xd48] sm:$0xff]
        %v5363 = vld [vmem:[%s4936 + $0xd50] sm:$0xff]
        %v5364 = vld [vmem:[%s4936 + $0xd58] sm:$0xff]
        %v5365 = vld [vmem:[%s4936 + $0xd60] sm:$0xff]
        %v5366 = vld [vmem:[%s4936 + $0xd68] sm:$0xff]
        %v5367 = vld [vmem:[%s4936 + $0xd70] sm:$0xff]
        %v5368 = vld [vmem:[%s4936 + $0xd78] sm:$0xff]
        %v5369 = vld [vmem:[%s4936 + $0xd80] sm:$0xff]
        %v5370 = vld [vmem:[%s4936 + $0xd88] sm:$0xff]
        %v5371 = vld [vmem:[%s4936 + $0xd90] sm:$0xff]
        %v5372 = vld [vmem:[%s4936 + $0xd98] sm:$0xff]
        %v5373 = vld [vmem:[%s4936 + $0xda0] sm:$0xff]
        %v5374 = vld [vmem:[%s4936 + $0xda8] sm:$0xff]
        %v5375 = vld [vmem:[%s4936 + $0xdb0] sm:$0xff]
        %v5376 = vld [vmem:[%s4936 + $0xdb8] sm:$0xff]
        %v5377 = vld [vmem:[%s4936 + $0xdc0] sm:$0xff]
        %v5378 = vld [vmem:[%s4936 + $0xdc8] sm:$0xff]
        %v5379 = vld [vmem:[%s4936 + $0xdd0] sm:$0xff]
        %v5380 = vld [vmem:[%s4936 + $0xdd8] sm:$0xff]
        %v5381 = vld [vmem:[%s4936 + $0xde0] sm:$0xff]
        %v5382 = vld [vmem:[%s4936 + $0xde8] sm:$0xff]
        %v5383 = vld [vmem:[%s4936 + $0xdf0] sm:$0xff]
        %v5384 = vld [vmem:[%s4936 + $0xdf8] sm:$0xff]
        %v5385 = vld [vmem:[%s4936 + $0xe00] sm:$0xff]
        %v5386 = vld [vmem:[%s4936 + $0xe08] sm:$0xff]
        %v5387 = vld [vmem:[%s4936 + $0xe10] sm:$0xff]
        %v5388 = vld [vmem:[%s4936 + $0xe18] sm:$0xff]
        %v5389 = vld [vmem:[%s4936 + $0xe20] sm:$0xff]
        %v5390 = vld [vmem:[%s4936 + $0xe28] sm:$0xff]
        %v5391 = vld [vmem:[%s4936 + $0xe30] sm:$0xff]
        %v5392 = vld [vmem:[%s4936 + $0xe38] sm:$0xff]
        %v5393 = vld [vmem:[%s4936 + $0xe40] sm:$0xff]
        %v5394 = vld [vmem:[%s4936 + $0xe48] sm:$0xff]
        %v5395 = vld [vmem:[%s4936 + $0xe50] sm:$0xff]
        %v5396 = vld [vmem:[%s4936 + $0xe58] sm:$0xff]
        %v5397 = vld [vmem:[%s4936 + $0xe60] sm:$0xff]
        %v5398 = vld [vmem:[%s4936 + $0xe68] sm:$0xff]
        %v5399 = vld [vmem:[%s4936 + $0xe70] sm:$0xff]
        %v5400 = vld [vmem:[%s4936 + $0xe78] sm:$0xff]
        %v5401 = vld [vmem:[%s4936 + $0xe80] sm:$0xff]
        %v5402 = vld [vmem:[%s4936 + $0xe88] sm:$0xff]
        %v5403 = vld [vmem:[%s4936 + $0xe90] sm:$0xff]
        %v5404 = vld [vmem:[%s4936 + $0xe98] sm:$0xff]
        %v5405 = vld [vmem:[%s4936 + $0xea0] sm:$0xff]
        %v5406 = vld [vmem:[%s4936 + $0xea8] sm:$0xff]
        %v5407 = vld [vmem:[%s4936 + $0xeb0] sm:$0xff]
        %v5408 = vld [vmem:[%s4936 + $0xeb8] sm:$0xff]
        %v5409 = vld [vmem:[%s4936 + $0xec0] sm:$0xff]
        %v5410 = vld [vmem:[%s4936 + $0xec8] sm:$0xff]
        %v5411 = vld [vmem:[%s4936 + $0xed0] sm:$0xff]
        %v5412 = vld [vmem:[%s4936 + $0xed8] sm:$0xff]
        %v5413 = vld [vmem:[%s4936 + $0xee0] sm:$0xff]
        %v5414 = vld [vmem:[%s4936 + $0xee8] sm:$0xff]
        %v5415 = vld [vmem:[%s4936 + $0xef0] sm:$0xff]
        %v5416 = vld [vmem:[%s4936 + $0xef8] sm:$0xff]
        %v5417 = vld [vmem:[%s4936 + $0xf00] sm:$0xff]
        %v5418 = vld [vmem:[%s4936 + $0xf08] sm:$0xff]
        %v5419 = vld [vmem:[%s4936 + $0xf10] sm:$0xff]
        %v5420 = vld [vmem:[%s4936 + $0xf18] sm:$0xff]
        %v5421 = vld [vmem:[%s4936 + $0xf20] sm:$0xff]
        %v5422 = vld [vmem:[%s4936 + $0xf28] sm:$0xff]
        %v5423 = vld [vmem:[%s4936 + $0xf30] sm:$0xff]
        %v5424 = vld [vmem:[%s4936 + $0xf38] sm:$0xff]
        %v5425 = vld [vmem:[%s4936 + $0xf40] sm:$0xff]
        %v5426 = vld [vmem:[%s4936 + $0xf48] sm:$0xff]
        %v5427 = vld [vmem:[%s4936 + $0xf50] sm:$0xff]
        %v5428 = vld [vmem:[%s4936 + $0xf58] sm:$0xff]
        %v5429 = vld [vmem:[%s4936 + $0xf60] sm:$0xff]
        %v5430 = vld [vmem:[%s4936 + $0xf68] sm:$0xff]
        %v5431 = vld [vmem:[%s4936 + $0xf70] sm:$0xff]
        %v5432 = vld [vmem:[%s4936 + $0xf78] sm:$0xff]
        %v5433 = vld [vmem:[%s4936 + $0xf80] sm:$0xff]
        %v5434 = vld [vmem:[%s4936 + $0xf88] sm:$0xff]
        %v5435 = vld [vmem:[%s4936 + $0xf90] sm:$0xff]
        %v5436 = vld [vmem:[%s4936 + $0xf98] sm:$0xff]
        %v5437 = vld [vmem:[%s4936 + $0xfa0] sm:$0xff]
        %v5438 = vld [vmem:[%s4936 + $0xfa8] sm:$0xff]
        %v5439 = vld [vmem:[%s4936 + $0xfb0] sm:$0xff]
        %v5440 = vld [vmem:[%s4936 + $0xfb8] sm:$0xff]
        %v5441 = vld [vmem:[%s4936 + $0xfc0] sm:$0xff]
        %v5442 = vld [vmem:[%s4936 + $0xfc8] sm:$0xff]
        %v5443 = vld [vmem:[%s4936 + $0xfd0] sm:$0xff]
        %v5444 = vld [vmem:[%s4936 + $0xfd8] sm:$0xff]
        %v5445 = vld [vmem:[%s4936 + $0xfe0] sm:$0xff]
        %v5446 = vld [vmem:[%s4936 + $0xfe8] sm:$0xff]
        %v5447 = vld [vmem:[%s4936 + $0xff0] sm:$0xff]
        %v5448 = vld [vmem:[%s4936 + $0xff8] sm:$0xff]
        %s5449 = scalar_lea.vmem %s362, 8 [#allocation11]
        %v5450 = vld [vmem:[%s5449] sm:$0xff]
        %v5452 = vperm.slane %v5450, 0
        %v5453 = vperm.slane %v5450, 1
        %v5454 = vperm.slane %v5450, 2
        %v5455 = vperm.slane %v5450, 3
        %v5456 = vperm.slane %v5450, 4
        %v5457 = vperm.slane %v5450, 5
        %v5458 = vperm.slane %v5450, 6
        %v5459 = vperm.slane %v5450, 7
        %v5980 = vunpack.c.l.b16 %v4937
        %v5981 = vunpack.c.h.b16 %v4937
        %v5982 = vunpack.c.l.b16 %v4938
        %v5983 = vunpack.c.h.b16 %v4938
        %v5984 = vunpack.c.l.b16 %v4939
        %v5985 = vunpack.c.h.b16 %v4939
        %v5986 = vunpack.c.l.b16 %v4940
        %v5987 = vunpack.c.h.b16 %v4940
        %v5988 = vunpack.c.l.b16 %v4941
        %v5989 = vunpack.c.h.b16 %v4941
        %v5990 = vunpack.c.l.b16 %v4942
        %v5991 = vunpack.c.h.b16 %v4942
        %v5992 = vunpack.c.l.b16 %v4943
        %v5993 = vunpack.c.h.b16 %v4943
        %v5994 = vunpack.c.l.b16 %v4944
        %v5995 = vunpack.c.h.b16 %v4944
        %v5996 = vunpack.c.l.b16 %v4945
        %v5997 = vunpack.c.h.b16 %v4945
        %v5998 = vunpack.c.l.b16 %v4946
        %v5999 = vunpack.c.h.b16 %v4946
        %v6000 = vunpack.c.l.b16 %v4947
        %v6001 = vunpack.c.h.b16 %v4947
        %v6002 = vunpack.c.l.b16 %v4948
        %v6003 = vunpack.c.h.b16 %v4948
        %v6004 = vunpack.c.l.b16 %v4949
        %v6005 = vunpack.c.h.b16 %v4949
        %v6006 = vunpack.c.l.b16 %v4950
        %v6007 = vunpack.c.h.b16 %v4950
        %v6008 = vunpack.c.l.b16 %v4951
        %v6009 = vunpack.c.h.b16 %v4951
        %v6010 = vunpack.c.l.b16 %v4952
        %v6011 = vunpack.c.h.b16 %v4952
        %v6012 = vunpack.c.l.b16 %v4953
        %v6013 = vunpack.c.h.b16 %v4953
        %v6014 = vunpack.c.l.b16 %v4954
        %v6015 = vunpack.c.h.b16 %v4954
        %v6016 = vunpack.c.l.b16 %v4955
        %v6017 = vunpack.c.h.b16 %v4955
        %v6018 = vunpack.c.l.b16 %v4956
        %v6019 = vunpack.c.h.b16 %v4956
        %v6020 = vunpack.c.l.b16 %v4957
        %v6021 = vunpack.c.h.b16 %v4957
        %v6022 = vunpack.c.l.b16 %v4958
        %v6023 = vunpack.c.h.b16 %v4958
        %v6024 = vunpack.c.l.b16 %v4959
        %v6025 = vunpack.c.h.b16 %v4959
        %v6026 = vunpack.c.l.b16 %v4960
        %v6027 = vunpack.c.h.b16 %v4960
        %v6028 = vunpack.c.l.b16 %v4961
        %v6029 = vunpack.c.h.b16 %v4961
        %v6030 = vunpack.c.l.b16 %v4962
        %v6031 = vunpack.c.h.b16 %v4962
        %v6032 = vunpack.c.l.b16 %v4963
        %v6033 = vunpack.c.h.b16 %v4963
        %v6034 = vunpack.c.l.b16 %v4964
        %v6035 = vunpack.c.h.b16 %v4964
        %v6036 = vunpack.c.l.b16 %v4965
        %v6037 = vunpack.c.h.b16 %v4965
        %v6038 = vunpack.c.l.b16 %v4966
        %v6039 = vunpack.c.h.b16 %v4966
        %v6040 = vunpack.c.l.b16 %v4967
        %v6041 = vunpack.c.h.b16 %v4967
        %v6042 = vunpack.c.l.b16 %v4968
        %v6043 = vunpack.c.h.b16 %v4968
        %v6044 = vunpack.c.l.b16 %v4969
        %v6045 = vunpack.c.h.b16 %v4969
        %v6046 = vunpack.c.l.b16 %v4970
        %v6047 = vunpack.c.h.b16 %v4970
        %v6048 = vunpack.c.l.b16 %v4971
        %v6049 = vunpack.c.h.b16 %v4971
        %v6050 = vunpack.c.l.b16 %v4972
        %v6051 = vunpack.c.h.b16 %v4972
        %v6052 = vunpack.c.l.b16 %v4973
        %v6053 = vunpack.c.h.b16 %v4973
        %v6054 = vunpack.c.l.b16 %v4974
        %v6055 = vunpack.c.h.b16 %v4974
        %v6056 = vunpack.c.l.b16 %v4975
        %v6057 = vunpack.c.h.b16 %v4975
        %v6058 = vunpack.c.l.b16 %v4976
        %v6059 = vunpack.c.h.b16 %v4976
        %v6060 = vunpack.c.l.b16 %v4977
        %v6061 = vunpack.c.h.b16 %v4977
        %v6062 = vunpack.c.l.b16 %v4978
        %v6063 = vunpack.c.h.b16 %v4978
        %v6064 = vunpack.c.l.b16 %v4979
        %v6065 = vunpack.c.h.b16 %v4979
        %v6066 = vunpack.c.l.b16 %v4980
        %v6067 = vunpack.c.h.b16 %v4980
        %v6068 = vunpack.c.l.b16 %v4981
        %v6069 = vunpack.c.h.b16 %v4981
        %v6070 = vunpack.c.l.b16 %v4982
        %v6071 = vunpack.c.h.b16 %v4982
        %v6072 = vunpack.c.l.b16 %v4983
        %v6073 = vunpack.c.h.b16 %v4983
        %v6074 = vunpack.c.l.b16 %v4984
        %v6075 = vunpack.c.h.b16 %v4984
        %v6076 = vunpack.c.l.b16 %v4985
        %v6077 = vunpack.c.h.b16 %v4985
        %v6078 = vunpack.c.l.b16 %v4986
        %v6079 = vunpack.c.h.b16 %v4986
        %v6080 = vunpack.c.l.b16 %v4987
        %v6081 = vunpack.c.h.b16 %v4987
        %v6082 = vunpack.c.l.b16 %v4988
        %v6083 = vunpack.c.h.b16 %v4988
        %v6084 = vunpack.c.l.b16 %v4989
        %v6085 = vunpack.c.h.b16 %v4989
        %v6086 = vunpack.c.l.b16 %v4990
        %v6087 = vunpack.c.h.b16 %v4990
        %v6088 = vunpack.c.l.b16 %v4991
        %v6089 = vunpack.c.h.b16 %v4991
        %v6090 = vunpack.c.l.b16 %v4992
        %v6091 = vunpack.c.h.b16 %v4992
        %v6092 = vunpack.c.l.b16 %v4993
        %v6093 = vunpack.c.h.b16 %v4993
        %v6094 = vunpack.c.l.b16 %v4994
        %v6095 = vunpack.c.h.b16 %v4994
        %v6096 = vunpack.c.l.b16 %v4995
        %v6097 = vunpack.c.h.b16 %v4995
        %v6098 = vunpack.c.l.b16 %v4996
        %v6099 = vunpack.c.h.b16 %v4996
        %v6100 = vunpack.c.l.b16 %v4997
        %v6101 = vunpack.c.h.b16 %v4997
        %v6102 = vunpack.c.l.b16 %v4998
        %v6103 = vunpack.c.h.b16 %v4998
        %v6104 = vunpack.c.l.b16 %v4999
        %v6105 = vunpack.c.h.b16 %v4999
        %v6106 = vunpack.c.l.b16 %v5000
        %v6107 = vunpack.c.h.b16 %v5000
        %v6108 = vunpack.c.l.b16 %v5001
        %v6109 = vunpack.c.h.b16 %v5001
        %v6110 = vunpack.c.l.b16 %v5002
        %v6111 = vunpack.c.h.b16 %v5002
        %v6112 = vunpack.c.l.b16 %v5003
        %v6113 = vunpack.c.h.b16 %v5003
        %v6114 = vunpack.c.l.b16 %v5004
        %v6115 = vunpack.c.h.b16 %v5004
        %v6116 = vunpack.c.l.b16 %v5005
        %v6117 = vunpack.c.h.b16 %v5005
        %v6118 = vunpack.c.l.b16 %v5006
        %v6119 = vunpack.c.h.b16 %v5006
        %v6120 = vunpack.c.l.b16 %v5007
        %v6121 = vunpack.c.h.b16 %v5007
        %v6122 = vunpack.c.l.b16 %v5008
        %v6123 = vunpack.c.h.b16 %v5008
        %v6124 = vunpack.c.l.b16 %v5009
        %v6125 = vunpack.c.h.b16 %v5009
        %v6126 = vunpack.c.l.b16 %v5010
        %v6127 = vunpack.c.h.b16 %v5010
        %v6128 = vunpack.c.l.b16 %v5011
        %v6129 = vunpack.c.h.b16 %v5011
        %v6130 = vunpack.c.l.b16 %v5012
        %v6131 = vunpack.c.h.b16 %v5012
        %v6132 = vunpack.c.l.b16 %v5013
        %v6133 = vunpack.c.h.b16 %v5013
        %v6134 = vunpack.c.l.b16 %v5014
        %v6135 = vunpack.c.h.b16 %v5014
        %v6136 = vunpack.c.l.b16 %v5015
        %v6137 = vunpack.c.h.b16 %v5015
        %v6138 = vunpack.c.l.b16 %v5016
        %v6139 = vunpack.c.h.b16 %v5016
        %v6140 = vunpack.c.l.b16 %v5017
        %v6141 = vunpack.c.h.b16 %v5017
        %v6142 = vunpack.c.l.b16 %v5018
        %v6143 = vunpack.c.h.b16 %v5018
        %v6144 = vunpack.c.l.b16 %v5019
        %v6145 = vunpack.c.h.b16 %v5019
        %v6146 = vunpack.c.l.b16 %v5020
        %v6147 = vunpack.c.h.b16 %v5020
        %v6148 = vunpack.c.l.b16 %v5021
        %v6149 = vunpack.c.h.b16 %v5021
        %v6150 = vunpack.c.l.b16 %v5022
        %v6151 = vunpack.c.h.b16 %v5022
        %v6152 = vunpack.c.l.b16 %v5023
        %v6153 = vunpack.c.h.b16 %v5023
        %v6154 = vunpack.c.l.b16 %v5024
        %v6155 = vunpack.c.h.b16 %v5024
        %v6156 = vunpack.c.l.b16 %v5025
        %v6157 = vunpack.c.h.b16 %v5025
        %v6158 = vunpack.c.l.b16 %v5026
        %v6159 = vunpack.c.h.b16 %v5026
        %v6160 = vunpack.c.l.b16 %v5027
        %v6161 = vunpack.c.h.b16 %v5027
        %v6162 = vunpack.c.l.b16 %v5028
        %v6163 = vunpack.c.h.b16 %v5028
        %v6164 = vunpack.c.l.b16 %v5029
        %v6165 = vunpack.c.h.b16 %v5029
        %v6166 = vunpack.c.l.b16 %v5030
        %v6167 = vunpack.c.h.b16 %v5030
        %v6168 = vunpack.c.l.b16 %v5031
        %v6169 = vunpack.c.h.b16 %v5031
        %v6170 = vunpack.c.l.b16 %v5032
        %v6171 = vunpack.c.h.b16 %v5032
        %v6172 = vunpack.c.l.b16 %v5033
        %v6173 = vunpack.c.h.b16 %v5033
        %v6174 = vunpack.c.l.b16 %v5034
        %v6175 = vunpack.c.h.b16 %v5034
        %v6176 = vunpack.c.l.b16 %v5035
        %v6177 = vunpack.c.h.b16 %v5035
        %v6178 = vunpack.c.l.b16 %v5036
        %v6179 = vunpack.c.h.b16 %v5036
        %v6180 = vunpack.c.l.b16 %v5037
        %v6181 = vunpack.c.h.b16 %v5037
        %v6182 = vunpack.c.l.b16 %v5038
        %v6183 = vunpack.c.h.b16 %v5038
        %v6184 = vunpack.c.l.b16 %v5039
        %v6185 = vunpack.c.h.b16 %v5039
        %v6186 = vunpack.c.l.b16 %v5040
        %v6187 = vunpack.c.h.b16 %v5040
        %v6188 = vunpack.c.l.b16 %v5041
        %v6189 = vunpack.c.h.b16 %v5041
        %v6190 = vunpack.c.l.b16 %v5042
        %v6191 = vunpack.c.h.b16 %v5042
        %v6192 = vunpack.c.l.b16 %v5043
        %v6193 = vunpack.c.h.b16 %v5043
        %v6194 = vunpack.c.l.b16 %v5044
        %v6195 = vunpack.c.h.b16 %v5044
        %v6196 = vunpack.c.l.b16 %v5045
        %v6197 = vunpack.c.h.b16 %v5045
        %v6198 = vunpack.c.l.b16 %v5046
        %v6199 = vunpack.c.h.b16 %v5046
        %v6200 = vunpack.c.l.b16 %v5047
        %v6201 = vunpack.c.h.b16 %v5047
        %v6202 = vunpack.c.l.b16 %v5048
        %v6203 = vunpack.c.h.b16 %v5048
        %v6204 = vunpack.c.l.b16 %v5049
        %v6205 = vunpack.c.h.b16 %v5049
        %v6206 = vunpack.c.l.b16 %v5050
        %v6207 = vunpack.c.h.b16 %v5050
        %v6208 = vunpack.c.l.b16 %v5051
        %v6209 = vunpack.c.h.b16 %v5051
        %v6210 = vunpack.c.l.b16 %v5052
        %v6211 = vunpack.c.h.b16 %v5052
        %v6212 = vunpack.c.l.b16 %v5053
        %v6213 = vunpack.c.h.b16 %v5053
        %v6214 = vunpack.c.l.b16 %v5054
        %v6215 = vunpack.c.h.b16 %v5054
        %v6216 = vunpack.c.l.b16 %v5055
        %v6217 = vunpack.c.h.b16 %v5055
        %v6218 = vunpack.c.l.b16 %v5056
        %v6219 = vunpack.c.h.b16 %v5056
        %v6220 = vunpack.c.l.b16 %v5057
        %v6221 = vunpack.c.h.b16 %v5057
        %v6222 = vunpack.c.l.b16 %v5058
        %v6223 = vunpack.c.h.b16 %v5058
        %v6224 = vunpack.c.l.b16 %v5059
        %v6225 = vunpack.c.h.b16 %v5059
        %v6226 = vunpack.c.l.b16 %v5060
        %v6227 = vunpack.c.h.b16 %v5060
        %v6228 = vunpack.c.l.b16 %v5061
        %v6229 = vunpack.c.h.b16 %v5061
        %v6230 = vunpack.c.l.b16 %v5062
        %v6231 = vunpack.c.h.b16 %v5062
        %v6232 = vunpack.c.l.b16 %v5063
        %v6233 = vunpack.c.h.b16 %v5063
        %v6234 = vunpack.c.l.b16 %v5064
        %v6235 = vunpack.c.h.b16 %v5064
        %v6236 = vunpack.c.l.b16 %v5065
        %v6237 = vunpack.c.h.b16 %v5065
        %v6238 = vunpack.c.l.b16 %v5066
        %v6239 = vunpack.c.h.b16 %v5066
        %v6240 = vunpack.c.l.b16 %v5067
        %v6241 = vunpack.c.h.b16 %v5067
        %v6242 = vunpack.c.l.b16 %v5068
        %v6243 = vunpack.c.h.b16 %v5068
        %v6244 = vunpack.c.l.b16 %v5069
        %v6245 = vunpack.c.h.b16 %v5069
        %v6246 = vunpack.c.l.b16 %v5070
        %v6247 = vunpack.c.h.b16 %v5070
        %v6248 = vunpack.c.l.b16 %v5071
        %v6249 = vunpack.c.h.b16 %v5071
        %v6250 = vunpack.c.l.b16 %v5072
        %v6251 = vunpack.c.h.b16 %v5072
        %v6252 = vunpack.c.l.b16 %v5073
        %v6253 = vunpack.c.h.b16 %v5073
        %v6254 = vunpack.c.l.b16 %v5074
        %v6255 = vunpack.c.h.b16 %v5074
        %v6256 = vunpack.c.l.b16 %v5075
        %v6257 = vunpack.c.h.b16 %v5075
        %v6258 = vunpack.c.l.b16 %v5076
        %v6259 = vunpack.c.h.b16 %v5076
        %v6260 = vunpack.c.l.b16 %v5077
        %v6261 = vunpack.c.h.b16 %v5077
        %v6262 = vunpack.c.l.b16 %v5078
        %v6263 = vunpack.c.h.b16 %v5078
        %v6264 = vunpack.c.l.b16 %v5079
        %v6265 = vunpack.c.h.b16 %v5079
        %v6266 = vunpack.c.l.b16 %v5080
        %v6267 = vunpack.c.h.b16 %v5080
        %v6268 = vunpack.c.l.b16 %v5081
        %v6269 = vunpack.c.h.b16 %v5081
        %v6270 = vunpack.c.l.b16 %v5082
        %v6271 = vunpack.c.h.b16 %v5082
        %v6272 = vunpack.c.l.b16 %v5083
        %v6273 = vunpack.c.h.b16 %v5083
        %v6274 = vunpack.c.l.b16 %v5084
        %v6275 = vunpack.c.h.b16 %v5084
        %v6276 = vunpack.c.l.b16 %v5085
        %v6277 = vunpack.c.h.b16 %v5085
        %v6278 = vunpack.c.l.b16 %v5086
        %v6279 = vunpack.c.h.b16 %v5086
        %v6280 = vunpack.c.l.b16 %v5087
        %v6281 = vunpack.c.h.b16 %v5087
        %v6282 = vunpack.c.l.b16 %v5088
        %v6283 = vunpack.c.h.b16 %v5088
        %v6284 = vunpack.c.l.b16 %v5089
        %v6285 = vunpack.c.h.b16 %v5089
        %v6286 = vunpack.c.l.b16 %v5090
        %v6287 = vunpack.c.h.b16 %v5090
        %v6288 = vunpack.c.l.b16 %v5091
        %v6289 = vunpack.c.h.b16 %v5091
        %v6290 = vunpack.c.l.b16 %v5092
        %v6291 = vunpack.c.h.b16 %v5092
        %v6292 = vunpack.c.l.b16 %v5093
        %v6293 = vunpack.c.h.b16 %v5093
        %v6294 = vunpack.c.l.b16 %v5094
        %v6295 = vunpack.c.h.b16 %v5094
        %v6296 = vunpack.c.l.b16 %v5095
        %v6297 = vunpack.c.h.b16 %v5095
        %v6298 = vunpack.c.l.b16 %v5096
        %v6299 = vunpack.c.h.b16 %v5096
        %v6300 = vunpack.c.l.b16 %v5097
        %v6301 = vunpack.c.h.b16 %v5097
        %v6302 = vunpack.c.l.b16 %v5098
        %v6303 = vunpack.c.h.b16 %v5098
        %v6304 = vunpack.c.l.b16 %v5099
        %v6305 = vunpack.c.h.b16 %v5099
        %v6306 = vunpack.c.l.b16 %v5100
        %v6307 = vunpack.c.h.b16 %v5100
        %v6308 = vunpack.c.l.b16 %v5101
        %v6309 = vunpack.c.h.b16 %v5101
        %v6310 = vunpack.c.l.b16 %v5102
        %v6311 = vunpack.c.h.b16 %v5102
        %v6312 = vunpack.c.l.b16 %v5103
        %v6313 = vunpack.c.h.b16 %v5103
        %v6314 = vunpack.c.l.b16 %v5104
        %v6315 = vunpack.c.h.b16 %v5104
        %v6316 = vunpack.c.l.b16 %v5105
        %v6317 = vunpack.c.h.b16 %v5105
        %v6318 = vunpack.c.l.b16 %v5106
        %v6319 = vunpack.c.h.b16 %v5106
        %v6320 = vunpack.c.l.b16 %v5107
        %v6321 = vunpack.c.h.b16 %v5107
        %v6322 = vunpack.c.l.b16 %v5108
        %v6323 = vunpack.c.h.b16 %v5108
        %v6324 = vunpack.c.l.b16 %v5109
        %v6325 = vunpack.c.h.b16 %v5109
        %v6326 = vunpack.c.l.b16 %v5110
        %v6327 = vunpack.c.h.b16 %v5110
        %v6328 = vunpack.c.l.b16 %v5111
        %v6329 = vunpack.c.h.b16 %v5111
        %v6330 = vunpack.c.l.b16 %v5112
        %v6331 = vunpack.c.h.b16 %v5112
        %v6332 = vunpack.c.l.b16 %v5113
        %v6333 = vunpack.c.h.b16 %v5113
        %v6334 = vunpack.c.l.b16 %v5114
        %v6335 = vunpack.c.h.b16 %v5114
        %v6336 = vunpack.c.l.b16 %v5115
        %v6337 = vunpack.c.h.b16 %v5115
        %v6338 = vunpack.c.l.b16 %v5116
        %v6339 = vunpack.c.h.b16 %v5116
        %v6340 = vunpack.c.l.b16 %v5117
        %v6341 = vunpack.c.h.b16 %v5117
        %v6342 = vunpack.c.l.b16 %v5118
        %v6343 = vunpack.c.h.b16 %v5118
        %v6344 = vunpack.c.l.b16 %v5119
        %v6345 = vunpack.c.h.b16 %v5119
        %v6346 = vunpack.c.l.b16 %v5120
        %v6347 = vunpack.c.h.b16 %v5120
        %v6348 = vunpack.c.l.b16 %v5121
        %v6349 = vunpack.c.h.b16 %v5121
        %v6350 = vunpack.c.l.b16 %v5122
        %v6351 = vunpack.c.h.b16 %v5122
        %v6352 = vunpack.c.l.b16 %v5123
        %v6353 = vunpack.c.h.b16 %v5123
        %v6354 = vunpack.c.l.b16 %v5124
        %v6355 = vunpack.c.h.b16 %v5124
        %v6356 = vunpack.c.l.b16 %v5125
        %v6357 = vunpack.c.h.b16 %v5125
        %v6358 = vunpack.c.l.b16 %v5126
        %v6359 = vunpack.c.h.b16 %v5126
        %v6360 = vunpack.c.l.b16 %v5127
        %v6361 = vunpack.c.h.b16 %v5127
        %v6362 = vunpack.c.l.b16 %v5128
        %v6363 = vunpack.c.h.b16 %v5128
        %v6364 = vunpack.c.l.b16 %v5129
        %v6365 = vunpack.c.h.b16 %v5129
        %v6366 = vunpack.c.l.b16 %v5130
        %v6367 = vunpack.c.h.b16 %v5130
        %v6368 = vunpack.c.l.b16 %v5131
        %v6369 = vunpack.c.h.b16 %v5131
        %v6370 = vunpack.c.l.b16 %v5132
        %v6371 = vunpack.c.h.b16 %v5132
        %v6372 = vunpack.c.l.b16 %v5133
        %v6373 = vunpack.c.h.b16 %v5133
        %v6374 = vunpack.c.l.b16 %v5134
        %v6375 = vunpack.c.h.b16 %v5134
        %v6376 = vunpack.c.l.b16 %v5135
        %v6377 = vunpack.c.h.b16 %v5135
        %v6378 = vunpack.c.l.b16 %v5136
        %v6379 = vunpack.c.h.b16 %v5136
        %v6380 = vunpack.c.l.b16 %v5137
        %v6381 = vunpack.c.h.b16 %v5137
        %v6382 = vunpack.c.l.b16 %v5138
        %v6383 = vunpack.c.h.b16 %v5138
        %v6384 = vunpack.c.l.b16 %v5139
        %v6385 = vunpack.c.h.b16 %v5139
        %v6386 = vunpack.c.l.b16 %v5140
        %v6387 = vunpack.c.h.b16 %v5140
        %v6388 = vunpack.c.l.b16 %v5141
        %v6389 = vunpack.c.h.b16 %v5141
        %v6390 = vunpack.c.l.b16 %v5142
        %v6391 = vunpack.c.h.b16 %v5142
        %v6392 = vunpack.c.l.b16 %v5143
        %v6393 = vunpack.c.h.b16 %v5143
        %v6394 = vunpack.c.l.b16 %v5144
        %v6395 = vunpack.c.h.b16 %v5144
        %v6396 = vunpack.c.l.b16 %v5145
        %v6397 = vunpack.c.h.b16 %v5145
        %v6398 = vunpack.c.l.b16 %v5146
        %v6399 = vunpack.c.h.b16 %v5146
        %v6400 = vunpack.c.l.b16 %v5147
        %v6401 = vunpack.c.h.b16 %v5147
        %v6402 = vunpack.c.l.b16 %v5148
        %v6403 = vunpack.c.h.b16 %v5148
        %v6404 = vunpack.c.l.b16 %v5149
        %v6405 = vunpack.c.h.b16 %v5149
        %v6406 = vunpack.c.l.b16 %v5150
        %v6407 = vunpack.c.h.b16 %v5150
        %v6408 = vunpack.c.l.b16 %v5151
        %v6409 = vunpack.c.h.b16 %v5151
        %v6410 = vunpack.c.l.b16 %v5152
        %v6411 = vunpack.c.h.b16 %v5152
        %v6412 = vunpack.c.l.b16 %v5153
        %v6413 = vunpack.c.h.b16 %v5153
        %v6414 = vunpack.c.l.b16 %v5154
        %v6415 = vunpack.c.h.b16 %v5154
        %v6416 = vunpack.c.l.b16 %v5155
        %v6417 = vunpack.c.h.b16 %v5155
        %v6418 = vunpack.c.l.b16 %v5156
        %v6419 = vunpack.c.h.b16 %v5156
        %v6420 = vunpack.c.l.b16 %v5157
        %v6421 = vunpack.c.h.b16 %v5157
        %v6422 = vunpack.c.l.b16 %v5158
        %v6423 = vunpack.c.h.b16 %v5158
        %v6424 = vunpack.c.l.b16 %v5159
        %v6425 = vunpack.c.h.b16 %v5159
        %v6426 = vunpack.c.l.b16 %v5160
        %v6427 = vunpack.c.h.b16 %v5160
        %v6428 = vunpack.c.l.b16 %v5161
        %v6429 = vunpack.c.h.b16 %v5161
        %v6430 = vunpack.c.l.b16 %v5162
        %v6431 = vunpack.c.h.b16 %v5162
        %v6432 = vunpack.c.l.b16 %v5163
        %v6433 = vunpack.c.h.b16 %v5163
        %v6434 = vunpack.c.l.b16 %v5164
        %v6435 = vunpack.c.h.b16 %v5164
        %v6436 = vunpack.c.l.b16 %v5165
        %v6437 = vunpack.c.h.b16 %v5165
        %v6438 = vunpack.c.l.b16 %v5166
        %v6439 = vunpack.c.h.b16 %v5166
        %v6440 = vunpack.c.l.b16 %v5167
        %v6441 = vunpack.c.h.b16 %v5167
        %v6442 = vunpack.c.l.b16 %v5168
        %v6443 = vunpack.c.h.b16 %v5168
        %v6444 = vunpack.c.l.b16 %v5169
        %v6445 = vunpack.c.h.b16 %v5169
        %v6446 = vunpack.c.l.b16 %v5170
        %v6447 = vunpack.c.h.b16 %v5170
        %v6448 = vunpack.c.l.b16 %v5171
        %v6449 = vunpack.c.h.b16 %v5171
        %v6450 = vunpack.c.l.b16 %v5172
        %v6451 = vunpack.c.h.b16 %v5172
        %v6452 = vunpack.c.l.b16 %v5173
        %v6453 = vunpack.c.h.b16 %v5173
        %v6454 = vunpack.c.l.b16 %v5174
        %v6455 = vunpack.c.h.b16 %v5174
        %v6456 = vunpack.c.l.b16 %v5175
        %v6457 = vunpack.c.h.b16 %v5175
        %v6458 = vunpack.c.l.b16 %v5176
        %v6459 = vunpack.c.h.b16 %v5176
        %v6460 = vunpack.c.l.b16 %v5177
        %v6461 = vunpack.c.h.b16 %v5177
        %v6462 = vunpack.c.l.b16 %v5178
        %v6463 = vunpack.c.h.b16 %v5178
        %v6464 = vunpack.c.l.b16 %v5179
        %v6465 = vunpack.c.h.b16 %v5179
        %v6466 = vunpack.c.l.b16 %v5180
        %v6467 = vunpack.c.h.b16 %v5180
        %v6468 = vunpack.c.l.b16 %v5181
        %v6469 = vunpack.c.h.b16 %v5181
        %v6470 = vunpack.c.l.b16 %v5182
        %v6471 = vunpack.c.h.b16 %v5182
        %v6472 = vunpack.c.l.b16 %v5183
        %v6473 = vunpack.c.h.b16 %v5183
        %v6474 = vunpack.c.l.b16 %v5184
        %v6475 = vunpack.c.h.b16 %v5184
        %v6476 = vunpack.c.l.b16 %v5185
        %v6477 = vunpack.c.h.b16 %v5185
        %v6478 = vunpack.c.l.b16 %v5186
        %v6479 = vunpack.c.h.b16 %v5186
        %v6480 = vunpack.c.l.b16 %v5187
        %v6481 = vunpack.c.h.b16 %v5187
        %v6482 = vunpack.c.l.b16 %v5188
        %v6483 = vunpack.c.h.b16 %v5188
        %v6484 = vunpack.c.l.b16 %v5189
        %v6485 = vunpack.c.h.b16 %v5189
        %v6486 = vunpack.c.l.b16 %v5190
        %v6487 = vunpack.c.h.b16 %v5190
        %v6488 = vunpack.c.l.b16 %v5191
        %v6489 = vunpack.c.h.b16 %v5191
        %v6490 = vunpack.c.l.b16 %v5192
        %v6491 = vunpack.c.h.b16 %v5192
        %v6492 = vunpack.c.l.b16 %v5193
        %v6493 = vunpack.c.h.b16 %v5193
        %v6494 = vunpack.c.l.b16 %v5194
        %v6495 = vunpack.c.h.b16 %v5194
        %v6496 = vunpack.c.l.b16 %v5195
        %v6497 = vunpack.c.h.b16 %v5195
        %v6498 = vunpack.c.l.b16 %v5196
        %v6499 = vunpack.c.h.b16 %v5196
        %v6500 = vunpack.c.l.b16 %v5197
        %v6501 = vunpack.c.h.b16 %v5197
        %v6502 = vunpack.c.l.b16 %v5198
        %v6503 = vunpack.c.h.b16 %v5198
        %v6504 = vunpack.c.l.b16 %v5199
        %v6505 = vunpack.c.h.b16 %v5199
        %v6506 = vunpack.c.l.b16 %v5200
        %v6507 = vunpack.c.h.b16 %v5200
        %v6508 = vunpack.c.l.b16 %v5201
        %v6509 = vunpack.c.h.b16 %v5201
        %v6510 = vunpack.c.l.b16 %v5202
        %v6511 = vunpack.c.h.b16 %v5202
        %v6512 = vunpack.c.l.b16 %v5203
        %v6513 = vunpack.c.h.b16 %v5203
        %v6514 = vunpack.c.l.b16 %v5204
        %v6515 = vunpack.c.h.b16 %v5204
        %v6516 = vunpack.c.l.b16 %v5205
        %v6517 = vunpack.c.h.b16 %v5205
        %v6518 = vunpack.c.l.b16 %v5206
        %v6519 = vunpack.c.h.b16 %v5206
        %v6520 = vunpack.c.l.b16 %v5207
        %v6521 = vunpack.c.h.b16 %v5207
        %v6522 = vunpack.c.l.b16 %v5208
        %v6523 = vunpack.c.h.b16 %v5208
        %v6524 = vunpack.c.l.b16 %v5209
        %v6525 = vunpack.c.h.b16 %v5209
        %v6526 = vunpack.c.l.b16 %v5210
        %v6527 = vunpack.c.h.b16 %v5210
        %v6528 = vunpack.c.l.b16 %v5211
        %v6529 = vunpack.c.h.b16 %v5211
        %v6530 = vunpack.c.l.b16 %v5212
        %v6531 = vunpack.c.h.b16 %v5212
        %v6532 = vunpack.c.l.b16 %v5213
        %v6533 = vunpack.c.h.b16 %v5213
        %v6534 = vunpack.c.l.b16 %v5214
        %v6535 = vunpack.c.h.b16 %v5214
        %v6536 = vunpack.c.l.b16 %v5215
        %v6537 = vunpack.c.h.b16 %v5215
        %v6538 = vunpack.c.l.b16 %v5216
        %v6539 = vunpack.c.h.b16 %v5216
        %v6540 = vunpack.c.l.b16 %v5217
        %v6541 = vunpack.c.h.b16 %v5217
        %v6542 = vunpack.c.l.b16 %v5218
        %v6543 = vunpack.c.h.b16 %v5218
        %v6544 = vunpack.c.l.b16 %v5219
        %v6545 = vunpack.c.h.b16 %v5219
        %v6546 = vunpack.c.l.b16 %v5220
        %v6547 = vunpack.c.h.b16 %v5220
        %v6548 = vunpack.c.l.b16 %v5221
        %v6549 = vunpack.c.h.b16 %v5221
        %v6550 = vunpack.c.l.b16 %v5222
        %v6551 = vunpack.c.h.b16 %v5222
        %v6552 = vunpack.c.l.b16 %v5223
        %v6553 = vunpack.c.h.b16 %v5223
        %v6554 = vunpack.c.l.b16 %v5224
        %v6555 = vunpack.c.h.b16 %v5224
        %v6556 = vunpack.c.l.b16 %v5225
        %v6557 = vunpack.c.h.b16 %v5225
        %v6558 = vunpack.c.l.b16 %v5226
        %v6559 = vunpack.c.h.b16 %v5226
        %v6560 = vunpack.c.l.b16 %v5227
        %v6561 = vunpack.c.h.b16 %v5227
        %v6562 = vunpack.c.l.b16 %v5228
        %v6563 = vunpack.c.h.b16 %v5228
        %v6564 = vunpack.c.l.b16 %v5229
        %v6565 = vunpack.c.h.b16 %v5229
        %v6566 = vunpack.c.l.b16 %v5230
        %v6567 = vunpack.c.h.b16 %v5230
        %v6568 = vunpack.c.l.b16 %v5231
        %v6569 = vunpack.c.h.b16 %v5231
        %v6570 = vunpack.c.l.b16 %v5232
        %v6571 = vunpack.c.h.b16 %v5232
        %v6572 = vunpack.c.l.b16 %v5233
        %v6573 = vunpack.c.h.b16 %v5233
        %v6574 = vunpack.c.l.b16 %v5234
        %v6575 = vunpack.c.h.b16 %v5234
        %v6576 = vunpack.c.l.b16 %v5235
        %v6577 = vunpack.c.h.b16 %v5235
        %v6578 = vunpack.c.l.b16 %v5236
        %v6579 = vunpack.c.h.b16 %v5236
        %v6580 = vunpack.c.l.b16 %v5237
        %v6581 = vunpack.c.h.b16 %v5237
        %v6582 = vunpack.c.l.b16 %v5238
        %v6583 = vunpack.c.h.b16 %v5238
        %v6584 = vunpack.c.l.b16 %v5239
        %v6585 = vunpack.c.h.b16 %v5239
        %v6586 = vunpack.c.l.b16 %v5240
        %v6587 = vunpack.c.h.b16 %v5240
        %v6588 = vunpack.c.l.b16 %v5241
        %v6589 = vunpack.c.h.b16 %v5241
        %v6590 = vunpack.c.l.b16 %v5242
        %v6591 = vunpack.c.h.b16 %v5242
        %v6592 = vunpack.c.l.b16 %v5243
        %v6593 = vunpack.c.h.b16 %v5243
        %v6594 = vunpack.c.l.b16 %v5244
        %v6595 = vunpack.c.h.b16 %v5244
        %v6596 = vunpack.c.l.b16 %v5245
        %v6597 = vunpack.c.h.b16 %v5245
        %v6598 = vunpack.c.l.b16 %v5246
        %v6599 = vunpack.c.h.b16 %v5246
        %v6600 = vunpack.c.l.b16 %v5247
        %v6601 = vunpack.c.h.b16 %v5247
        %v6602 = vunpack.c.l.b16 %v5248
        %v6603 = vunpack.c.h.b16 %v5248
        %v6604 = vunpack.c.l.b16 %v5249
        %v6605 = vunpack.c.h.b16 %v5249
        %v6606 = vunpack.c.l.b16 %v5250
        %v6607 = vunpack.c.h.b16 %v5250
        %v6608 = vunpack.c.l.b16 %v5251
        %v6609 = vunpack.c.h.b16 %v5251
        %v6610 = vunpack.c.l.b16 %v5252
        %v6611 = vunpack.c.h.b16 %v5252
        %v6612 = vunpack.c.l.b16 %v5253
        %v6613 = vunpack.c.h.b16 %v5253
        %v6614 = vunpack.c.l.b16 %v5254
        %v6615 = vunpack.c.h.b16 %v5254
        %v6616 = vunpack.c.l.b16 %v5255
        %v6617 = vunpack.c.h.b16 %v5255
        %v6618 = vunpack.c.l.b16 %v5256
        %v6619 = vunpack.c.h.b16 %v5256
        %v6620 = vunpack.c.l.b16 %v5257
        %v6621 = vunpack.c.h.b16 %v5257
        %v6622 = vunpack.c.l.b16 %v5258
        %v6623 = vunpack.c.h.b16 %v5258
        %v6624 = vunpack.c.l.b16 %v5259
        %v6625 = vunpack.c.h.b16 %v5259
        %v6626 = vunpack.c.l.b16 %v5260
        %v6627 = vunpack.c.h.b16 %v5260
        %v6628 = vunpack.c.l.b16 %v5261
        %v6629 = vunpack.c.h.b16 %v5261
        %v6630 = vunpack.c.l.b16 %v5262
        %v6631 = vunpack.c.h.b16 %v5262
        %v6632 = vunpack.c.l.b16 %v5263
        %v6633 = vunpack.c.h.b16 %v5263
        %v6634 = vunpack.c.l.b16 %v5264
        %v6635 = vunpack.c.h.b16 %v5264
        %v6636 = vunpack.c.l.b16 %v5265
        %v6637 = vunpack.c.h.b16 %v5265
        %v6638 = vunpack.c.l.b16 %v5266
        %v6639 = vunpack.c.h.b16 %v5266
        %v6640 = vunpack.c.l.b16 %v5267
        %v6641 = vunpack.c.h.b16 %v5267
        %v6642 = vunpack.c.l.b16 %v5268
        %v6643 = vunpack.c.h.b16 %v5268
        %v6644 = vunpack.c.l.b16 %v5269
        %v6645 = vunpack.c.h.b16 %v5269
        %v6646 = vunpack.c.l.b16 %v5270
        %v6647 = vunpack.c.h.b16 %v5270
        %v6648 = vunpack.c.l.b16 %v5271
        %v6649 = vunpack.c.h.b16 %v5271
        %v6650 = vunpack.c.l.b16 %v5272
        %v6651 = vunpack.c.h.b16 %v5272
        %v6652 = vunpack.c.l.b16 %v5273
        %v6653 = vunpack.c.h.b16 %v5273
        %v6654 = vunpack.c.l.b16 %v5274
        %v6655 = vunpack.c.h.b16 %v5274
        %v6656 = vunpack.c.l.b16 %v5275
        %v6657 = vunpack.c.h.b16 %v5275
        %v6658 = vunpack.c.l.b16 %v5276
        %v6659 = vunpack.c.h.b16 %v5276
        %v6660 = vunpack.c.l.b16 %v5277
        %v6661 = vunpack.c.h.b16 %v5277
        %v6662 = vunpack.c.l.b16 %v5278
        %v6663 = vunpack.c.h.b16 %v5278
        %v6664 = vunpack.c.l.b16 %v5279
        %v6665 = vunpack.c.h.b16 %v5279
        %v6666 = vunpack.c.l.b16 %v5280
        %v6667 = vunpack.c.h.b16 %v5280
        %v6668 = vunpack.c.l.b16 %v5281
        %v6669 = vunpack.c.h.b16 %v5281
        %v6670 = vunpack.c.l.b16 %v5282
        %v6671 = vunpack.c.h.b16 %v5282
        %v6672 = vunpack.c.l.b16 %v5283
        %v6673 = vunpack.c.h.b16 %v5283
        %v6674 = vunpack.c.l.b16 %v5284
        %v6675 = vunpack.c.h.b16 %v5284
        %v6676 = vunpack.c.l.b16 %v5285
        %v6677 = vunpack.c.h.b16 %v5285
        %v6678 = vunpack.c.l.b16 %v5286
        %v6679 = vunpack.c.h.b16 %v5286
        %v6680 = vunpack.c.l.b16 %v5287
        %v6681 = vunpack.c.h.b16 %v5287
        %v6682 = vunpack.c.l.b16 %v5288
        %v6683 = vunpack.c.h.b16 %v5288
        %v6684 = vunpack.c.l.b16 %v5289
        %v6685 = vunpack.c.h.b16 %v5289
        %v6686 = vunpack.c.l.b16 %v5290
        %v6687 = vunpack.c.h.b16 %v5290
        %v6688 = vunpack.c.l.b16 %v5291
        %v6689 = vunpack.c.h.b16 %v5291
        %v6690 = vunpack.c.l.b16 %v5292
        %v6691 = vunpack.c.h.b16 %v5292
        %v6692 = vunpack.c.l.b16 %v5293
        %v6693 = vunpack.c.h.b16 %v5293
        %v6694 = vunpack.c.l.b16 %v5294
        %v6695 = vunpack.c.h.b16 %v5294
        %v6696 = vunpack.c.l.b16 %v5295
        %v6697 = vunpack.c.h.b16 %v5295
        %v6698 = vunpack.c.l.b16 %v5296
        %v6699 = vunpack.c.h.b16 %v5296
        %v6700 = vunpack.c.l.b16 %v5297
        %v6701 = vunpack.c.h.b16 %v5297
        %v6702 = vunpack.c.l.b16 %v5298
        %v6703 = vunpack.c.h.b16 %v5298
        %v6704 = vunpack.c.l.b16 %v5299
        %v6705 = vunpack.c.h.b16 %v5299
        %v6706 = vunpack.c.l.b16 %v5300
        %v6707 = vunpack.c.h.b16 %v5300
        %v6708 = vunpack.c.l.b16 %v5301
        %v6709 = vunpack.c.h.b16 %v5301
        %v6710 = vunpack.c.l.b16 %v5302
        %v6711 = vunpack.c.h.b16 %v5302
        %v6712 = vunpack.c.l.b16 %v5303
        %v6713 = vunpack.c.h.b16 %v5303
        %v6714 = vunpack.c.l.b16 %v5304
        %v6715 = vunpack.c.h.b16 %v5304
        %v6716 = vunpack.c.l.b16 %v5305
        %v6717 = vunpack.c.h.b16 %v5305
        %v6718 = vunpack.c.l.b16 %v5306
        %v6719 = vunpack.c.h.b16 %v5306
        %v6720 = vunpack.c.l.b16 %v5307
        %v6721 = vunpack.c.h.b16 %v5307
        %v6722 = vunpack.c.l.b16 %v5308
        %v6723 = vunpack.c.h.b16 %v5308
        %v6724 = vunpack.c.l.b16 %v5309
        %v6725 = vunpack.c.h.b16 %v5309
        %v6726 = vunpack.c.l.b16 %v5310
        %v6727 = vunpack.c.h.b16 %v5310
        %v6728 = vunpack.c.l.b16 %v5311
        %v6729 = vunpack.c.h.b16 %v5311
        %v6730 = vunpack.c.l.b16 %v5312
        %v6731 = vunpack.c.h.b16 %v5312
        %v6732 = vunpack.c.l.b16 %v5313
        %v6733 = vunpack.c.h.b16 %v5313
        %v6734 = vunpack.c.l.b16 %v5314
        %v6735 = vunpack.c.h.b16 %v5314
        %v6736 = vunpack.c.l.b16 %v5315
        %v6737 = vunpack.c.h.b16 %v5315
        %v6738 = vunpack.c.l.b16 %v5316
        %v6739 = vunpack.c.h.b16 %v5316
        %v6740 = vunpack.c.l.b16 %v5317
        %v6741 = vunpack.c.h.b16 %v5317
        %v6742 = vunpack.c.l.b16 %v5318
        %v6743 = vunpack.c.h.b16 %v5318
        %v6744 = vunpack.c.l.b16 %v5319
        %v6745 = vunpack.c.h.b16 %v5319
        %v6746 = vunpack.c.l.b16 %v5320
        %v6747 = vunpack.c.h.b16 %v5320
        %v6748 = vunpack.c.l.b16 %v5321
        %v6749 = vunpack.c.h.b16 %v5321
        %v6750 = vunpack.c.l.b16 %v5322
        %v6751 = vunpack.c.h.b16 %v5322
        %v6752 = vunpack.c.l.b16 %v5323
        %v6753 = vunpack.c.h.b16 %v5323
        %v6754 = vunpack.c.l.b16 %v5324
        %v6755 = vunpack.c.h.b16 %v5324
        %v6756 = vunpack.c.l.b16 %v5325
        %v6757 = vunpack.c.h.b16 %v5325
        %v6758 = vunpack.c.l.b16 %v5326
        %v6759 = vunpack.c.h.b16 %v5326
        %v6760 = vunpack.c.l.b16 %v5327
        %v6761 = vunpack.c.h.b16 %v5327
        %v6762 = vunpack.c.l.b16 %v5328
        %v6763 = vunpack.c.h.b16 %v5328
        %v6764 = vunpack.c.l.b16 %v5329
        %v6765 = vunpack.c.h.b16 %v5329
        %v6766 = vunpack.c.l.b16 %v5330
        %v6767 = vunpack.c.h.b16 %v5330
        %v6768 = vunpack.c.l.b16 %v5331
        %v6769 = vunpack.c.h.b16 %v5331
        %v6770 = vunpack.c.l.b16 %v5332
        %v6771 = vunpack.c.h.b16 %v5332
        %v6772 = vunpack.c.l.b16 %v5333
        %v6773 = vunpack.c.h.b16 %v5333
        %v6774 = vunpack.c.l.b16 %v5334
        %v6775 = vunpack.c.h.b16 %v5334
        %v6776 = vunpack.c.l.b16 %v5335
        %v6777 = vunpack.c.h.b16 %v5335
        %v6778 = vunpack.c.l.b16 %v5336
        %v6779 = vunpack.c.h.b16 %v5336
        %v6780 = vunpack.c.l.b16 %v5337
        %v6781 = vunpack.c.h.b16 %v5337
        %v6782 = vunpack.c.l.b16 %v5338
        %v6783 = vunpack.c.h.b16 %v5338
        %v6784 = vunpack.c.l.b16 %v5339
        %v6785 = vunpack.c.h.b16 %v5339
        %v6786 = vunpack.c.l.b16 %v5340
        %v6787 = vunpack.c.h.b16 %v5340
        %v6788 = vunpack.c.l.b16 %v5341
        %v6789 = vunpack.c.h.b16 %v5341
        %v6790 = vunpack.c.l.b16 %v5342
        %v6791 = vunpack.c.h.b16 %v5342
        %v6792 = vunpack.c.l.b16 %v5343
        %v6793 = vunpack.c.h.b16 %v5343
        %v6794 = vunpack.c.l.b16 %v5344
        %v6795 = vunpack.c.h.b16 %v5344
        %v6796 = vunpack.c.l.b16 %v5345
        %v6797 = vunpack.c.h.b16 %v5345
        %v6798 = vunpack.c.l.b16 %v5346
        %v6799 = vunpack.c.h.b16 %v5346
        %v6800 = vunpack.c.l.b16 %v5347
        %v6801 = vunpack.c.h.b16 %v5347
        %v6802 = vunpack.c.l.b16 %v5348
        %v6803 = vunpack.c.h.b16 %v5348
        %v6804 = vunpack.c.l.b16 %v5349
        %v6805 = vunpack.c.h.b16 %v5349
        %v6806 = vunpack.c.l.b16 %v5350
        %v6807 = vunpack.c.h.b16 %v5350
        %v6808 = vunpack.c.l.b16 %v5351
        %v6809 = vunpack.c.h.b16 %v5351
        %v6810 = vunpack.c.l.b16 %v5352
        %v6811 = vunpack.c.h.b16 %v5352
        %v6812 = vunpack.c.l.b16 %v5353
        %v6813 = vunpack.c.h.b16 %v5353
        %v6814 = vunpack.c.l.b16 %v5354
        %v6815 = vunpack.c.h.b16 %v5354
        %v6816 = vunpack.c.l.b16 %v5355
        %v6817 = vunpack.c.h.b16 %v5355
        %v6818 = vunpack.c.l.b16 %v5356
        %v6819 = vunpack.c.h.b16 %v5356
        %v6820 = vunpack.c.l.b16 %v5357
        %v6821 = vunpack.c.h.b16 %v5357
        %v6822 = vunpack.c.l.b16 %v5358
        %v6823 = vunpack.c.h.b16 %v5358
        %v6824 = vunpack.c.l.b16 %v5359
        %v6825 = vunpack.c.h.b16 %v5359
        %v6826 = vunpack.c.l.b16 %v5360
        %v6827 = vunpack.c.h.b16 %v5360
        %v6828 = vunpack.c.l.b16 %v5361
        %v6829 = vunpack.c.h.b16 %v5361
        %v6830 = vunpack.c.l.b16 %v5362
        %v6831 = vunpack.c.h.b16 %v5362
        %v6832 = vunpack.c.l.b16 %v5363
        %v6833 = vunpack.c.h.b16 %v5363
        %v6834 = vunpack.c.l.b16 %v5364
        %v6835 = vunpack.c.h.b16 %v5364
        %v6836 = vunpack.c.l.b16 %v5365
        %v6837 = vunpack.c.h.b16 %v5365
        %v6838 = vunpack.c.l.b16 %v5366
        %v6839 = vunpack.c.h.b16 %v5366
        %v6840 = vunpack.c.l.b16 %v5367
        %v6841 = vunpack.c.h.b16 %v5367
        %v6842 = vunpack.c.l.b16 %v5368
        %v6843 = vunpack.c.h.b16 %v5368
        %v6844 = vunpack.c.l.b16 %v5369
        %v6845 = vunpack.c.h.b16 %v5369
        %v6846 = vunpack.c.l.b16 %v5370
        %v6847 = vunpack.c.h.b16 %v5370
        %v6848 = vunpack.c.l.b16 %v5371
        %v6849 = vunpack.c.h.b16 %v5371
        %v6850 = vunpack.c.l.b16 %v5372
        %v6851 = vunpack.c.h.b16 %v5372
        %v6852 = vunpack.c.l.b16 %v5373
        %v6853 = vunpack.c.h.b16 %v5373
        %v6854 = vunpack.c.l.b16 %v5374
        %v6855 = vunpack.c.h.b16 %v5374
        %v6856 = vunpack.c.l.b16 %v5375
        %v6857 = vunpack.c.h.b16 %v5375
        %v6858 = vunpack.c.l.b16 %v5376
        %v6859 = vunpack.c.h.b16 %v5376
        %v6860 = vunpack.c.l.b16 %v5377
        %v6861 = vunpack.c.h.b16 %v5377
        %v6862 = vunpack.c.l.b16 %v5378
        %v6863 = vunpack.c.h.b16 %v5378
        %v6864 = vunpack.c.l.b16 %v5379
        %v6865 = vunpack.c.h.b16 %v5379
        %v6866 = vunpack.c.l.b16 %v5380
        %v6867 = vunpack.c.h.b16 %v5380
        %v6868 = vunpack.c.l.b16 %v5381
        %v6869 = vunpack.c.h.b16 %v5381
        %v6870 = vunpack.c.l.b16 %v5382
        %v6871 = vunpack.c.h.b16 %v5382
        %v6872 = vunpack.c.l.b16 %v5383
        %v6873 = vunpack.c.h.b16 %v5383
        %v6874 = vunpack.c.l.b16 %v5384
        %v6875 = vunpack.c.h.b16 %v5384
        %v6876 = vunpack.c.l.b16 %v5385
        %v6877 = vunpack.c.h.b16 %v5385
        %v6878 = vunpack.c.l.b16 %v5386
        %v6879 = vunpack.c.h.b16 %v5386
        %v6880 = vunpack.c.l.b16 %v5387
        %v6881 = vunpack.c.h.b16 %v5387
        %v6882 = vunpack.c.l.b16 %v5388
        %v6883 = vunpack.c.h.b16 %v5388
        %v6884 = vunpack.c.l.b16 %v5389
        %v6885 = vunpack.c.h.b16 %v5389
        %v6886 = vunpack.c.l.b16 %v5390
        %v6887 = vunpack.c.h.b16 %v5390
        %v6888 = vunpack.c.l.b16 %v5391
        %v6889 = vunpack.c.h.b16 %v5391
        %v6890 = vunpack.c.l.b16 %v5392
        %v6891 = vunpack.c.h.b16 %v5392
        %v6892 = vunpack.c.l.b16 %v5393
        %v6893 = vunpack.c.h.b16 %v5393
        %v6894 = vunpack.c.l.b16 %v5394
        %v6895 = vunpack.c.h.b16 %v5394
        %v6896 = vunpack.c.l.b16 %v5395
        %v6897 = vunpack.c.h.b16 %v5395
        %v6898 = vunpack.c.l.b16 %v5396
        %v6899 = vunpack.c.h.b16 %v5396
        %v6900 = vunpack.c.l.b16 %v5397
        %v6901 = vunpack.c.h.b16 %v5397
        %v6902 = vunpack.c.l.b16 %v5398
        %v6903 = vunpack.c.h.b16 %v5398
        %v6904 = vunpack.c.l.b16 %v5399
        %v6905 = vunpack.c.h.b16 %v5399
        %v6906 = vunpack.c.l.b16 %v5400
        %v6907 = vunpack.c.h.b16 %v5400
        %v6908 = vunpack.c.l.b16 %v5401
        %v6909 = vunpack.c.h.b16 %v5401
        %v6910 = vunpack.c.l.b16 %v5402
        %v6911 = vunpack.c.h.b16 %v5402
        %v6912 = vunpack.c.l.b16 %v5403
        %v6913 = vunpack.c.h.b16 %v5403
        %v6914 = vunpack.c.l.b16 %v5404
        %v6915 = vunpack.c.h.b16 %v5404
        %v6916 = vunpack.c.l.b16 %v5405
        %v6917 = vunpack.c.h.b16 %v5405
        %v6918 = vunpack.c.l.b16 %v5406
        %v6919 = vunpack.c.h.b16 %v5406
        %v6920 = vunpack.c.l.b16 %v5407
        %v6921 = vunpack.c.h.b16 %v5407
        %v6922 = vunpack.c.l.b16 %v5408
        %v6923 = vunpack.c.h.b16 %v5408
        %v6924 = vunpack.c.l.b16 %v5409
        %v6925 = vunpack.c.h.b16 %v5409
        %v6926 = vunpack.c.l.b16 %v5410
        %v6927 = vunpack.c.h.b16 %v5410
        %v6928 = vunpack.c.l.b16 %v5411
        %v6929 = vunpack.c.h.b16 %v5411
        %v6930 = vunpack.c.l.b16 %v5412
        %v6931 = vunpack.c.h.b16 %v5412
        %v6932 = vunpack.c.l.b16 %v5413
        %v6933 = vunpack.c.h.b16 %v5413
        %v6934 = vunpack.c.l.b16 %v5414
        %v6935 = vunpack.c.h.b16 %v5414
        %v6936 = vunpack.c.l.b16 %v5415
        %v6937 = vunpack.c.h.b16 %v5415
        %v6938 = vunpack.c.l.b16 %v5416
        %v6939 = vunpack.c.h.b16 %v5416
        %v6940 = vunpack.c.l.b16 %v5417
        %v6941 = vunpack.c.h.b16 %v5417
        %v6942 = vunpack.c.l.b16 %v5418
        %v6943 = vunpack.c.h.b16 %v5418
        %v6944 = vunpack.c.l.b16 %v5419
        %v6945 = vunpack.c.h.b16 %v5419
        %v6946 = vunpack.c.l.b16 %v5420
        %v6947 = vunpack.c.h.b16 %v5420
        %v6948 = vunpack.c.l.b16 %v5421
        %v6949 = vunpack.c.h.b16 %v5421
        %v6950 = vunpack.c.l.b16 %v5422
        %v6951 = vunpack.c.h.b16 %v5422
        %v6952 = vunpack.c.l.b16 %v5423
        %v6953 = vunpack.c.h.b16 %v5423
        %v6954 = vunpack.c.l.b16 %v5424
        %v6955 = vunpack.c.h.b16 %v5424
        %v6956 = vunpack.c.l.b16 %v5425
        %v6957 = vunpack.c.h.b16 %v5425
        %v6958 = vunpack.c.l.b16 %v5426
        %v6959 = vunpack.c.h.b16 %v5426
        %v6960 = vunpack.c.l.b16 %v5427
        %v6961 = vunpack.c.h.b16 %v5427
        %v6962 = vunpack.c.l.b16 %v5428
        %v6963 = vunpack.c.h.b16 %v5428
        %v6964 = vunpack.c.l.b16 %v5429
        %v6965 = vunpack.c.h.b16 %v5429
        %v6966 = vunpack.c.l.b16 %v5430
        %v6967 = vunpack.c.h.b16 %v5430
        %v6968 = vunpack.c.l.b16 %v5431
        %v6969 = vunpack.c.h.b16 %v5431
        %v6970 = vunpack.c.l.b16 %v5432
        %v6971 = vunpack.c.h.b16 %v5432
        %v6972 = vunpack.c.l.b16 %v5433
        %v6973 = vunpack.c.h.b16 %v5433
        %v6974 = vunpack.c.l.b16 %v5434
        %v6975 = vunpack.c.h.b16 %v5434
        %v6976 = vunpack.c.l.b16 %v5435
        %v6977 = vunpack.c.h.b16 %v5435
        %v6978 = vunpack.c.l.b16 %v5436
        %v6979 = vunpack.c.h.b16 %v5436
        %v6980 = vunpack.c.l.b16 %v5437
        %v6981 = vunpack.c.h.b16 %v5437
        %v6982 = vunpack.c.l.b16 %v5438
        %v6983 = vunpack.c.h.b16 %v5438
        %v6984 = vunpack.c.l.b16 %v5439
        %v6985 = vunpack.c.h.b16 %v5439
        %v6986 = vunpack.c.l.b16 %v5440
        %v6987 = vunpack.c.h.b16 %v5440
        %v6988 = vunpack.c.l.b16 %v5441
        %v6989 = vunpack.c.h.b16 %v5441
        %v6990 = vunpack.c.l.b16 %v5442
        %v6991 = vunpack.c.h.b16 %v5442
        %v6992 = vunpack.c.l.b16 %v5443
        %v6993 = vunpack.c.h.b16 %v5443
        %v6994 = vunpack.c.l.b16 %v5444
        %v6995 = vunpack.c.h.b16 %v5444
        %v6996 = vunpack.c.l.b16 %v5445
        %v6997 = vunpack.c.h.b16 %v5445
        %v6998 = vunpack.c.l.b16 %v5446
        %v6999 = vunpack.c.h.b16 %v5446
        %v7000 = vunpack.c.l.b16 %v5447
        %v7001 = vunpack.c.h.b16 %v5447
        %v7002 = vunpack.c.l.b16 %v5448
        %v7003 = vunpack.c.h.b16 %v5448
        %v7004 = vpack.c.b16 %v5988, %v5980
        %v7005 = vpack.c.b16 %v5989, %v5981
        %v7006 = vpack.c.b16 %v5990, %v5982
        %v7007 = vpack.c.b16 %v5991, %v5983
        %v7008 = vpack.c.b16 %v5992, %v5984
        %v7009 = vpack.c.b16 %v5993, %v5985
        %v7010 = vpack.c.b16 %v5994, %v5986
        %v7011 = vpack.c.b16 %v5995, %v5987
        %v7012 = vpack.c.b16 %v6004, %v5996
        %v7013 = vpack.c.b16 %v6005, %v5997
        %v7014 = vpack.c.b16 %v6006, %v5998
        %v7015 = vpack.c.b16 %v6007, %v5999
        %v7016 = vpack.c.b16 %v6008, %v6000
        %v7017 = vpack.c.b16 %v6009, %v6001
        %v7018 = vpack.c.b16 %v6010, %v6002
        %v7019 = vpack.c.b16 %v6011, %v6003
        %v7020 = vpack.c.b16 %v6020, %v6012
        %v7021 = vpack.c.b16 %v6021, %v6013
        %v7022 = vpack.c.b16 %v6022, %v6014
        %v7023 = vpack.c.b16 %v6023, %v6015
        %v7024 = vpack.c.b16 %v6024, %v6016
        %v7025 = vpack.c.b16 %v6025, %v6017
        %v7026 = vpack.c.b16 %v6026, %v6018
        %v7027 = vpack.c.b16 %v6027, %v6019
        %v7028 = vpack.c.b16 %v6036, %v6028
        %v7029 = vpack.c.b16 %v6037, %v6029
        %v7030 = vpack.c.b16 %v6038, %v6030
        %v7031 = vpack.c.b16 %v6039, %v6031
        %v7032 = vpack.c.b16 %v6040, %v6032
        %v7033 = vpack.c.b16 %v6041, %v6033
        %v7034 = vpack.c.b16 %v6042, %v6034
        %v7035 = vpack.c.b16 %v6043, %v6035
        %v7036 = vpack.c.b16 %v6052, %v6044
        %v7037 = vpack.c.b16 %v6053, %v6045
        %v7038 = vpack.c.b16 %v6054, %v6046
        %v7039 = vpack.c.b16 %v6055, %v6047
        %v7040 = vpack.c.b16 %v6056, %v6048
        %v7041 = vpack.c.b16 %v6057, %v6049
        %v7042 = vpack.c.b16 %v6058, %v6050
        %v7043 = vpack.c.b16 %v6059, %v6051
        %v7044 = vpack.c.b16 %v6068, %v6060
        %v7045 = vpack.c.b16 %v6069, %v6061
        %v7046 = vpack.c.b16 %v6070, %v6062
        %v7047 = vpack.c.b16 %v6071, %v6063
        %v7048 = vpack.c.b16 %v6072, %v6064
        %v7049 = vpack.c.b16 %v6073, %v6065
        %v7050 = vpack.c.b16 %v6074, %v6066
        %v7051 = vpack.c.b16 %v6075, %v6067
        %v7052 = vpack.c.b16 %v6084, %v6076
        %v7053 = vpack.c.b16 %v6085, %v6077
        %v7054 = vpack.c.b16 %v6086, %v6078
        %v7055 = vpack.c.b16 %v6087, %v6079
        %v7056 = vpack.c.b16 %v6088, %v6080
        %v7057 = vpack.c.b16 %v6089, %v6081
        %v7058 = vpack.c.b16 %v6090, %v6082
        %v7059 = vpack.c.b16 %v6091, %v6083
        %v7060 = vpack.c.b16 %v6100, %v6092
        %v7061 = vpack.c.b16 %v6101, %v6093
        %v7062 = vpack.c.b16 %v6102, %v6094
        %v7063 = vpack.c.b16 %v6103, %v6095
        %v7064 = vpack.c.b16 %v6104, %v6096
        %v7065 = vpack.c.b16 %v6105, %v6097
        %v7066 = vpack.c.b16 %v6106, %v6098
        %v7067 = vpack.c.b16 %v6107, %v6099
        %v7068 = vpack.c.b16 %v6116, %v6108
        %v7069 = vpack.c.b16 %v6117, %v6109
        %v7070 = vpack.c.b16 %v6118, %v6110
        %v7071 = vpack.c.b16 %v6119, %v6111
        %v7072 = vpack.c.b16 %v6120, %v6112
        %v7073 = vpack.c.b16 %v6121, %v6113
        %v7074 = vpack.c.b16 %v6122, %v6114
        %v7075 = vpack.c.b16 %v6123, %v6115
        %v7076 = vpack.c.b16 %v6132, %v6124
        %v7077 = vpack.c.b16 %v6133, %v6125
        %v7078 = vpack.c.b16 %v6134, %v6126
        %v7079 = vpack.c.b16 %v6135, %v6127
        %v7080 = vpack.c.b16 %v6136, %v6128
        %v7081 = vpack.c.b16 %v6137, %v6129
        %v7082 = vpack.c.b16 %v6138, %v6130
        %v7083 = vpack.c.b16 %v6139, %v6131
        %v7084 = vpack.c.b16 %v6148, %v6140
        %v7085 = vpack.c.b16 %v6149, %v6141
        %v7086 = vpack.c.b16 %v6150, %v6142
        %v7087 = vpack.c.b16 %v6151, %v6143
        %v7088 = vpack.c.b16 %v6152, %v6144
        %v7089 = vpack.c.b16 %v6153, %v6145
        %v7090 = vpack.c.b16 %v6154, %v6146
        %v7091 = vpack.c.b16 %v6155, %v6147
        %v7092 = vpack.c.b16 %v6164, %v6156
        %v7093 = vpack.c.b16 %v6165, %v6157
        %v7094 = vpack.c.b16 %v6166, %v6158
        %v7095 = vpack.c.b16 %v6167, %v6159
        %v7096 = vpack.c.b16 %v6168, %v6160
        %v7097 = vpack.c.b16 %v6169, %v6161
        %v7098 = vpack.c.b16 %v6170, %v6162
        %v7099 = vpack.c.b16 %v6171, %v6163
        %v7100 = vpack.c.b16 %v6180, %v6172
        %v7101 = vpack.c.b16 %v6181, %v6173
        %v7102 = vpack.c.b16 %v6182, %v6174
        %v7103 = vpack.c.b16 %v6183, %v6175
        %v7104 = vpack.c.b16 %v6184, %v6176
        %v7105 = vpack.c.b16 %v6185, %v6177
        %v7106 = vpack.c.b16 %v6186, %v6178
        %v7107 = vpack.c.b16 %v6187, %v6179
        %v7108 = vpack.c.b16 %v6196, %v6188
        %v7109 = vpack.c.b16 %v6197, %v6189
        %v7110 = vpack.c.b16 %v6198, %v6190
        %v7111 = vpack.c.b16 %v6199, %v6191
        %v7112 = vpack.c.b16 %v6200, %v6192
        %v7113 = vpack.c.b16 %v6201, %v6193
        %v7114 = vpack.c.b16 %v6202, %v6194
        %v7115 = vpack.c.b16 %v6203, %v6195
        %v7116 = vpack.c.b16 %v6212, %v6204
        %v7117 = vpack.c.b16 %v6213, %v6205
        %v7118 = vpack.c.b16 %v6214, %v6206
        %v7119 = vpack.c.b16 %v6215, %v6207
        %v7120 = vpack.c.b16 %v6216, %v6208
        %v7121 = vpack.c.b16 %v6217, %v6209
        %v7122 = vpack.c.b16 %v6218, %v6210
        %v7123 = vpack.c.b16 %v6219, %v6211
        %v7124 = vpack.c.b16 %v6228, %v6220
        %v7125 = vpack.c.b16 %v6229, %v6221
        %v7126 = vpack.c.b16 %v6230, %v6222
        %v7127 = vpack.c.b16 %v6231, %v6223
        %v7128 = vpack.c.b16 %v6232, %v6224
        %v7129 = vpack.c.b16 %v6233, %v6225
        %v7130 = vpack.c.b16 %v6234, %v6226
        %v7131 = vpack.c.b16 %v6235, %v6227
        %v7132 = vpack.c.b16 %v6244, %v6236
        %v7133 = vpack.c.b16 %v6245, %v6237
        %v7134 = vpack.c.b16 %v6246, %v6238
        %v7135 = vpack.c.b16 %v6247, %v6239
        %v7136 = vpack.c.b16 %v6248, %v6240
        %v7137 = vpack.c.b16 %v6249, %v6241
        %v7138 = vpack.c.b16 %v6250, %v6242
        %v7139 = vpack.c.b16 %v6251, %v6243
        %v7140 = vpack.c.b16 %v6260, %v6252
        %v7141 = vpack.c.b16 %v6261, %v6253
        %v7142 = vpack.c.b16 %v6262, %v6254
        %v7143 = vpack.c.b16 %v6263, %v6255
        %v7144 = vpack.c.b16 %v6264, %v6256
        %v7145 = vpack.c.b16 %v6265, %v6257
        %v7146 = vpack.c.b16 %v6266, %v6258
        %v7147 = vpack.c.b16 %v6267, %v6259
        %v7148 = vpack.c.b16 %v6276, %v6268
        %v7149 = vpack.c.b16 %v6277, %v6269
        %v7150 = vpack.c.b16 %v6278, %v6270
        %v7151 = vpack.c.b16 %v6279, %v6271
        %v7152 = vpack.c.b16 %v6280, %v6272
        %v7153 = vpack.c.b16 %v6281, %v6273
        %v7154 = vpack.c.b16 %v6282, %v6274
        %v7155 = vpack.c.b16 %v6283, %v6275
        %v7156 = vpack.c.b16 %v6292, %v6284
        %v7157 = vpack.c.b16 %v6293, %v6285
        %v7158 = vpack.c.b16 %v6294, %v6286
        %v7159 = vpack.c.b16 %v6295, %v6287
        %v7160 = vpack.c.b16 %v6296, %v6288
        %v7161 = vpack.c.b16 %v6297, %v6289
        %v7162 = vpack.c.b16 %v6298, %v6290
        %v7163 = vpack.c.b16 %v6299, %v6291
        %v7164 = vpack.c.b16 %v6308, %v6300
        %v7165 = vpack.c.b16 %v6309, %v6301
        %v7166 = vpack.c.b16 %v6310, %v6302
        %v7167 = vpack.c.b16 %v6311, %v6303
        %v7168 = vpack.c.b16 %v6312, %v6304
        %v7169 = vpack.c.b16 %v6313, %v6305
        %v7170 = vpack.c.b16 %v6314, %v6306
        %v7171 = vpack.c.b16 %v6315, %v6307
        %v7172 = vpack.c.b16 %v6324, %v6316
        %v7173 = vpack.c.b16 %v6325, %v6317
        %v7174 = vpack.c.b16 %v6326, %v6318
        %v7175 = vpack.c.b16 %v6327, %v6319
        %v7176 = vpack.c.b16 %v6328, %v6320
        %v7177 = vpack.c.b16 %v6329, %v6321
        %v7178 = vpack.c.b16 %v6330, %v6322
        %v7179 = vpack.c.b16 %v6331, %v6323
        %v7180 = vpack.c.b16 %v6340, %v6332
        %v7181 = vpack.c.b16 %v6341, %v6333
        %v7182 = vpack.c.b16 %v6342, %v6334
        %v7183 = vpack.c.b16 %v6343, %v6335
        %v7184 = vpack.c.b16 %v6344, %v6336
        %v7185 = vpack.c.b16 %v6345, %v6337
        %v7186 = vpack.c.b16 %v6346, %v6338
        %v7187 = vpack.c.b16 %v6347, %v6339
        %v7188 = vpack.c.b16 %v6356, %v6348
        %v7189 = vpack.c.b16 %v6357, %v6349
        %v7190 = vpack.c.b16 %v6358, %v6350
        %v7191 = vpack.c.b16 %v6359, %v6351
        %v7192 = vpack.c.b16 %v6360, %v6352
        %v7193 = vpack.c.b16 %v6361, %v6353
        %v7194 = vpack.c.b16 %v6362, %v6354
        %v7195 = vpack.c.b16 %v6363, %v6355
        %v7196 = vpack.c.b16 %v6372, %v6364
        %v7197 = vpack.c.b16 %v6373, %v6365
        %v7198 = vpack.c.b16 %v6374, %v6366
        %v7199 = vpack.c.b16 %v6375, %v6367
        %v7200 = vpack.c.b16 %v6376, %v6368
        %v7201 = vpack.c.b16 %v6377, %v6369
        %v7202 = vpack.c.b16 %v6378, %v6370
        %v7203 = vpack.c.b16 %v6379, %v6371
        %v7204 = vpack.c.b16 %v6388, %v6380
        %v7205 = vpack.c.b16 %v6389, %v6381
        %v7206 = vpack.c.b16 %v6390, %v6382
        %v7207 = vpack.c.b16 %v6391, %v6383
        %v7208 = vpack.c.b16 %v6392, %v6384
        %v7209 = vpack.c.b16 %v6393, %v6385
        %v7210 = vpack.c.b16 %v6394, %v6386
        %v7211 = vpack.c.b16 %v6395, %v6387
        %v7212 = vpack.c.b16 %v6404, %v6396
        %v7213 = vpack.c.b16 %v6405, %v6397
        %v7214 = vpack.c.b16 %v6406, %v6398
        %v7215 = vpack.c.b16 %v6407, %v6399
        %v7216 = vpack.c.b16 %v6408, %v6400
        %v7217 = vpack.c.b16 %v6409, %v6401
        %v7218 = vpack.c.b16 %v6410, %v6402
        %v7219 = vpack.c.b16 %v6411, %v6403
        %v7220 = vpack.c.b16 %v6420, %v6412
        %v7221 = vpack.c.b16 %v6421, %v6413
        %v7222 = vpack.c.b16 %v6422, %v6414
        %v7223 = vpack.c.b16 %v6423, %v6415
        %v7224 = vpack.c.b16 %v6424, %v6416
        %v7225 = vpack.c.b16 %v6425, %v6417
        %v7226 = vpack.c.b16 %v6426, %v6418
        %v7227 = vpack.c.b16 %v6427, %v6419
        %v7228 = vpack.c.b16 %v6436, %v6428
        %v7229 = vpack.c.b16 %v6437, %v6429
        %v7230 = vpack.c.b16 %v6438, %v6430
        %v7231 = vpack.c.b16 %v6439, %v6431
        %v7232 = vpack.c.b16 %v6440, %v6432
        %v7233 = vpack.c.b16 %v6441, %v6433
        %v7234 = vpack.c.b16 %v6442, %v6434
        %v7235 = vpack.c.b16 %v6443, %v6435
        %v7236 = vpack.c.b16 %v6452, %v6444
        %v7237 = vpack.c.b16 %v6453, %v6445
        %v7238 = vpack.c.b16 %v6454, %v6446
        %v7239 = vpack.c.b16 %v6455, %v6447
        %v7240 = vpack.c.b16 %v6456, %v6448
        %v7241 = vpack.c.b16 %v6457, %v6449
        %v7242 = vpack.c.b16 %v6458, %v6450
        %v7243 = vpack.c.b16 %v6459, %v6451
        %v7244 = vpack.c.b16 %v6468, %v6460
        %v7245 = vpack.c.b16 %v6469, %v6461
        %v7246 = vpack.c.b16 %v6470, %v6462
        %v7247 = vpack.c.b16 %v6471, %v6463
        %v7248 = vpack.c.b16 %v6472, %v6464
        %v7249 = vpack.c.b16 %v6473, %v6465
        %v7250 = vpack.c.b16 %v6474, %v6466
        %v7251 = vpack.c.b16 %v6475, %v6467
        %v7252 = vpack.c.b16 %v6484, %v6476
        %v7253 = vpack.c.b16 %v6485, %v6477
        %v7254 = vpack.c.b16 %v6486, %v6478
        %v7255 = vpack.c.b16 %v6487, %v6479
        %v7256 = vpack.c.b16 %v6488, %v6480
        %v7257 = vpack.c.b16 %v6489, %v6481
        %v7258 = vpack.c.b16 %v6490, %v6482
        %v7259 = vpack.c.b16 %v6491, %v6483
        %v7260 = vpack.c.b16 %v6500, %v6492
        %v7261 = vpack.c.b16 %v6501, %v6493
        %v7262 = vpack.c.b16 %v6502, %v6494
        %v7263 = vpack.c.b16 %v6503, %v6495
        %v7264 = vpack.c.b16 %v6504, %v6496
        %v7265 = vpack.c.b16 %v6505, %v6497
        %v7266 = vpack.c.b16 %v6506, %v6498
        %v7267 = vpack.c.b16 %v6507, %v6499
        %v7268 = vpack.c.b16 %v6516, %v6508
        %v7269 = vpack.c.b16 %v6517, %v6509
        %v7270 = vpack.c.b16 %v6518, %v6510
        %v7271 = vpack.c.b16 %v6519, %v6511
        %v7272 = vpack.c.b16 %v6520, %v6512
        %v7273 = vpack.c.b16 %v6521, %v6513
        %v7274 = vpack.c.b16 %v6522, %v6514
        %v7275 = vpack.c.b16 %v6523, %v6515
        %v7276 = vpack.c.b16 %v6532, %v6524
        %v7277 = vpack.c.b16 %v6533, %v6525
        %v7278 = vpack.c.b16 %v6534, %v6526
        %v7279 = vpack.c.b16 %v6535, %v6527
        %v7280 = vpack.c.b16 %v6536, %v6528
        %v7281 = vpack.c.b16 %v6537, %v6529
        %v7282 = vpack.c.b16 %v6538, %v6530
        %v7283 = vpack.c.b16 %v6539, %v6531
        %v7284 = vpack.c.b16 %v6548, %v6540
        %v7285 = vpack.c.b16 %v6549, %v6541
        %v7286 = vpack.c.b16 %v6550, %v6542
        %v7287 = vpack.c.b16 %v6551, %v6543
        %v7288 = vpack.c.b16 %v6552, %v6544
        %v7289 = vpack.c.b16 %v6553, %v6545
        %v7290 = vpack.c.b16 %v6554, %v6546
        %v7291 = vpack.c.b16 %v6555, %v6547
        %v7292 = vpack.c.b16 %v6564, %v6556
        %v7293 = vpack.c.b16 %v6565, %v6557
        %v7294 = vpack.c.b16 %v6566, %v6558
        %v7295 = vpack.c.b16 %v6567, %v6559
        %v7296 = vpack.c.b16 %v6568, %v6560
        %v7297 = vpack.c.b16 %v6569, %v6561
        %v7298 = vpack.c.b16 %v6570, %v6562
        %v7299 = vpack.c.b16 %v6571, %v6563
        %v7300 = vpack.c.b16 %v6580, %v6572
        %v7301 = vpack.c.b16 %v6581, %v6573
        %v7302 = vpack.c.b16 %v6582, %v6574
        %v7303 = vpack.c.b16 %v6583, %v6575
        %v7304 = vpack.c.b16 %v6584, %v6576
        %v7305 = vpack.c.b16 %v6585, %v6577
        %v7306 = vpack.c.b16 %v6586, %v6578
        %v7307 = vpack.c.b16 %v6587, %v6579
        %v7308 = vpack.c.b16 %v6596, %v6588
        %v7309 = vpack.c.b16 %v6597, %v6589
        %v7310 = vpack.c.b16 %v6598, %v6590
        %v7311 = vpack.c.b16 %v6599, %v6591
        %v7312 = vpack.c.b16 %v6600, %v6592
        %v7313 = vpack.c.b16 %v6601, %v6593
        %v7314 = vpack.c.b16 %v6602, %v6594
        %v7315 = vpack.c.b16 %v6603, %v6595
        %v7316 = vpack.c.b16 %v6612, %v6604
        %v7317 = vpack.c.b16 %v6613, %v6605
        %v7318 = vpack.c.b16 %v6614, %v6606
        %v7319 = vpack.c.b16 %v6615, %v6607
        %v7320 = vpack.c.b16 %v6616, %v6608
        %v7321 = vpack.c.b16 %v6617, %v6609
        %v7322 = vpack.c.b16 %v6618, %v6610
        %v7323 = vpack.c.b16 %v6619, %v6611
        %v7324 = vpack.c.b16 %v6628, %v6620
        %v7325 = vpack.c.b16 %v6629, %v6621
        %v7326 = vpack.c.b16 %v6630, %v6622
        %v7327 = vpack.c.b16 %v6631, %v6623
        %v7328 = vpack.c.b16 %v6632, %v6624
        %v7329 = vpack.c.b16 %v6633, %v6625
        %v7330 = vpack.c.b16 %v6634, %v6626
        %v7331 = vpack.c.b16 %v6635, %v6627
        %v7332 = vpack.c.b16 %v6644, %v6636
        %v7333 = vpack.c.b16 %v6645, %v6637
        %v7334 = vpack.c.b16 %v6646, %v6638
        %v7335 = vpack.c.b16 %v6647, %v6639
        %v7336 = vpack.c.b16 %v6648, %v6640
        %v7337 = vpack.c.b16 %v6649, %v6641
        %v7338 = vpack.c.b16 %v6650, %v6642
        %v7339 = vpack.c.b16 %v6651, %v6643
        %v7340 = vpack.c.b16 %v6660, %v6652
        %v7341 = vpack.c.b16 %v6661, %v6653
        %v7342 = vpack.c.b16 %v6662, %v6654
        %v7343 = vpack.c.b16 %v6663, %v6655
        %v7344 = vpack.c.b16 %v6664, %v6656
        %v7345 = vpack.c.b16 %v6665, %v6657
        %v7346 = vpack.c.b16 %v6666, %v6658
        %v7347 = vpack.c.b16 %v6667, %v6659
        %v7348 = vpack.c.b16 %v6676, %v6668
        %v7349 = vpack.c.b16 %v6677, %v6669
        %v7350 = vpack.c.b16 %v6678, %v6670
        %v7351 = vpack.c.b16 %v6679, %v6671
        %v7352 = vpack.c.b16 %v6680, %v6672
        %v7353 = vpack.c.b16 %v6681, %v6673
        %v7354 = vpack.c.b16 %v6682, %v6674
        %v7355 = vpack.c.b16 %v6683, %v6675
        %v7356 = vpack.c.b16 %v6692, %v6684
        %v7357 = vpack.c.b16 %v6693, %v6685
        %v7358 = vpack.c.b16 %v6694, %v6686
        %v7359 = vpack.c.b16 %v6695, %v6687
        %v7360 = vpack.c.b16 %v6696, %v6688
        %v7361 = vpack.c.b16 %v6697, %v6689
        %v7362 = vpack.c.b16 %v6698, %v6690
        %v7363 = vpack.c.b16 %v6699, %v6691
        %v7364 = vpack.c.b16 %v6708, %v6700
        %v7365 = vpack.c.b16 %v6709, %v6701
        %v7366 = vpack.c.b16 %v6710, %v6702
        %v7367 = vpack.c.b16 %v6711, %v6703
        %v7368 = vpack.c.b16 %v6712, %v6704
        %v7369 = vpack.c.b16 %v6713, %v6705
        %v7370 = vpack.c.b16 %v6714, %v6706
        %v7371 = vpack.c.b16 %v6715, %v6707
        %v7372 = vpack.c.b16 %v6724, %v6716
        %v7373 = vpack.c.b16 %v6725, %v6717
        %v7374 = vpack.c.b16 %v6726, %v6718
        %v7375 = vpack.c.b16 %v6727, %v6719
        %v7376 = vpack.c.b16 %v6728, %v6720
        %v7377 = vpack.c.b16 %v6729, %v6721
        %v7378 = vpack.c.b16 %v6730, %v6722
        %v7379 = vpack.c.b16 %v6731, %v6723
        %v7380 = vpack.c.b16 %v6740, %v6732
        %v7381 = vpack.c.b16 %v6741, %v6733
        %v7382 = vpack.c.b16 %v6742, %v6734
        %v7383 = vpack.c.b16 %v6743, %v6735
        %v7384 = vpack.c.b16 %v6744, %v6736
        %v7385 = vpack.c.b16 %v6745, %v6737
        %v7386 = vpack.c.b16 %v6746, %v6738
        %v7387 = vpack.c.b16 %v6747, %v6739
        %v7388 = vpack.c.b16 %v6756, %v6748
        %v7389 = vpack.c.b16 %v6757, %v6749
        %v7390 = vpack.c.b16 %v6758, %v6750
        %v7391 = vpack.c.b16 %v6759, %v6751
        %v7392 = vpack.c.b16 %v6760, %v6752
        %v7393 = vpack.c.b16 %v6761, %v6753
        %v7394 = vpack.c.b16 %v6762, %v6754
        %v7395 = vpack.c.b16 %v6763, %v6755
        %v7396 = vpack.c.b16 %v6772, %v6764
        %v7397 = vpack.c.b16 %v6773, %v6765
        %v7398 = vpack.c.b16 %v6774, %v6766
        %v7399 = vpack.c.b16 %v6775, %v6767
        %v7400 = vpack.c.b16 %v6776, %v6768
        %v7401 = vpack.c.b16 %v6777, %v6769
        %v7402 = vpack.c.b16 %v6778, %v6770
        %v7403 = vpack.c.b16 %v6779, %v6771
        %v7404 = vpack.c.b16 %v6788, %v6780
        %v7405 = vpack.c.b16 %v6789, %v6781
        %v7406 = vpack.c.b16 %v6790, %v6782
        %v7407 = vpack.c.b16 %v6791, %v6783
        %v7408 = vpack.c.b16 %v6792, %v6784
        %v7409 = vpack.c.b16 %v6793, %v6785
        %v7410 = vpack.c.b16 %v6794, %v6786
        %v7411 = vpack.c.b16 %v6795, %v6787
        %v7412 = vpack.c.b16 %v6804, %v6796
        %v7413 = vpack.c.b16 %v6805, %v6797
        %v7414 = vpack.c.b16 %v6806, %v6798
        %v7415 = vpack.c.b16 %v6807, %v6799
        %v7416 = vpack.c.b16 %v6808, %v6800
        %v7417 = vpack.c.b16 %v6809, %v6801
        %v7418 = vpack.c.b16 %v6810, %v6802
        %v7419 = vpack.c.b16 %v6811, %v6803
        %v7420 = vpack.c.b16 %v6820, %v6812
        %v7421 = vpack.c.b16 %v6821, %v6813
        %v7422 = vpack.c.b16 %v6822, %v6814
        %v7423 = vpack.c.b16 %v6823, %v6815
        %v7424 = vpack.c.b16 %v6824, %v6816
        %v7425 = vpack.c.b16 %v6825, %v6817
        %v7426 = vpack.c.b16 %v6826, %v6818
        %v7427 = vpack.c.b16 %v6827, %v6819
        %v7428 = vpack.c.b16 %v6836, %v6828
        %v7429 = vpack.c.b16 %v6837, %v6829
        %v7430 = vpack.c.b16 %v6838, %v6830
        %v7431 = vpack.c.b16 %v6839, %v6831
        %v7432 = vpack.c.b16 %v6840, %v6832
        %v7433 = vpack.c.b16 %v6841, %v6833
        %v7434 = vpack.c.b16 %v6842, %v6834
        %v7435 = vpack.c.b16 %v6843, %v6835
        %v7436 = vpack.c.b16 %v6852, %v6844
        %v7437 = vpack.c.b16 %v6853, %v6845
        %v7438 = vpack.c.b16 %v6854, %v6846
        %v7439 = vpack.c.b16 %v6855, %v6847
        %v7440 = vpack.c.b16 %v6856, %v6848
        %v7441 = vpack.c.b16 %v6857, %v6849
        %v7442 = vpack.c.b16 %v6858, %v6850
        %v7443 = vpack.c.b16 %v6859, %v6851
        %v7444 = vpack.c.b16 %v6868, %v6860
        %v7445 = vpack.c.b16 %v6869, %v6861
        %v7446 = vpack.c.b16 %v6870, %v6862
        %v7447 = vpack.c.b16 %v6871, %v6863
        %v7448 = vpack.c.b16 %v6872, %v6864
        %v7449 = vpack.c.b16 %v6873, %v6865
        %v7450 = vpack.c.b16 %v6874, %v6866
        %v7451 = vpack.c.b16 %v6875, %v6867
        %v7452 = vpack.c.b16 %v6884, %v6876
        %v7453 = vpack.c.b16 %v6885, %v6877
        %v7454 = vpack.c.b16 %v6886, %v6878
        %v7455 = vpack.c.b16 %v6887, %v6879
        %v7456 = vpack.c.b16 %v6888, %v6880
        %v7457 = vpack.c.b16 %v6889, %v6881
        %v7458 = vpack.c.b16 %v6890, %v6882
        %v7459 = vpack.c.b16 %v6891, %v6883
        %v7460 = vpack.c.b16 %v6900, %v6892
        %v7461 = vpack.c.b16 %v6901, %v6893
        %v7462 = vpack.c.b16 %v6902, %v6894
        %v7463 = vpack.c.b16 %v6903, %v6895
        %v7464 = vpack.c.b16 %v6904, %v6896
        %v7465 = vpack.c.b16 %v6905, %v6897
        %v7466 = vpack.c.b16 %v6906, %v6898
        %v7467 = vpack.c.b16 %v6907, %v6899
        %v7468 = vpack.c.b16 %v6916, %v6908
        %v7469 = vpack.c.b16 %v6917, %v6909
        %v7470 = vpack.c.b16 %v6918, %v6910
        %v7471 = vpack.c.b16 %v6919, %v6911
        %v7472 = vpack.c.b16 %v6920, %v6912
        %v7473 = vpack.c.b16 %v6921, %v6913
        %v7474 = vpack.c.b16 %v6922, %v6914
        %v7475 = vpack.c.b16 %v6923, %v6915
        %v7476 = vpack.c.b16 %v6932, %v6924
        %v7477 = vpack.c.b16 %v6933, %v6925
        %v7478 = vpack.c.b16 %v6934, %v6926
        %v7479 = vpack.c.b16 %v6935, %v6927
        %v7480 = vpack.c.b16 %v6936, %v6928
        %v7481 = vpack.c.b16 %v6937, %v6929
        %v7482 = vpack.c.b16 %v6938, %v6930
        %v7483 = vpack.c.b16 %v6939, %v6931
        %v7484 = vpack.c.b16 %v6948, %v6940
        %v7485 = vpack.c.b16 %v6949, %v6941
        %v7486 = vpack.c.b16 %v6950, %v6942
        %v7487 = vpack.c.b16 %v6951, %v6943
        %v7488 = vpack.c.b16 %v6952, %v6944
        %v7489 = vpack.c.b16 %v6953, %v6945
        %v7490 = vpack.c.b16 %v6954, %v6946
        %v7491 = vpack.c.b16 %v6955, %v6947
        %v7492 = vpack.c.b16 %v6964, %v6956
        %v7493 = vpack.c.b16 %v6965, %v6957
        %v7494 = vpack.c.b16 %v6966, %v6958
        %v7495 = vpack.c.b16 %v6967, %v6959
        %v7496 = vpack.c.b16 %v6968, %v6960
        %v7497 = vpack.c.b16 %v6969, %v6961
        %v7498 = vpack.c.b16 %v6970, %v6962
        %v7499 = vpack.c.b16 %v6971, %v6963
        %v7500 = vpack.c.b16 %v6980, %v6972
        %v7501 = vpack.c.b16 %v6981, %v6973
        %v7502 = vpack.c.b16 %v6982, %v6974
        %v7503 = vpack.c.b16 %v6983, %v6975
        %v7504 = vpack.c.b16 %v6984, %v6976
        %v7505 = vpack.c.b16 %v6985, %v6977
        %v7506 = vpack.c.b16 %v6986, %v6978
        %v7507 = vpack.c.b16 %v6987, %v6979
        %v7508 = vpack.c.b16 %v6996, %v6988
        %v7509 = vpack.c.b16 %v6997, %v6989
        %v7510 = vpack.c.b16 %v6998, %v6990
        %v7511 = vpack.c.b16 %v6999, %v6991
        %v7512 = vpack.c.b16 %v7000, %v6992
        %v7513 = vpack.c.b16 %v7001, %v6993
        %v7514 = vpack.c.b16 %v7002, %v6994
        %v7515 = vpack.c.b16 %v7003, %v6995
        %8028 = vmatpush.bf16.msra.mxu0 %v7060
        %8029 = vmatpush.bf16.msra.mxu0 %v7052
        %8030 = vmatpush.bf16.msra.mxu0 %v7044
        %8031 = vmatpush.bf16.msra.mxu0 %v7036
        %8032 = vmatpush.bf16.msra.mxu0 %v7028
        %8033 = vmatpush.bf16.msra.mxu0 %v7020
        %8034 = vmatpush.bf16.msra.mxu0 %v7012
        %8035 = vmatpush.bf16.msra.mxu0 %v7004
        %8036 = vmatmul.bf16.gmra.mxu0 %v4928
        %v8037 = vpop.f32.mrf.mxu0
        %v8038 = vadd.f32 %v5452, %v8037
        %v8039 = vpop.f32.mrf.mxu0
        %8040 = vdwg.mxu0
        %8041 = vmatpush.bf16.msra.mxu0 %v7124
        %8042 = vmatpush.bf16.msra.mxu0 %v7116
        %8043 = vmatpush.bf16.msra.mxu0 %v7108
        %8044 = vmatpush.bf16.msra.mxu0 %v7100
        %8045 = vmatpush.bf16.msra.mxu0 %v7092
        %8046 = vmatpush.bf16.msra.mxu0 %v7084
        %8047 = vmatpush.bf16.msra.mxu0 %v7076
        %8048 = vmatpush.bf16.msra.mxu0 %v7068
        %8049 = vmatmul.bf16.gmra.mxu0 %v4929
        %v8050 = vpop.f32.mrf.mxu0
        %v8051 = vadd.f32 %v8038, %v8050
        %v8052 = vpop.f32.mrf.mxu0
        %8053 = vdwg.mxu0
        %8054 = vmatpush.bf16.msra.mxu0 %v7188
        %8055 = vmatpush.bf16.msra.mxu0 %v7180
        %8056 = vmatpush.bf16.msra.mxu0 %v7172
        %8057 = vmatpush.bf16.msra.mxu0 %v7164
        %8058 = vmatpush.bf16.msra.mxu0 %v7156
        %8059 = vmatpush.bf16.msra.mxu0 %v7148
        %8060 = vmatpush.bf16.msra.mxu0 %v7140
        %8061 = vmatpush.bf16.msra.mxu0 %v7132
        %8062 = vmatmul.bf16.gmra.mxu0 %v4930
        %v8063 = vpop.f32.mrf.mxu0
        %v8064 = vadd.f32 %v8051, %v8063
        %v8065 = vpop.f32.mrf.mxu0
        %8066 = vdwg.mxu0
        %8067 = vmatpush.bf16.msra.mxu0 %v7252
        %8068 = vmatpush.bf16.msra.mxu0 %v7244
        %8069 = vmatpush.bf16.msra.mxu0 %v7236
        %8070 = vmatpush.bf16.msra.mxu0 %v7228
        %8071 = vmatpush.bf16.msra.mxu0 %v7220
        %8072 = vmatpush.bf16.msra.mxu0 %v7212
        %8073 = vmatpush.bf16.msra.mxu0 %v7204
        %8074 = vmatpush.bf16.msra.mxu0 %v7196
        %8075 = vmatmul.bf16.gmra.mxu0 %v4931
        %v8076 = vpop.f32.mrf.mxu0
        %v8077 = vadd.f32 %v8064, %v8076
        %v8078 = vpop.f32.mrf.mxu0
        %8079 = vdwg.mxu0
        %8080 = vmatpush.bf16.msra.mxu0 %v7316
        %8081 = vmatpush.bf16.msra.mxu0 %v7308
        %8082 = vmatpush.bf16.msra.mxu0 %v7300
        %8083 = vmatpush.bf16.msra.mxu0 %v7292
        %8084 = vmatpush.bf16.msra.mxu0 %v7284
        %8085 = vmatpush.bf16.msra.mxu0 %v7276
        %8086 = vmatpush.bf16.msra.mxu0 %v7268
        %8087 = vmatpush.bf16.msra.mxu0 %v7260
        %8088 = vmatmul.bf16.gmra.mxu0 %v4932
        %v8089 = vpop.f32.mrf.mxu0
        %v8090 = vadd.f32 %v8077, %v8089
        %v8091 = vpop.f32.mrf.mxu0
        %8092 = vdwg.mxu0
        %8093 = vmatpush.bf16.msra.mxu0 %v7380
        %8094 = vmatpush.bf16.msra.mxu0 %v7372
        %8095 = vmatpush.bf16.msra.mxu0 %v7364
        %8096 = vmatpush.bf16.msra.mxu0 %v7356
        %8097 = vmatpush.bf16.msra.mxu0 %v7348
        %8098 = vmatpush.bf16.msra.mxu0 %v7340
        %8099 = vmatpush.bf16.msra.mxu0 %v7332
        %8100 = vmatpush.bf16.msra.mxu0 %v7324
        %8101 = vmatmul.bf16.gmra.mxu0 %v4933
        %v8102 = vpop.f32.mrf.mxu0
        %v8103 = vadd.f32 %v8090, %v8102
        %v8104 = vpop.f32.mrf.mxu0
        %8105 = vdwg.mxu0
        %8106 = vmatpush.bf16.msra.mxu0 %v7444
        %8107 = vmatpush.bf16.msra.mxu0 %v7436
        %8108 = vmatpush.bf16.msra.mxu0 %v7428
        %8109 = vmatpush.bf16.msra.mxu0 %v7420
        %8110 = vmatpush.bf16.msra.mxu0 %v7412
        %8111 = vmatpush.bf16.msra.mxu0 %v7404
        %8112 = vmatpush.bf16.msra.mxu0 %v7396
        %8113 = vmatpush.bf16.msra.mxu0 %v7388
        %8114 = vmatmul.bf16.gmra.mxu0 %v4934
        %v8115 = vpop.f32.mrf.mxu0
        %v8116 = vadd.f32 %v8103, %v8115
        %v8117 = vpop.f32.mrf.mxu0
        %8118 = vdwg.mxu0
        %8119 = vmatpush.bf16.msra.mxu0 %v7508
        %8120 = vmatpush.bf16.msra.mxu0 %v7500
        %8121 = vmatpush.bf16.msra.mxu0 %v7492
        %8122 = vmatpush.bf16.msra.mxu0 %v7484
        %8123 = vmatpush.bf16.msra.mxu0 %v7476
        %8124 = vmatpush.bf16.msra.mxu0 %v7468
        %8125 = vmatpush.bf16.msra.mxu0 %v7460
        %8126 = vmatpush.bf16.msra.mxu0 %v7452
        %8127 = vmatmul.bf16.gmra.mxu0 %v4935
        %v8128 = vpop.f32.mrf.mxu0
        %v8129 = vadd.f32 %v8116, %v8128
        %v8130 = vpop.f32.mrf.mxu0
        %8131 = vdwg.mxu0
        %8132 = vmatpush.bf16.msra.mxu0 %v7061
        %8133 = vmatpush.bf16.msra.mxu0 %v7053
        %8134 = vmatpush.bf16.msra.mxu0 %v7045
        %8135 = vmatpush.bf16.msra.mxu0 %v7037
        %8136 = vmatpush.bf16.msra.mxu0 %v7029
        %8137 = vmatpush.bf16.msra.mxu0 %v7021
        %8138 = vmatpush.bf16.msra.mxu0 %v7013
        %8139 = vmatpush.bf16.msra.mxu0 %v7005
        %8140 = vmatmul.bf16.gmra.mxu0 %v4928
        %v8141 = vpop.f32.mrf.mxu0
        %v8142 = vadd.f32 %v5453, %v8141
        %v8143 = vpop.f32.mrf.mxu0
        %8144 = vdwg.mxu0
        %8145 = vmatpush.bf16.msra.mxu0 %v7125
        %8146 = vmatpush.bf16.msra.mxu0 %v7117
        %8147 = vmatpush.bf16.msra.mxu0 %v7109
        %8148 = vmatpush.bf16.msra.mxu0 %v7101
        %8149 = vmatpush.bf16.msra.mxu0 %v7093
        %8150 = vmatpush.bf16.msra.mxu0 %v7085
        %8151 = vmatpush.bf16.msra.mxu0 %v7077
        %8152 = vmatpush.bf16.msra.mxu0 %v7069
        %8153 = vmatmul.bf16.gmra.mxu0 %v4929
        %v8154 = vpop.f32.mrf.mxu0
        %v8155 = vadd.f32 %v8142, %v8154
        %v8156 = vpop.f32.mrf.mxu0
        %8157 = vdwg.mxu0
        %8158 = vmatpush.bf16.msra.mxu0 %v7189
        %8159 = vmatpush.bf16.msra.mxu0 %v7181
        %8160 = vmatpush.bf16.msra.mxu0 %v7173
        %8161 = vmatpush.bf16.msra.mxu0 %v7165
        %8162 = vmatpush.bf16.msra.mxu0 %v7157
        %8163 = vmatpush.bf16.msra.mxu0 %v7149
        %8164 = vmatpush.bf16.msra.mxu0 %v7141
        %8165 = vmatpush.bf16.msra.mxu0 %v7133
        %8166 = vmatmul.bf16.gmra.mxu0 %v4930
        %v8167 = vpop.f32.mrf.mxu0
        %v8168 = vadd.f32 %v8155, %v8167
        %v8169 = vpop.f32.mrf.mxu0
        %8170 = vdwg.mxu0
        %8171 = vmatpush.bf16.msra.mxu0 %v7253
        %8172 = vmatpush.bf16.msra.mxu0 %v7245
        %8173 = vmatpush.bf16.msra.mxu0 %v7237
        %8174 = vmatpush.bf16.msra.mxu0 %v7229
        %8175 = vmatpush.bf16.msra.mxu0 %v7221
        %8176 = vmatpush.bf16.msra.mxu0 %v7213
        %8177 = vmatpush.bf16.msra.mxu0 %v7205
        %8178 = vmatpush.bf16.msra.mxu0 %v7197
        %8179 = vmatmul.bf16.gmra.mxu0 %v4931
        %v8180 = vpop.f32.mrf.mxu0
        %v8181 = vadd.f32 %v8168, %v8180
        %v8182 = vpop.f32.mrf.mxu0
        %8183 = vdwg.mxu0
        %8184 = vmatpush.bf16.msra.mxu0 %v7317
        %8185 = vmatpush.bf16.msra.mxu0 %v7309
        %8186 = vmatpush.bf16.msra.mxu0 %v7301
        %8187 = vmatpush.bf16.msra.mxu0 %v7293
        %8188 = vmatpush.bf16.msra.mxu0 %v7285
        %8189 = vmatpush.bf16.msra.mxu0 %v7277
        %8190 = vmatpush.bf16.msra.mxu0 %v7269
        %8191 = vmatpush.bf16.msra.mxu0 %v7261
        %8192 = vmatmul.bf16.gmra.mxu0 %v4932
        %v8193 = vpop.f32.mrf.mxu0
        %v8194 = vadd.f32 %v8181, %v8193
        %v8195 = vpop.f32.mrf.mxu0
        %8196 = vdwg.mxu0
        %8197 = vmatpush.bf16.msra.mxu0 %v7381
        %8198 = vmatpush.bf16.msra.mxu0 %v7373
        %8199 = vmatpush.bf16.msra.mxu0 %v7365
        %8200 = vmatpush.bf16.msra.mxu0 %v7357
        %8201 = vmatpush.bf16.msra.mxu0 %v7349
        %8202 = vmatpush.bf16.msra.mxu0 %v7341
        %8203 = vmatpush.bf16.msra.mxu0 %v7333
        %8204 = vmatpush.bf16.msra.mxu0 %v7325
        %8205 = vmatmul.bf16.gmra.mxu0 %v4933
        %v8206 = vpop.f32.mrf.mxu0
        %v8207 = vadd.f32 %v8194, %v8206
        %v8208 = vpop.f32.mrf.mxu0
        %8209 = vdwg.mxu0
        %8210 = vmatpush.bf16.msra.mxu0 %v7445
        %8211 = vmatpush.bf16.msra.mxu0 %v7437
        %8212 = vmatpush.bf16.msra.mxu0 %v7429
        %8213 = vmatpush.bf16.msra.mxu0 %v7421
        %8214 = vmatpush.bf16.msra.mxu0 %v7413
        %8215 = vmatpush.bf16.msra.mxu0 %v7405
        %8216 = vmatpush.bf16.msra.mxu0 %v7397
        %8217 = vmatpush.bf16.msra.mxu0 %v7389
        %8218 = vmatmul.bf16.gmra.mxu0 %v4934
        %v8219 = vpop.f32.mrf.mxu0
        %v8220 = vadd.f32 %v8207, %v8219
        %v8221 = vpop.f32.mrf.mxu0
        %8222 = vdwg.mxu0
        %8223 = vmatpush.bf16.msra.mxu0 %v7509
        %8224 = vmatpush.bf16.msra.mxu0 %v7501
        %8225 = vmatpush.bf16.msra.mxu0 %v7493
        %8226 = vmatpush.bf16.msra.mxu0 %v7485
        %8227 = vmatpush.bf16.msra.mxu0 %v7477
        %8228 = vmatpush.bf16.msra.mxu0 %v7469
        %8229 = vmatpush.bf16.msra.mxu0 %v7461
        %8230 = vmatpush.bf16.msra.mxu0 %v7453
        %8231 = vmatmul.bf16.gmra.mxu0 %v4935
        %v8232 = vpop.f32.mrf.mxu0
        %v8233 = vadd.f32 %v8220, %v8232
        %v8234 = vpop.f32.mrf.mxu0
        %8235 = vdwg.mxu0
        %8236 = vmatpush.bf16.msra.mxu0 %v7062
        %8237 = vmatpush.bf16.msra.mxu0 %v7054
        %8238 = vmatpush.bf16.msra.mxu0 %v7046
        %8239 = vmatpush.bf16.msra.mxu0 %v7038
        %8240 = vmatpush.bf16.msra.mxu0 %v7030
        %8241 = vmatpush.bf16.msra.mxu0 %v7022
        %8242 = vmatpush.bf16.msra.mxu0 %v7014
        %8243 = vmatpush.bf16.msra.mxu0 %v7006
        %8244 = vmatmul.bf16.gmra.mxu0 %v4928
        %v8245 = vpop.f32.mrf.mxu0
        %v8246 = vadd.f32 %v5454, %v8245
        %v8247 = vpop.f32.mrf.mxu0
        %8248 = vdwg.mxu0
        %8249 = vmatpush.bf16.msra.mxu0 %v7126
        %8250 = vmatpush.bf16.msra.mxu0 %v7118
        %8251 = vmatpush.bf16.msra.mxu0 %v7110
        %8252 = vmatpush.bf16.msra.mxu0 %v7102
        %8253 = vmatpush.bf16.msra.mxu0 %v7094
        %8254 = vmatpush.bf16.msra.mxu0 %v7086
        %8255 = vmatpush.bf16.msra.mxu0 %v7078
        %8256 = vmatpush.bf16.msra.mxu0 %v7070
        %8257 = vmatmul.bf16.gmra.mxu0 %v4929
        %v8258 = vpop.f32.mrf.mxu0
        %v8259 = vadd.f32 %v8246, %v8258
        %v8260 = vpop.f32.mrf.mxu0
        %8261 = vdwg.mxu0
        %8262 = vmatpush.bf16.msra.mxu0 %v7190
        %8263 = vmatpush.bf16.msra.mxu0 %v7182
        %8264 = vmatpush.bf16.msra.mxu0 %v7174
        %8265 = vmatpush.bf16.msra.mxu0 %v7166
        %8266 = vmatpush.bf16.msra.mxu0 %v7158
        %8267 = vmatpush.bf16.msra.mxu0 %v7150
        %8268 = vmatpush.bf16.msra.mxu0 %v7142
        %8269 = vmatpush.bf16.msra.mxu0 %v7134
        %8270 = vmatmul.bf16.gmra.mxu0 %v4930
        %v8271 = vpop.f32.mrf.mxu0
        %v8272 = vadd.f32 %v8259, %v8271
        %v8273 = vpop.f32.mrf.mxu0
        %8274 = vdwg.mxu0
        %8275 = vmatpush.bf16.msra.mxu0 %v7254
        %8276 = vmatpush.bf16.msra.mxu0 %v7246
        %8277 = vmatpush.bf16.msra.mxu0 %v7238
        %8278 = vmatpush.bf16.msra.mxu0 %v7230
        %8279 = vmatpush.bf16.msra.mxu0 %v7222
        %8280 = vmatpush.bf16.msra.mxu0 %v7214
        %8281 = vmatpush.bf16.msra.mxu0 %v7206
        %8282 = vmatpush.bf16.msra.mxu0 %v7198
        %8283 = vmatmul.bf16.gmra.mxu0 %v4931
        %v8284 = vpop.f32.mrf.mxu0
        %v8285 = vadd.f32 %v8272, %v8284
        %v8286 = vpop.f32.mrf.mxu0
        %8287 = vdwg.mxu0
        %8288 = vmatpush.bf16.msra.mxu0 %v7318
        %8289 = vmatpush.bf16.msra.mxu0 %v7310
        %8290 = vmatpush.bf16.msra.mxu0 %v7302
        %8291 = vmatpush.bf16.msra.mxu0 %v7294
        %8292 = vmatpush.bf16.msra.mxu0 %v7286
        %8293 = vmatpush.bf16.msra.mxu0 %v7278
        %8294 = vmatpush.bf16.msra.mxu0 %v7270
        %8295 = vmatpush.bf16.msra.mxu0 %v7262
        %8296 = vmatmul.bf16.gmra.mxu0 %v4932
        %v8297 = vpop.f32.mrf.mxu0
        %v8298 = vadd.f32 %v8285, %v8297
        %v8299 = vpop.f32.mrf.mxu0
        %8300 = vdwg.mxu0
        %8301 = vmatpush.bf16.msra.mxu0 %v7382
        %8302 = vmatpush.bf16.msra.mxu0 %v7374
        %8303 = vmatpush.bf16.msra.mxu0 %v7366
        %8304 = vmatpush.bf16.msra.mxu0 %v7358
        %8305 = vmatpush.bf16.msra.mxu0 %v7350
        %8306 = vmatpush.bf16.msra.mxu0 %v7342
        %8307 = vmatpush.bf16.msra.mxu0 %v7334
        %8308 = vmatpush.bf16.msra.mxu0 %v7326
        %8309 = vmatmul.bf16.gmra.mxu0 %v4933
        %v8310 = vpop.f32.mrf.mxu0
        %v8311 = vadd.f32 %v8298, %v8310
        %v8312 = vpop.f32.mrf.mxu0
        %8313 = vdwg.mxu0
        %8314 = vmatpush.bf16.msra.mxu0 %v7446
        %8315 = vmatpush.bf16.msra.mxu0 %v7438
        %8316 = vmatpush.bf16.msra.mxu0 %v7430
        %8317 = vmatpush.bf16.msra.mxu0 %v7422
        %8318 = vmatpush.bf16.msra.mxu0 %v7414
        %8319 = vmatpush.bf16.msra.mxu0 %v7406
        %8320 = vmatpush.bf16.msra.mxu0 %v7398
        %8321 = vmatpush.bf16.msra.mxu0 %v7390
        %8322 = vmatmul.bf16.gmra.mxu0 %v4934
        %v8323 = vpop.f32.mrf.mxu0
        %v8324 = vadd.f32 %v8311, %v8323
        %v8325 = vpop.f32.mrf.mxu0
        %8326 = vdwg.mxu0
        %8327 = vmatpush.bf16.msra.mxu0 %v7510
        %8328 = vmatpush.bf16.msra.mxu0 %v7502
        %8329 = vmatpush.bf16.msra.mxu0 %v7494
        %8330 = vmatpush.bf16.msra.mxu0 %v7486
        %8331 = vmatpush.bf16.msra.mxu0 %v7478
        %8332 = vmatpush.bf16.msra.mxu0 %v7470
        %8333 = vmatpush.bf16.msra.mxu0 %v7462
        %8334 = vmatpush.bf16.msra.mxu0 %v7454
        %8335 = vmatmul.bf16.gmra.mxu0 %v4935
        %v8336 = vpop.f32.mrf.mxu0
        %v8337 = vadd.f32 %v8324, %v8336
        %v8338 = vpop.f32.mrf.mxu0
        %8339 = vdwg.mxu0
        %8340 = vmatpush.bf16.msra.mxu0 %v7063
        %8341 = vmatpush.bf16.msra.mxu0 %v7055
        %8342 = vmatpush.bf16.msra.mxu0 %v7047
        %8343 = vmatpush.bf16.msra.mxu0 %v7039
        %8344 = vmatpush.bf16.msra.mxu0 %v7031
        %8345 = vmatpush.bf16.msra.mxu0 %v7023
        %8346 = vmatpush.bf16.msra.mxu0 %v7015
        %8347 = vmatpush.bf16.msra.mxu0 %v7007
        %8348 = vmatmul.bf16.gmra.mxu0 %v4928
        %v8349 = vpop.f32.mrf.mxu0
        %v8350 = vadd.f32 %v5455, %v8349
        %v8351 = vpop.f32.mrf.mxu0
        %8352 = vdwg.mxu0
        %8353 = vmatpush.bf16.msra.mxu0 %v7127
        %8354 = vmatpush.bf16.msra.mxu0 %v7119
        %8355 = vmatpush.bf16.msra.mxu0 %v7111
        %8356 = vmatpush.bf16.msra.mxu0 %v7103
        %8357 = vmatpush.bf16.msra.mxu0 %v7095
        %8358 = vmatpush.bf16.msra.mxu0 %v7087
        %8359 = vmatpush.bf16.msra.mxu0 %v7079
        %8360 = vmatpush.bf16.msra.mxu0 %v7071
        %8361 = vmatmul.bf16.gmra.mxu0 %v4929
        %v8362 = vpop.f32.mrf.mxu0
        %v8363 = vadd.f32 %v8350, %v8362
        %v8364 = vpop.f32.mrf.mxu0
        %8365 = vdwg.mxu0
        %8366 = vmatpush.bf16.msra.mxu0 %v7191
        %8367 = vmatpush.bf16.msra.mxu0 %v7183
        %8368 = vmatpush.bf16.msra.mxu0 %v7175
        %8369 = vmatpush.bf16.msra.mxu0 %v7167
        %8370 = vmatpush.bf16.msra.mxu0 %v7159
        %8371 = vmatpush.bf16.msra.mxu0 %v7151
        %8372 = vmatpush.bf16.msra.mxu0 %v7143
        %8373 = vmatpush.bf16.msra.mxu0 %v7135
        %8374 = vmatmul.bf16.gmra.mxu0 %v4930
        %v8375 = vpop.f32.mrf.mxu0
        %v8376 = vadd.f32 %v8363, %v8375
        %v8377 = vpop.f32.mrf.mxu0
        %8378 = vdwg.mxu0
        %8379 = vmatpush.bf16.msra.mxu0 %v7255
        %8380 = vmatpush.bf16.msra.mxu0 %v7247
        %8381 = vmatpush.bf16.msra.mxu0 %v7239
        %8382 = vmatpush.bf16.msra.mxu0 %v7231
        %8383 = vmatpush.bf16.msra.mxu0 %v7223
        %8384 = vmatpush.bf16.msra.mxu0 %v7215
        %8385 = vmatpush.bf16.msra.mxu0 %v7207
        %8386 = vmatpush.bf16.msra.mxu0 %v7199
        %8387 = vmatmul.bf16.gmra.mxu0 %v4931
        %v8388 = vpop.f32.mrf.mxu0
        %v8389 = vadd.f32 %v8376, %v8388
        %v8390 = vpop.f32.mrf.mxu0
        %8391 = vdwg.mxu0
        %8392 = vmatpush.bf16.msra.mxu0 %v7319
        %8393 = vmatpush.bf16.msra.mxu0 %v7311
        %8394 = vmatpush.bf16.msra.mxu0 %v7303
        %8395 = vmatpush.bf16.msra.mxu0 %v7295
        %8396 = vmatpush.bf16.msra.mxu0 %v7287
        %8397 = vmatpush.bf16.msra.mxu0 %v7279
        %8398 = vmatpush.bf16.msra.mxu0 %v7271
        %8399 = vmatpush.bf16.msra.mxu0 %v7263
        %8400 = vmatmul.bf16.gmra.mxu0 %v4932
        %v8401 = vpop.f32.mrf.mxu0
        %v8402 = vadd.f32 %v8389, %v8401
        %v8403 = vpop.f32.mrf.mxu0
        %8404 = vdwg.mxu0
        %8405 = vmatpush.bf16.msra.mxu0 %v7383
        %8406 = vmatpush.bf16.msra.mxu0 %v7375
        %8407 = vmatpush.bf16.msra.mxu0 %v7367
        %8408 = vmatpush.bf16.msra.mxu0 %v7359
        %8409 = vmatpush.bf16.msra.mxu0 %v7351
        %8410 = vmatpush.bf16.msra.mxu0 %v7343
        %8411 = vmatpush.bf16.msra.mxu0 %v7335
        %8412 = vmatpush.bf16.msra.mxu0 %v7327
        %8413 = vmatmul.bf16.gmra.mxu0 %v4933
        %v8414 = vpop.f32.mrf.mxu0
        %v8415 = vadd.f32 %v8402, %v8414
        %v8416 = vpop.f32.mrf.mxu0
        %8417 = vdwg.mxu0
        %8418 = vmatpush.bf16.msra.mxu0 %v7447
        %8419 = vmatpush.bf16.msra.mxu0 %v7439
        %8420 = vmatpush.bf16.msra.mxu0 %v7431
        %8421 = vmatpush.bf16.msra.mxu0 %v7423
        %8422 = vmatpush.bf16.msra.mxu0 %v7415
        %8423 = vmatpush.bf16.msra.mxu0 %v7407
        %8424 = vmatpush.bf16.msra.mxu0 %v7399
        %8425 = vmatpush.bf16.msra.mxu0 %v7391
        %8426 = vmatmul.bf16.gmra.mxu0 %v4934
        %v8427 = vpop.f32.mrf.mxu0
        %v8428 = vadd.f32 %v8415, %v8427
        %v8429 = vpop.f32.mrf.mxu0
        %8430 = vdwg.mxu0
        %8431 = vmatpush.bf16.msra.mxu0 %v7511
        %8432 = vmatpush.bf16.msra.mxu0 %v7503
        %8433 = vmatpush.bf16.msra.mxu0 %v7495
        %8434 = vmatpush.bf16.msra.mxu0 %v7487
        %8435 = vmatpush.bf16.msra.mxu0 %v7479
        %8436 = vmatpush.bf16.msra.mxu0 %v7471
        %8437 = vmatpush.bf16.msra.mxu0 %v7463
        %8438 = vmatpush.bf16.msra.mxu0 %v7455
        %8439 = vmatmul.bf16.gmra.mxu0 %v4935
        %v8440 = vpop.f32.mrf.mxu0
        %v8441 = vadd.f32 %v8428, %v8440
        %v8442 = vpop.f32.mrf.mxu0
        %8443 = vdwg.mxu0
        %8444 = vmatpush.bf16.msra.mxu0 %v7064
        %8445 = vmatpush.bf16.msra.mxu0 %v7056
        %8446 = vmatpush.bf16.msra.mxu0 %v7048
        %8447 = vmatpush.bf16.msra.mxu0 %v7040
        %8448 = vmatpush.bf16.msra.mxu0 %v7032
        %8449 = vmatpush.bf16.msra.mxu0 %v7024
        %8450 = vmatpush.bf16.msra.mxu0 %v7016
        %8451 = vmatpush.bf16.msra.mxu0 %v7008
        %8452 = vmatmul.bf16.gmra.mxu0 %v4928
        %v8453 = vpop.f32.mrf.mxu0
        %v8454 = vadd.f32 %v5456, %v8453
        %v8455 = vpop.f32.mrf.mxu0
        %8456 = vdwg.mxu0
        %8457 = vmatpush.bf16.msra.mxu0 %v7128
        %8458 = vmatpush.bf16.msra.mxu0 %v7120
        %8459 = vmatpush.bf16.msra.mxu0 %v7112
        %8460 = vmatpush.bf16.msra.mxu0 %v7104
        %8461 = vmatpush.bf16.msra.mxu0 %v7096
        %8462 = vmatpush.bf16.msra.mxu0 %v7088
        %8463 = vmatpush.bf16.msra.mxu0 %v7080
        %8464 = vmatpush.bf16.msra.mxu0 %v7072
        %8465 = vmatmul.bf16.gmra.mxu0 %v4929
        %v8466 = vpop.f32.mrf.mxu0
        %v8467 = vadd.f32 %v8454, %v8466
        %v8468 = vpop.f32.mrf.mxu0
        %8469 = vdwg.mxu0
        %8470 = vmatpush.bf16.msra.mxu0 %v7192
        %8471 = vmatpush.bf16.msra.mxu0 %v7184
        %8472 = vmatpush.bf16.msra.mxu0 %v7176
        %8473 = vmatpush.bf16.msra.mxu0 %v7168
        %8474 = vmatpush.bf16.msra.mxu0 %v7160
        %8475 = vmatpush.bf16.msra.mxu0 %v7152
        %8476 = vmatpush.bf16.msra.mxu0 %v7144
        %8477 = vmatpush.bf16.msra.mxu0 %v7136
        %8478 = vmatmul.bf16.gmra.mxu0 %v4930
        %v8479 = vpop.f32.mrf.mxu0
        %v8480 = vadd.f32 %v8467, %v8479
        %v8481 = vpop.f32.mrf.mxu0
        %8482 = vdwg.mxu0
        %8483 = vmatpush.bf16.msra.mxu0 %v7256
        %8484 = vmatpush.bf16.msra.mxu0 %v7248
        %8485 = vmatpush.bf16.msra.mxu0 %v7240
        %8486 = vmatpush.bf16.msra.mxu0 %v7232
        %8487 = vmatpush.bf16.msra.mxu0 %v7224
        %8488 = vmatpush.bf16.msra.mxu0 %v7216
        %8489 = vmatpush.bf16.msra.mxu0 %v7208
        %8490 = vmatpush.bf16.msra.mxu0 %v7200
        %8491 = vmatmul.bf16.gmra.mxu0 %v4931
        %v8492 = vpop.f32.mrf.mxu0
        %v8493 = vadd.f32 %v8480, %v8492
        %v8494 = vpop.f32.mrf.mxu0
        %8495 = vdwg.mxu0
        %8496 = vmatpush.bf16.msra.mxu0 %v7320
        %8497 = vmatpush.bf16.msra.mxu0 %v7312
        %8498 = vmatpush.bf16.msra.mxu0 %v7304
        %8499 = vmatpush.bf16.msra.mxu0 %v7296
        %8500 = vmatpush.bf16.msra.mxu0 %v7288
        %8501 = vmatpush.bf16.msra.mxu0 %v7280
        %8502 = vmatpush.bf16.msra.mxu0 %v7272
        %8503 = vmatpush.bf16.msra.mxu0 %v7264
        %8504 = vmatmul.bf16.gmra.mxu0 %v4932
        %v8505 = vpop.f32.mrf.mxu0
        %v8506 = vadd.f32 %v8493, %v8505
        %v8507 = vpop.f32.mrf.mxu0
        %8508 = vdwg.mxu0
        %8509 = vmatpush.bf16.msra.mxu0 %v7384
        %8510 = vmatpush.bf16.msra.mxu0 %v7376
        %8511 = vmatpush.bf16.msra.mxu0 %v7368
        %8512 = vmatpush.bf16.msra.mxu0 %v7360
        %8513 = vmatpush.bf16.msra.mxu0 %v7352
        %8514 = vmatpush.bf16.msra.mxu0 %v7344
        %8515 = vmatpush.bf16.msra.mxu0 %v7336
        %8516 = vmatpush.bf16.msra.mxu0 %v7328
        %8517 = vmatmul.bf16.gmra.mxu0 %v4933
        %v8518 = vpop.f32.mrf.mxu0
        %v8519 = vadd.f32 %v8506, %v8518
        %v8520 = vpop.f32.mrf.mxu0
        %8521 = vdwg.mxu0
        %8522 = vmatpush.bf16.msra.mxu0 %v7448
        %8523 = vmatpush.bf16.msra.mxu0 %v7440
        %8524 = vmatpush.bf16.msra.mxu0 %v7432
        %8525 = vmatpush.bf16.msra.mxu0 %v7424
        %8526 = vmatpush.bf16.msra.mxu0 %v7416
        %8527 = vmatpush.bf16.msra.mxu0 %v7408
        %8528 = vmatpush.bf16.msra.mxu0 %v7400
        %8529 = vmatpush.bf16.msra.mxu0 %v7392
        %8530 = vmatmul.bf16.gmra.mxu0 %v4934
        %v8531 = vpop.f32.mrf.mxu0
        %v8532 = vadd.f32 %v8519, %v8531
        %v8533 = vpop.f32.mrf.mxu0
        %8534 = vdwg.mxu0
        %8535 = vmatpush.bf16.msra.mxu0 %v7512
        %8536 = vmatpush.bf16.msra.mxu0 %v7504
        %8537 = vmatpush.bf16.msra.mxu0 %v7496
        %8538 = vmatpush.bf16.msra.mxu0 %v7488
        %8539 = vmatpush.bf16.msra.mxu0 %v7480
        %8540 = vmatpush.bf16.msra.mxu0 %v7472
        %8541 = vmatpush.bf16.msra.mxu0 %v7464
        %8542 = vmatpush.bf16.msra.mxu0 %v7456
        %8543 = vmatmul.bf16.gmra.mxu0 %v4935
        %v8544 = vpop.f32.mrf.mxu0
        %v8545 = vadd.f32 %v8532, %v8544
        %v8546 = vpop.f32.mrf.mxu0
        %8547 = vdwg.mxu0
        %8548 = vmatpush.bf16.msra.mxu0 %v7065
        %8549 = vmatpush.bf16.msra.mxu0 %v7057
        %8550 = vmatpush.bf16.msra.mxu0 %v7049
        %8551 = vmatpush.bf16.msra.mxu0 %v7041
        %8552 = vmatpush.bf16.msra.mxu0 %v7033
        %8553 = vmatpush.bf16.msra.mxu0 %v7025
        %8554 = vmatpush.bf16.msra.mxu0 %v7017
        %8555 = vmatpush.bf16.msra.mxu0 %v7009
        %8556 = vmatmul.bf16.gmra.mxu0 %v4928
        %v8557 = vpop.f32.mrf.mxu0
        %v8558 = vadd.f32 %v5457, %v8557
        %v8559 = vpop.f32.mrf.mxu0
        %8560 = vdwg.mxu0
        %8561 = vmatpush.bf16.msra.mxu0 %v7129
        %8562 = vmatpush.bf16.msra.mxu0 %v7121
        %8563 = vmatpush.bf16.msra.mxu0 %v7113
        %8564 = vmatpush.bf16.msra.mxu0 %v7105
        %8565 = vmatpush.bf16.msra.mxu0 %v7097
        %8566 = vmatpush.bf16.msra.mxu0 %v7089
        %8567 = vmatpush.bf16.msra.mxu0 %v7081
        %8568 = vmatpush.bf16.msra.mxu0 %v7073
        %8569 = vmatmul.bf16.gmra.mxu0 %v4929
        %v8570 = vpop.f32.mrf.mxu0
        %v8571 = vadd.f32 %v8558, %v8570
        %v8572 = vpop.f32.mrf.mxu0
        %8573 = vdwg.mxu0
        %8574 = vmatpush.bf16.msra.mxu0 %v7193
        %8575 = vmatpush.bf16.msra.mxu0 %v7185
        %8576 = vmatpush.bf16.msra.mxu0 %v7177
        %8577 = vmatpush.bf16.msra.mxu0 %v7169
        %8578 = vmatpush.bf16.msra.mxu0 %v7161
        %8579 = vmatpush.bf16.msra.mxu0 %v7153
        %8580 = vmatpush.bf16.msra.mxu0 %v7145
        %8581 = vmatpush.bf16.msra.mxu0 %v7137
        %8582 = vmatmul.bf16.gmra.mxu0 %v4930
        %v8583 = vpop.f32.mrf.mxu0
        %v8584 = vadd.f32 %v8571, %v8583
        %v8585 = vpop.f32.mrf.mxu0
        %8586 = vdwg.mxu0
        %8587 = vmatpush.bf16.msra.mxu0 %v7257
        %8588 = vmatpush.bf16.msra.mxu0 %v7249
        %8589 = vmatpush.bf16.msra.mxu0 %v7241
        %8590 = vmatpush.bf16.msra.mxu0 %v7233
        %8591 = vmatpush.bf16.msra.mxu0 %v7225
        %8592 = vmatpush.bf16.msra.mxu0 %v7217
        %8593 = vmatpush.bf16.msra.mxu0 %v7209
        %8594 = vmatpush.bf16.msra.mxu0 %v7201
        %8595 = vmatmul.bf16.gmra.mxu0 %v4931
        %v8596 = vpop.f32.mrf.mxu0
        %v8597 = vadd.f32 %v8584, %v8596
        %v8598 = vpop.f32.mrf.mxu0
        %8599 = vdwg.mxu0
        %8600 = vmatpush.bf16.msra.mxu0 %v7321
        %8601 = vmatpush.bf16.msra.mxu0 %v7313
        %8602 = vmatpush.bf16.msra.mxu0 %v7305
        %8603 = vmatpush.bf16.msra.mxu0 %v7297
        %8604 = vmatpush.bf16.msra.mxu0 %v7289
        %8605 = vmatpush.bf16.msra.mxu0 %v7281
        %8606 = vmatpush.bf16.msra.mxu0 %v7273
        %8607 = vmatpush.bf16.msra.mxu0 %v7265
        %8608 = vmatmul.bf16.gmra.mxu0 %v4932
        %v8609 = vpop.f32.mrf.mxu0
        %v8610 = vadd.f32 %v8597, %v8609
        %v8611 = vpop.f32.mrf.mxu0
        %8612 = vdwg.mxu0
        %8613 = vmatpush.bf16.msra.mxu0 %v7385
        %8614 = vmatpush.bf16.msra.mxu0 %v7377
        %8615 = vmatpush.bf16.msra.mxu0 %v7369
        %8616 = vmatpush.bf16.msra.mxu0 %v7361
        %8617 = vmatpush.bf16.msra.mxu0 %v7353
        %8618 = vmatpush.bf16.msra.mxu0 %v7345
        %8619 = vmatpush.bf16.msra.mxu0 %v7337
        %8620 = vmatpush.bf16.msra.mxu0 %v7329
        %8621 = vmatmul.bf16.gmra.mxu0 %v4933
        %v8622 = vpop.f32.mrf.mxu0
        %v8623 = vadd.f32 %v8610, %v8622
        %v8624 = vpop.f32.mrf.mxu0
        %8625 = vdwg.mxu0
        %8626 = vmatpush.bf16.msra.mxu0 %v7449
        %8627 = vmatpush.bf16.msra.mxu0 %v7441
        %8628 = vmatpush.bf16.msra.mxu0 %v7433
        %8629 = vmatpush.bf16.msra.mxu0 %v7425
        %8630 = vmatpush.bf16.msra.mxu0 %v7417
        %8631 = vmatpush.bf16.msra.mxu0 %v7409
        %8632 = vmatpush.bf16.msra.mxu0 %v7401
        %8633 = vmatpush.bf16.msra.mxu0 %v7393
        %8634 = vmatmul.bf16.gmra.mxu0 %v4934
        %v8635 = vpop.f32.mrf.mxu0
        %v8636 = vadd.f32 %v8623, %v8635
        %v8637 = vpop.f32.mrf.mxu0
        %8638 = vdwg.mxu0
        %8639 = vmatpush.bf16.msra.mxu0 %v7513
        %8640 = vmatpush.bf16.msra.mxu0 %v7505
        %8641 = vmatpush.bf16.msra.mxu0 %v7497
        %8642 = vmatpush.bf16.msra.mxu0 %v7489
        %8643 = vmatpush.bf16.msra.mxu0 %v7481
        %8644 = vmatpush.bf16.msra.mxu0 %v7473
        %8645 = vmatpush.bf16.msra.mxu0 %v7465
        %8646 = vmatpush.bf16.msra.mxu0 %v7457
        %8647 = vmatmul.bf16.gmra.mxu0 %v4935
        %v8648 = vpop.f32.mrf.mxu0
        %v8649 = vadd.f32 %v8636, %v8648
        %v8650 = vpop.f32.mrf.mxu0
        %8651 = vdwg.mxu0
        %8652 = vmatpush.bf16.msra.mxu0 %v7066
        %8653 = vmatpush.bf16.msra.mxu0 %v7058
        %8654 = vmatpush.bf16.msra.mxu0 %v7050
        %8655 = vmatpush.bf16.msra.mxu0 %v7042
        %8656 = vmatpush.bf16.msra.mxu0 %v7034
        %8657 = vmatpush.bf16.msra.mxu0 %v7026
        %8658 = vmatpush.bf16.msra.mxu0 %v7018
        %8659 = vmatpush.bf16.msra.mxu0 %v7010
        %8660 = vmatmul.bf16.gmra.mxu0 %v4928
        %v8661 = vpop.f32.mrf.mxu0
        %v8662 = vadd.f32 %v5458, %v8661
        %v8663 = vpop.f32.mrf.mxu0
        %8664 = vdwg.mxu0
        %8665 = vmatpush.bf16.msra.mxu0 %v7130
        %8666 = vmatpush.bf16.msra.mxu0 %v7122
        %8667 = vmatpush.bf16.msra.mxu0 %v7114
        %8668 = vmatpush.bf16.msra.mxu0 %v7106
        %8669 = vmatpush.bf16.msra.mxu0 %v7098
        %8670 = vmatpush.bf16.msra.mxu0 %v7090
        %8671 = vmatpush.bf16.msra.mxu0 %v7082
        %8672 = vmatpush.bf16.msra.mxu0 %v7074
        %8673 = vmatmul.bf16.gmra.mxu0 %v4929
        %v8674 = vpop.f32.mrf.mxu0
        %v8675 = vadd.f32 %v8662, %v8674
        %v8676 = vpop.f32.mrf.mxu0
        %8677 = vdwg.mxu0
        %8678 = vmatpush.bf16.msra.mxu0 %v7194
        %8679 = vmatpush.bf16.msra.mxu0 %v7186
        %8680 = vmatpush.bf16.msra.mxu0 %v7178
        %8681 = vmatpush.bf16.msra.mxu0 %v7170
        %8682 = vmatpush.bf16.msra.mxu0 %v7162
        %8683 = vmatpush.bf16.msra.mxu0 %v7154
        %8684 = vmatpush.bf16.msra.mxu0 %v7146
        %8685 = vmatpush.bf16.msra.mxu0 %v7138
        %8686 = vmatmul.bf16.gmra.mxu0 %v4930
        %v8687 = vpop.f32.mrf.mxu0
        %v8688 = vadd.f32 %v8675, %v8687
        %v8689 = vpop.f32.mrf.mxu0
        %8690 = vdwg.mxu0
        %8691 = vmatpush.bf16.msra.mxu0 %v7258
        %8692 = vmatpush.bf16.msra.mxu0 %v7250
        %8693 = vmatpush.bf16.msra.mxu0 %v7242
        %8694 = vmatpush.bf16.msra.mxu0 %v7234
        %8695 = vmatpush.bf16.msra.mxu0 %v7226
        %8696 = vmatpush.bf16.msra.mxu0 %v7218
        %8697 = vmatpush.bf16.msra.mxu0 %v7210
        %8698 = vmatpush.bf16.msra.mxu0 %v7202
        %8699 = vmatmul.bf16.gmra.mxu0 %v4931
        %v8700 = vpop.f32.mrf.mxu0
        %v8701 = vadd.f32 %v8688, %v8700
        %v8702 = vpop.f32.mrf.mxu0
        %8703 = vdwg.mxu0
        %8704 = vmatpush.bf16.msra.mxu0 %v7322
        %8705 = vmatpush.bf16.msra.mxu0 %v7314
        %8706 = vmatpush.bf16.msra.mxu0 %v7306
        %8707 = vmatpush.bf16.msra.mxu0 %v7298
        %8708 = vmatpush.bf16.msra.mxu0 %v7290
        %8709 = vmatpush.bf16.msra.mxu0 %v7282
        %8710 = vmatpush.bf16.msra.mxu0 %v7274
        %8711 = vmatpush.bf16.msra.mxu0 %v7266
        %8712 = vmatmul.bf16.gmra.mxu0 %v4932
        %v8713 = vpop.f32.mrf.mxu0
        %v8714 = vadd.f32 %v8701, %v8713
        %v8715 = vpop.f32.mrf.mxu0
        %8716 = vdwg.mxu0
        %8717 = vmatpush.bf16.msra.mxu0 %v7386
        %8718 = vmatpush.bf16.msra.mxu0 %v7378
        %8719 = vmatpush.bf16.msra.mxu0 %v7370
        %8720 = vmatpush.bf16.msra.mxu0 %v7362
        %8721 = vmatpush.bf16.msra.mxu0 %v7354
        %8722 = vmatpush.bf16.msra.mxu0 %v7346
        %8723 = vmatpush.bf16.msra.mxu0 %v7338
        %8724 = vmatpush.bf16.msra.mxu0 %v7330
        %8725 = vmatmul.bf16.gmra.mxu0 %v4933
        %v8726 = vpop.f32.mrf.mxu0
        %v8727 = vadd.f32 %v8714, %v8726
        %v8728 = vpop.f32.mrf.mxu0
        %8729 = vdwg.mxu0
        %8730 = vmatpush.bf16.msra.mxu0 %v7450
        %8731 = vmatpush.bf16.msra.mxu0 %v7442
        %8732 = vmatpush.bf16.msra.mxu0 %v7434
        %8733 = vmatpush.bf16.msra.mxu0 %v7426
        %8734 = vmatpush.bf16.msra.mxu0 %v7418
        %8735 = vmatpush.bf16.msra.mxu0 %v7410
        %8736 = vmatpush.bf16.msra.mxu0 %v7402
        %8737 = vmatpush.bf16.msra.mxu0 %v7394
        %8738 = vmatmul.bf16.gmra.mxu0 %v4934
        %v8739 = vpop.f32.mrf.mxu0
        %v8740 = vadd.f32 %v8727, %v8739
        %v8741 = vpop.f32.mrf.mxu0
        %8742 = vdwg.mxu0
        %8743 = vmatpush.bf16.msra.mxu0 %v7514
        %8744 = vmatpush.bf16.msra.mxu0 %v7506
        %8745 = vmatpush.bf16.msra.mxu0 %v7498
        %8746 = vmatpush.bf16.msra.mxu0 %v7490
        %8747 = vmatpush.bf16.msra.mxu0 %v7482
        %8748 = vmatpush.bf16.msra.mxu0 %v7474
        %8749 = vmatpush.bf16.msra.mxu0 %v7466
        %8750 = vmatpush.bf16.msra.mxu0 %v7458
        %8751 = vmatmul.bf16.gmra.mxu0 %v4935
        %v8752 = vpop.f32.mrf.mxu0
        %v8753 = vadd.f32 %v8740, %v8752
        %v8754 = vpop.f32.mrf.mxu0
        %8755 = vdwg.mxu0
        %8756 = vmatpush.bf16.msra.mxu0 %v7067
        %8757 = vmatpush.bf16.msra.mxu0 %v7059
        %8758 = vmatpush.bf16.msra.mxu0 %v7051
        %8759 = vmatpush.bf16.msra.mxu0 %v7043
        %8760 = vmatpush.bf16.msra.mxu0 %v7035
        %8761 = vmatpush.bf16.msra.mxu0 %v7027
        %8762 = vmatpush.bf16.msra.mxu0 %v7019
        %8763 = vmatpush.bf16.msra.mxu0 %v7011
        %8764 = vmatmul.bf16.gmra.mxu0 %v4928
        %v8765 = vpop.f32.mrf.mxu0
        %v8766 = vadd.f32 %v5459, %v8765
        %v8767 = vpop.f32.mrf.mxu0
        %8768 = vdwg.mxu0
        %8769 = vmatpush.bf16.msra.mxu0 %v7131
        %8770 = vmatpush.bf16.msra.mxu0 %v7123
        %8771 = vmatpush.bf16.msra.mxu0 %v7115
        %8772 = vmatpush.bf16.msra.mxu0 %v7107
        %8773 = vmatpush.bf16.msra.mxu0 %v7099
        %8774 = vmatpush.bf16.msra.mxu0 %v7091
        %8775 = vmatpush.bf16.msra.mxu0 %v7083
        %8776 = vmatpush.bf16.msra.mxu0 %v7075
        %8777 = vmatmul.bf16.gmra.mxu0 %v4929
        %v8778 = vpop.f32.mrf.mxu0
        %v8779 = vadd.f32 %v8766, %v8778
        %v8780 = vpop.f32.mrf.mxu0
        %8781 = vdwg.mxu0
        %8782 = vmatpush.bf16.msra.mxu0 %v7195
        %8783 = vmatpush.bf16.msra.mxu0 %v7187
        %8784 = vmatpush.bf16.msra.mxu0 %v7179
        %8785 = vmatpush.bf16.msra.mxu0 %v7171
        %8786 = vmatpush.bf16.msra.mxu0 %v7163
        %8787 = vmatpush.bf16.msra.mxu0 %v7155
        %8788 = vmatpush.bf16.msra.mxu0 %v7147
        %8789 = vmatpush.bf16.msra.mxu0 %v7139
        %8790 = vmatmul.bf16.gmra.mxu0 %v4930
        %v8791 = vpop.f32.mrf.mxu0
        %v8792 = vadd.f32 %v8779, %v8791
        %v8793 = vpop.f32.mrf.mxu0
        %8794 = vdwg.mxu0
        %8795 = vmatpush.bf16.msra.mxu0 %v7259
        %8796 = vmatpush.bf16.msra.mxu0 %v7251
        %8797 = vmatpush.bf16.msra.mxu0 %v7243
        %8798 = vmatpush.bf16.msra.mxu0 %v7235
        %8799 = vmatpush.bf16.msra.mxu0 %v7227
        %8800 = vmatpush.bf16.msra.mxu0 %v7219
        %8801 = vmatpush.bf16.msra.mxu0 %v7211
        %8802 = vmatpush.bf16.msra.mxu0 %v7203
        %8803 = vmatmul.bf16.gmra.mxu0 %v4931
        %v8804 = vpop.f32.mrf.mxu0
        %v8805 = vadd.f32 %v8792, %v8804
        %v8806 = vpop.f32.mrf.mxu0
        %8807 = vdwg.mxu0
        %8808 = vmatpush.bf16.msra.mxu0 %v7323
        %8809 = vmatpush.bf16.msra.mxu0 %v7315
        %8810 = vmatpush.bf16.msra.mxu0 %v7307
        %8811 = vmatpush.bf16.msra.mxu0 %v7299
        %8812 = vmatpush.bf16.msra.mxu0 %v7291
        %8813 = vmatpush.bf16.msra.mxu0 %v7283
        %8814 = vmatpush.bf16.msra.mxu0 %v7275
        %8815 = vmatpush.bf16.msra.mxu0 %v7267
        %8816 = vmatmul.bf16.gmra.mxu0 %v4932
        %v8817 = vpop.f32.mrf.mxu0
        %v8818 = vadd.f32 %v8805, %v8817
        %v8819 = vpop.f32.mrf.mxu0
        %8820 = vdwg.mxu0
        %8821 = vmatpush.bf16.msra.mxu0 %v7387
        %8822 = vmatpush.bf16.msra.mxu0 %v7379
        %8823 = vmatpush.bf16.msra.mxu0 %v7371
        %8824 = vmatpush.bf16.msra.mxu0 %v7363
        %8825 = vmatpush.bf16.msra.mxu0 %v7355
        %8826 = vmatpush.bf16.msra.mxu0 %v7347
        %8827 = vmatpush.bf16.msra.mxu0 %v7339
        %8828 = vmatpush.bf16.msra.mxu0 %v7331
        %8829 = vmatmul.bf16.gmra.mxu0 %v4933
        %v8830 = vpop.f32.mrf.mxu0
        %v8831 = vadd.f32 %v8818, %v8830
        %v8832 = vpop.f32.mrf.mxu0
        %8833 = vdwg.mxu0
        %8834 = vmatpush.bf16.msra.mxu0 %v7451
        %8835 = vmatpush.bf16.msra.mxu0 %v7443
        %8836 = vmatpush.bf16.msra.mxu0 %v7435
        %8837 = vmatpush.bf16.msra.mxu0 %v7427
        %8838 = vmatpush.bf16.msra.mxu0 %v7419
        %8839 = vmatpush.bf16.msra.mxu0 %v7411
        %8840 = vmatpush.bf16.msra.mxu0 %v7403
        %8841 = vmatpush.bf16.msra.mxu0 %v7395
        %8842 = vmatmul.bf16.gmra.mxu0 %v4934
        %v8843 = vpop.f32.mrf.mxu0
        %v8844 = vadd.f32 %v8831, %v8843
        %v8845 = vpop.f32.mrf.mxu0
        %8846 = vdwg.mxu0
        %8847 = vmatpush.bf16.msra.mxu0 %v7515
        %8848 = vmatpush.bf16.msra.mxu0 %v7507
        %8849 = vmatpush.bf16.msra.mxu0 %v7499
        %8850 = vmatpush.bf16.msra.mxu0 %v7491
        %8851 = vmatpush.bf16.msra.mxu0 %v7483
        %8852 = vmatpush.bf16.msra.mxu0 %v7475
        %8853 = vmatpush.bf16.msra.mxu0 %v7467
        %8854 = vmatpush.bf16.msra.mxu0 %v7459
        %8855 = vmatmul.bf16.gmra.mxu0 %v4935
        %v8856 = vpop.f32.mrf.mxu0
        %v8857 = vadd.f32 %v8844, %v8856
        %v8858 = vpop.f32.mrf.mxu0
        %8859 = vdwg.mxu0
        %vm8860 = vcmp.gt.f32.partialorder %v8129, 0.0
        %vm8861 = vcmp.gt.f32.partialorder %v8233, 0.0
        %vm8862 = vcmp.gt.f32.partialorder %v8337, 0.0
        %vm8863 = vcmp.gt.f32.partialorder %v8441, 0.0
        %vm8864 = vcmp.gt.f32.partialorder %v8545, 0.0
        %vm8865 = vcmp.gt.f32.partialorder %v8649, 0.0
        %vm8866 = vcmp.gt.f32.partialorder %v8753, 0.0
        %vm8867 = vcmp.gt.f32.partialorder %v8857, 0.0
        %v8868 = vmul.f32 %v8129, 0.2
        %v8869 = vmul.f32 %v8233, 0.2
        %v8870 = vmul.f32 %v8337, 0.2
        %v8871 = vmul.f32 %v8441, 0.2
        %v8872 = vmul.f32 %v8545, 0.2
        %v8873 = vmul.f32 %v8649, 0.2
        %v8874 = vmul.f32 %v8753, 0.2
        %v8875 = vmul.f32 %v8857, 0.2
        %v8876 = vsel %vm8860, %v8129, %v8868
        %v8877 = vsel %vm8861, %v8233, %v8869
        %v8878 = vsel %vm8862, %v8337, %v8870
        %v8879 = vsel %vm8863, %v8441, %v8871
        %v8880 = vsel %vm8864, %v8545, %v8872
        %v8881 = vsel %vm8865, %v8649, %v8873
        %v8882 = vsel %vm8866, %v8753, %v8874
        %v8883 = vsel %vm8867, %v8857, %v8875
        %8884 = vst [vmem:[#allocation2] sm:$0xff] %v8876
        %8885 = vst [vmem:[#allocation2 + $0x8] sm:$0xff] %v8877
        %8886 = vst [vmem:[#allocation2 + $0x10] sm:$0xff] %v8878
        %8887 = vst [vmem:[#allocation2 + $0x18] sm:$0xff] %v8879
        %8888 = vst [vmem:[#allocation2 + $0x20] sm:$0xff] %v8880
        %8889 = vst [vmem:[#allocation2 + $0x28] sm:$0xff] %v8881
        %8890 = vst [vmem:[#allocation2 + $0x30] sm:$0xff] %v8882
        %8891 = vst [vmem:[#allocation2 + $0x38] sm:$0xff] %v8883
        %p8892 = scmp.eq.s32.totalorder %s25, 1
        // Predicated region
        $region81: #{tpu_custom_call.1} parent=47 // pred_check
          %p8893 = pneg %p8892
        $region82: #{tpu_custom_call.1} parent=47 // pred_check_branch
          %8895 = sbr.rel (%p8893) target = $region84
        $region83: #{tpu_custom_call.1} parent=47 // pred_region
          %v8896 = vld [vmem:[#allocation2] sm:$0xff]
          %v8897 = vld [vmem:[#allocation2 + $0x8] sm:$0xff]
          %v8898 = vld [vmem:[#allocation2 + $0x10] sm:$0xff]
          %v8899 = vld [vmem:[#allocation2 + $0x18] sm:$0xff]
          %v8900 = vld [vmem:[#allocation2 + $0x20] sm:$0xff]
          %v8901 = vld [vmem:[#allocation2 + $0x28] sm:$0xff]
          %v8902 = vld [vmem:[#allocation2 + $0x30] sm:$0xff]
          %v8903 = vld [vmem:[#allocation2 + $0x38] sm:$0xff]
          %v8904 = vpack.c.bf16 %v8896, %v8896
          %v8905 = vpack.c.bf16 %v8897, %v8897
          %v8906 = vpack.c.bf16 %v8898, %v8898
          %v8907 = vpack.c.bf16 %v8899, %v8899
          %v8908 = vpack.c.bf16 %v8900, %v8900
          %v8909 = vpack.c.bf16 %v8901, %v8901
          %v8910 = vpack.c.bf16 %v8902, %v8902
          %v8911 = vpack.c.bf16 %v8903, %v8903
          %v8912 = vld [vmem:[#allocation12] sm:$0xf]
          %v8913 = vld [vmem:[#allocation12 + $0x4] sm:$0xf]
          %v8914 = vld [vmem:[#allocation12 + $0x8] sm:$0xf]
          %v8915 = vld [vmem:[#allocation12 + $0xc] sm:$0xf]
          %v8916 = vld [vmem:[#allocation12 + $0x10] sm:$0xf]
          %v8917 = vld [vmem:[#allocation12 + $0x14] sm:$0xf]
          %v8918 = vld [vmem:[#allocation12 + $0x18] sm:$0xf]
          %v8919 = vld [vmem:[#allocation12 + $0x1c] sm:$0xf]
          %v8920 = vld [vmem:[#allocation12 + $0x20] sm:$0xf]
          %v8921 = vld [vmem:[#allocation12 + $0x24] sm:$0xf]
          %v8922 = vld [vmem:[#allocation12 + $0x28] sm:$0xf]
          %v8923 = vld [vmem:[#allocation12 + $0x2c] sm:$0xf]
          %v8924 = vld [vmem:[#allocation12 + $0x30] sm:$0xf]
          %v8925 = vld [vmem:[#allocation12 + $0x34] sm:$0xf]
          %v8926 = vld [vmem:[#allocation12 + $0x38] sm:$0xf]
          %v8927 = vld [vmem:[#allocation12 + $0x3c] sm:$0xf]
          %v8928 = vld [vmem:[#allocation12 + $0x40] sm:$0xf]
          %v8929 = vld [vmem:[#allocation12 + $0x44] sm:$0xf]
          %v8930 = vld [vmem:[#allocation12 + $0x48] sm:$0xf]
          %v8931 = vld [vmem:[#allocation12 + $0x4c] sm:$0xf]
          %v8932 = vld [vmem:[#allocation12 + $0x50] sm:$0xf]
          %v8933 = vld [vmem:[#allocation12 + $0x54] sm:$0xf]
          %v8934 = vld [vmem:[#allocation12 + $0x58] sm:$0xf]
          %v8935 = vld [vmem:[#allocation12 + $0x5c] sm:$0xf]
          %v8936 = vld [vmem:[#allocation12 + $0x60] sm:$0xf]
          %v8937 = vld [vmem:[#allocation12 + $0x64] sm:$0xf]
          %v8938 = vld [vmem:[#allocation12 + $0x68] sm:$0xf]
          %v8939 = vld [vmem:[#allocation12 + $0x6c] sm:$0xf]
          %v8940 = vld [vmem:[#allocation12 + $0x70] sm:$0xf]
          %v8941 = vld [vmem:[#allocation12 + $0x74] sm:$0xf]
          %v8942 = vld [vmem:[#allocation12 + $0x78] sm:$0xf]
          %v8943 = vld [vmem:[#allocation12 + $0x7c] sm:$0xf]
          %v8944 = vld [vmem:[#allocation12 + $0x80] sm:$0xf]
          %v8945 = vld [vmem:[#allocation12 + $0x84] sm:$0xf]
          %v8946 = vld [vmem:[#allocation12 + $0x88] sm:$0xf]
          %v8947 = vld [vmem:[#allocation12 + $0x8c] sm:$0xf]
          %v8948 = vld [vmem:[#allocation12 + $0x90] sm:$0xf]
          %v8949 = vld [vmem:[#allocation12 + $0x94] sm:$0xf]
          %v8950 = vld [vmem:[#allocation12 + $0x98] sm:$0xf]
          %v8951 = vld [vmem:[#allocation12 + $0x9c] sm:$0xf]
          %v8952 = vld [vmem:[#allocation12 + $0xa0] sm:$0xf]
          %v8953 = vld [vmem:[#allocation12 + $0xa4] sm:$0xf]
          %v8954 = vld [vmem:[#allocation12 + $0xa8] sm:$0xf]
          %v8955 = vld [vmem:[#allocation12 + $0xac] sm:$0xf]
          %v8956 = vld [vmem:[#allocation12 + $0xb0] sm:$0xf]
          %v8957 = vld [vmem:[#allocation12 + $0xb4] sm:$0xf]
          %v8958 = vld [vmem:[#allocation12 + $0xb8] sm:$0xf]
          %v8959 = vld [vmem:[#allocation12 + $0xbc] sm:$0xf]
          %v8960 = vld [vmem:[#allocation12 + $0xc0] sm:$0xf]
          %v8961 = vld [vmem:[#allocation12 + $0xc4] sm:$0xf]
          %v8962 = vld [vmem:[#allocation12 + $0xc8] sm:$0xf]
          %v8963 = vld [vmem:[#allocation12 + $0xcc] sm:$0xf]
          %v8964 = vld [vmem:[#allocation12 + $0xd0] sm:$0xf]
          %v8965 = vld [vmem:[#allocation12 + $0xd4] sm:$0xf]
          %v8966 = vld [vmem:[#allocation12 + $0xd8] sm:$0xf]
          %v8967 = vld [vmem:[#allocation12 + $0xdc] sm:$0xf]
          %v8968 = vld [vmem:[#allocation12 + $0xe0] sm:$0xf]
          %v8969 = vld [vmem:[#allocation12 + $0xe4] sm:$0xf]
          %v8970 = vld [vmem:[#allocation12 + $0xe8] sm:$0xf]
          %v8971 = vld [vmem:[#allocation12 + $0xec] sm:$0xf]
          %v8972 = vld [vmem:[#allocation12 + $0xf0] sm:$0xf]
          %v8973 = vld [vmem:[#allocation12 + $0xf4] sm:$0xf]
          %v8974 = vld [vmem:[#allocation12 + $0xf8] sm:$0xf]
          %v8975 = vld [vmem:[#allocation12 + $0xfc] sm:$0xf]
          %v8976 = vld [vmem:[#allocation12 + $0x100] sm:$0xf]
          %v8977 = vld [vmem:[#allocation12 + $0x104] sm:$0xf]
          %v8978 = vld [vmem:[#allocation12 + $0x108] sm:$0xf]
          %v8979 = vld [vmem:[#allocation12 + $0x10c] sm:$0xf]
          %v8980 = vld [vmem:[#allocation12 + $0x110] sm:$0xf]
          %v8981 = vld [vmem:[#allocation12 + $0x114] sm:$0xf]
          %v8982 = vld [vmem:[#allocation12 + $0x118] sm:$0xf]
          %v8983 = vld [vmem:[#allocation12 + $0x11c] sm:$0xf]
          %v8984 = vld [vmem:[#allocation12 + $0x120] sm:$0xf]
          %v8985 = vld [vmem:[#allocation12 + $0x124] sm:$0xf]
          %v8986 = vld [vmem:[#allocation12 + $0x128] sm:$0xf]
          %v8987 = vld [vmem:[#allocation12 + $0x12c] sm:$0xf]
          %v8988 = vld [vmem:[#allocation12 + $0x130] sm:$0xf]
          %v8989 = vld [vmem:[#allocation12 + $0x134] sm:$0xf]
          %v8990 = vld [vmem:[#allocation12 + $0x138] sm:$0xf]
          %v8991 = vld [vmem:[#allocation12 + $0x13c] sm:$0xf]
          %v8992 = vld [vmem:[#allocation12 + $0x140] sm:$0xf]
          %v8993 = vld [vmem:[#allocation12 + $0x144] sm:$0xf]
          %v8994 = vld [vmem:[#allocation12 + $0x148] sm:$0xf]
          %v8995 = vld [vmem:[#allocation12 + $0x14c] sm:$0xf]
          %v8996 = vld [vmem:[#allocation12 + $0x150] sm:$0xf]
          %v8997 = vld [vmem:[#allocation12 + $0x154] sm:$0xf]
          %v8998 = vld [vmem:[#allocation12 + $0x158] sm:$0xf]
          %v8999 = vld [vmem:[#allocation12 + $0x15c] sm:$0xf]
          %v9000 = vld [vmem:[#allocation12 + $0x160] sm:$0xf]
          %v9001 = vld [vmem:[#allocation12 + $0x164] sm:$0xf]
          %v9002 = vld [vmem:[#allocation12 + $0x168] sm:$0xf]
          %v9003 = vld [vmem:[#allocation12 + $0x16c] sm:$0xf]
          %v9004 = vld [vmem:[#allocation12 + $0x170] sm:$0xf]
          %v9005 = vld [vmem:[#allocation12 + $0x174] sm:$0xf]
          %v9006 = vld [vmem:[#allocation12 + $0x178] sm:$0xf]
          %v9007 = vld [vmem:[#allocation12 + $0x17c] sm:$0xf]
          %v9008 = vld [vmem:[#allocation12 + $0x180] sm:$0xf]
          %v9009 = vld [vmem:[#allocation12 + $0x184] sm:$0xf]
          %v9010 = vld [vmem:[#allocation12 + $0x188] sm:$0xf]
          %v9011 = vld [vmem:[#allocation12 + $0x18c] sm:$0xf]
          %v9012 = vld [vmem:[#allocation12 + $0x190] sm:$0xf]
          %v9013 = vld [vmem:[#allocation12 + $0x194] sm:$0xf]
          %v9014 = vld [vmem:[#allocation12 + $0x198] sm:$0xf]
          %v9015 = vld [vmem:[#allocation12 + $0x19c] sm:$0xf]
          %v9016 = vld [vmem:[#allocation12 + $0x1a0] sm:$0xf]
          %v9017 = vld [vmem:[#allocation12 + $0x1a4] sm:$0xf]
          %v9018 = vld [vmem:[#allocation12 + $0x1a8] sm:$0xf]
          %v9019 = vld [vmem:[#allocation12 + $0x1ac] sm:$0xf]
          %v9020 = vld [vmem:[#allocation12 + $0x1b0] sm:$0xf]
          %v9021 = vld [vmem:[#allocation12 + $0x1b4] sm:$0xf]
          %v9022 = vld [vmem:[#allocation12 + $0x1b8] sm:$0xf]
          %v9023 = vld [vmem:[#allocation12 + $0x1bc] sm:$0xf]
          %v9024 = vld [vmem:[#allocation12 + $0x1c0] sm:$0xf]
          %v9025 = vld [vmem:[#allocation12 + $0x1c4] sm:$0xf]
          %v9026 = vld [vmem:[#allocation12 + $0x1c8] sm:$0xf]
          %v9027 = vld [vmem:[#allocation12 + $0x1cc] sm:$0xf]
          %v9028 = vld [vmem:[#allocation12 + $0x1d0] sm:$0xf]
          %v9029 = vld [vmem:[#allocation12 + $0x1d4] sm:$0xf]
          %v9030 = vld [vmem:[#allocation12 + $0x1d8] sm:$0xf]
          %v9031 = vld [vmem:[#allocation12 + $0x1dc] sm:$0xf]
          %v9032 = vld [vmem:[#allocation12 + $0x1e0] sm:$0xf]
          %v9033 = vld [vmem:[#allocation12 + $0x1e4] sm:$0xf]
          %v9034 = vld [vmem:[#allocation12 + $0x1e8] sm:$0xf]
          %v9035 = vld [vmem:[#allocation12 + $0x1ec] sm:$0xf]
          %v9036 = vld [vmem:[#allocation12 + $0x1f0] sm:$0xf]
          %v9037 = vld [vmem:[#allocation12 + $0x1f4] sm:$0xf]
          %v9038 = vld [vmem:[#allocation12 + $0x1f8] sm:$0xf]
          %v9039 = vld [vmem:[#allocation12 + $0x1fc] sm:$0xf]
          %v9040 = vld [vmem:[#allocation14] sm:$0x1]
          %v9042 = vperm.slane %v9040, 0
          %v9172 = vunpack.c.l.b16 %v8912
          %v9173 = vunpack.c.l.b16 %v8913
          %v9174 = vunpack.c.l.b16 %v8914
          %v9175 = vunpack.c.l.b16 %v8915
          %v9176 = vunpack.c.l.b16 %v8916
          %v9177 = vunpack.c.l.b16 %v8917
          %v9178 = vunpack.c.l.b16 %v8918
          %v9179 = vunpack.c.l.b16 %v8919
          %v9180 = vunpack.c.l.b16 %v8920
          %v9181 = vunpack.c.l.b16 %v8921
          %v9182 = vunpack.c.l.b16 %v8922
          %v9183 = vunpack.c.l.b16 %v8923
          %v9184 = vunpack.c.l.b16 %v8924
          %v9185 = vunpack.c.l.b16 %v8925
          %v9186 = vunpack.c.l.b16 %v8926
          %v9187 = vunpack.c.l.b16 %v8927
          %v9188 = vunpack.c.l.b16 %v8928
          %v9189 = vunpack.c.l.b16 %v8929
          %v9190 = vunpack.c.l.b16 %v8930
          %v9191 = vunpack.c.l.b16 %v8931
          %v9192 = vunpack.c.l.b16 %v8932
          %v9193 = vunpack.c.l.b16 %v8933
          %v9194 = vunpack.c.l.b16 %v8934
          %v9195 = vunpack.c.l.b16 %v8935
          %v9196 = vunpack.c.l.b16 %v8936
          %v9197 = vunpack.c.l.b16 %v8937
          %v9198 = vunpack.c.l.b16 %v8938
          %v9199 = vunpack.c.l.b16 %v8939
          %v9200 = vunpack.c.l.b16 %v8940
          %v9201 = vunpack.c.l.b16 %v8941
          %v9202 = vunpack.c.l.b16 %v8942
          %v9203 = vunpack.c.l.b16 %v8943
          %v9204 = vunpack.c.l.b16 %v8944
          %v9205 = vunpack.c.l.b16 %v8945
          %v9206 = vunpack.c.l.b16 %v8946
          %v9207 = vunpack.c.l.b16 %v8947
          %v9208 = vunpack.c.l.b16 %v8948
          %v9209 = vunpack.c.l.b16 %v8949
          %v9210 = vunpack.c.l.b16 %v8950
          %v9211 = vunpack.c.l.b16 %v8951
          %v9212 = vunpack.c.l.b16 %v8952
          %v9213 = vunpack.c.l.b16 %v8953
          %v9214 = vunpack.c.l.b16 %v8954
          %v9215 = vunpack.c.l.b16 %v8955
          %v9216 = vunpack.c.l.b16 %v8956
          %v9217 = vunpack.c.l.b16 %v8957
          %v9218 = vunpack.c.l.b16 %v8958
          %v9219 = vunpack.c.l.b16 %v8959
          %v9220 = vunpack.c.l.b16 %v8960
          %v9221 = vunpack.c.l.b16 %v8961
          %v9222 = vunpack.c.l.b16 %v8962
          %v9223 = vunpack.c.l.b16 %v8963
          %v9224 = vunpack.c.l.b16 %v8964
          %v9225 = vunpack.c.l.b16 %v8965
          %v9226 = vunpack.c.l.b16 %v8966
          %v9227 = vunpack.c.l.b16 %v8967
          %v9228 = vunpack.c.l.b16 %v8968
          %v9229 = vunpack.c.l.b16 %v8969
          %v9230 = vunpack.c.l.b16 %v8970
          %v9231 = vunpack.c.l.b16 %v8971
          %v9232 = vunpack.c.l.b16 %v8972
          %v9233 = vunpack.c.l.b16 %v8973
          %v9234 = vunpack.c.l.b16 %v8974
          %v9235 = vunpack.c.l.b16 %v8975
          %v9236 = vunpack.c.l.b16 %v8976
          %v9237 = vunpack.c.l.b16 %v8977
          %v9238 = vunpack.c.l.b16 %v8978
          %v9239 = vunpack.c.l.b16 %v8979
          %v9240 = vunpack.c.l.b16 %v8980
          %v9241 = vunpack.c.l.b16 %v8981
          %v9242 = vunpack.c.l.b16 %v8982
          %v9243 = vunpack.c.l.b16 %v8983
          %v9244 = vunpack.c.l.b16 %v8984
          %v9245 = vunpack.c.l.b16 %v8985
          %v9246 = vunpack.c.l.b16 %v8986
          %v9247 = vunpack.c.l.b16 %v8987
          %v9248 = vunpack.c.l.b16 %v8988
          %v9249 = vunpack.c.l.b16 %v8989
          %v9250 = vunpack.c.l.b16 %v8990
          %v9251 = vunpack.c.l.b16 %v8991
          %v9252 = vunpack.c.l.b16 %v8992
          %v9253 = vunpack.c.l.b16 %v8993
          %v9254 = vunpack.c.l.b16 %v8994
          %v9255 = vunpack.c.l.b16 %v8995
          %v9256 = vunpack.c.l.b16 %v8996
          %v9257 = vunpack.c.l.b16 %v8997
          %v9258 = vunpack.c.l.b16 %v8998
          %v9259 = vunpack.c.l.b16 %v8999
          %v9260 = vunpack.c.l.b16 %v9000
          %v9261 = vunpack.c.l.b16 %v9001
          %v9262 = vunpack.c.l.b16 %v9002
          %v9263 = vunpack.c.l.b16 %v9003
          %v9264 = vunpack.c.l.b16 %v9004
          %v9265 = vunpack.c.l.b16 %v9005
          %v9266 = vunpack.c.l.b16 %v9006
          %v9267 = vunpack.c.l.b16 %v9007
          %v9268 = vunpack.c.l.b16 %v9008
          %v9269 = vunpack.c.l.b16 %v9009
          %v9270 = vunpack.c.l.b16 %v9010
          %v9271 = vunpack.c.l.b16 %v9011
          %v9272 = vunpack.c.l.b16 %v9012
          %v9273 = vunpack.c.l.b16 %v9013
          %v9274 = vunpack.c.l.b16 %v9014
          %v9275 = vunpack.c.l.b16 %v9015
          %v9276 = vunpack.c.l.b16 %v9016
          %v9277 = vunpack.c.l.b16 %v9017
          %v9278 = vunpack.c.l.b16 %v9018
          %v9279 = vunpack.c.l.b16 %v9019
          %v9280 = vunpack.c.l.b16 %v9020
          %v9281 = vunpack.c.l.b16 %v9021
          %v9282 = vunpack.c.l.b16 %v9022
          %v9283 = vunpack.c.l.b16 %v9023
          %v9284 = vunpack.c.l.b16 %v9024
          %v9285 = vunpack.c.l.b16 %v9025
          %v9286 = vunpack.c.l.b16 %v9026
          %v9287 = vunpack.c.l.b16 %v9027
          %v9288 = vunpack.c.l.b16 %v9028
          %v9289 = vunpack.c.l.b16 %v9029
          %v9290 = vunpack.c.l.b16 %v9030
          %v9291 = vunpack.c.l.b16 %v9031
          %v9292 = vunpack.c.l.b16 %v9032
          %v9293 = vunpack.c.l.b16 %v9033
          %v9294 = vunpack.c.l.b16 %v9034
          %v9295 = vunpack.c.l.b16 %v9035
          %v9296 = vunpack.c.l.b16 %v9036
          %v9297 = vunpack.c.l.b16 %v9037
          %v9298 = vunpack.c.l.b16 %v9038
          %v9299 = vunpack.c.l.b16 %v9039
          %v9300 = vpack.c.b16 %v9173, %v9172
          %v9301 = vpack.c.b16 %v9175, %v9174
          %v9302 = vpack.c.b16 %v9177, %v9176
          %v9303 = vpack.c.b16 %v9179, %v9178
          %v9304 = vpack.c.b16 %v9181, %v9180
          %v9305 = vpack.c.b16 %v9183, %v9182
          %v9306 = vpack.c.b16 %v9185, %v9184
          %v9307 = vpack.c.b16 %v9187, %v9186
          %v9308 = vpack.c.b16 %v9189, %v9188
          %v9309 = vpack.c.b16 %v9191, %v9190
          %v9310 = vpack.c.b16 %v9193, %v9192
          %v9311 = vpack.c.b16 %v9195, %v9194
          %v9312 = vpack.c.b16 %v9197, %v9196
          %v9313 = vpack.c.b16 %v9199, %v9198
          %v9314 = vpack.c.b16 %v9201, %v9200
          %v9315 = vpack.c.b16 %v9203, %v9202
          %v9316 = vpack.c.b16 %v9205, %v9204
          %v9317 = vpack.c.b16 %v9207, %v9206
          %v9318 = vpack.c.b16 %v9209, %v9208
          %v9319 = vpack.c.b16 %v9211, %v9210
          %v9320 = vpack.c.b16 %v9213, %v9212
          %v9321 = vpack.c.b16 %v9215, %v9214
          %v9322 = vpack.c.b16 %v9217, %v9216
          %v9323 = vpack.c.b16 %v9219, %v9218
          %v9324 = vpack.c.b16 %v9221, %v9220
          %v9325 = vpack.c.b16 %v9223, %v9222
          %v9326 = vpack.c.b16 %v9225, %v9224
          %v9327 = vpack.c.b16 %v9227, %v9226
          %v9328 = vpack.c.b16 %v9229, %v9228
          %v9329 = vpack.c.b16 %v9231, %v9230
          %v9330 = vpack.c.b16 %v9233, %v9232
          %v9331 = vpack.c.b16 %v9235, %v9234
          %v9332 = vpack.c.b16 %v9237, %v9236
          %v9333 = vpack.c.b16 %v9239, %v9238
          %v9334 = vpack.c.b16 %v9241, %v9240
          %v9335 = vpack.c.b16 %v9243, %v9242
          %v9336 = vpack.c.b16 %v9245, %v9244
          %v9337 = vpack.c.b16 %v9247, %v9246
          %v9338 = vpack.c.b16 %v9249, %v9248
          %v9339 = vpack.c.b16 %v9251, %v9250
          %v9340 = vpack.c.b16 %v9253, %v9252
          %v9341 = vpack.c.b16 %v9255, %v9254
          %v9342 = vpack.c.b16 %v9257, %v9256
          %v9343 = vpack.c.b16 %v9259, %v9258
          %v9344 = vpack.c.b16 %v9261, %v9260
          %v9345 = vpack.c.b16 %v9263, %v9262
          %v9346 = vpack.c.b16 %v9265, %v9264
          %v9347 = vpack.c.b16 %v9267, %v9266
          %v9348 = vpack.c.b16 %v9269, %v9268
          %v9349 = vpack.c.b16 %v9271, %v9270
          %v9350 = vpack.c.b16 %v9273, %v9272
          %v9351 = vpack.c.b16 %v9275, %v9274
          %v9352 = vpack.c.b16 %v9277, %v9276
          %v9353 = vpack.c.b16 %v9279, %v9278
          %v9354 = vpack.c.b16 %v9281, %v9280
          %v9355 = vpack.c.b16 %v9283, %v9282
          %v9356 = vpack.c.b16 %v9285, %v9284
          %v9357 = vpack.c.b16 %v9287, %v9286
          %v9358 = vpack.c.b16 %v9289, %v9288
          %v9359 = vpack.c.b16 %v9291, %v9290
          %v9360 = vpack.c.b16 %v9293, %v9292
          %v9361 = vpack.c.b16 %v9295, %v9294
          %v9362 = vpack.c.b16 %v9297, %v9296
          %v9363 = vpack.c.b16 %v9299, %v9298
          %9428 = vmatpush.bf16.msra.mxu0 %v9307
          %9429 = vmatpush.bf16.msra.mxu0 %v9306
          %9430 = vmatpush.bf16.msra.mxu0 %v9305
          %9431 = vmatpush.bf16.msra.mxu0 %v9304
          %9432 = vmatpush.bf16.msra.mxu0 %v9303
          %9433 = vmatpush.bf16.msra.mxu0 %v9302
          %9434 = vmatpush.bf16.msra.mxu0 %v9301
          %9435 = vmatpush.bf16.msra.mxu0 %v9300
          %9436 = vmatmul.bf16.gmra.mxu0 %v8904
          %v9437 = vpop.f32.mrf.mxu0
          %v9438 = vadd.f32 %v9042, %v9437
          %v9439 = vpop.f32.mrf.mxu0
          %9440 = vdwg.mxu0
          %9441 = vmatpush.bf16.msra.mxu0 %v9315
          %9442 = vmatpush.bf16.msra.mxu0 %v9314
          %9443 = vmatpush.bf16.msra.mxu0 %v9313
          %9444 = vmatpush.bf16.msra.mxu0 %v9312
          %9445 = vmatpush.bf16.msra.mxu0 %v9311
          %9446 = vmatpush.bf16.msra.mxu0 %v9310
          %9447 = vmatpush.bf16.msra.mxu0 %v9309
          %9448 = vmatpush.bf16.msra.mxu0 %v9308
          %9449 = vmatmul.bf16.gmra.mxu0 %v8905
          %v9450 = vpop.f32.mrf.mxu0
          %v9451 = vadd.f32 %v9438, %v9450
          %v9452 = vpop.f32.mrf.mxu0
          %9453 = vdwg.mxu0
          %9454 = vmatpush.bf16.msra.mxu0 %v9323
          %9455 = vmatpush.bf16.msra.mxu0 %v9322
          %9456 = vmatpush.bf16.msra.mxu0 %v9321
          %9457 = vmatpush.bf16.msra.mxu0 %v9320
          %9458 = vmatpush.bf16.msra.mxu0 %v9319
          %9459 = vmatpush.bf16.msra.mxu0 %v9318
          %9460 = vmatpush.bf16.msra.mxu0 %v9317
          %9461 = vmatpush.bf16.msra.mxu0 %v9316
          %9462 = vmatmul.bf16.gmra.mxu0 %v8906
          %v9463 = vpop.f32.mrf.mxu0
          %v9464 = vadd.f32 %v9451, %v9463
          %v9465 = vpop.f32.mrf.mxu0
          %9466 = vdwg.mxu0
          %9467 = vmatpush.bf16.msra.mxu0 %v9331
          %9468 = vmatpush.bf16.msra.mxu0 %v9330
          %9469 = vmatpush.bf16.msra.mxu0 %v9329
          %9470 = vmatpush.bf16.msra.mxu0 %v9328
          %9471 = vmatpush.bf16.msra.mxu0 %v9327
          %9472 = vmatpush.bf16.msra.mxu0 %v9326
          %9473 = vmatpush.bf16.msra.mxu0 %v9325
          %9474 = vmatpush.bf16.msra.mxu0 %v9324
          %9475 = vmatmul.bf16.gmra.mxu0 %v8907
          %v9476 = vpop.f32.mrf.mxu0
          %v9477 = vadd.f32 %v9464, %v9476
          %v9478 = vpop.f32.mrf.mxu0
          %9479 = vdwg.mxu0
          %9480 = vmatpush.bf16.msra.mxu0 %v9339
          %9481 = vmatpush.bf16.msra.mxu0 %v9338
          %9482 = vmatpush.bf16.msra.mxu0 %v9337
          %9483 = vmatpush.bf16.msra.mxu0 %v9336
          %9484 = vmatpush.bf16.msra.mxu0 %v9335
          %9485 = vmatpush.bf16.msra.mxu0 %v9334
          %9486 = vmatpush.bf16.msra.mxu0 %v9333
          %9487 = vmatpush.bf16.msra.mxu0 %v9332
          %9488 = vmatmul.bf16.gmra.mxu0 %v8908
          %v9489 = vpop.f32.mrf.mxu0
          %v9490 = vadd.f32 %v9477, %v9489
          %v9491 = vpop.f32.mrf.mxu0
          %9492 = vdwg.mxu0
          %9493 = vmatpush.bf16.msra.mxu0 %v9347
          %9494 = vmatpush.bf16.msra.mxu0 %v9346
          %9495 = vmatpush.bf16.msra.mxu0 %v9345
          %9496 = vmatpush.bf16.msra.mxu0 %v9344
          %9497 = vmatpush.bf16.msra.mxu0 %v9343
          %9498 = vmatpush.bf16.msra.mxu0 %v9342
          %9499 = vmatpush.bf16.msra.mxu0 %v9341
          %9500 = vmatpush.bf16.msra.mxu0 %v9340
          %9501 = vmatmul.bf16.gmra.mxu0 %v8909
          %v9502 = vpop.f32.mrf.mxu0
          %v9503 = vadd.f32 %v9490, %v9502
          %v9504 = vpop.f32.mrf.mxu0
          %9505 = vdwg.mxu0
          %9506 = vmatpush.bf16.msra.mxu0 %v9355
          %9507 = vmatpush.bf16.msra.mxu0 %v9354
          %9508 = vmatpush.bf16.msra.mxu0 %v9353
          %9509 = vmatpush.bf16.msra.mxu0 %v9352
          %9510 = vmatpush.bf16.msra.mxu0 %v9351
          %9511 = vmatpush.bf16.msra.mxu0 %v9350
          %9512 = vmatpush.bf16.msra.mxu0 %v9349
          %9513 = vmatpush.bf16.msra.mxu0 %v9348
          %9514 = vmatmul.bf16.gmra.mxu0 %v8910
          %v9515 = vpop.f32.mrf.mxu0
          %v9516 = vadd.f32 %v9503, %v9515
          %v9517 = vpop.f32.mrf.mxu0
          %9518 = vdwg.mxu0
          %9519 = vmatpush.bf16.msra.mxu0 %v9363
          %9520 = vmatpush.bf16.msra.mxu0 %v9362
          %9521 = vmatpush.bf16.msra.mxu0 %v9361
          %9522 = vmatpush.bf16.msra.mxu0 %v9360
          %9523 = vmatpush.bf16.msra.mxu0 %v9359
          %9524 = vmatpush.bf16.msra.mxu0 %v9358
          %9525 = vmatpush.bf16.msra.mxu0 %v9357
          %9526 = vmatpush.bf16.msra.mxu0 %v9356
          %9527 = vmatmul.bf16.gmra.mxu0 %v8911
          %v9528 = vpop.f32.mrf.mxu0
          %v9529 = vadd.f32 %v9516, %v9528
          %v9530 = vpop.f32.mrf.mxu0
          %9531 = vdwg.mxu0
          %v9532 = vlaneseq
          %v9533 = vand.u32 %v9532, 127
          %vm9534 = vcmp.lt.s32.totalorder %v9533, 2
          %v9535 = vsel %vm9534, %v9529, -1e+30
          %9536 = vmax.xlane.f32.xlu0 %v9535
          %v9537 = vpop.xlane.xlu0 %9536
          %v9538 = vsub.f32 %v9535, %v9537
          %v9539 = vmul.f32 %v9538, 1.442695
          %v9540 = vpow.pop %v9539
          %9541 = vadd.xlane.f32.xlu0 %v9540
          %v9542 = vpop.xlane.xlu0 %9541
          %v9543 = vlog2.pop %v9542
          %v9544 = vmul.f32 %v9543, 0.6931472
          %v9545 = vsub.f32 %v9538, %v9544
          %9546 = vst [vmem:[#allocation15] sm:$0xff] %v9545
        $region84: #{tpu_custom_call.1} parent=47 // pred_fallthru
          _
        // Predicated region
        $region85: #{tpu_custom_call.1} parent=47 // pred_check
          %p9547 = pneg %p195
        $region86: #{tpu_custom_call.1} parent=47 // pred_check_branch
          %9549 = sbr.rel (%p9547) target = $region88
        $region87: #{tpu_custom_call.1} parent=47 // pred_region
          %9551 = vsyncadd [#allocation5], 0
          %s9553 = sshll.u32 [#allocation15], 4
          %s9554 = int_to_ptr.vmem [resolvable:$true] %s9553
          %s9555 = sshll.u32 %s7, 4
          %s9556 = int_to_ptr.hbm [resolvable:$true] %s9555
          %9558 = dma.vmem_to_hbm [thread:$0]  %s9554, 128, %s9556, [#allocation5]
        $region88: #{tpu_custom_call.1} parent=47 // pred_fallthru
          _
        // Predicated region
        $region89: #{tpu_custom_call.1} parent=47 // pred_check
          %p9559 = pneg %p195
        $region90: #{tpu_custom_call.1} parent=47 // pred_check_branch
          %9561 = sbr.rel (%p9559) target = $region92
        $region91: #{tpu_custom_call.1} parent=47 // pred_region
          %9563 = dma.done [#allocation5], 128
        $region92: #{tpu_custom_call.1} parent=47 // pred_fallthru
          _
      $region48: #{tpu_custom_call.1} parent=5 // pred_fallthru
        _
      %p9564 = scmp.le.s32.totalorder 2, %s20
      // Predicated region
      $region93: #{tpu_custom_call.1} parent=5 // pred_check
        %p9565 = pneg %p9564
      $region94: #{tpu_custom_call.1} parent=5 // pred_check_branch
        %9567 = sbr.rel (%p9565) target = $region96
      $region95: #{tpu_custom_call.1} parent=5 // pred_region
        %s9568 = ssub.s32 %s20, 2
      $region96: #{tpu_custom_call.1} parent=5 // pred_fallthru
        _
    $region6: #{tpu_custom_call.1} parent=1 // loop_footer
      %s24 = sadd.s32 1, %s20
    $region7: #{tpu_custom_call.1} parent=1 // loop_footer_branch
      %19 = sbr.rel target = $region3
    $region8: #{tpu_custom_call.1} parent=1 // loop_exit
      _
    %9569 = vsyncpa [#allocation4], 1
    %s9570 = scalar_lea.sflag [#allocation4], 1
    %9571 = vsyncpa %s9570, 1
    %9572 = vsyncpa [#allocation7], 1
    %9573 = vsyncpa [#allocation10], 1
    %s9574 = scalar_lea.sflag [#allocation10], 1
    %9575 = vsyncpa %s9574, 1
    %9576 = vsyncpa [#allocation13], 1
    %9577 = vsyncpa [#allocation5], 1
    %s9578 = scalar_lea.sflag [#allocation5], 1
    %9579 = vsyncpa %s9578, 1

</llo_original>
